<compile_context>
chip_gen: v6e
topology: v6e:2x2x1
jax: 0.10.0
libtpu: 0.0.40
codegen_flags: <defaults>
</compile_context>

<pallas_src>
import numpy as np
import jax
import jax.numpy as jnp
from jax import lax
from jax.experimental import pallas as pl
from jax.experimental.pallas import tpu as pltpu

# ---- hyper-parameters consistent with the module ---------------------------
HIST = 8            # historical_steps
D = 32              # embed_dim
H = 8               # num_heads
HD = D // H         # head_dim = 4
NL = 4              # num_layers
FF = 128            # dim_feedforward (temp_ff default)
B = 2               # batch
L = HIST + 1        # sequence length including cls token
NR = HIST * B       # 16 real timestep rows, row r = t*B + b
NC = NR + B         # 18 rows including the B cls rows
NP = 32             # padded row count (multiple of 8; == D so consts pack in one slab)
NPH = H * NP        # 256 head-stacked rows
EPS = 1e-5
NEG = -1e30
SCALE = 1.0 / float(np.sqrt(HD))

assert NP % 8 == 0 and NP >= NC and NP == D


def _layer_norm(x, w, b):
    # x: [rows, D] f32; w, b: [1, D] f32
    mu = jnp.mean(x, axis=-1, keepdims=True)
    xc = x - mu
    var = jnp.mean(xc * xc, axis=-1, keepdims=True)
    return xc * lax.rsqrt(var + EPS) * w + b


def _build_consts():
    """Static attention constants (trace-time NumPy): head-tiled causal mask + head-lane mask."""
    t_of = np.zeros(NP, np.int64)
    b_of = np.zeros(NP, np.int64)
    real = np.zeros(NP, bool)
    for n in range(NR):                               # real timestep rows: r = t*B + b
        t_of[n], b_of[n], real[n] = n // B, n % B, True
    for b in range(B):                                # cls rows at t = HIST
        t_of[NR + b], b_of[NR + b], real[NR + b] = HIST, b, True
    allowed = (real[:, None] & real[None, :]
               & (b_of[:, None] == b_of[None, :])
               & (t_of[None, :] <= t_of[:, None]))    # same batch, causal, real rows only
    mask_add = np.where(allowed, 0.0, NEG).astype(np.float32)     # [NP, NP]
    mask_add = np.tile(mask_add, (H, 1))                          # [NPH, NP] (same per head)
    hm = np.zeros((NPH, D), np.float32)                           # head-lane mask per row block
    for h in range(H):
        hm[h * NP:(h + 1) * NP, h * HD:(h + 1) * HD] = 1.0
    return np.stack([mask_add, hm])                               # [2, NPH, D] f32 (NP == D)


def encoder_kernel(pin_ref, consts_ref, vecs_ref, ff1b_ref,
                   w_qkvo_ref, w_ff1_ref, w_ff2_ref, o_ref):
    f32, bf16 = jnp.float32, jnp.bfloat16

    # ----- fused prologue: padding-token select + cls append + pos add (one select) ----
    # pin slab rows: 0 = x (flat, zero-padded), 1 = padding mask, 2 = padding_token+pos,
    #                3 = pos (real rows) / cls+pos (cls rows) / 0 (structural pad rows)
    x = jnp.where(pin_ref[1] > 0.5, pin_ref[2], pin_ref[0] + pin_ref[3])      # [NP, D] f32

    vec = vecs_ref[...]                    # [4 + NL*9, D] f32: ln0_w, ln0_b, fn_w, fn_b, per-layer vecs
    mask_add = consts_ref[0]               # [NPH, NP] f32: 0 / -1e30 head-tiled causal mask
    hm = consts_ref[1]                     # [NPH, D]  f32: head-lane mask per head row-block

    # self.layer_norm(self.dropout(x)) -- dropout is identity at inference
    x = _layer_norm(x, vec[0:1], vec[1:2])

    # TODO(synk): dropout layers inside TransformerEncoderLayer omitted (eval mode).
    for l in range(NL):                    # static unroll over the 4 layers
        base = 4 + l * 9                   # q_b, k_b, v_b, out_b, n1_w, n1_b, n2_w, n2_b, ff2_b
        wl = w_qkvo_ref[l]                 # [4, D, D] bf16: Wq^T, Wk^T, Wv^T, Wout^T
        xb = x.astype(bf16)

        q = (jnp.dot(xb, wl[0], preferred_element_type=f32) + vec[base + 0:base + 1]) * SCALE
        k = jnp.dot(xb, wl[1], preferred_element_type=f32) + vec[base + 1:base + 2]
        v = jnp.dot(xb, wl[2], preferred_element_type=f32) + vec[base + 2:base + 3]

        # ----- head-stacked attention: heads along the sublane axis, two plain matmuls ----
        qh = (jnp.concatenate([q] * H, axis=0) * hm).astype(bf16)             # [NPH, D] bf16
        kT = jnp.transpose(k).astype(bf16)                                    # [D, NP] bf16
        s = jnp.dot(qh, kT, preferred_element_type=f32) + mask_add            # [NPH, NP] f32
        s = s - jnp.max(s, axis=-1, keepdims=True)
        p = jnp.exp(s)
        p = p * pl.reciprocal(jnp.sum(p, axis=-1, keepdims=True), approx=True)
        ctx = jnp.dot(p.astype(bf16), v.astype(bf16),
                      preferred_element_type=f32) * hm                        # [NPH, D] f32
        attn = ctx[0:NP]                                                      # merge heads:
        for h in range(1, H):                                                 # aligned 32-row blocks
            attn = attn + ctx[h * NP:(h + 1) * NP]                            # [NP, D]
        attn = jnp.dot(attn.astype(bf16), wl[3],
                       preferred_element_type=f32) + vec[base + 3:base + 4]

        x = _layer_norm(x + attn, vec[base + 4:base + 5], vec[base + 5:base + 6])

        # ----- feed-forward (ReLU) ----
        hdn = jnp.dot(x.astype(bf16), w_ff1_ref[l], preferred_element_type=f32) + ff1b_ref[l]
        hdn = jnp.maximum(hdn, 0.0)
        ff = jnp.dot(hdn.astype(bf16), w_ff2_ref[l],
                     preferred_element_type=f32) + vec[base + 8:base + 9]

        x = _layer_norm(x + ff, vec[base + 6:base + 7], vec[base + 7:base + 8])

    # final TransformerEncoder norm, applied only to the cls rows (out[-1])
    cls = _layer_norm(x[NR:NC], vec[2:3], vec[3:4])
    o_ref[...] = cls.astype(o_ref.dtype)


def init_params(key):
    ks = jax.random.split(key, 7)
    std = 0.02
    ones_d = jnp.ones((D,), jnp.float32)
    zeros_d = jnp.zeros((D,), jnp.float32)
    # per-layer packed D-sized vectors: q_b, k_b, v_b, out_b, n1_w, n1_b, n2_w, n2_b, ff2_b
    vec_one = jnp.stack([zeros_d, zeros_d, zeros_d, zeros_d,
                         ones_d, zeros_d, ones_d, zeros_d, zeros_d])
    return {
        "padding_token": jax.random.normal(ks[0], (HIST, D), jnp.float32) * std,
        "cls_token":     jax.random.normal(ks[1], (1, D), jnp.float32) * std,
        "pos_embed":     jax.random.normal(ks[2], (L, D), jnp.float32) * std,
        "ln0": jnp.stack([ones_d, zeros_d]),                       # initial LayerNorm [w; b]
        # attention projections pre-transposed so activations are x @ W:
        "qkv_w": jax.random.normal(ks[3], (NL, 3, D, D), jnp.float32) * std,
        "out_w": jax.random.normal(ks[4], (NL, D, D), jnp.float32) * std,
        "ff1_w": jax.random.normal(ks[5], (NL, D, FF), jnp.float32) * std,   # linear1.weight.T
        "ff1_b": jnp.zeros((NL, 1, FF), jnp.float32),
        "ff2_w": jax.random.normal(ks[6], (NL, FF, D), jnp.float32) * std,   # linear2.weight.T
        "vec": jnp.tile(vec_one[None], (NL, 1, 1)),                # [NL, 9, D]
        "fn": jnp.stack([ones_d, zeros_d]),                        # final encoder norm [w; b]
    }


def pack_params(params):
    """One-time packing of the module parameters into a few DMA-friendly slabs."""
    f32 = jnp.float32
    pad_rep = jnp.repeat(params["padding_token"], B, axis=0)                  # [NR, D]
    pos_rep = jnp.repeat(params["pos_embed"][:HIST], B, axis=0)               # [NR, D]
    padpos = jnp.concatenate([pad_rep + pos_rep,
                              jnp.zeros((NP - NR, D), f32)], axis=0)          # [NP, D]
    cls_rows = jnp.broadcast_to(params["cls_token"] + params["pos_embed"][HIST:HIST + 1], (B, D))
    add = jnp.concatenate([pos_rep, cls_rows,
                           jnp.zeros((NP - NC, D), f32)], axis=0)             # [NP, D]

    vec_rows = [params["ln0"][0], params["ln0"][1], params["fn"][0], params["fn"][1]]
    for l in range(NL):
        vec_rows.extend(list(params["vec"][l]))
    vecs = jnp.stack(vec_rows).astype(f32)                                    # [4 + NL*9, D]

    w_qkvo = jnp.concatenate([params["qkv_w"], params["out_w"][:, None]],
                             axis=1).astype(jnp.bfloat16)                     # [NL, 4, D, D]
    return {
        "padpos": padpos.astype(f32),
        "add": add.astype(f32),
        "vecs": vecs,
        "ff1_b": params["ff1_b"].astype(f32),
        "w_qkvo": w_qkvo,
        "w_ff1": params["ff1_w"].astype(jnp.bfloat16),
        "w_ff2": params["ff2_w"].astype(jnp.bfloat16),
        "consts": jnp.asarray(_build_consts(), dtype=jnp.float32),            # [2, NPH, D]
    }


def _full_block(shape):
    # whole array resident in VMEM for the single grid step (everything is tiny)
    return pl.BlockSpec(shape, lambda i: (0,) * len(shape))


@jax.jit
def temporal_encoder_forward(x, padding_mask, packed):
    """x: [HIST, B, D] float32 (seq, batch, feature); padding_mask: [B, HIST] bool."""
    f32 = jnp.float32
    # wrapper does only cheap, flat rearrangements; the select/add happens in-kernel
    xin = jnp.concatenate([x.astype(f32).reshape(NR, D),
                           jnp.zeros((NP - NR, D), f32)], axis=0)             # [NP, D]
    m = jnp.concatenate([padding_mask.T.astype(f32).reshape(NR, 1),
                         jnp.zeros((NP - NR, 1), f32)], axis=0)
    m = jnp.broadcast_to(m, (NP, D))
    pin = jnp.stack([xin, m, packed["padpos"], packed["add"]])                # [4, NP, D]

    inputs = [pin, packed["consts"], packed["vecs"], packed["ff1_b"],
              packed["w_qkvo"], packed["w_ff1"], packed["w_ff2"]]

    out = pl.pallas_call(
        encoder_kernel,
        out_shape=jax.ShapeDtypeStruct((B, D), jnp.float32),
        grid_spec=pltpu.PrefetchScalarGridSpec(
            num_scalar_prefetch=0,
            grid=(1,),                                   # single step: whole batch at once
            in_specs=[_full_block(a.shape) for a in inputs],
            out_specs=pl.BlockSpec((B, D), lambda i: (0, 0)),
        ),
        compiler_params=pltpu.CompilerParams(
            dimension_semantics=("arbitrary",)),
    )(*inputs)
    return out                                           # [B, D] == out[-1] in torch layout


if __name__ == "__main__":
    key = jax.random.PRNGKey(0)
    k_param, k_x, k_mask = jax.random.split(key, 3)

    params = init_params(k_param)
    packed = pack_params(params)

    x = jax.random.normal(k_x, (HIST, B, D), jnp.float32)        # [seq, batch, feature]
    padding_mask = jax.random.bernoulli(k_mask, 0.3, (B, HIST))  # [batch, seq] bool

    out = temporal_encoder_forward(x, padding_mask, packed)
    out = jax.block_until_ready(out)
    assert out.shape == (B, D)
    assert bool(jnp.all(jnp.isfinite(out)))
    print("KERNEL_OK")
</pallas_src>

<mosaic_0001>
module attributes {stable_mosaic.version = 11 : i64} {
  func.func @encoder_kernel(%arg0: i32, %arg1: memref<4x32x32xf32, #tpu.memory_space<vmem>>, %arg2: memref<2x256x32xf32, #tpu.memory_space<vmem>>, %arg3: memref<40x32xf32, #tpu.memory_space<vmem>>, %arg4: memref<4x1x128xf32, #tpu.memory_space<vmem>>, %arg5: memref<4x4x32x32xbf16, #tpu.memory_space<vmem>>, %arg6: memref<4x32x128xbf16, #tpu.memory_space<vmem>>, %arg7: memref<4x128x32xbf16, #tpu.memory_space<vmem>>, %arg8: memref<2x32xf32, #tpu.memory_space<vmem>>) attributes {dimension_semantics = [#tpu.dimension_semantics<arbitrary>], iteration_bounds = array<i64: 1>, scalar_prefetch = 0 : i64, scratch_operands = 0 : i64, tpu.core_type = #tpu.core_type<tc>, window_params = [{pipeline_mode = #tpu.pipeline_mode<synchronous>, transform_indices = @transform_0, window_bounds = array<i64: 4, 32, 32>}, {pipeline_mode = #tpu.pipeline_mode<synchronous>, transform_indices = @transform_1, window_bounds = array<i64: 2, 256, 32>}, {pipeline_mode = #tpu.pipeline_mode<synchronous>, transform_indices = @transform_2, window_bounds = array<i64: 40, 32>}, {pipeline_mode = #tpu.pipeline_mode<synchronous>, transform_indices = @transform_3, window_bounds = array<i64: 4, 1, 128>}, {pipeline_mode = #tpu.pipeline_mode<synchronous>, transform_indices = @transform_4, window_bounds = array<i64: 4, 4, 32, 32>}, {pipeline_mode = #tpu.pipeline_mode<synchronous>, transform_indices = @transform_5, window_bounds = array<i64: 4, 32, 128>}, {pipeline_mode = #tpu.pipeline_mode<synchronous>, transform_indices = @transform_6, window_bounds = array<i64: 4, 128, 32>}, {pipeline_mode = #tpu.pipeline_mode<synchronous>, transform_indices = @transform_7, window_bounds = array<i64: 2, 32>}]} {
    %c1 = arith.constant 1 : index
    %c0 = arith.constant 0 : index
    %c0_0 = arith.constant 0 : index
    %0 = vector.load %arg1[%c1, %c0, %c0_0] : memref<4x32x32xf32, #tpu.memory_space<vmem>>, vector<1x32x32xf32>
    %1 = vector.shape_cast %0 : vector<1x32x32xf32> to vector<32x32xf32>
    %cst = arith.constant 5.000000e-01 : f32
    %2 = vector.broadcast %cst : f32 to vector<32x32xf32>
    %3 = arith.cmpf ogt, %1, %2 : vector<32x32xf32>
    %c2 = arith.constant 2 : index
    %c0_1 = arith.constant 0 : index
    %c0_2 = arith.constant 0 : index
    %4 = vector.load %arg1[%c2, %c0_1, %c0_2] : memref<4x32x32xf32, #tpu.memory_space<vmem>>, vector<1x32x32xf32>
    %5 = vector.shape_cast %4 : vector<1x32x32xf32> to vector<32x32xf32>
    %c0_3 = arith.constant 0 : index
    %c0_4 = arith.constant 0 : index
    %c0_5 = arith.constant 0 : index
    %6 = vector.load %arg1[%c0_3, %c0_4, %c0_5] : memref<4x32x32xf32, #tpu.memory_space<vmem>>, vector<1x32x32xf32>
    %7 = vector.shape_cast %6 : vector<1x32x32xf32> to vector<32x32xf32>
    %c3 = arith.constant 3 : index
    %c0_6 = arith.constant 0 : index
    %c0_7 = arith.constant 0 : index
    %8 = vector.load %arg1[%c3, %c0_6, %c0_7] : memref<4x32x32xf32, #tpu.memory_space<vmem>>, vector<1x32x32xf32>
    %9 = vector.shape_cast %8 : vector<1x32x32xf32> to vector<32x32xf32>
    %10 = arith.addf %7, %9 : vector<32x32xf32>
    %11 = arith.select %3, %5, %10 : vector<32x32xi1>, vector<32x32xf32>
    %c0_8 = arith.constant 0 : index
    %c0_9 = arith.constant 0 : index
    %12 = vector.load %arg3[%c0_8, %c0_9] : memref<40x32xf32, #tpu.memory_space<vmem>>, vector<40x32xf32>
    %c0_10 = arith.constant 0 : index
    %c0_11 = arith.constant 0 : index
    %c0_12 = arith.constant 0 : index
    %13 = vector.load %arg2[%c0_10, %c0_11, %c0_12] : memref<2x256x32xf32, #tpu.memory_space<vmem>>, vector<1x256x32xf32>
    %14 = vector.shape_cast %13 : vector<1x256x32xf32> to vector<256x32xf32>
    %c1_13 = arith.constant 1 : index
    %c0_14 = arith.constant 0 : index
    %c0_15 = arith.constant 0 : index
    %15 = vector.load %arg2[%c1_13, %c0_14, %c0_15] : memref<2x256x32xf32, #tpu.memory_space<vmem>>, vector<1x256x32xf32>
    %16 = vector.shape_cast %15 : vector<1x256x32xf32> to vector<256x32xf32>
    %17 = vector.extract_strided_slice %12 {offsets = [0, 0], sizes = [1, 32], strides = [1, 1]} : vector<40x32xf32> to vector<1x32xf32>
    %18 = vector.extract_strided_slice %12 {offsets = [1, 0], sizes = [1, 32], strides = [1, 1]} : vector<40x32xf32> to vector<1x32xf32>
    %cst_16 = arith.constant dense<0.000000e+00> : vector<32xf32>
    %19 = vector.multi_reduction <add>, %11, %cst_16 [1] : vector<32x32xf32> to vector<32xf32>
    %20 = vector.shape_cast %19 : vector<32xf32> to vector<32x1xf32>
    %cst_17 = arith.constant 3.200000e+01 : f32
    %21 = vector.broadcast %cst_17 : f32 to vector<32x1xf32>
    %22 = arith.divf %20, %21 : vector<32x1xf32>
    %23 = vector.broadcast %22 : vector<32x1xf32> to vector<32x32xf32>
    %24 = arith.subf %11, %23 : vector<32x32xf32>
    %25 = arith.mulf %24, %24 : vector<32x32xf32>
    %cst_18 = arith.constant dense<0.000000e+00> : vector<32xf32>
    %26 = vector.multi_reduction <add>, %25, %cst_18 [1] : vector<32x32xf32> to vector<32xf32>
    %27 = vector.shape_cast %26 : vector<32xf32> to vector<32x1xf32>
    %cst_19 = arith.constant 3.200000e+01 : f32
    %28 = vector.broadcast %cst_19 : f32 to vector<32x1xf32>
    %29 = arith.divf %27, %28 : vector<32x1xf32>
    %cst_20 = arith.constant 9.99999974E-6 : f32
    %30 = vector.broadcast %cst_20 : f32 to vector<32x1xf32>
    %31 = arith.addf %29, %30 : vector<32x1xf32>
    %32 = math.rsqrt %31 : vector<32x1xf32>
    %33 = vector.broadcast %32 : vector<32x1xf32> to vector<32x32xf32>
    %34 = arith.mulf %24, %33 : vector<32x32xf32>
    %35 = vector.broadcast %17 : vector<1x32xf32> to vector<32x32xf32>
    %36 = arith.mulf %34, %35 : vector<32x32xf32>
    %37 = vector.broadcast %18 : vector<1x32xf32> to vector<32x32xf32>
    %38 = arith.addf %36, %37 : vector<32x32xf32>
    %c0_21 = arith.constant 0 : index
    %c0_22 = arith.constant 0 : index
    %c0_23 = arith.constant 0 : index
    %c0_24 = arith.constant 0 : index
    %39 = vector.load %arg5[%c0_21, %c0_22, %c0_23, %c0_24] : memref<4x4x32x32xbf16, #tpu.memory_space<vmem>>, vector<1x4x32x32xbf16>
    %40 = vector.shape_cast %39 : vector<1x4x32x32xbf16> to vector<4x32x32xbf16>
    %41 = arith.truncf %38 : vector<32x32xf32> to vector<32x32xbf16>
    %42 = vector.extract_strided_slice %40 {offsets = [0, 0, 0], sizes = [1, 32, 32], strides = [1, 1, 1]} : vector<4x32x32xbf16> to vector<1x32x32xbf16>
    %43 = vector.shape_cast %42 : vector<1x32x32xbf16> to vector<32x32xbf16>
    %cst_25 = arith.constant dense<0.000000e+00> : vector<32x32xf32>
    %44 = tpu.matmul %41, %43, %cst_25 {dimension_numbers = #tpu.dot_dimension_numbers<[1], [0], [0], [1], [0, 0, 1, 1], [], []>} : vector<32x32xbf16>, vector<32x32xbf16>, vector<32x32xf32> -> vector<32x32xf32>
    %45 = vector.extract_strided_slice %12 {offsets = [4, 0], sizes = [1, 32], strides = [1, 1]} : vector<40x32xf32> to vector<1x32xf32>
    %46 = vector.broadcast %45 : vector<1x32xf32> to vector<32x32xf32>
    %47 = arith.addf %44, %46 : vector<32x32xf32>
    %cst_26 = arith.constant 5.000000e-01 : f32
    %48 = vector.broadcast %cst_26 : f32 to vector<32x32xf32>
    %49 = arith.mulf %47, %48 : vector<32x32xf32>
    %50 = vector.extract_strided_slice %40 {offsets = [1, 0, 0], sizes = [1, 32, 32], strides = [1, 1, 1]} : vector<4x32x32xbf16> to vector<1x32x32xbf16>
    %51 = vector.shape_cast %50 : vector<1x32x32xbf16> to vector<32x32xbf16>
    %cst_27 = arith.constant dense<0.000000e+00> : vector<32x32xf32>
    %52 = tpu.matmul %41, %51, %cst_27 {dimension_numbers = #tpu.dot_dimension_numbers<[1], [0], [0], [1], [0, 0, 1, 1], [], []>} : vector<32x32xbf16>, vector<32x32xbf16>, vector<32x32xf32> -> vector<32x32xf32>
    %53 = vector.extract_strided_slice %12 {offsets = [5, 0], sizes = [1, 32], strides = [1, 1]} : vector<40x32xf32> to vector<1x32xf32>
    %54 = vector.broadcast %53 : vector<1x32xf32> to vector<32x32xf32>
    %55 = arith.addf %52, %54 : vector<32x32xf32>
    %56 = vector.extract_strided_slice %40 {offsets = [2, 0, 0], sizes = [1, 32, 32], strides = [1, 1, 1]} : vector<4x32x32xbf16> to vector<1x32x32xbf16>
    %57 = vector.shape_cast %56 : vector<1x32x32xbf16> to vector<32x32xbf16>
    %cst_28 = arith.constant dense<0.000000e+00> : vector<32x32xf32>
    %58 = tpu.matmul %41, %57, %cst_28 {dimension_numbers = #tpu.dot_dimension_numbers<[1], [0], [0], [1], [0, 0, 1, 1], [], []>} : vector<32x32xbf16>, vector<32x32xbf16>, vector<32x32xf32> -> vector<32x32xf32>
    %59 = vector.extract_strided_slice %12 {offsets = [6, 0], sizes = [1, 32], strides = [1, 1]} : vector<40x32xf32> to vector<1x32xf32>
    %60 = vector.broadcast %59 : vector<1x32xf32> to vector<32x32xf32>
    %61 = arith.addf %58, %60 : vector<32x32xf32>
    %62 = tpu.concatenate %49, %49, %49, %49, %49, %49, %49, %49 in 0 : vector<32x32xf32>, vector<32x32xf32>, vector<32x32xf32>, vector<32x32xf32>, vector<32x32xf32>, vector<32x32xf32>, vector<32x32xf32>, vector<32x32xf32> -> vector<256x32xf32>
    %63 = arith.mulf %62, %16 : vector<256x32xf32>
    %64 = arith.truncf %63 : vector<256x32xf32> to vector<256x32xbf16>
    %65 = tpu.transpose %55, [1, 0] : vector<32x32xf32> -> vector<32x32xf32>
    %66 = arith.truncf %65 : vector<32x32xf32> to vector<32x32xbf16>
    %cst_29 = arith.constant dense<0.000000e+00> : vector<256x32xf32>
    %67 = tpu.matmul %64, %66, %cst_29 {dimension_numbers = #tpu.dot_dimension_numbers<[1], [0], [0], [1], [0, 0, 1, 1], [], []>} : vector<256x32xbf16>, vector<32x32xbf16>, vector<256x32xf32> -> vector<256x32xf32>
    %68 = arith.addf %67, %14 : vector<256x32xf32>
    %cst_30 = arith.constant dense<0xFF800000> : vector<256xf32>
    %69 = vector.multi_reduction <maximumf>, %68, %cst_30 [1] : vector<256x32xf32> to vector<256xf32>
    %70 = vector.shape_cast %69 : vector<256xf32> to vector<256x1xf32>
    %71 = vector.broadcast %70 : vector<256x1xf32> to vector<256x32xf32>
    %72 = arith.subf %68, %71 : vector<256x32xf32>
    %73 = math.exp %72 : vector<256x32xf32>
    %cst_31 = arith.constant dense<0.000000e+00> : vector<256xf32>
    %74 = vector.multi_reduction <add>, %73, %cst_31 [1] : vector<256x32xf32> to vector<256xf32>
    %75 = vector.shape_cast %74 : vector<256xf32> to vector<256x1xf32>
    %76 = tpu.reciprocal %75 {approx = true} : vector<256x1xf32> -> vector<256x1xf32>
    %77 = vector.broadcast %76 : vector<256x1xf32> to vector<256x32xf32>
    %78 = arith.mulf %73, %77 : vector<256x32xf32>
    %79 = arith.truncf %78 : vector<256x32xf32> to vector<256x32xbf16>
    %80 = arith.truncf %61 : vector<32x32xf32> to vector<32x32xbf16>
    %cst_32 = arith.constant dense<0.000000e+00> : vector<256x32xf32>
    %81 = tpu.matmul %79, %80, %cst_32 {dimension_numbers = #tpu.dot_dimension_numbers<[1], [0], [0], [1], [0, 0, 1, 1], [], []>} : vector<256x32xbf16>, vector<32x32xbf16>, vector<256x32xf32> -> vector<256x32xf32>
    %82 = arith.mulf %81, %16 : vector<256x32xf32>
    %83 = vector.extract_strided_slice %82 {offsets = [0, 0], sizes = [32, 32], strides = [1, 1]} : vector<256x32xf32> to vector<32x32xf32>
    %84 = vector.extract_strided_slice %82 {offsets = [32, 0], sizes = [32, 32], strides = [1, 1]} : vector<256x32xf32> to vector<32x32xf32>
    %85 = arith.addf %83, %84 : vector<32x32xf32>
    %86 = vector.extract_strided_slice %82 {offsets = [64, 0], sizes = [32, 32], strides = [1, 1]} : vector<256x32xf32> to vector<32x32xf32>
    %87 = arith.addf %85, %86 : vector<32x32xf32>
    %88 = vector.extract_strided_slice %82 {offsets = [96, 0], sizes = [32, 32], strides = [1, 1]} : vector<256x32xf32> to vector<32x32xf32>
    %89 = arith.addf %87, %88 : vector<32x32xf32>
    %90 = vector.extract_strided_slice %82 {offsets = [128, 0], sizes = [32, 32], strides = [1, 1]} : vector<256x32xf32> to vector<32x32xf32>
    %91 = arith.addf %89, %90 : vector<32x32xf32>
    %92 = vector.extract_strided_slice %82 {offsets = [160, 0], sizes = [32, 32], strides = [1, 1]} : vector<256x32xf32> to vector<32x32xf32>
    %93 = arith.addf %91, %92 : vector<32x32xf32>
    %94 = vector.extract_strided_slice %82 {offsets = [192, 0], sizes = [32, 32], strides = [1, 1]} : vector<256x32xf32> to vector<32x32xf32>
    %95 = arith.addf %93, %94 : vector<32x32xf32>
    %96 = vector.extract_strided_slice %82 {offsets = [224, 0], sizes = [32, 32], strides = [1, 1]} : vector<256x32xf32> to vector<32x32xf32>
    %97 = arith.addf %95, %96 : vector<32x32xf32>
    %98 = arith.truncf %97 : vector<32x32xf32> to vector<32x32xbf16>
    %99 = vector.extract_strided_slice %40 {offsets = [3, 0, 0], sizes = [1, 32, 32], strides = [1, 1, 1]} : vector<4x32x32xbf16> to vector<1x32x32xbf16>
    %100 = vector.shape_cast %99 : vector<1x32x32xbf16> to vector<32x32xbf16>
    %cst_33 = arith.constant dense<0.000000e+00> : vector<32x32xf32>
    %101 = tpu.matmul %98, %100, %cst_33 {dimension_numbers = #tpu.dot_dimension_numbers<[1], [0], [0], [1], [0, 0, 1, 1], [], []>} : vector<32x32xbf16>, vector<32x32xbf16>, vector<32x32xf32> -> vector<32x32xf32>
    %102 = vector.extract_strided_slice %12 {offsets = [7, 0], sizes = [1, 32], strides = [1, 1]} : vector<40x32xf32> to vector<1x32xf32>
    %103 = vector.broadcast %102 : vector<1x32xf32> to vector<32x32xf32>
    %104 = arith.addf %101, %103 : vector<32x32xf32>
    %105 = arith.addf %38, %104 : vector<32x32xf32>
    %106 = vector.extract_strided_slice %12 {offsets = [8, 0], sizes = [1, 32], strides = [1, 1]} : vector<40x32xf32> to vector<1x32xf32>
    %107 = vector.extract_strided_slice %12 {offsets = [9, 0], sizes = [1, 32], strides = [1, 1]} : vector<40x32xf32> to vector<1x32xf32>
    %cst_34 = arith.constant dense<0.000000e+00> : vector<32xf32>
    %108 = vector.multi_reduction <add>, %105, %cst_34 [1] : vector<32x32xf32> to vector<32xf32>
    %109 = vector.shape_cast %108 : vector<32xf32> to vector<32x1xf32>
    %cst_35 = arith.constant 3.200000e+01 : f32
    %110 = vector.broadcast %cst_35 : f32 to vector<32x1xf32>
    %111 = arith.divf %109, %110 : vector<32x1xf32>
    %112 = vector.broadcast %111 : vector<32x1xf32> to vector<32x32xf32>
    %113 = arith.subf %105, %112 : vector<32x32xf32>
    %114 = arith.mulf %113, %113 : vector<32x32xf32>
    %cst_36 = arith.constant dense<0.000000e+00> : vector<32xf32>
    %115 = vector.multi_reduction <add>, %114, %cst_36 [1] : vector<32x32xf32> to vector<32xf32>
    %116 = vector.shape_cast %115 : vector<32xf32> to vector<32x1xf32>
    %cst_37 = arith.constant 3.200000e+01 : f32
    %117 = vector.broadcast %cst_37 : f32 to vector<32x1xf32>
    %118 = arith.divf %116, %117 : vector<32x1xf32>
    %cst_38 = arith.constant 9.99999974E-6 : f32
    %119 = vector.broadcast %cst_38 : f32 to vector<32x1xf32>
    %120 = arith.addf %118, %119 : vector<32x1xf32>
    %121 = math.rsqrt %120 : vector<32x1xf32>
    %122 = vector.broadcast %121 : vector<32x1xf32> to vector<32x32xf32>
    %123 = arith.mulf %113, %122 : vector<32x32xf32>
    %124 = vector.broadcast %106 : vector<1x32xf32> to vector<32x32xf32>
    %125 = arith.mulf %123, %124 : vector<32x32xf32>
    %126 = vector.broadcast %107 : vector<1x32xf32> to vector<32x32xf32>
    %127 = arith.addf %125, %126 : vector<32x32xf32>
    %128 = arith.truncf %127 : vector<32x32xf32> to vector<32x32xbf16>
    %c0_39 = arith.constant 0 : index
    %c0_40 = arith.constant 0 : index
    %c0_41 = arith.constant 0 : index
    %129 = vector.load %arg6[%c0_39, %c0_40, %c0_41] : memref<4x32x128xbf16, #tpu.memory_space<vmem>>, vector<1x32x128xbf16>
    %130 = vector.shape_cast %129 : vector<1x32x128xbf16> to vector<32x128xbf16>
    %cst_42 = arith.constant dense<0.000000e+00> : vector<32x128xf32>
    %131 = tpu.matmul %128, %130, %cst_42 {dimension_numbers = #tpu.dot_dimension_numbers<[1], [0], [0], [1], [0, 0, 1, 1], [], []>} : vector<32x32xbf16>, vector<32x128xbf16>, vector<32x128xf32> -> vector<32x128xf32>
    %c0_43 = arith.constant 0 : index
    %c0_44 = arith.constant 0 : index
    %c0_45 = arith.constant 0 : index
    %132 = vector.load %arg4[%c0_43, %c0_44, %c0_45] : memref<4x1x128xf32, #tpu.memory_space<vmem>>, vector<1x1x128xf32>
    %133 = vector.shape_cast %132 : vector<1x1x128xf32> to vector<1x128xf32>
    %134 = vector.broadcast %133 : vector<1x128xf32> to vector<32x128xf32>
    %135 = arith.addf %131, %134 : vector<32x128xf32>
    %cst_46 = arith.constant 0.000000e+00 : f32
    %136 = vector.broadcast %cst_46 : f32 to vector<32x128xf32>
    %137 = arith.maximumf %135, %136 : vector<32x128xf32>
    %138 = arith.truncf %137 : vector<32x128xf32> to vector<32x128xbf16>
    %c0_47 = arith.constant 0 : index
    %c0_48 = arith.constant 0 : index
    %c0_49 = arith.constant 0 : index
    %139 = vector.load %arg7[%c0_47, %c0_48, %c0_49] : memref<4x128x32xbf16, #tpu.memory_space<vmem>>, vector<1x128x32xbf16>
    %140 = vector.shape_cast %139 : vector<1x128x32xbf16> to vector<128x32xbf16>
    %cst_50 = arith.constant dense<0.000000e+00> : vector<32x32xf32>
    %141 = tpu.matmul %138, %140, %cst_50 {dimension_numbers = #tpu.dot_dimension_numbers<[1], [0], [0], [1], [0, 0, 1, 1], [], []>} : vector<32x128xbf16>, vector<128x32xbf16>, vector<32x32xf32> -> vector<32x32xf32>
    %142 = vector.extract_strided_slice %12 {offsets = [12, 0], sizes = [1, 32], strides = [1, 1]} : vector<40x32xf32> to vector<1x32xf32>
    %143 = vector.broadcast %142 : vector<1x32xf32> to vector<32x32xf32>
    %144 = arith.addf %141, %143 : vector<32x32xf32>
    %145 = arith.addf %127, %144 : vector<32x32xf32>
    %146 = vector.extract_strided_slice %12 {offsets = [10, 0], sizes = [1, 32], strides = [1, 1]} : vector<40x32xf32> to vector<1x32xf32>
    %147 = vector.extract_strided_slice %12 {offsets = [11, 0], sizes = [1, 32], strides = [1, 1]} : vector<40x32xf32> to vector<1x32xf32>
    %cst_51 = arith.constant dense<0.000000e+00> : vector<32xf32>
    %148 = vector.multi_reduction <add>, %145, %cst_51 [1] : vector<32x32xf32> to vector<32xf32>
    %149 = vector.shape_cast %148 : vector<32xf32> to vector<32x1xf32>
    %cst_52 = arith.constant 3.200000e+01 : f32
    %150 = vector.broadcast %cst_52 : f32 to vector<32x1xf32>
    %151 = arith.divf %149, %150 : vector<32x1xf32>
    %152 = vector.broadcast %151 : vector<32x1xf32> to vector<32x32xf32>
    %153 = arith.subf %145, %152 : vector<32x32xf32>
    %154 = arith.mulf %153, %153 : vector<32x32xf32>
    %cst_53 = arith.constant dense<0.000000e+00> : vector<32xf32>
    %155 = vector.multi_reduction <add>, %154, %cst_53 [1] : vector<32x32xf32> to vector<32xf32>
    %156 = vector.shape_cast %155 : vector<32xf32> to vector<32x1xf32>
    %cst_54 = arith.constant 3.200000e+01 : f32
    %157 = vector.broadcast %cst_54 : f32 to vector<32x1xf32>
    %158 = arith.divf %156, %157 : vector<32x1xf32>
    %cst_55 = arith.constant 9.99999974E-6 : f32
    %159 = vector.broadcast %cst_55 : f32 to vector<32x1xf32>
    %160 = arith.addf %158, %159 : vector<32x1xf32>
    %161 = math.rsqrt %160 : vector<32x1xf32>
    %162 = vector.broadcast %161 : vector<32x1xf32> to vector<32x32xf32>
    %163 = arith.mulf %153, %162 : vector<32x32xf32>
    %164 = vector.broadcast %146 : vector<1x32xf32> to vector<32x32xf32>
    %165 = arith.mulf %163, %164 : vector<32x32xf32>
    %166 = vector.broadcast %147 : vector<1x32xf32> to vector<32x32xf32>
    %167 = arith.addf %165, %166 : vector<32x32xf32>
    %c1_56 = arith.constant 1 : index
    %c0_57 = arith.constant 0 : index
    %c0_58 = arith.constant 0 : index
    %c0_59 = arith.constant 0 : index
    %168 = vector.load %arg5[%c1_56, %c0_57, %c0_58, %c0_59] : memref<4x4x32x32xbf16, #tpu.memory_space<vmem>>, vector<1x4x32x32xbf16>
    %169 = vector.shape_cast %168 : vector<1x4x32x32xbf16> to vector<4x32x32xbf16>
    %170 = arith.truncf %167 : vector<32x32xf32> to vector<32x32xbf16>
    %171 = vector.extract_strided_slice %169 {offsets = [0, 0, 0], sizes = [1, 32, 32], strides = [1, 1, 1]} : vector<4x32x32xbf16> to vector<1x32x32xbf16>
    %172 = vector.shape_cast %171 : vector<1x32x32xbf16> to vector<32x32xbf16>
    %cst_60 = arith.constant dense<0.000000e+00> : vector<32x32xf32>
    %173 = tpu.matmul %170, %172, %cst_60 {dimension_numbers = #tpu.dot_dimension_numbers<[1], [0], [0], [1], [0, 0, 1, 1], [], []>} : vector<32x32xbf16>, vector<32x32xbf16>, vector<32x32xf32> -> vector<32x32xf32>
    %174 = vector.extract_strided_slice %12 {offsets = [13, 0], sizes = [1, 32], strides = [1, 1]} : vector<40x32xf32> to vector<1x32xf32>
    %175 = vector.broadcast %174 : vector<1x32xf32> to vector<32x32xf32>
    %176 = arith.addf %173, %175 : vector<32x32xf32>
    %cst_61 = arith.constant 5.000000e-01 : f32
    %177 = vector.broadcast %cst_61 : f32 to vector<32x32xf32>
    %178 = arith.mulf %176, %177 : vector<32x32xf32>
    %179 = vector.extract_strided_slice %169 {offsets = [1, 0, 0], sizes = [1, 32, 32], strides = [1, 1, 1]} : vector<4x32x32xbf16> to vector<1x32x32xbf16>
    %180 = vector.shape_cast %179 : vector<1x32x32xbf16> to vector<32x32xbf16>
    %cst_62 = arith.constant dense<0.000000e+00> : vector<32x32xf32>
    %181 = tpu.matmul %170, %180, %cst_62 {dimension_numbers = #tpu.dot_dimension_numbers<[1], [0], [0], [1], [0, 0, 1, 1], [], []>} : vector<32x32xbf16>, vector<32x32xbf16>, vector<32x32xf32> -> vector<32x32xf32>
    %182 = vector.extract_strided_slice %12 {offsets = [14, 0], sizes = [1, 32], strides = [1, 1]} : vector<40x32xf32> to vector<1x32xf32>
    %183 = vector.broadcast %182 : vector<1x32xf32> to vector<32x32xf32>
    %184 = arith.addf %181, %183 : vector<32x32xf32>
    %185 = vector.extract_strided_slice %169 {offsets = [2, 0, 0], sizes = [1, 32, 32], strides = [1, 1, 1]} : vector<4x32x32xbf16> to vector<1x32x32xbf16>
    %186 = vector.shape_cast %185 : vector<1x32x32xbf16> to vector<32x32xbf16>
    %cst_63 = arith.constant dense<0.000000e+00> : vector<32x32xf32>
    %187 = tpu.matmul %170, %186, %cst_63 {dimension_numbers = #tpu.dot_dimension_numbers<[1], [0], [0], [1], [0, 0, 1, 1], [], []>} : vector<32x32xbf16>, vector<32x32xbf16>, vector<32x32xf32> -> vector<32x32xf32>
    %188 = vector.extract_strided_slice %12 {offsets = [15, 0], sizes = [1, 32], strides = [1, 1]} : vector<40x32xf32> to vector<1x32xf32>
    %189 = vector.broadcast %188 : vector<1x32xf32> to vector<32x32xf32>
    %190 = arith.addf %187, %189 : vector<32x32xf32>
    %191 = tpu.concatenate %178, %178, %178, %178, %178, %178, %178, %178 in 0 : vector<32x32xf32>, vector<32x32xf32>, vector<32x32xf32>, vector<32x32xf32>, vector<32x32xf32>, vector<32x32xf32>, vector<32x32xf32>, vector<32x32xf32> -> vector<256x32xf32>
    %192 = arith.mulf %191, %16 : vector<256x32xf32>
    %193 = arith.truncf %192 : vector<256x32xf32> to vector<256x32xbf16>
    %194 = tpu.transpose %184, [1, 0] : vector<32x32xf32> -> vector<32x32xf32>
    %195 = arith.truncf %194 : vector<32x32xf32> to vector<32x32xbf16>
    %cst_64 = arith.constant dense<0.000000e+00> : vector<256x32xf32>
    %196 = tpu.matmul %193, %195, %cst_64 {dimension_numbers = #tpu.dot_dimension_numbers<[1], [0], [0], [1], [0, 0, 1, 1], [], []>} : vector<256x32xbf16>, vector<32x32xbf16>, vector<256x32xf32> -> vector<256x32xf32>
    %197 = arith.addf %196, %14 : vector<256x32xf32>
    %cst_65 = arith.constant dense<0xFF800000> : vector<256xf32>
    %198 = vector.multi_reduction <maximumf>, %197, %cst_65 [1] : vector<256x32xf32> to vector<256xf32>
    %199 = vector.shape_cast %198 : vector<256xf32> to vector<256x1xf32>
    %200 = vector.broadcast %199 : vector<256x1xf32> to vector<256x32xf32>
    %201 = arith.subf %197, %200 : vector<256x32xf32>
    %202 = math.exp %201 : vector<256x32xf32>
    %cst_66 = arith.constant dense<0.000000e+00> : vector<256xf32>
    %203 = vector.multi_reduction <add>, %202, %cst_66 [1] : vector<256x32xf32> to vector<256xf32>
    %204 = vector.shape_cast %203 : vector<256xf32> to vector<256x1xf32>
    %205 = tpu.reciprocal %204 {approx = true} : vector<256x1xf32> -> vector<256x1xf32>
    %206 = vector.broadcast %205 : vector<256x1xf32> to vector<256x32xf32>
    %207 = arith.mulf %202, %206 : vector<256x32xf32>
    %208 = arith.truncf %207 : vector<256x32xf32> to vector<256x32xbf16>
    %209 = arith.truncf %190 : vector<32x32xf32> to vector<32x32xbf16>
    %cst_67 = arith.constant dense<0.000000e+00> : vector<256x32xf32>
    %210 = tpu.matmul %208, %209, %cst_67 {dimension_numbers = #tpu.dot_dimension_numbers<[1], [0], [0], [1], [0, 0, 1, 1], [], []>} : vector<256x32xbf16>, vector<32x32xbf16>, vector<256x32xf32> -> vector<256x32xf32>
    %211 = arith.mulf %210, %16 : vector<256x32xf32>
    %212 = vector.extract_strided_slice %211 {offsets = [0, 0], sizes = [32, 32], strides = [1, 1]} : vector<256x32xf32> to vector<32x32xf32>
    %213 = vector.extract_strided_slice %211 {offsets = [32, 0], sizes = [32, 32], strides = [1, 1]} : vector<256x32xf32> to vector<32x32xf32>
    %214 = arith.addf %212, %213 : vector<32x32xf32>
    %215 = vector.extract_strided_slice %211 {offsets = [64, 0], sizes = [32, 32], strides = [1, 1]} : vector<256x32xf32> to vector<32x32xf32>
    %216 = arith.addf %214, %215 : vector<32x32xf32>
    %217 = vector.extract_strided_slice %211 {offsets = [96, 0], sizes = [32, 32], strides = [1, 1]} : vector<256x32xf32> to vector<32x32xf32>
    %218 = arith.addf %216, %217 : vector<32x32xf32>
    %219 = vector.extract_strided_slice %211 {offsets = [128, 0], sizes = [32, 32], strides = [1, 1]} : vector<256x32xf32> to vector<32x32xf32>
    %220 = arith.addf %218, %219 : vector<32x32xf32>
    %221 = vector.extract_strided_slice %211 {offsets = [160, 0], sizes = [32, 32], strides = [1, 1]} : vector<256x32xf32> to vector<32x32xf32>
    %222 = arith.addf %220, %221 : vector<32x32xf32>
    %223 = vector.extract_strided_slice %211 {offsets = [192, 0], sizes = [32, 32], strides = [1, 1]} : vector<256x32xf32> to vector<32x32xf32>
    %224 = arith.addf %222, %223 : vector<32x32xf32>
    %225 = vector.extract_strided_slice %211 {offsets = [224, 0], sizes = [32, 32], strides = [1, 1]} : vector<256x32xf32> to vector<32x32xf32>
    %226 = arith.addf %224, %225 : vector<32x32xf32>
    %227 = arith.truncf %226 : vector<32x32xf32> to vector<32x32xbf16>
    %228 = vector.extract_strided_slice %169 {offsets = [3, 0, 0], sizes = [1, 32, 32], strides = [1, 1, 1]} : vector<4x32x32xbf16> to vector<1x32x32xbf16>
    %229 = vector.shape_cast %228 : vector<1x32x32xbf16> to vector<32x32xbf16>
    %cst_68 = arith.constant dense<0.000000e+00> : vector<32x32xf32>
    %230 = tpu.matmul %227, %229, %cst_68 {dimension_numbers = #tpu.dot_dimension_numbers<[1], [0], [0], [1], [0, 0, 1, 1], [], []>} : vector<32x32xbf16>, vector<32x32xbf16>, vector<32x32xf32> -> vector<32x32xf32>
    %231 = vector.extract_strided_slice %12 {offsets = [16, 0], sizes = [1, 32], strides = [1, 1]} : vector<40x32xf32> to vector<1x32xf32>
    %232 = vector.broadcast %231 : vector<1x32xf32> to vector<32x32xf32>
    %233 = arith.addf %230, %232 : vector<32x32xf32>
    %234 = arith.addf %167, %233 : vector<32x32xf32>
    %235 = vector.extract_strided_slice %12 {offsets = [17, 0], sizes = [1, 32], strides = [1, 1]} : vector<40x32xf32> to vector<1x32xf32>
    %236 = vector.extract_strided_slice %12 {offsets = [18, 0], sizes = [1, 32], strides = [1, 1]} : vector<40x32xf32> to vector<1x32xf32>
    %cst_69 = arith.constant dense<0.000000e+00> : vector<32xf32>
    %237 = vector.multi_reduction <add>, %234, %cst_69 [1] : vector<32x32xf32> to vector<32xf32>
    %238 = vector.shape_cast %237 : vector<32xf32> to vector<32x1xf32>
    %cst_70 = arith.constant 3.200000e+01 : f32
    %239 = vector.broadcast %cst_70 : f32 to vector<32x1xf32>
    %240 = arith.divf %238, %239 : vector<32x1xf32>
    %241 = vector.broadcast %240 : vector<32x1xf32> to vector<32x32xf32>
    %242 = arith.subf %234, %241 : vector<32x32xf32>
    %243 = arith.mulf %242, %242 : vector<32x32xf32>
    %cst_71 = arith.constant dense<0.000000e+00> : vector<32xf32>
    %244 = vector.multi_reduction <add>, %243, %cst_71 [1] : vector<32x32xf32> to vector<32xf32>
    %245 = vector.shape_cast %244 : vector<32xf32> to vector<32x1xf32>
    %cst_72 = arith.constant 3.200000e+01 : f32
    %246 = vector.broadcast %cst_72 : f32 to vector<32x1xf32>
    %247 = arith.divf %245, %246 : vector<32x1xf32>
    %cst_73 = arith.constant 9.99999974E-6 : f32
    %248 = vector.broadcast %cst_73 : f32 to vector<32x1xf32>
    %249 = arith.addf %247, %248 : vector<32x1xf32>
    %250 = math.rsqrt %249 : vector<32x1xf32>
    %251 = vector.broadcast %250 : vector<32x1xf32> to vector<32x32xf32>
    %252 = arith.mulf %242, %251 : vector<32x32xf32>
    %253 = vector.broadcast %235 : vector<1x32xf32> to vector<32x32xf32>
    %254 = arith.mulf %252, %253 : vector<32x32xf32>
    %255 = vector.broadcast %236 : vector<1x32xf32> to vector<32x32xf32>
    %256 = arith.addf %254, %255 : vector<32x32xf32>
    %257 = arith.truncf %256 : vector<32x32xf32> to vector<32x32xbf16>
    %c1_74 = arith.constant 1 : index
    %c0_75 = arith.constant 0 : index
    %c0_76 = arith.constant 0 : index
    %258 = vector.load %arg6[%c1_74, %c0_75, %c0_76] : memref<4x32x128xbf16, #tpu.memory_space<vmem>>, vector<1x32x128xbf16>
    %259 = vector.shape_cast %258 : vector<1x32x128xbf16> to vector<32x128xbf16>
    %cst_77 = arith.constant dense<0.000000e+00> : vector<32x128xf32>
    %260 = tpu.matmul %257, %259, %cst_77 {dimension_numbers = #tpu.dot_dimension_numbers<[1], [0], [0], [1], [0, 0, 1, 1], [], []>} : vector<32x32xbf16>, vector<32x128xbf16>, vector<32x128xf32> -> vector<32x128xf32>
    %c1_78 = arith.constant 1 : index
    %c0_79 = arith.constant 0 : index
    %c0_80 = arith.constant 0 : index
    %261 = vector.load %arg4[%c1_78, %c0_79, %c0_80] : memref<4x1x128xf32, #tpu.memory_space<vmem>>, vector<1x1x128xf32>
    %262 = vector.shape_cast %261 : vector<1x1x128xf32> to vector<1x128xf32>
    %263 = vector.broadcast %262 : vector<1x128xf32> to vector<32x128xf32>
    %264 = arith.addf %260, %263 : vector<32x128xf32>
    %cst_81 = arith.constant 0.000000e+00 : f32
    %265 = vector.broadcast %cst_81 : f32 to vector<32x128xf32>
    %266 = arith.maximumf %264, %265 : vector<32x128xf32>
    %267 = arith.truncf %266 : vector<32x128xf32> to vector<32x128xbf16>
    %c1_82 = arith.constant 1 : index
    %c0_83 = arith.constant 0 : index
    %c0_84 = arith.constant 0 : index
    %268 = vector.load %arg7[%c1_82, %c0_83, %c0_84] : memref<4x128x32xbf16, #tpu.memory_space<vmem>>, vector<1x128x32xbf16>
    %269 = vector.shape_cast %268 : vector<1x128x32xbf16> to vector<128x32xbf16>
    %cst_85 = arith.constant dense<0.000000e+00> : vector<32x32xf32>
    %270 = tpu.matmul %267, %269, %cst_85 {dimension_numbers = #tpu.dot_dimension_numbers<[1], [0], [0], [1], [0, 0, 1, 1], [], []>} : vector<32x128xbf16>, vector<128x32xbf16>, vector<32x32xf32> -> vector<32x32xf32>
    %271 = vector.extract_strided_slice %12 {offsets = [21, 0], sizes = [1, 32], strides = [1, 1]} : vector<40x32xf32> to vector<1x32xf32>
    %272 = vector.broadcast %271 : vector<1x32xf32> to vector<32x32xf32>
    %273 = arith.addf %270, %272 : vector<32x32xf32>
    %274 = arith.addf %256, %273 : vector<32x32xf32>
    %275 = vector.extract_strided_slice %12 {offsets = [19, 0], sizes = [1, 32], strides = [1, 1]} : vector<40x32xf32> to vector<1x32xf32>
    %276 = vector.extract_strided_slice %12 {offsets = [20, 0], sizes = [1, 32], strides = [1, 1]} : vector<40x32xf32> to vector<1x32xf32>
    %cst_86 = arith.constant dense<0.000000e+00> : vector<32xf32>
    %277 = vector.multi_reduction <add>, %274, %cst_86 [1] : vector<32x32xf32> to vector<32xf32>
    %278 = vector.shape_cast %277 : vector<32xf32> to vector<32x1xf32>
    %cst_87 = arith.constant 3.200000e+01 : f32
    %279 = vector.broadcast %cst_87 : f32 to vector<32x1xf32>
    %280 = arith.divf %278, %279 : vector<32x1xf32>
    %281 = vector.broadcast %280 : vector<32x1xf32> to vector<32x32xf32>
    %282 = arith.subf %274, %281 : vector<32x32xf32>
    %283 = arith.mulf %282, %282 : vector<32x32xf32>
    %cst_88 = arith.constant dense<0.000000e+00> : vector<32xf32>
    %284 = vector.multi_reduction <add>, %283, %cst_88 [1] : vector<32x32xf32> to vector<32xf32>
    %285 = vector.shape_cast %284 : vector<32xf32> to vector<32x1xf32>
    %cst_89 = arith.constant 3.200000e+01 : f32
    %286 = vector.broadcast %cst_89 : f32 to vector<32x1xf32>
    %287 = arith.divf %285, %286 : vector<32x1xf32>
    %cst_90 = arith.constant 9.99999974E-6 : f32
    %288 = vector.broadcast %cst_90 : f32 to vector<32x1xf32>
    %289 = arith.addf %287, %288 : vector<32x1xf32>
    %290 = math.rsqrt %289 : vector<32x1xf32>
    %291 = vector.broadcast %290 : vector<32x1xf32> to vector<32x32xf32>
    %292 = arith.mulf %282, %291 : vector<32x32xf32>
    %293 = vector.broadcast %275 : vector<1x32xf32> to vector<32x32xf32>
    %294 = arith.mulf %292, %293 : vector<32x32xf32>
    %295 = vector.broadcast %276 : vector<1x32xf32> to vector<32x32xf32>
    %296 = arith.addf %294, %295 : vector<32x32xf32>
    %c2_91 = arith.constant 2 : index
    %c0_92 = arith.constant 0 : index
    %c0_93 = arith.constant 0 : index
    %c0_94 = arith.constant 0 : index
    %297 = vector.load %arg5[%c2_91, %c0_92, %c0_93, %c0_94] : memref<4x4x32x32xbf16, #tpu.memory_space<vmem>>, vector<1x4x32x32xbf16>
    %298 = vector.shape_cast %297 : vector<1x4x32x32xbf16> to vector<4x32x32xbf16>
    %299 = arith.truncf %296 : vector<32x32xf32> to vector<32x32xbf16>
    %300 = vector.extract_strided_slice %298 {offsets = [0, 0, 0], sizes = [1, 32, 32], strides = [1, 1, 1]} : vector<4x32x32xbf16> to vector<1x32x32xbf16>
    %301 = vector.shape_cast %300 : vector<1x32x32xbf16> to vector<32x32xbf16>
    %cst_95 = arith.constant dense<0.000000e+00> : vector<32x32xf32>
    %302 = tpu.matmul %299, %301, %cst_95 {dimension_numbers = #tpu.dot_dimension_numbers<[1], [0], [0], [1], [0, 0, 1, 1], [], []>} : vector<32x32xbf16>, vector<32x32xbf16>, vector<32x32xf32> -> vector<32x32xf32>
    %303 = vector.extract_strided_slice %12 {offsets = [22, 0], sizes = [1, 32], strides = [1, 1]} : vector<40x32xf32> to vector<1x32xf32>
    %304 = vector.broadcast %303 : vector<1x32xf32> to vector<32x32xf32>
    %305 = arith.addf %302, %304 : vector<32x32xf32>
    %cst_96 = arith.constant 5.000000e-01 : f32
    %306 = vector.broadcast %cst_96 : f32 to vector<32x32xf32>
    %307 = arith.mulf %305, %306 : vector<32x32xf32>
    %308 = vector.extract_strided_slice %298 {offsets = [1, 0, 0], sizes = [1, 32, 32], strides = [1, 1, 1]} : vector<4x32x32xbf16> to vector<1x32x32xbf16>
    %309 = vector.shape_cast %308 : vector<1x32x32xbf16> to vector<32x32xbf16>
    %cst_97 = arith.constant dense<0.000000e+00> : vector<32x32xf32>
    %310 = tpu.matmul %299, %309, %cst_97 {dimension_numbers = #tpu.dot_dimension_numbers<[1], [0], [0], [1], [0, 0, 1, 1], [], []>} : vector<32x32xbf16>, vector<32x32xbf16>, vector<32x32xf32> -> vector<32x32xf32>
    %311 = vector.extract_strided_slice %12 {offsets = [23, 0], sizes = [1, 32], strides = [1, 1]} : vector<40x32xf32> to vector<1x32xf32>
    %312 = vector.broadcast %311 : vector<1x32xf32> to vector<32x32xf32>
    %313 = arith.addf %310, %312 : vector<32x32xf32>
    %314 = vector.extract_strided_slice %298 {offsets = [2, 0, 0], sizes = [1, 32, 32], strides = [1, 1, 1]} : vector<4x32x32xbf16> to vector<1x32x32xbf16>
    %315 = vector.shape_cast %314 : vector<1x32x32xbf16> to vector<32x32xbf16>
    %cst_98 = arith.constant dense<0.000000e+00> : vector<32x32xf32>
    %316 = tpu.matmul %299, %315, %cst_98 {dimension_numbers = #tpu.dot_dimension_numbers<[1], [0], [0], [1], [0, 0, 1, 1], [], []>} : vector<32x32xbf16>, vector<32x32xbf16>, vector<32x32xf32> -> vector<32x32xf32>
    %317 = vector.extract_strided_slice %12 {offsets = [24, 0], sizes = [1, 32], strides = [1, 1]} : vector<40x32xf32> to vector<1x32xf32>
    %318 = vector.broadcast %317 : vector<1x32xf32> to vector<32x32xf32>
    %319 = arith.addf %316, %318 : vector<32x32xf32>
    %320 = tpu.concatenate %307, %307, %307, %307, %307, %307, %307, %307 in 0 : vector<32x32xf32>, vector<32x32xf32>, vector<32x32xf32>, vector<32x32xf32>, vector<32x32xf32>, vector<32x32xf32>, vector<32x32xf32>, vector<32x32xf32> -> vector<256x32xf32>
    %321 = arith.mulf %320, %16 : vector<256x32xf32>
    %322 = arith.truncf %321 : vector<256x32xf32> to vector<256x32xbf16>
    %323 = tpu.transpose %313, [1, 0] : vector<32x32xf32> -> vector<32x32xf32>
    %324 = arith.truncf %323 : vector<32x32xf32> to vector<32x32xbf16>
    %cst_99 = arith.constant dense<0.000000e+00> : vector<256x32xf32>
    %325 = tpu.matmul %322, %324, %cst_99 {dimension_numbers = #tpu.dot_dimension_numbers<[1], [0], [0], [1], [0, 0, 1, 1], [], []>} : vector<256x32xbf16>, vector<32x32xbf16>, vector<256x32xf32> -> vector<256x32xf32>
    %326 = arith.addf %325, %14 : vector<256x32xf32>
    %cst_100 = arith.constant dense<0xFF800000> : vector<256xf32>
    %327 = vector.multi_reduction <maximumf>, %326, %cst_100 [1] : vector<256x32xf32> to vector<256xf32>
    %328 = vector.shape_cast %327 : vector<256xf32> to vector<256x1xf32>
    %329 = vector.broadcast %328 : vector<256x1xf32> to vector<256x32xf32>
    %330 = arith.subf %326, %329 : vector<256x32xf32>
    %331 = math.exp %330 : vector<256x32xf32>
    %cst_101 = arith.constant dense<0.000000e+00> : vector<256xf32>
    %332 = vector.multi_reduction <add>, %331, %cst_101 [1] : vector<256x32xf32> to vector<256xf32>
    %333 = vector.shape_cast %332 : vector<256xf32> to vector<256x1xf32>
    %334 = tpu.reciprocal %333 {approx = true} : vector<256x1xf32> -> vector<256x1xf32>
    %335 = vector.broadcast %334 : vector<256x1xf32> to vector<256x32xf32>
    %336 = arith.mulf %331, %335 : vector<256x32xf32>
    %337 = arith.truncf %336 : vector<256x32xf32> to vector<256x32xbf16>
    %338 = arith.truncf %319 : vector<32x32xf32> to vector<32x32xbf16>
    %cst_102 = arith.constant dense<0.000000e+00> : vector<256x32xf32>
    %339 = tpu.matmul %337, %338, %cst_102 {dimension_numbers = #tpu.dot_dimension_numbers<[1], [0], [0], [1], [0, 0, 1, 1], [], []>} : vector<256x32xbf16>, vector<32x32xbf16>, vector<256x32xf32> -> vector<256x32xf32>
    %340 = arith.mulf %339, %16 : vector<256x32xf32>
    %341 = vector.extract_strided_slice %340 {offsets = [0, 0], sizes = [32, 32], strides = [1, 1]} : vector<256x32xf32> to vector<32x32xf32>
    %342 = vector.extract_strided_slice %340 {offsets = [32, 0], sizes = [32, 32], strides = [1, 1]} : vector<256x32xf32> to vector<32x32xf32>
    %343 = arith.addf %341, %342 : vector<32x32xf32>
    %344 = vector.extract_strided_slice %340 {offsets = [64, 0], sizes = [32, 32], strides = [1, 1]} : vector<256x32xf32> to vector<32x32xf32>
    %345 = arith.addf %343, %344 : vector<32x32xf32>
    %346 = vector.extract_strided_slice %340 {offsets = [96, 0], sizes = [32, 32], strides = [1, 1]} : vector<256x32xf32> to vector<32x32xf32>
    %347 = arith.addf %345, %346 : vector<32x32xf32>
    %348 = vector.extract_strided_slice %340 {offsets = [128, 0], sizes = [32, 32], strides = [1, 1]} : vector<256x32xf32> to vector<32x32xf32>
    %349 = arith.addf %347, %348 : vector<32x32xf32>
    %350 = vector.extract_strided_slice %340 {offsets = [160, 0], sizes = [32, 32], strides = [1, 1]} : vector<256x32xf32> to vector<32x32xf32>
    %351 = arith.addf %349, %350 : vector<32x32xf32>
    %352 = vector.extract_strided_slice %340 {offsets = [192, 0], sizes = [32, 32], strides = [1, 1]} : vector<256x32xf32> to vector<32x32xf32>
    %353 = arith.addf %351, %352 : vector<32x32xf32>
    %354 = vector.extract_strided_slice %340 {offsets = [224, 0], sizes = [32, 32], strides = [1, 1]} : vector<256x32xf32> to vector<32x32xf32>
    %355 = arith.addf %353, %354 : vector<32x32xf32>
    %356 = arith.truncf %355 : vector<32x32xf32> to vector<32x32xbf16>
    %357 = vector.extract_strided_slice %298 {offsets = [3, 0, 0], sizes = [1, 32, 32], strides = [1, 1, 1]} : vector<4x32x32xbf16> to vector<1x32x32xbf16>
    %358 = vector.shape_cast %357 : vector<1x32x32xbf16> to vector<32x32xbf16>
    %cst_103 = arith.constant dense<0.000000e+00> : vector<32x32xf32>
    %359 = tpu.matmul %356, %358, %cst_103 {dimension_numbers = #tpu.dot_dimension_numbers<[1], [0], [0], [1], [0, 0, 1, 1], [], []>} : vector<32x32xbf16>, vector<32x32xbf16>, vector<32x32xf32> -> vector<32x32xf32>
    %360 = vector.extract_strided_slice %12 {offsets = [25, 0], sizes = [1, 32], strides = [1, 1]} : vector<40x32xf32> to vector<1x32xf32>
    %361 = vector.broadcast %360 : vector<1x32xf32> to vector<32x32xf32>
    %362 = arith.addf %359, %361 : vector<32x32xf32>
    %363 = arith.addf %296, %362 : vector<32x32xf32>
    %364 = vector.extract_strided_slice %12 {offsets = [26, 0], sizes = [1, 32], strides = [1, 1]} : vector<40x32xf32> to vector<1x32xf32>
    %365 = vector.extract_strided_slice %12 {offsets = [27, 0], sizes = [1, 32], strides = [1, 1]} : vector<40x32xf32> to vector<1x32xf32>
    %cst_104 = arith.constant dense<0.000000e+00> : vector<32xf32>
    %366 = vector.multi_reduction <add>, %363, %cst_104 [1] : vector<32x32xf32> to vector<32xf32>
    %367 = vector.shape_cast %366 : vector<32xf32> to vector<32x1xf32>
    %cst_105 = arith.constant 3.200000e+01 : f32
    %368 = vector.broadcast %cst_105 : f32 to vector<32x1xf32>
    %369 = arith.divf %367, %368 : vector<32x1xf32>
    %370 = vector.broadcast %369 : vector<32x1xf32> to vector<32x32xf32>
    %371 = arith.subf %363, %370 : vector<32x32xf32>
    %372 = arith.mulf %371, %371 : vector<32x32xf32>
    %cst_106 = arith.constant dense<0.000000e+00> : vector<32xf32>
    %373 = vector.multi_reduction <add>, %372, %cst_106 [1] : vector<32x32xf32> to vector<32xf32>
    %374 = vector.shape_cast %373 : vector<32xf32> to vector<32x1xf32>
    %cst_107 = arith.constant 3.200000e+01 : f32
    %375 = vector.broadcast %cst_107 : f32 to vector<32x1xf32>
    %376 = arith.divf %374, %375 : vector<32x1xf32>
    %cst_108 = arith.constant 9.99999974E-6 : f32
    %377 = vector.broadcast %cst_108 : f32 to vector<32x1xf32>
    %378 = arith.addf %376, %377 : vector<32x1xf32>
    %379 = math.rsqrt %378 : vector<32x1xf32>
    %380 = vector.broadcast %379 : vector<32x1xf32> to vector<32x32xf32>
    %381 = arith.mulf %371, %380 : vector<32x32xf32>
    %382 = vector.broadcast %364 : vector<1x32xf32> to vector<32x32xf32>
    %383 = arith.mulf %381, %382 : vector<32x32xf32>
    %384 = vector.broadcast %365 : vector<1x32xf32> to vector<32x32xf32>
    %385 = arith.addf %383, %384 : vector<32x32xf32>
    %386 = arith.truncf %385 : vector<32x32xf32> to vector<32x32xbf16>
    %c2_109 = arith.constant 2 : index
    %c0_110 = arith.constant 0 : index
    %c0_111 = arith.constant 0 : index
    %387 = vector.load %arg6[%c2_109, %c0_110, %c0_111] : memref<4x32x128xbf16, #tpu.memory_space<vmem>>, vector<1x32x128xbf16>
    %388 = vector.shape_cast %387 : vector<1x32x128xbf16> to vector<32x128xbf16>
    %cst_112 = arith.constant dense<0.000000e+00> : vector<32x128xf32>
    %389 = tpu.matmul %386, %388, %cst_112 {dimension_numbers = #tpu.dot_dimension_numbers<[1], [0], [0], [1], [0, 0, 1, 1], [], []>} : vector<32x32xbf16>, vector<32x128xbf16>, vector<32x128xf32> -> vector<32x128xf32>
    %c2_113 = arith.constant 2 : index
    %c0_114 = arith.constant 0 : index
    %c0_115 = arith.constant 0 : index
    %390 = vector.load %arg4[%c2_113, %c0_114, %c0_115] : memref<4x1x128xf32, #tpu.memory_space<vmem>>, vector<1x1x128xf32>
    %391 = vector.shape_cast %390 : vector<1x1x128xf32> to vector<1x128xf32>
    %392 = vector.broadcast %391 : vector<1x128xf32> to vector<32x128xf32>
    %393 = arith.addf %389, %392 : vector<32x128xf32>
    %cst_116 = arith.constant 0.000000e+00 : f32
    %394 = vector.broadcast %cst_116 : f32 to vector<32x128xf32>
    %395 = arith.maximumf %393, %394 : vector<32x128xf32>
    %396 = arith.truncf %395 : vector<32x128xf32> to vector<32x128xbf16>
    %c2_117 = arith.constant 2 : index
    %c0_118 = arith.constant 0 : index
    %c0_119 = arith.constant 0 : index
    %397 = vector.load %arg7[%c2_117, %c0_118, %c0_119] : memref<4x128x32xbf16, #tpu.memory_space<vmem>>, vector<1x128x32xbf16>
    %398 = vector.shape_cast %397 : vector<1x128x32xbf16> to vector<128x32xbf16>
    %cst_120 = arith.constant dense<0.000000e+00> : vector<32x32xf32>
    %399 = tpu.matmul %396, %398, %cst_120 {dimension_numbers = #tpu.dot_dimension_numbers<[1], [0], [0], [1], [0, 0, 1, 1], [], []>} : vector<32x128xbf16>, vector<128x32xbf16>, vector<32x32xf32> -> vector<32x32xf32>
    %400 = vector.extract_strided_slice %12 {offsets = [30, 0], sizes = [1, 32], strides = [1, 1]} : vector<40x32xf32> to vector<1x32xf32>
    %401 = vector.broadcast %400 : vector<1x32xf32> to vector<32x32xf32>
    %402 = arith.addf %399, %401 : vector<32x32xf32>
    %403 = arith.addf %385, %402 : vector<32x32xf32>
    %404 = vector.extract_strided_slice %12 {offsets = [28, 0], sizes = [1, 32], strides = [1, 1]} : vector<40x32xf32> to vector<1x32xf32>
    %405 = vector.extract_strided_slice %12 {offsets = [29, 0], sizes = [1, 32], strides = [1, 1]} : vector<40x32xf32> to vector<1x32xf32>
    %cst_121 = arith.constant dense<0.000000e+00> : vector<32xf32>
    %406 = vector.multi_reduction <add>, %403, %cst_121 [1] : vector<32x32xf32> to vector<32xf32>
    %407 = vector.shape_cast %406 : vector<32xf32> to vector<32x1xf32>
    %cst_122 = arith.constant 3.200000e+01 : f32
    %408 = vector.broadcast %cst_122 : f32 to vector<32x1xf32>
    %409 = arith.divf %407, %408 : vector<32x1xf32>
    %410 = vector.broadcast %409 : vector<32x1xf32> to vector<32x32xf32>
    %411 = arith.subf %403, %410 : vector<32x32xf32>
    %412 = arith.mulf %411, %411 : vector<32x32xf32>
    %cst_123 = arith.constant dense<0.000000e+00> : vector<32xf32>
    %413 = vector.multi_reduction <add>, %412, %cst_123 [1] : vector<32x32xf32> to vector<32xf32>
    %414 = vector.shape_cast %413 : vector<32xf32> to vector<32x1xf32>
    %cst_124 = arith.constant 3.200000e+01 : f32
    %415 = vector.broadcast %cst_124 : f32 to vector<32x1xf32>
    %416 = arith.divf %414, %415 : vector<32x1xf32>
    %cst_125 = arith.constant 9.99999974E-6 : f32
    %417 = vector.broadcast %cst_125 : f32 to vector<32x1xf32>
    %418 = arith.addf %416, %417 : vector<32x1xf32>
    %419 = math.rsqrt %418 : vector<32x1xf32>
    %420 = vector.broadcast %419 : vector<32x1xf32> to vector<32x32xf32>
    %421 = arith.mulf %411, %420 : vector<32x32xf32>
    %422 = vector.broadcast %404 : vector<1x32xf32> to vector<32x32xf32>
    %423 = arith.mulf %421, %422 : vector<32x32xf32>
    %424 = vector.broadcast %405 : vector<1x32xf32> to vector<32x32xf32>
    %425 = arith.addf %423, %424 : vector<32x32xf32>
    %c3_126 = arith.constant 3 : index
    %c0_127 = arith.constant 0 : index
    %c0_128 = arith.constant 0 : index
    %c0_129 = arith.constant 0 : index
    %426 = vector.load %arg5[%c3_126, %c0_127, %c0_128, %c0_129] : memref<4x4x32x32xbf16, #tpu.memory_space<vmem>>, vector<1x4x32x32xbf16>
    %427 = vector.shape_cast %426 : vector<1x4x32x32xbf16> to vector<4x32x32xbf16>
    %428 = arith.truncf %425 : vector<32x32xf32> to vector<32x32xbf16>
    %429 = vector.extract_strided_slice %427 {offsets = [0, 0, 0], sizes = [1, 32, 32], strides = [1, 1, 1]} : vector<4x32x32xbf16> to vector<1x32x32xbf16>
    %430 = vector.shape_cast %429 : vector<1x32x32xbf16> to vector<32x32xbf16>
    %cst_130 = arith.constant dense<0.000000e+00> : vector<32x32xf32>
    %431 = tpu.matmul %428, %430, %cst_130 {dimension_numbers = #tpu.dot_dimension_numbers<[1], [0], [0], [1], [0, 0, 1, 1], [], []>} : vector<32x32xbf16>, vector<32x32xbf16>, vector<32x32xf32> -> vector<32x32xf32>
    %432 = vector.extract_strided_slice %12 {offsets = [31, 0], sizes = [1, 32], strides = [1, 1]} : vector<40x32xf32> to vector<1x32xf32>
    %433 = vector.broadcast %432 : vector<1x32xf32> to vector<32x32xf32>
    %434 = arith.addf %431, %433 : vector<32x32xf32>
    %cst_131 = arith.constant 5.000000e-01 : f32
    %435 = vector.broadcast %cst_131 : f32 to vector<32x32xf32>
    %436 = arith.mulf %434, %435 : vector<32x32xf32>
    %437 = vector.extract_strided_slice %427 {offsets = [1, 0, 0], sizes = [1, 32, 32], strides = [1, 1, 1]} : vector<4x32x32xbf16> to vector<1x32x32xbf16>
    %438 = vector.shape_cast %437 : vector<1x32x32xbf16> to vector<32x32xbf16>
    %cst_132 = arith.constant dense<0.000000e+00> : vector<32x32xf32>
    %439 = tpu.matmul %428, %438, %cst_132 {dimension_numbers = #tpu.dot_dimension_numbers<[1], [0], [0], [1], [0, 0, 1, 1], [], []>} : vector<32x32xbf16>, vector<32x32xbf16>, vector<32x32xf32> -> vector<32x32xf32>
    %440 = vector.extract_strided_slice %12 {offsets = [32, 0], sizes = [1, 32], strides = [1, 1]} : vector<40x32xf32> to vector<1x32xf32>
    %441 = vector.broadcast %440 : vector<1x32xf32> to vector<32x32xf32>
    %442 = arith.addf %439, %441 : vector<32x32xf32>
    %443 = vector.extract_strided_slice %427 {offsets = [2, 0, 0], sizes = [1, 32, 32], strides = [1, 1, 1]} : vector<4x32x32xbf16> to vector<1x32x32xbf16>
    %444 = vector.shape_cast %443 : vector<1x32x32xbf16> to vector<32x32xbf16>
    %cst_133 = arith.constant dense<0.000000e+00> : vector<32x32xf32>
    %445 = tpu.matmul %428, %444, %cst_133 {dimension_numbers = #tpu.dot_dimension_numbers<[1], [0], [0], [1], [0, 0, 1, 1], [], []>} : vector<32x32xbf16>, vector<32x32xbf16>, vector<32x32xf32> -> vector<32x32xf32>
    %446 = vector.extract_strided_slice %12 {offsets = [33, 0], sizes = [1, 32], strides = [1, 1]} : vector<40x32xf32> to vector<1x32xf32>
    %447 = vector.broadcast %446 : vector<1x32xf32> to vector<32x32xf32>
    %448 = arith.addf %445, %447 : vector<32x32xf32>
    %449 = tpu.concatenate %436, %436, %436, %436, %436, %436, %436, %436 in 0 : vector<32x32xf32>, vector<32x32xf32>, vector<32x32xf32>, vector<32x32xf32>, vector<32x32xf32>, vector<32x32xf32>, vector<32x32xf32>, vector<32x32xf32> -> vector<256x32xf32>
    %450 = arith.mulf %449, %16 : vector<256x32xf32>
    %451 = arith.truncf %450 : vector<256x32xf32> to vector<256x32xbf16>
    %452 = tpu.transpose %442, [1, 0] : vector<32x32xf32> -> vector<32x32xf32>
    %453 = arith.truncf %452 : vector<32x32xf32> to vector<32x32xbf16>
    %cst_134 = arith.constant dense<0.000000e+00> : vector<256x32xf32>
    %454 = tpu.matmul %451, %453, %cst_134 {dimension_numbers = #tpu.dot_dimension_numbers<[1], [0], [0], [1], [0, 0, 1, 1], [], []>} : vector<256x32xbf16>, vector<32x32xbf16>, vector<256x32xf32> -> vector<256x32xf32>
    %455 = arith.addf %454, %14 : vector<256x32xf32>
    %cst_135 = arith.constant dense<0xFF800000> : vector<256xf32>
    %456 = vector.multi_reduction <maximumf>, %455, %cst_135 [1] : vector<256x32xf32> to vector<256xf32>
    %457 = vector.shape_cast %456 : vector<256xf32> to vector<256x1xf32>
    %458 = vector.broadcast %457 : vector<256x1xf32> to vector<256x32xf32>
    %459 = arith.subf %455, %458 : vector<256x32xf32>
    %460 = math.exp %459 : vector<256x32xf32>
    %cst_136 = arith.constant dense<0.000000e+00> : vector<256xf32>
    %461 = vector.multi_reduction <add>, %460, %cst_136 [1] : vector<256x32xf32> to vector<256xf32>
    %462 = vector.shape_cast %461 : vector<256xf32> to vector<256x1xf32>
    %463 = tpu.reciprocal %462 {approx = true} : vector<256x1xf32> -> vector<256x1xf32>
    %464 = vector.broadcast %463 : vector<256x1xf32> to vector<256x32xf32>
    %465 = arith.mulf %460, %464 : vector<256x32xf32>
    %466 = arith.truncf %465 : vector<256x32xf32> to vector<256x32xbf16>
    %467 = arith.truncf %448 : vector<32x32xf32> to vector<32x32xbf16>
    %cst_137 = arith.constant dense<0.000000e+00> : vector<256x32xf32>
    %468 = tpu.matmul %466, %467, %cst_137 {dimension_numbers = #tpu.dot_dimension_numbers<[1], [0], [0], [1], [0, 0, 1, 1], [], []>} : vector<256x32xbf16>, vector<32x32xbf16>, vector<256x32xf32> -> vector<256x32xf32>
    %469 = arith.mulf %468, %16 : vector<256x32xf32>
    %470 = vector.extract_strided_slice %469 {offsets = [0, 0], sizes = [32, 32], strides = [1, 1]} : vector<256x32xf32> to vector<32x32xf32>
    %471 = vector.extract_strided_slice %469 {offsets = [32, 0], sizes = [32, 32], strides = [1, 1]} : vector<256x32xf32> to vector<32x32xf32>
    %472 = arith.addf %470, %471 : vector<32x32xf32>
    %473 = vector.extract_strided_slice %469 {offsets = [64, 0], sizes = [32, 32], strides = [1, 1]} : vector<256x32xf32> to vector<32x32xf32>
    %474 = arith.addf %472, %473 : vector<32x32xf32>
    %475 = vector.extract_strided_slice %469 {offsets = [96, 0], sizes = [32, 32], strides = [1, 1]} : vector<256x32xf32> to vector<32x32xf32>
    %476 = arith.addf %474, %475 : vector<32x32xf32>
    %477 = vector.extract_strided_slice %469 {offsets = [128, 0], sizes = [32, 32], strides = [1, 1]} : vector<256x32xf32> to vector<32x32xf32>
    %478 = arith.addf %476, %477 : vector<32x32xf32>
    %479 = vector.extract_strided_slice %469 {offsets = [160, 0], sizes = [32, 32], strides = [1, 1]} : vector<256x32xf32> to vector<32x32xf32>
    %480 = arith.addf %478, %479 : vector<32x32xf32>
    %481 = vector.extract_strided_slice %469 {offsets = [192, 0], sizes = [32, 32], strides = [1, 1]} : vector<256x32xf32> to vector<32x32xf32>
    %482 = arith.addf %480, %481 : vector<32x32xf32>
    %483 = vector.extract_strided_slice %469 {offsets = [224, 0], sizes = [32, 32], strides = [1, 1]} : vector<256x32xf32> to vector<32x32xf32>
    %484 = arith.addf %482, %483 : vector<32x32xf32>
    %485 = arith.truncf %484 : vector<32x32xf32> to vector<32x32xbf16>
    %486 = vector.extract_strided_slice %427 {offsets = [3, 0, 0], sizes = [1, 32, 32], strides = [1, 1, 1]} : vector<4x32x32xbf16> to vector<1x32x32xbf16>
    %487 = vector.shape_cast %486 : vector<1x32x32xbf16> to vector<32x32xbf16>
    %cst_138 = arith.constant dense<0.000000e+00> : vector<32x32xf32>
    %488 = tpu.matmul %485, %487, %cst_138 {dimension_numbers = #tpu.dot_dimension_numbers<[1], [0], [0], [1], [0, 0, 1, 1], [], []>} : vector<32x32xbf16>, vector<32x32xbf16>, vector<32x32xf32> -> vector<32x32xf32>
    %489 = vector.extract_strided_slice %12 {offsets = [34, 0], sizes = [1, 32], strides = [1, 1]} : vector<40x32xf32> to vector<1x32xf32>
    %490 = vector.broadcast %489 : vector<1x32xf32> to vector<32x32xf32>
    %491 = arith.addf %488, %490 : vector<32x32xf32>
    %492 = arith.addf %425, %491 : vector<32x32xf32>
    %493 = vector.extract_strided_slice %12 {offsets = [35, 0], sizes = [1, 32], strides = [1, 1]} : vector<40x32xf32> to vector<1x32xf32>
    %494 = vector.extract_strided_slice %12 {offsets = [36, 0], sizes = [1, 32], strides = [1, 1]} : vector<40x32xf32> to vector<1x32xf32>
    %cst_139 = arith.constant dense<0.000000e+00> : vector<32xf32>
    %495 = vector.multi_reduction <add>, %492, %cst_139 [1] : vector<32x32xf32> to vector<32xf32>
    %496 = vector.shape_cast %495 : vector<32xf32> to vector<32x1xf32>
    %cst_140 = arith.constant 3.200000e+01 : f32
    %497 = vector.broadcast %cst_140 : f32 to vector<32x1xf32>
    %498 = arith.divf %496, %497 : vector<32x1xf32>
    %499 = vector.broadcast %498 : vector<32x1xf32> to vector<32x32xf32>
    %500 = arith.subf %492, %499 : vector<32x32xf32>
    %501 = arith.mulf %500, %500 : vector<32x32xf32>
    %cst_141 = arith.constant dense<0.000000e+00> : vector<32xf32>
    %502 = vector.multi_reduction <add>, %501, %cst_141 [1] : vector<32x32xf32> to vector<32xf32>
    %503 = vector.shape_cast %502 : vector<32xf32> to vector<32x1xf32>
    %cst_142 = arith.constant 3.200000e+01 : f32
    %504 = vector.broadcast %cst_142 : f32 to vector<32x1xf32>
    %505 = arith.divf %503, %504 : vector<32x1xf32>
    %cst_143 = arith.constant 9.99999974E-6 : f32
    %506 = vector.broadcast %cst_143 : f32 to vector<32x1xf32>
    %507 = arith.addf %505, %506 : vector<32x1xf32>
    %508 = math.rsqrt %507 : vector<32x1xf32>
    %509 = vector.broadcast %508 : vector<32x1xf32> to vector<32x32xf32>
    %510 = arith.mulf %500, %509 : vector<32x32xf32>
    %511 = vector.broadcast %493 : vector<1x32xf32> to vector<32x32xf32>
    %512 = arith.mulf %510, %511 : vector<32x32xf32>
    %513 = vector.broadcast %494 : vector<1x32xf32> to vector<32x32xf32>
    %514 = arith.addf %512, %513 : vector<32x32xf32>
    %515 = arith.truncf %514 : vector<32x32xf32> to vector<32x32xbf16>
    %c3_144 = arith.constant 3 : index
    %c0_145 = arith.constant 0 : index
    %c0_146 = arith.constant 0 : index
    %516 = vector.load %arg6[%c3_144, %c0_145, %c0_146] : memref<4x32x128xbf16, #tpu.memory_space<vmem>>, vector<1x32x128xbf16>
    %517 = vector.shape_cast %516 : vector<1x32x128xbf16> to vector<32x128xbf16>
    %cst_147 = arith.constant dense<0.000000e+00> : vector<32x128xf32>
    %518 = tpu.matmul %515, %517, %cst_147 {dimension_numbers = #tpu.dot_dimension_numbers<[1], [0], [0], [1], [0, 0, 1, 1], [], []>} : vector<32x32xbf16>, vector<32x128xbf16>, vector<32x128xf32> -> vector<32x128xf32>
    %c3_148 = arith.constant 3 : index
    %c0_149 = arith.constant 0 : index
    %c0_150 = arith.constant 0 : index
    %519 = vector.load %arg4[%c3_148, %c0_149, %c0_150] : memref<4x1x128xf32, #tpu.memory_space<vmem>>, vector<1x1x128xf32>
    %520 = vector.shape_cast %519 : vector<1x1x128xf32> to vector<1x128xf32>
    %521 = vector.broadcast %520 : vector<1x128xf32> to vector<32x128xf32>
    %522 = arith.addf %518, %521 : vector<32x128xf32>
    %cst_151 = arith.constant 0.000000e+00 : f32
    %523 = vector.broadcast %cst_151 : f32 to vector<32x128xf32>
    %524 = arith.maximumf %522, %523 : vector<32x128xf32>
    %525 = arith.truncf %524 : vector<32x128xf32> to vector<32x128xbf16>
    %c3_152 = arith.constant 3 : index
    %c0_153 = arith.constant 0 : index
    %c0_154 = arith.constant 0 : index
    %526 = vector.load %arg7[%c3_152, %c0_153, %c0_154] : memref<4x128x32xbf16, #tpu.memory_space<vmem>>, vector<1x128x32xbf16>
    %527 = vector.shape_cast %526 : vector<1x128x32xbf16> to vector<128x32xbf16>
    %cst_155 = arith.constant dense<0.000000e+00> : vector<32x32xf32>
    %528 = tpu.matmul %525, %527, %cst_155 {dimension_numbers = #tpu.dot_dimension_numbers<[1], [0], [0], [1], [0, 0, 1, 1], [], []>} : vector<32x128xbf16>, vector<128x32xbf16>, vector<32x32xf32> -> vector<32x32xf32>
    %529 = vector.extract_strided_slice %12 {offsets = [39, 0], sizes = [1, 32], strides = [1, 1]} : vector<40x32xf32> to vector<1x32xf32>
    %530 = vector.broadcast %529 : vector<1x32xf32> to vector<32x32xf32>
    %531 = arith.addf %528, %530 : vector<32x32xf32>
    %532 = arith.addf %514, %531 : vector<32x32xf32>
    %533 = vector.extract_strided_slice %12 {offsets = [37, 0], sizes = [1, 32], strides = [1, 1]} : vector<40x32xf32> to vector<1x32xf32>
    %534 = vector.extract_strided_slice %12 {offsets = [38, 0], sizes = [1, 32], strides = [1, 1]} : vector<40x32xf32> to vector<1x32xf32>
    %cst_156 = arith.constant dense<0.000000e+00> : vector<32xf32>
    %535 = vector.multi_reduction <add>, %532, %cst_156 [1] : vector<32x32xf32> to vector<32xf32>
    %536 = vector.shape_cast %535 : vector<32xf32> to vector<32x1xf32>
    %cst_157 = arith.constant 3.200000e+01 : f32
    %537 = vector.broadcast %cst_157 : f32 to vector<32x1xf32>
    %538 = arith.divf %536, %537 : vector<32x1xf32>
    %539 = vector.broadcast %538 : vector<32x1xf32> to vector<32x32xf32>
    %540 = arith.subf %532, %539 : vector<32x32xf32>
    %541 = arith.mulf %540, %540 : vector<32x32xf32>
    %cst_158 = arith.constant dense<0.000000e+00> : vector<32xf32>
    %542 = vector.multi_reduction <add>, %541, %cst_158 [1] : vector<32x32xf32> to vector<32xf32>
    %543 = vector.shape_cast %542 : vector<32xf32> to vector<32x1xf32>
    %cst_159 = arith.constant 3.200000e+01 : f32
    %544 = vector.broadcast %cst_159 : f32 to vector<32x1xf32>
    %545 = arith.divf %543, %544 : vector<32x1xf32>
    %cst_160 = arith.constant 9.99999974E-6 : f32
    %546 = vector.broadcast %cst_160 : f32 to vector<32x1xf32>
    %547 = arith.addf %545, %546 : vector<32x1xf32>
    %548 = math.rsqrt %547 : vector<32x1xf32>
    %549 = vector.broadcast %548 : vector<32x1xf32> to vector<32x32xf32>
    %550 = arith.mulf %540, %549 : vector<32x32xf32>
    %551 = vector.broadcast %533 : vector<1x32xf32> to vector<32x32xf32>
    %552 = arith.mulf %550, %551 : vector<32x32xf32>
    %553 = vector.broadcast %534 : vector<1x32xf32> to vector<32x32xf32>
    %554 = arith.addf %552, %553 : vector<32x32xf32>
    %555 = vector.extract_strided_slice %554 {offsets = [16, 0], sizes = [2, 32], strides = [1, 1]} : vector<32x32xf32> to vector<2x32xf32>
    %556 = vector.extract_strided_slice %12 {offsets = [2, 0], sizes = [1, 32], strides = [1, 1]} : vector<40x32xf32> to vector<1x32xf32>
    %557 = vector.extract_strided_slice %12 {offsets = [3, 0], sizes = [1, 32], strides = [1, 1]} : vector<40x32xf32> to vector<1x32xf32>
    %cst_161 = arith.constant dense<0.000000e+00> : vector<2xf32>
    %558 = vector.multi_reduction <add>, %555, %cst_161 [1] : vector<2x32xf32> to vector<2xf32>
    %559 = vector.shape_cast %558 : vector<2xf32> to vector<2x1xf32>
    %cst_162 = arith.constant 3.200000e+01 : f32
    %560 = vector.broadcast %cst_162 : f32 to vector<2x1xf32>
    %561 = arith.divf %559, %560 : vector<2x1xf32>
    %562 = vector.broadcast %561 : vector<2x1xf32> to vector<2x32xf32>
    %563 = arith.subf %555, %562 : vector<2x32xf32>
    %564 = arith.mulf %563, %563 : vector<2x32xf32>
    %cst_163 = arith.constant dense<0.000000e+00> : vector<2xf32>
    %565 = vector.multi_reduction <add>, %564, %cst_163 [1] : vector<2x32xf32> to vector<2xf32>
    %566 = vector.shape_cast %565 : vector<2xf32> to vector<2x1xf32>
    %cst_164 = arith.constant 3.200000e+01 : f32
    %567 = vector.broadcast %cst_164 : f32 to vector<2x1xf32>
    %568 = arith.divf %566, %567 : vector<2x1xf32>
    %cst_165 = arith.constant 9.99999974E-6 : f32
    %569 = vector.broadcast %cst_165 : f32 to vector<2x1xf32>
    %570 = arith.addf %568, %569 : vector<2x1xf32>
    %571 = math.rsqrt %570 : vector<2x1xf32>
    %572 = vector.broadcast %571 : vector<2x1xf32> to vector<2x32xf32>
    %573 = arith.mulf %563, %572 : vector<2x32xf32>
    %574 = vector.broadcast %556 : vector<1x32xf32> to vector<2x32xf32>
    %575 = arith.mulf %573, %574 : vector<2x32xf32>
    %576 = vector.broadcast %557 : vector<1x32xf32> to vector<2x32xf32>
    %577 = arith.addf %575, %576 : vector<2x32xf32>
    %c0_166 = arith.constant 0 : index
    %c0_167 = arith.constant 0 : index
    %578 = vector.load %arg8[%c0_166, %c0_167] : memref<2x32xf32, #tpu.memory_space<vmem>>, vector<2x32xf32>
    tpu.vector_store %arg8[%c0_166, %c0_167], %577 {strides = array<i32>} : memref<2x32xf32, #tpu.memory_space<vmem>>, vector<2x32xf32>,
    return
  }
  func.func @transform_0(%arg0: i32) -> (i32, i32, i32) {
    %c0_i32 = arith.constant 0 : i32
    %c0_i32_0 = arith.constant 0 : i32
    %c0_i32_1 = arith.constant 0 : i32
    %c0_i32_2 = arith.constant 0 : i32
    return %c0_i32, %c0_i32_0, %c0_i32_1 : i32, i32, i32
  }
  func.func @transform_1(%arg0: i32) -> (i32, i32, i32) {
    %c0_i32 = arith.constant 0 : i32
    %c0_i32_0 = arith.constant 0 : i32
    %c0_i32_1 = arith.constant 0 : i32
    %c0_i32_2 = arith.constant 0 : i32
    return %c0_i32, %c0_i32_0, %c0_i32_1 : i32, i32, i32
  }
  func.func @transform_2(%arg0: i32) -> (i32, i32) {
    %c0_i32 = arith.constant 0 : i32
    %c0_i32_0 = arith.constant 0 : i32
    %c0_i32_1 = arith.constant 0 : i32
    return %c0_i32, %c0_i32_0 : i32, i32
  }
  func.func @transform_3(%arg0: i32) -> (i32, i32, i32) {
    %c0_i32 = arith.constant 0 : i32
    %c0_i32_0 = arith.constant 0 : i32
    %c0_i32_1 = arith.constant 0 : i32
    %c0_i32_2 = arith.constant 0 : i32
    return %c0_i32, %c0_i32_0, %c0_i32_1 : i32, i32, i32
  }
  func.func @transform_4(%arg0: i32) -> (i32, i32, i32, i32) {
    %c0_i32 = arith.constant 0 : i32
    %c0_i32_0 = arith.constant 0 : i32
    %c0_i32_1 = arith.constant 0 : i32
    %c0_i32_2 = arith.constant 0 : i32
    %c0_i32_3 = arith.constant 0 : i32
    return %c0_i32, %c0_i32_0, %c0_i32_1, %c0_i32_2 : i32, i32, i32, i32
  }
  func.func @transform_5(%arg0: i32) -> (i32, i32, i32) {
    %c0_i32 = arith.constant 0 : i32
    %c0_i32_0 = arith.constant 0 : i32
    %c0_i32_1 = arith.constant 0 : i32
    %c0_i32_2 = arith.constant 0 : i32
    return %c0_i32, %c0_i32_0, %c0_i32_1 : i32, i32, i32
  }
  func.func @transform_6(%arg0: i32) -> (i32, i32, i32) {
    %c0_i32 = arith.constant 0 : i32
    %c0_i32_0 = arith.constant 0 : i32
    %c0_i32_1 = arith.constant 0 : i32
    %c0_i32_2 = arith.constant 0 : i32
    return %c0_i32, %c0_i32_0, %c0_i32_1 : i32, i32, i32
  }
  func.func @transform_7(%arg0: i32) -> (i32, i32) {
    %c0_i32 = arith.constant 0 : i32
    %c0_i32_0 = arith.constant 0 : i32
    %c0_i32_1 = arith.constant 0 : i32
    return %c0_i32, %c0_i32_0 : i32, i32
  }
}

</mosaic_0001>

<llo_original>
// kernel: temporal_encoder_forward.1
$region0: #{temporal_encoder_forward.1}
  #allocation0 [shape = 'u32[]', space=smem, size = 0x4, offset = 0x4, fixed_abs, tag = 'smem constant byte address 0x4 - core index']
  #allocation1 [shape = 'u32[144,128]{1,0:T(1,128)}', space=vmem, size = 0x12000, scoped, tag = 'internal scratch']
  %s0 = inlined_call_operand.vmem [shape: f32[4,32,32], index: 0, kind: input, shape index: {}]
  %s1 = inlined_call_operand.vmem [shape: f32[2,256,32], index: 1, kind: input, shape index: {}]
  %s2 = inlined_call_operand.vmem [shape: f32[40,32], index: 2, kind: input, shape index: {}]
  %s3 = inlined_call_operand.vmem [shape: f32[4,1,128], index: 3, kind: input, shape index: {}]
  %s4 = inlined_call_operand.vmem [shape: bf16[4,4,32,32], index: 4, kind: input, shape index: {}]
  %s5 = inlined_call_operand.vmem [shape: bf16[4,32,128], index: 5, kind: input, shape index: {}]
  %s6 = inlined_call_operand.vmem [shape: bf16[4,128,32], index: 6, kind: input, shape index: {}]
  %s7 = inlined_call_operand.hbm [shape: f32[2,32], index: 7, kind: output, shape index: {}]
  %s8 = sld [smem:[#allocation0]]
  $region38: #{temporal_encoder_forward.1} parent=0
    _
  %s10 = ssub.s32 1, %s8
  %s11 = scalar_select 0, %s10, %s8
  $region1: #{temporal_encoder_forward.1} parent=0
    #allocation2 [shape = 'u8[1024]{0}', space=vmem, size = 0x400, scoped, tag = 'output window, operand 0, single buffered']
    #allocation3 [shape = 's32[1]{0}', space=sflag, size = 0x4, scoped, tag = 'scoped memory for temporal_encoder_forward.1']
    %12 = vsyncpa [#allocation3], 0
    // Predicated region
    $region2: #{temporal_encoder_forward.1} parent=1 // pred_check
      _
    $region3: #{temporal_encoder_forward.1} parent=1 // pred_check_branch
      %14 = sbr.rel (0) target = $region5
    $region4: #{temporal_encoder_forward.1} parent=1 // pred_region
      _
    $region5: #{temporal_encoder_forward.1} parent=1 // pred_fallthru
      _
    // Predicated region
    $region6: #{temporal_encoder_forward.1} parent=1 // pred_check
      _
    $region7: #{temporal_encoder_forward.1} parent=1 // pred_check_branch
      %16 = sbr.rel (0) target = $region9
    $region8: #{temporal_encoder_forward.1} parent=1 // pred_region
      _
    $region9: #{temporal_encoder_forward.1} parent=1 // pred_fallthru
      _
    // Predicated region
    $region10: #{temporal_encoder_forward.1} parent=1 // pred_check
      _
    $region11: #{temporal_encoder_forward.1} parent=1 // pred_check_branch
      %18 = sbr.rel (0) target = $region13
    $region12: #{temporal_encoder_forward.1} parent=1 // pred_region
      _
    $region13: #{temporal_encoder_forward.1} parent=1 // pred_fallthru
      _
    // Predicated region
    $region14: #{temporal_encoder_forward.1} parent=1 // pred_check
      _
    $region15: #{temporal_encoder_forward.1} parent=1 // pred_check_branch
      %20 = sbr.rel (0) target = $region17
    $region16: #{temporal_encoder_forward.1} parent=1 // pred_region
      _
    $region17: #{temporal_encoder_forward.1} parent=1 // pred_fallthru
      _
    // Predicated region
    $region18: #{temporal_encoder_forward.1} parent=1 // pred_check
      _
    $region19: #{temporal_encoder_forward.1} parent=1 // pred_check_branch
      %22 = sbr.rel (0) target = $region21
    $region20: #{temporal_encoder_forward.1} parent=1 // pred_region
      _
    $region21: #{temporal_encoder_forward.1} parent=1 // pred_fallthru
      _
    // Predicated region
    $region22: #{temporal_encoder_forward.1} parent=1 // pred_check
      _
    $region23: #{temporal_encoder_forward.1} parent=1 // pred_check_branch
      %24 = sbr.rel (0) target = $region25
    $region24: #{temporal_encoder_forward.1} parent=1 // pred_region
      _
    $region25: #{temporal_encoder_forward.1} parent=1 // pred_fallthru
      _
    // Predicated region
    $region26: #{temporal_encoder_forward.1} parent=1 // pred_check
      _
    $region27: #{temporal_encoder_forward.1} parent=1 // pred_check_branch
      %26 = sbr.rel (0) target = $region29
    $region28: #{temporal_encoder_forward.1} parent=1 // pred_region
      _
    $region29: #{temporal_encoder_forward.1} parent=1 // pred_fallthru
      _
    %s28 = scalar_lea.vmem %s0, 32
    %v29 = vld [vmem:[%s28] sm:$0xff]
    %v30 = vld [vmem:[%s28 + $0x8] sm:$0xff]
    %v31 = vld [vmem:[%s28 + $0x10] sm:$0xff]
    %v32 = vld [vmem:[%s28 + $0x18] sm:$0xff]
    %vm33 = vcmp.gt.f32.partialorder %v29, 0.5
    %vm34 = vcmp.gt.f32.partialorder %v30, 0.5
    %vm35 = vcmp.gt.f32.partialorder %v31, 0.5
    %vm36 = vcmp.gt.f32.partialorder %v32, 0.5
    %s37 = scalar_lea.vmem %s0, 64
    %v38 = vld [vmem:[%s37] sm:$0xff]
    %v39 = vld [vmem:[%s37 + $0x8] sm:$0xff]
    %v40 = vld [vmem:[%s37 + $0x10] sm:$0xff]
    %v41 = vld [vmem:[%s37 + $0x18] sm:$0xff]
    %v42 = vld [vmem:[%s0] sm:$0xff]
    %v43 = vld [vmem:[%s0 + $0x8] sm:$0xff]
    %v44 = vld [vmem:[%s0 + $0x10] sm:$0xff]
    %v45 = vld [vmem:[%s0 + $0x18] sm:$0xff]
    %s46 = scalar_lea.vmem %s0, 96
    %v47 = vld [vmem:[%s46] sm:$0xff]
    %v48 = vld [vmem:[%s46 + $0x8] sm:$0xff]
    %v49 = vld [vmem:[%s46 + $0x10] sm:$0xff]
    %v50 = vld [vmem:[%s46 + $0x18] sm:$0xff]
    %v51 = vadd.f32 %v42, %v47
    %v52 = vadd.f32 %v43, %v48
    %v53 = vadd.f32 %v44, %v49
    %v54 = vadd.f32 %v45, %v50
    %v55 = vsel %vm33, %v38, %v51
    %v56 = vsel %vm34, %v39, %v52
    %v57 = vsel %vm35, %v40, %v53
    %v58 = vsel %vm36, %v41, %v54
    %v59 = vld [vmem:[%s2] sm:$0xff]
    %v60 = vld [vmem:[%s2 + $0x8] sm:$0xff]
    %v61 = vld [vmem:[%s2 + $0x10] sm:$0xff]
    %v62 = vld [vmem:[%s2 + $0x18] sm:$0xff]
    %v63 = vld [vmem:[%s2 + $0x20] sm:$0xff]
    %v64 = vld [vmem:[%s1] sm:$0xff]
    %v65 = vld [vmem:[%s1 + $0x8] sm:$0xff]
    %v66 = vld [vmem:[%s1 + $0x10] sm:$0xff]
    %v67 = vld [vmem:[%s1 + $0x18] sm:$0xff]
    %v68 = vld [vmem:[%s1 + $0x20] sm:$0xff]
    %v69 = vld [vmem:[%s1 + $0x28] sm:$0xff]
    %v70 = vld [vmem:[%s1 + $0x30] sm:$0xff]
    %v71 = vld [vmem:[%s1 + $0x38] sm:$0xff]
    %v72 = vld [vmem:[%s1 + $0x40] sm:$0xff]
    %v73 = vld [vmem:[%s1 + $0x48] sm:$0xff]
    %v74 = vld [vmem:[%s1 + $0x50] sm:$0xff]
    %v75 = vld [vmem:[%s1 + $0x58] sm:$0xff]
    %v76 = vld [vmem:[%s1 + $0x60] sm:$0xff]
    %v77 = vld [vmem:[%s1 + $0x68] sm:$0xff]
    %v78 = vld [vmem:[%s1 + $0x70] sm:$0xff]
    %v79 = vld [vmem:[%s1 + $0x78] sm:$0xff]
    %v80 = vld [vmem:[%s1 + $0x80] sm:$0xff]
    %v81 = vld [vmem:[%s1 + $0x88] sm:$0xff]
    %v82 = vld [vmem:[%s1 + $0x90] sm:$0xff]
    %v83 = vld [vmem:[%s1 + $0x98] sm:$0xff]
    %v84 = vld [vmem:[%s1 + $0xa0] sm:$0xff]
    %v85 = vld [vmem:[%s1 + $0xa8] sm:$0xff]
    %v86 = vld [vmem:[%s1 + $0xb0] sm:$0xff]
    %v87 = vld [vmem:[%s1 + $0xb8] sm:$0xff]
    %v88 = vld [vmem:[%s1 + $0xc0] sm:$0xff]
    %v89 = vld [vmem:[%s1 + $0xc8] sm:$0xff]
    %v90 = vld [vmem:[%s1 + $0xd0] sm:$0xff]
    %v91 = vld [vmem:[%s1 + $0xd8] sm:$0xff]
    %v92 = vld [vmem:[%s1 + $0xe0] sm:$0xff]
    %v93 = vld [vmem:[%s1 + $0xe8] sm:$0xff]
    %v94 = vld [vmem:[%s1 + $0xf0] sm:$0xff]
    %v95 = vld [vmem:[%s1 + $0xf8] sm:$0xff]
    %s96 = scalar_lea.vmem %s1, 256
    %v97 = vld [vmem:[%s96] sm:$0xff]
    %v98 = vld [vmem:[%s96 + $0x8] sm:$0xff]
    %v99 = vld [vmem:[%s96 + $0x10] sm:$0xff]
    %v100 = vld [vmem:[%s96 + $0x18] sm:$0xff]
    %v101 = vld [vmem:[%s96 + $0x20] sm:$0xff]
    %v102 = vld [vmem:[%s96 + $0x28] sm:$0xff]
    %v103 = vld [vmem:[%s96 + $0x30] sm:$0xff]
    %v104 = vld [vmem:[%s96 + $0x38] sm:$0xff]
    %v105 = vld [vmem:[%s96 + $0x40] sm:$0xff]
    %v106 = vld [vmem:[%s96 + $0x48] sm:$0xff]
    %v107 = vld [vmem:[%s96 + $0x50] sm:$0xff]
    %v108 = vld [vmem:[%s96 + $0x58] sm:$0xff]
    %v109 = vld [vmem:[%s96 + $0x60] sm:$0xff]
    %v110 = vld [vmem:[%s96 + $0x68] sm:$0xff]
    %v111 = vld [vmem:[%s96 + $0x70] sm:$0xff]
    %v112 = vld [vmem:[%s96 + $0x78] sm:$0xff]
    %v113 = vld [vmem:[%s96 + $0x80] sm:$0xff]
    %v114 = vld [vmem:[%s96 + $0x88] sm:$0xff]
    %v115 = vld [vmem:[%s96 + $0x90] sm:$0xff]
    %v116 = vld [vmem:[%s96 + $0x98] sm:$0xff]
    %v117 = vld [vmem:[%s96 + $0xa0] sm:$0xff]
    %v118 = vld [vmem:[%s96 + $0xa8] sm:$0xff]
    %v119 = vld [vmem:[%s96 + $0xb0] sm:$0xff]
    %v120 = vld [vmem:[%s96 + $0xb8] sm:$0xff]
    %v121 = vld [vmem:[%s96 + $0xc0] sm:$0xff]
    %v122 = vld [vmem:[%s96 + $0xc8] sm:$0xff]
    %v123 = vld [vmem:[%s96 + $0xd0] sm:$0xff]
    %v124 = vld [vmem:[%s96 + $0xd8] sm:$0xff]
    %v125 = vld [vmem:[%s96 + $0xe0] sm:$0xff]
    %v126 = vld [vmem:[%s96 + $0xe8] sm:$0xff]
    %v127 = vld [vmem:[%s96 + $0xf0] sm:$0xff]
    %v128 = vld [vmem:[%s96 + $0xf8] sm:$0xff]
    %vm129 = vcmask 261120
    %v130 = vsel %vm129, %v55, 0.0
    %131 = vadd.xlane.f32.xlu0 %v130
    %v132 = vpop.xlane.xlu0 %131
    %v133 = vsel %vm129, %v56, 0.0
    %134 = vadd.xlane.f32.xlu0 %v133
    %v135 = vpop.xlane.xlu0 %134
    %v136 = vsel %vm129, %v57, 0.0
    %137 = vadd.xlane.f32.xlu0 %v136
    %v138 = vpop.xlane.xlu0 %137
    %v139 = vsel %vm129, %v58, 0.0
    %140 = vadd.xlane.f32.xlu0 %v139
    %v141 = vpop.xlane.xlu0 %140
    %v142 = vrcp.pop 32.0
    %v143 = vmul.f32 %v132, %v142
    %v144 = vmul.f32 %v135, %v142
    %v145 = vmul.f32 %v138, %v142
    %v146 = vmul.f32 %v141, %v142
    %v147 = vsub.f32 %v55, %v143
    %v148 = vsub.f32 %v56, %v144
    %v149 = vsub.f32 %v57, %v145
    %v150 = vsub.f32 %v58, %v146
    %v151 = vmul.f32 %v147, %v147
    %v152 = vmul.f32 %v148, %v148
    %v153 = vmul.f32 %v149, %v149
    %v154 = vmul.f32 %v150, %v150
    %v155 = vsel %vm129, %v151, 0.0
    %156 = vadd.xlane.f32.xlu0 %v155
    %v157 = vpop.xlane.xlu0 %156
    %v158 = vsel %vm129, %v152, 0.0
    %159 = vadd.xlane.f32.xlu0 %v158
    %v160 = vpop.xlane.xlu0 %159
    %v161 = vsel %vm129, %v153, 0.0
    %162 = vadd.xlane.f32.xlu0 %v161
    %v163 = vpop.xlane.xlu0 %162
    %v164 = vsel %vm129, %v154, 0.0
    %165 = vadd.xlane.f32.xlu0 %v164
    %v166 = vpop.xlane.xlu0 %165
    %v167 = vmul.f32 %v157, %v142
    %v168 = vmul.f32 %v160, %v142
    %v169 = vmul.f32 %v163, %v142
    %v170 = vmul.f32 %v166, %v142
    %v171 = vadd.f32 %v167, 1e-05
    %v172 = vadd.f32 %v168, 1e-05
    %v173 = vadd.f32 %v169, 1e-05
    %v174 = vadd.f32 %v170, 1e-05
    %v175 = vrsqrt.pop %v171
    %v176 = vrsqrt.pop %v172
    %v177 = vrsqrt.pop %v173
    %v178 = vrsqrt.pop %v174
    %v179 = vmul.f32 %v147, %v175
    %v180 = vmul.f32 %v148, %v176
    %v181 = vmul.f32 %v149, %v177
    %v182 = vmul.f32 %v150, %v178
    %v183 = vlaneseq
    %v184 = vshrl.u32 %v183, 7
    %v185 = vsub.s32 0, %v184
    %v186 = vrot.slane %v59, %v185
    %v187 = vmul.f32 %v179, %v186
    %v188 = vmul.f32 %v180, %v186
    %v189 = vmul.f32 %v181, %v186
    %v190 = vmul.f32 %v182, %v186
    %v191 = vlaneseq
    %v192 = vshrl.u32 %v191, 7
    %v193 = vsub.s32 1, %v192
    %v194 = vrot.slane %v59, %v193
    %v195 = vadd.f32 %v187, %v194
    %v196 = vadd.f32 %v188, %v194
    %v197 = vadd.f32 %v189, %v194
    %v198 = vadd.f32 %v190, %v194
    %v199 = vld [vmem:[%s4] sm:$0xf]
    %v200 = vld [vmem:[%s4 + $0x4] sm:$0xf]
    %v201 = vld [vmem:[%s4 + $0x8] sm:$0xf]
    %v202 = vld [vmem:[%s4 + $0xc] sm:$0xf]
    %v203 = vld [vmem:[%s4 + $0x10] sm:$0xf]
    %v204 = vld [vmem:[%s4 + $0x14] sm:$0xf]
    %v205 = vld [vmem:[%s4 + $0x18] sm:$0xf]
    %v206 = vld [vmem:[%s4 + $0x1c] sm:$0xf]
    %v207 = vld [vmem:[%s4 + $0x20] sm:$0xf]
    %v208 = vld [vmem:[%s4 + $0x24] sm:$0xf]
    %v209 = vld [vmem:[%s4 + $0x28] sm:$0xf]
    %v210 = vld [vmem:[%s4 + $0x2c] sm:$0xf]
    %v211 = vld [vmem:[%s4 + $0x30] sm:$0xf]
    %v212 = vld [vmem:[%s4 + $0x34] sm:$0xf]
    %v213 = vld [vmem:[%s4 + $0x38] sm:$0xf]
    %v214 = vld [vmem:[%s4 + $0x3c] sm:$0xf]
    %v215 = vpack.c.bf16 %v196, %v195
    %v216 = vpack.c.bf16 %v198, %v197
    %v217 = vlaneseq
    %v218 = vshrl.u32 %v217, 7
    %v219 = vsub.s32 4, %v218
    %v220 = vrot.slane %v59, %v219
    %v225 = vunpack.c.l.b16 %v199
    %v226 = vunpack.c.l.b16 %v200
    %v227 = vunpack.c.l.b16 %v201
    %v228 = vunpack.c.l.b16 %v202
    %v229 = vpack.c.b16 %v226, %v225
    %v230 = vpack.c.b16 %v228, %v227
    %v234 = vsel %vm129, %v215, 0
    %v237 = vsel %vm129, %v216, 0
    %239 = vmatprep.subr.bf16.mxu0 0
    %240 = vmatpush1.bf16.msra.mxu0 0
    %241 = vmatprep.subr.bf16.mxu0 0
    %242 = vmatpush1.bf16.msra.mxu0 0
    %243 = vmatprep.subr.bf16.mxu0 0
    %244 = vmatpush1.bf16.msra.mxu0 0
    %245 = vmatprep.subr.bf16.mxu0 0
    %246 = vmatpush1.bf16.msra.mxu0 0
    %247 = vmatprep.subr.bf16.mxu0 0
    %248 = vmatpush1.bf16.msra.mxu0 0
    %249 = vmatprep.subr.bf16.mxu0 0
    %250 = vmatpush1.bf16.msra.mxu0 0
    %251 = vmatprep.subr.bf16.mxu0 0
    %252 = vmatpush1.bf16.msra.mxu0 %v230
    %253 = vmatprep.subr.bf16.mxu0 0
    %254 = vmatpush1.bf16.msra.mxu0 %v229
    %255 = vmatprep.subr.bf16.mxu0 0
    %256 = vmatpush2.bf16.msra.mxu0 0
    %257 = vmatprep.subr.bf16.mxu0 0
    %258 = vmatpush2.bf16.msra.mxu0 0
    %259 = vmatprep.subr.bf16.mxu0 0
    %260 = vmatpush2.bf16.msra.mxu0 0
    %261 = vmatprep.subr.bf16.mxu0 0
    %262 = vmatpush2.bf16.msra.mxu0 0
    %263 = vmatprep.subr.bf16.mxu0 0
    %264 = vmatpush2.bf16.msra.mxu0 0
    %265 = vmatprep.subr.bf16.mxu0 0
    %266 = vmatpush2.bf16.msra.mxu0 0
    %267 = vmatprep.subr.bf16.mxu0 0
    %268 = vmatpush2.bf16.msra.mxu0 0
    %269 = vmatprep.subr.bf16.mxu0 0
    %270 = vmatpush2.bf16.msra.mxu0 0
    %271 = vmatprep.mubr.bf16.mxu0 0
    %272 = vmatmul.mubr.bf16.gmra.mxu0 %v234
    %v273 = vpop.f32.mrf.mxu0
    %v274 = vadd.f32 %v220, %v273
    %v275 = vpop.f32.mrf.mxu0
    %v276 = vpop.f32.mrf.mxu0
    %v277 = vadd.f32 %v220, %v276
    %v278 = vpop.f32.mrf.mxu0
    %279 = vmatprep.mubr.bf16.mxu0 0
    %280 = vmatmul.mubr.bf16.gmra.mxu0 %v237
    %v281 = vpop.f32.mrf.mxu0
    %v282 = vadd.f32 %v220, %v281
    %v283 = vpop.f32.mrf.mxu0
    %v284 = vpop.f32.mrf.mxu0
    %v285 = vadd.f32 %v220, %v284
    %v286 = vpop.f32.mrf.mxu0
    %287 = vdwg.mxu0
    %v288 = vmul.f32 %v274, 0.5
    %v289 = vmul.f32 %v277, 0.5
    %v290 = vmul.f32 %v282, 0.5
    %v291 = vmul.f32 %v285, 0.5
    %v292 = vlaneseq
    %v293 = vshrl.u32 %v292, 7
    %v294 = vsub.s32 5, %v293
    %v295 = vrot.slane %v59, %v294
    %v300 = vunpack.c.l.b16 %v203
    %v301 = vunpack.c.l.b16 %v204
    %v302 = vunpack.c.l.b16 %v205
    %v303 = vunpack.c.l.b16 %v206
    %v304 = vpack.c.b16 %v301, %v300
    %v305 = vpack.c.b16 %v303, %v302
    %308 = vmatprep.subr.bf16.mxu0 0
    %309 = vmatpush1.bf16.msra.mxu0 0
    %310 = vmatprep.subr.bf16.mxu0 0
    %311 = vmatpush1.bf16.msra.mxu0 0
    %312 = vmatprep.subr.bf16.mxu0 0
    %313 = vmatpush1.bf16.msra.mxu0 0
    %314 = vmatprep.subr.bf16.mxu0 0
    %315 = vmatpush1.bf16.msra.mxu0 0
    %316 = vmatprep.subr.bf16.mxu0 0
    %317 = vmatpush1.bf16.msra.mxu0 0
    %318 = vmatprep.subr.bf16.mxu0 0
    %319 = vmatpush1.bf16.msra.mxu0 0
    %320 = vmatprep.subr.bf16.mxu0 0
    %321 = vmatpush1.bf16.msra.mxu0 %v305
    %322 = vmatprep.subr.bf16.mxu0 0
    %323 = vmatpush1.bf16.msra.mxu0 %v304
    %324 = vmatprep.subr.bf16.mxu0 0
    %325 = vmatpush2.bf16.msra.mxu0 0
    %326 = vmatprep.subr.bf16.mxu0 0
    %327 = vmatpush2.bf16.msra.mxu0 0
    %328 = vmatprep.subr.bf16.mxu0 0
    %329 = vmatpush2.bf16.msra.mxu0 0
    %330 = vmatprep.subr.bf16.mxu0 0
    %331 = vmatpush2.bf16.msra.mxu0 0
    %332 = vmatprep.subr.bf16.mxu0 0
    %333 = vmatpush2.bf16.msra.mxu0 0
    %334 = vmatprep.subr.bf16.mxu0 0
    %335 = vmatpush2.bf16.msra.mxu0 0
    %336 = vmatprep.subr.bf16.mxu0 0
    %337 = vmatpush2.bf16.msra.mxu0 0
    %338 = vmatprep.subr.bf16.mxu0 0
    %339 = vmatpush2.bf16.msra.mxu0 0
    %340 = vmatprep.mubr.bf16.mxu0 0
    %341 = vmatmul.mubr.bf16.gmra.mxu0 %v234
    %v342 = vpop.f32.mrf.mxu0
    %v343 = vadd.f32 %v295, %v342
    %v344 = vpop.f32.mrf.mxu0
    %v345 = vpop.f32.mrf.mxu0
    %v346 = vadd.f32 %v295, %v345
    %v347 = vpop.f32.mrf.mxu0
    %348 = vmatprep.mubr.bf16.mxu0 0
    %349 = vmatmul.mubr.bf16.gmra.mxu0 %v237
    %v350 = vpop.f32.mrf.mxu0
    %v351 = vadd.f32 %v295, %v350
    %v352 = vpop.f32.mrf.mxu0
    %v353 = vpop.f32.mrf.mxu0
    %v354 = vadd.f32 %v295, %v353
    %v355 = vpop.f32.mrf.mxu0
    %356 = vdwg.mxu0
    %v357 = vlaneseq
    %v358 = vshrl.u32 %v357, 7
    %v359 = vsub.s32 6, %v358
    %v360 = vrot.slane %v59, %v359
    %v365 = vunpack.c.l.b16 %v207
    %v366 = vunpack.c.l.b16 %v208
    %v367 = vunpack.c.l.b16 %v209
    %v368 = vunpack.c.l.b16 %v210
    %v369 = vpack.c.b16 %v366, %v365
    %v370 = vpack.c.b16 %v368, %v367
    %373 = vmatprep.subr.bf16.mxu0 0
    %374 = vmatpush1.bf16.msra.mxu0 0
    %375 = vmatprep.subr.bf16.mxu0 0
    %376 = vmatpush1.bf16.msra.mxu0 0
    %377 = vmatprep.subr.bf16.mxu0 0
    %378 = vmatpush1.bf16.msra.mxu0 0
    %379 = vmatprep.subr.bf16.mxu0 0
    %380 = vmatpush1.bf16.msra.mxu0 0
    %381 = vmatprep.subr.bf16.mxu0 0
    %382 = vmatpush1.bf16.msra.mxu0 0
    %383 = vmatprep.subr.bf16.mxu0 0
    %384 = vmatpush1.bf16.msra.mxu0 0
    %385 = vmatprep.subr.bf16.mxu0 0
    %386 = vmatpush1.bf16.msra.mxu0 %v370
    %387 = vmatprep.subr.bf16.mxu0 0
    %388 = vmatpush1.bf16.msra.mxu0 %v369
    %389 = vmatprep.subr.bf16.mxu0 0
    %390 = vmatpush2.bf16.msra.mxu0 0
    %391 = vmatprep.subr.bf16.mxu0 0
    %392 = vmatpush2.bf16.msra.mxu0 0
    %393 = vmatprep.subr.bf16.mxu0 0
    %394 = vmatpush2.bf16.msra.mxu0 0
    %395 = vmatprep.subr.bf16.mxu0 0
    %396 = vmatpush2.bf16.msra.mxu0 0
    %397 = vmatprep.subr.bf16.mxu0 0
    %398 = vmatpush2.bf16.msra.mxu0 0
    %399 = vmatprep.subr.bf16.mxu0 0
    %400 = vmatpush2.bf16.msra.mxu0 0
    %401 = vmatprep.subr.bf16.mxu0 0
    %402 = vmatpush2.bf16.msra.mxu0 0
    %403 = vmatprep.subr.bf16.mxu0 0
    %404 = vmatpush2.bf16.msra.mxu0 0
    %405 = vmatprep.mubr.bf16.mxu0 0
    %406 = vmatmul.mubr.bf16.gmra.mxu0 %v234
    %v407 = vpop.f32.mrf.mxu0
    %v408 = vadd.f32 %v360, %v407
    %v409 = vpop.f32.mrf.mxu0
    %v410 = vpop.f32.mrf.mxu0
    %v411 = vadd.f32 %v360, %v410
    %v412 = vpop.f32.mrf.mxu0
    %413 = vmatprep.mubr.bf16.mxu0 0
    %414 = vmatmul.mubr.bf16.gmra.mxu0 %v237
    %v415 = vpop.f32.mrf.mxu0
    %v416 = vadd.f32 %v360, %v415
    %v417 = vpop.f32.mrf.mxu0
    %v418 = vpop.f32.mrf.mxu0
    %v419 = vadd.f32 %v360, %v418
    %v420 = vpop.f32.mrf.mxu0
    %421 = vdwg.mxu0
    %v422 = vmul.f32 %v288, %v97
    %v423 = vmul.f32 %v289, %v98
    %v424 = vmul.f32 %v290, %v99
    %v425 = vmul.f32 %v291, %v100
    %v426 = vmul.f32 %v288, %v101
    %v427 = vmul.f32 %v289, %v102
    %v428 = vmul.f32 %v290, %v103
    %v429 = vmul.f32 %v291, %v104
    %v430 = vmul.f32 %v288, %v105
    %v431 = vmul.f32 %v289, %v106
    %v432 = vmul.f32 %v290, %v107
    %v433 = vmul.f32 %v291, %v108
    %v434 = vmul.f32 %v288, %v109
    %v435 = vmul.f32 %v289, %v110
    %v436 = vmul.f32 %v290, %v111
    %v437 = vmul.f32 %v291, %v112
    %v438 = vmul.f32 %v288, %v113
    %v439 = vmul.f32 %v289, %v114
    %v440 = vmul.f32 %v290, %v115
    %v441 = vmul.f32 %v291, %v116
    %v442 = vmul.f32 %v288, %v117
    %v443 = vmul.f32 %v289, %v118
    %v444 = vmul.f32 %v290, %v119
    %v445 = vmul.f32 %v291, %v120
    %v446 = vmul.f32 %v288, %v121
    %v447 = vmul.f32 %v289, %v122
    %v448 = vmul.f32 %v290, %v123
    %v449 = vmul.f32 %v291, %v124
    %v450 = vmul.f32 %v288, %v125
    %v451 = vmul.f32 %v289, %v126
    %v452 = vmul.f32 %v290, %v127
    %v453 = vmul.f32 %v291, %v128
    %v454 = vpack.c.bf16 %v423, %v422
    %v455 = vpack.c.bf16 %v425, %v424
    %v456 = vpack.c.bf16 %v427, %v426
    %v457 = vpack.c.bf16 %v429, %v428
    %v458 = vpack.c.bf16 %v431, %v430
    %v459 = vpack.c.bf16 %v433, %v432
    %v460 = vpack.c.bf16 %v435, %v434
    %v461 = vpack.c.bf16 %v437, %v436
    %v462 = vpack.c.bf16 %v439, %v438
    %v463 = vpack.c.bf16 %v441, %v440
    %v464 = vpack.c.bf16 %v443, %v442
    %v465 = vpack.c.bf16 %v445, %v444
    %v466 = vpack.c.bf16 %v447, %v446
    %v467 = vpack.c.bf16 %v449, %v448
    %v468 = vpack.c.bf16 %v451, %v450
    %v469 = vpack.c.bf16 %v453, %v452
    %470 = vxpose.xlu0.b32.start [1/16] %v343, 128
    %471 = vxpose.xlu0.b32.cont [2/16] %v346, 128
    %472 = vxpose.xlu0.b32.cont [3/16] %v351, 128
    %473 = vxpose.xlu0.b32.cont [4/16] %v354, 128
    %474 = vxpose.xlu0.b32.cont [5/16] 0.0, 128
    %475 = vxpose.xlu0.b32.cont [6/16] 0.0, 128
    %476 = vxpose.xlu0.b32.cont [7/16] 0.0, 128
    %477 = vxpose.xlu0.b32.cont [8/16] 0.0, 128
    %478 = vxpose.xlu0.b32.cont [9/16] 0.0, 128
    %479 = vxpose.xlu0.b32.cont [10/16] 0.0, 128
    %480 = vxpose.xlu0.b32.cont [11/16] 0.0, 128
    %481 = vxpose.xlu0.b32.cont [12/16] 0.0, 128
    %482 = vxpose.xlu0.b32.cont [13/16] 0.0, 128
    %483 = vxpose.xlu0.b32.cont [14/16] 0.0, 128
    %484 = vxpose.xlu0.b32.cont [15/16] 0.0, 128
    %485 = vxpose.xlu0.b32.end [16/16] 0.0, 128
    %v486 = vpop.trf.xlu0
    %v487 = vpop.trf.xlu0
    %v488 = vpop.trf.xlu0
    %v489 = vpop.trf.xlu0
    %v490 = vpop.trf.xlu0
    %v491 = vpop.trf.xlu0
    %v492 = vpop.trf.xlu0
    %v493 = vpop.trf.xlu0
    %v494 = vpop.trf.xlu0
    %v495 = vpop.trf.xlu0
    %v496 = vpop.trf.xlu0
    %v497 = vpop.trf.xlu0
    %v498 = vpop.trf.xlu0
    %v499 = vpop.trf.xlu0
    %v500 = vpop.trf.xlu0
    %v501 = vpop.trf.xlu0
    %v502 = vpack.c.bf16 %v487, %v486
    %v503 = vpack.c.bf16 %v489, %v488
    %v505 = vsel %vm129, %v454, 0
    %v508 = vsel %vm129, %v455, 0
    %v511 = vsel %vm129, %v456, 0
    %v514 = vsel %vm129, %v457, 0
    %v517 = vsel %vm129, %v458, 0
    %v520 = vsel %vm129, %v459, 0
    %v523 = vsel %vm129, %v460, 0
    %v526 = vsel %vm129, %v461, 0
    %v529 = vsel %vm129, %v462, 0
    %v532 = vsel %vm129, %v463, 0
    %v535 = vsel %vm129, %v464, 0
    %v538 = vsel %vm129, %v465, 0
    %v541 = vsel %vm129, %v466, 0
    %v544 = vsel %vm129, %v467, 0
    %v547 = vsel %vm129, %v468, 0
    %v550 = vsel %vm129, %v469, 0
    %552 = vmatprep.subr.bf16.mxu0 0
    %553 = vmatpush1.bf16.msra.mxu0 0
    %554 = vmatprep.subr.bf16.mxu0 0
    %555 = vmatpush1.bf16.msra.mxu0 0
    %556 = vmatprep.subr.bf16.mxu0 0
    %557 = vmatpush1.bf16.msra.mxu0 0
    %558 = vmatprep.subr.bf16.mxu0 0
    %559 = vmatpush1.bf16.msra.mxu0 0
    %560 = vmatprep.subr.bf16.mxu0 0
    %561 = vmatpush1.bf16.msra.mxu0 0
    %562 = vmatprep.subr.bf16.mxu0 0
    %563 = vmatpush1.bf16.msra.mxu0 0
    %564 = vmatprep.subr.bf16.mxu0 0
    %565 = vmatpush1.bf16.msra.mxu0 %v503
    %566 = vmatprep.subr.bf16.mxu0 0
    %567 = vmatpush1.bf16.msra.mxu0 %v502
    %568 = vmatprep.subr.bf16.mxu0 0
    %569 = vmatpush2.bf16.msra.mxu0 0
    %570 = vmatprep.subr.bf16.mxu0 0
    %571 = vmatpush2.bf16.msra.mxu0 0
    %572 = vmatprep.subr.bf16.mxu0 0
    %573 = vmatpush2.bf16.msra.mxu0 0
    %574 = vmatprep.subr.bf16.mxu0 0
    %575 = vmatpush2.bf16.msra.mxu0 0
    %576 = vmatprep.subr.bf16.mxu0 0
    %577 = vmatpush2.bf16.msra.mxu0 0
    %578 = vmatprep.subr.bf16.mxu0 0
    %579 = vmatpush2.bf16.msra.mxu0 0
    %580 = vmatprep.subr.bf16.mxu0 0
    %581 = vmatpush2.bf16.msra.mxu0 0
    %582 = vmatprep.subr.bf16.mxu0 0
    %583 = vmatpush2.bf16.msra.mxu0 0
    %584 = vmatprep.mubr.bf16.mxu0 0
    %585 = vmatmul.mubr.bf16.gmra.mxu0 %v505
    %v586 = vpop.f32.mrf.mxu0
    %v587 = vadd.f32 %v64, %v586
    %v588 = vpop.f32.mrf.mxu0
    %v589 = vpop.f32.mrf.mxu0
    %v590 = vadd.f32 %v65, %v589
    %v591 = vpop.f32.mrf.mxu0
    %592 = vmatprep.mubr.bf16.mxu0 0
    %593 = vmatmul.mubr.bf16.gmra.mxu0 %v508
    %v594 = vpop.f32.mrf.mxu0
    %v595 = vadd.f32 %v66, %v594
    %v596 = vpop.f32.mrf.mxu0
    %v597 = vpop.f32.mrf.mxu0
    %v598 = vadd.f32 %v67, %v597
    %v599 = vpop.f32.mrf.mxu0
    %600 = vmatprep.mubr.bf16.mxu0 0
    %601 = vmatmul.mubr.bf16.gmra.mxu0 %v511
    %v602 = vpop.f32.mrf.mxu0
    %v603 = vadd.f32 %v68, %v602
    %v604 = vpop.f32.mrf.mxu0
    %v605 = vpop.f32.mrf.mxu0
    %v606 = vadd.f32 %v69, %v605
    %v607 = vpop.f32.mrf.mxu0
    %608 = vmatprep.mubr.bf16.mxu0 0
    %609 = vmatmul.mubr.bf16.gmra.mxu0 %v514
    %v610 = vpop.f32.mrf.mxu0
    %v611 = vadd.f32 %v70, %v610
    %v612 = vpop.f32.mrf.mxu0
    %v613 = vpop.f32.mrf.mxu0
    %v614 = vadd.f32 %v71, %v613
    %v615 = vpop.f32.mrf.mxu0
    %616 = vmatprep.mubr.bf16.mxu0 0
    %617 = vmatmul.mubr.bf16.gmra.mxu0 %v517
    %v618 = vpop.f32.mrf.mxu0
    %v619 = vadd.f32 %v72, %v618
    %v620 = vpop.f32.mrf.mxu0
    %v621 = vpop.f32.mrf.mxu0
    %v622 = vadd.f32 %v73, %v621
    %v623 = vpop.f32.mrf.mxu0
    %624 = vmatprep.mubr.bf16.mxu0 0
    %625 = vmatmul.mubr.bf16.gmra.mxu0 %v520
    %v626 = vpop.f32.mrf.mxu0
    %v627 = vadd.f32 %v74, %v626
    %v628 = vpop.f32.mrf.mxu0
    %v629 = vpop.f32.mrf.mxu0
    %v630 = vadd.f32 %v75, %v629
    %v631 = vpop.f32.mrf.mxu0
    %632 = vmatprep.mubr.bf16.mxu0 0
    %633 = vmatmul.mubr.bf16.gmra.mxu0 %v523
    %v634 = vpop.f32.mrf.mxu0
    %v635 = vadd.f32 %v76, %v634
    %v636 = vpop.f32.mrf.mxu0
    %v637 = vpop.f32.mrf.mxu0
    %v638 = vadd.f32 %v77, %v637
    %v639 = vpop.f32.mrf.mxu0
    %640 = vmatprep.mubr.bf16.mxu0 0
    %641 = vmatmul.mubr.bf16.gmra.mxu0 %v526
    %v642 = vpop.f32.mrf.mxu0
    %v643 = vadd.f32 %v78, %v642
    %v644 = vpop.f32.mrf.mxu0
    %v645 = vpop.f32.mrf.mxu0
    %v646 = vadd.f32 %v79, %v645
    %v647 = vpop.f32.mrf.mxu0
    %648 = vmatprep.mubr.bf16.mxu0 0
    %649 = vmatmul.mubr.bf16.gmra.mxu0 %v529
    %v650 = vpop.f32.mrf.mxu0
    %v651 = vadd.f32 %v80, %v650
    %v652 = vpop.f32.mrf.mxu0
    %v653 = vpop.f32.mrf.mxu0
    %v654 = vadd.f32 %v81, %v653
    %v655 = vpop.f32.mrf.mxu0
    %656 = vmatprep.mubr.bf16.mxu0 0
    %657 = vmatmul.mubr.bf16.gmra.mxu0 %v532
    %v658 = vpop.f32.mrf.mxu0
    %v659 = vadd.f32 %v82, %v658
    %v660 = vpop.f32.mrf.mxu0
    %v661 = vpop.f32.mrf.mxu0
    %v662 = vadd.f32 %v83, %v661
    %v663 = vpop.f32.mrf.mxu0
    %664 = vmatprep.mubr.bf16.mxu0 0
    %665 = vmatmul.mubr.bf16.gmra.mxu0 %v535
    %v666 = vpop.f32.mrf.mxu0
    %v667 = vadd.f32 %v84, %v666
    %v668 = vpop.f32.mrf.mxu0
    %v669 = vpop.f32.mrf.mxu0
    %v670 = vadd.f32 %v85, %v669
    %v671 = vpop.f32.mrf.mxu0
    %672 = vmatprep.mubr.bf16.mxu0 0
    %673 = vmatmul.mubr.bf16.gmra.mxu0 %v538
    %v674 = vpop.f32.mrf.mxu0
    %v675 = vadd.f32 %v86, %v674
    %v676 = vpop.f32.mrf.mxu0
    %v677 = vpop.f32.mrf.mxu0
    %v678 = vadd.f32 %v87, %v677
    %v679 = vpop.f32.mrf.mxu0
    %680 = vmatprep.mubr.bf16.mxu0 0
    %681 = vmatmul.mubr.bf16.gmra.mxu0 %v541
    %v682 = vpop.f32.mrf.mxu0
    %v683 = vadd.f32 %v88, %v682
    %v684 = vpop.f32.mrf.mxu0
    %v685 = vpop.f32.mrf.mxu0
    %v686 = vadd.f32 %v89, %v685
    %v687 = vpop.f32.mrf.mxu0
    %688 = vmatprep.mubr.bf16.mxu0 0
    %689 = vmatmul.mubr.bf16.gmra.mxu0 %v544
    %v690 = vpop.f32.mrf.mxu0
    %v691 = vadd.f32 %v90, %v690
    %v692 = vpop.f32.mrf.mxu0
    %v693 = vpop.f32.mrf.mxu0
    %v694 = vadd.f32 %v91, %v693
    %v695 = vpop.f32.mrf.mxu0
    %696 = vmatprep.mubr.bf16.mxu0 0
    %697 = vmatmul.mubr.bf16.gmra.mxu0 %v547
    %v698 = vpop.f32.mrf.mxu0
    %v699 = vadd.f32 %v92, %v698
    %v700 = vpop.f32.mrf.mxu0
    %v701 = vpop.f32.mrf.mxu0
    %v702 = vadd.f32 %v93, %v701
    %v703 = vpop.f32.mrf.mxu0
    %704 = vmatprep.mubr.bf16.mxu0 0
    %705 = vmatmul.mubr.bf16.gmra.mxu0 %v550
    %v706 = vpop.f32.mrf.mxu0
    %v707 = vadd.f32 %v94, %v706
    %v708 = vpop.f32.mrf.mxu0
    %v709 = vpop.f32.mrf.mxu0
    %v710 = vadd.f32 %v95, %v709
    %v711 = vpop.f32.mrf.mxu0
    %712 = vdwg.mxu0
    %v713 = vsel %vm129, %v587, -inf
    %714 = vmax.xlane.f32.xlu0 %v713
    %v715 = vpop.xlane.xlu0 %714
    %v716 = vsel %vm129, %v590, -inf
    %717 = vmax.xlane.f32.xlu0 %v716
    %v718 = vpop.xlane.xlu0 %717
    %v719 = vsel %vm129, %v595, -inf
    %720 = vmax.xlane.f32.xlu0 %v719
    %v721 = vpop.xlane.xlu0 %720
    %v722 = vsel %vm129, %v598, -inf
    %723 = vmax.xlane.f32.xlu0 %v722
    %v724 = vpop.xlane.xlu0 %723
    %v725 = vsel %vm129, %v603, -inf
    %726 = vmax.xlane.f32.xlu0 %v725
    %v727 = vpop.xlane.xlu0 %726
    %v728 = vsel %vm129, %v606, -inf
    %729 = vmax.xlane.f32.xlu0 %v728
    %v730 = vpop.xlane.xlu0 %729
    %v731 = vsel %vm129, %v611, -inf
    %732 = vmax.xlane.f32.xlu0 %v731
    %v733 = vpop.xlane.xlu0 %732
    %v734 = vsel %vm129, %v614, -inf
    %735 = vmax.xlane.f32.xlu0 %v734
    %v736 = vpop.xlane.xlu0 %735
    %v737 = vsel %vm129, %v619, -inf
    %738 = vmax.xlane.f32.xlu0 %v737
    %v739 = vpop.xlane.xlu0 %738
    %v740 = vsel %vm129, %v622, -inf
    %741 = vmax.xlane.f32.xlu0 %v740
    %v742 = vpop.xlane.xlu0 %741
    %v743 = vsel %vm129, %v627, -inf
    %744 = vmax.xlane.f32.xlu0 %v743
    %v745 = vpop.xlane.xlu0 %744
    %v746 = vsel %vm129, %v630, -inf
    %747 = vmax.xlane.f32.xlu0 %v746
    %v748 = vpop.xlane.xlu0 %747
    %v749 = vsel %vm129, %v635, -inf
    %750 = vmax.xlane.f32.xlu0 %v749
    %v751 = vpop.xlane.xlu0 %750
    %v752 = vsel %vm129, %v638, -inf
    %753 = vmax.xlane.f32.xlu0 %v752
    %v754 = vpop.xlane.xlu0 %753
    %v755 = vsel %vm129, %v643, -inf
    %756 = vmax.xlane.f32.xlu0 %v755
    %v757 = vpop.xlane.xlu0 %756
    %v758 = vsel %vm129, %v646, -inf
    %759 = vmax.xlane.f32.xlu0 %v758
    %v760 = vpop.xlane.xlu0 %759
    %v761 = vsel %vm129, %v651, -inf
    %762 = vmax.xlane.f32.xlu0 %v761
    %v763 = vpop.xlane.xlu0 %762
    %v764 = vsel %vm129, %v654, -inf
    %765 = vmax.xlane.f32.xlu0 %v764
    %v766 = vpop.xlane.xlu0 %765
    %v767 = vsel %vm129, %v659, -inf
    %768 = vmax.xlane.f32.xlu0 %v767
    %v769 = vpop.xlane.xlu0 %768
    %v770 = vsel %vm129, %v662, -inf
    %771 = vmax.xlane.f32.xlu0 %v770
    %v772 = vpop.xlane.xlu0 %771
    %v773 = vsel %vm129, %v667, -inf
    %774 = vmax.xlane.f32.xlu0 %v773
    %v775 = vpop.xlane.xlu0 %774
    %v776 = vsel %vm129, %v670, -inf
    %777 = vmax.xlane.f32.xlu0 %v776
    %v778 = vpop.xlane.xlu0 %777
    %v779 = vsel %vm129, %v675, -inf
    %780 = vmax.xlane.f32.xlu0 %v779
    %v781 = vpop.xlane.xlu0 %780
    %v782 = vsel %vm129, %v678, -inf
    %783 = vmax.xlane.f32.xlu0 %v782
    %v784 = vpop.xlane.xlu0 %783
    %v785 = vsel %vm129, %v683, -inf
    %786 = vmax.xlane.f32.xlu0 %v785
    %v787 = vpop.xlane.xlu0 %786
    %v788 = vsel %vm129, %v686, -inf
    %789 = vmax.xlane.f32.xlu0 %v788
    %v790 = vpop.xlane.xlu0 %789
    %v791 = vsel %vm129, %v691, -inf
    %792 = vmax.xlane.f32.xlu0 %v791
    %v793 = vpop.xlane.xlu0 %792
    %v794 = vsel %vm129, %v694, -inf
    %795 = vmax.xlane.f32.xlu0 %v794
    %v796 = vpop.xlane.xlu0 %795
    %v797 = vsel %vm129, %v699, -inf
    %798 = vmax.xlane.f32.xlu0 %v797
    %v799 = vpop.xlane.xlu0 %798
    %v800 = vsel %vm129, %v702, -inf
    %801 = vmax.xlane.f32.xlu0 %v800
    %v802 = vpop.xlane.xlu0 %801
    %v803 = vsel %vm129, %v707, -inf
    %804 = vmax.xlane.f32.xlu0 %v803
    %v805 = vpop.xlane.xlu0 %804
    %v806 = vsel %vm129, %v710, -inf
    %807 = vmax.xlane.f32.xlu0 %v806
    %v808 = vpop.xlane.xlu0 %807
    %v809 = vsub.f32 %v587, %v715
    %v810 = vsub.f32 %v590, %v718
    %v811 = vsub.f32 %v595, %v721
    %v812 = vsub.f32 %v598, %v724
    %v813 = vsub.f32 %v603, %v727
    %v814 = vsub.f32 %v606, %v730
    %v815 = vsub.f32 %v611, %v733
    %v816 = vsub.f32 %v614, %v736
    %v817 = vsub.f32 %v619, %v739
    %v818 = vsub.f32 %v622, %v742
    %v819 = vsub.f32 %v627, %v745
    %v820 = vsub.f32 %v630, %v748
    %v821 = vsub.f32 %v635, %v751
    %v822 = vsub.f32 %v638, %v754
    %v823 = vsub.f32 %v643, %v757
    %v824 = vsub.f32 %v646, %v760
    %v825 = vsub.f32 %v651, %v763
    %v826 = vsub.f32 %v654, %v766
    %v827 = vsub.f32 %v659, %v769
    %v828 = vsub.f32 %v662, %v772
    %v829 = vsub.f32 %v667, %v775
    %v830 = vsub.f32 %v670, %v778
    %v831 = vsub.f32 %v675, %v781
    %v832 = vsub.f32 %v678, %v784
    %v833 = vsub.f32 %v683, %v787
    %v834 = vsub.f32 %v686, %v790
    %v835 = vsub.f32 %v691, %v793
    %v836 = vsub.f32 %v694, %v796
    %v837 = vsub.f32 %v699, %v799
    %v838 = vsub.f32 %v702, %v802
    %v839 = vsub.f32 %v707, %v805
    %v840 = vsub.f32 %v710, %v808
    %v841 = vmul.f32 %v809, 1.442695
    %v842 = vpow.pop %v841
    %v843 = vmul.f32 %v810, 1.442695
    %v844 = vpow.pop %v843
    %v845 = vmul.f32 %v811, 1.442695
    %v846 = vpow.pop %v845
    %v847 = vmul.f32 %v812, 1.442695
    %v848 = vpow.pop %v847
    %v849 = vmul.f32 %v813, 1.442695
    %v850 = vpow.pop %v849
    %v851 = vmul.f32 %v814, 1.442695
    %v852 = vpow.pop %v851
    %v853 = vmul.f32 %v815, 1.442695
    %v854 = vpow.pop %v853
    %v855 = vmul.f32 %v816, 1.442695
    %v856 = vpow.pop %v855
    %v857 = vmul.f32 %v817, 1.442695
    %v858 = vpow.pop %v857
    %v859 = vmul.f32 %v818, 1.442695
    %v860 = vpow.pop %v859
    %v861 = vmul.f32 %v819, 1.442695
    %v862 = vpow.pop %v861
    %v863 = vmul.f32 %v820, 1.442695
    %v864 = vpow.pop %v863
    %v865 = vmul.f32 %v821, 1.442695
    %v866 = vpow.pop %v865
    %v867 = vmul.f32 %v822, 1.442695
    %v868 = vpow.pop %v867
    %v869 = vmul.f32 %v823, 1.442695
    %v870 = vpow.pop %v869
    %v871 = vmul.f32 %v824, 1.442695
    %v872 = vpow.pop %v871
    %v873 = vmul.f32 %v825, 1.442695
    %v874 = vpow.pop %v873
    %v875 = vmul.f32 %v826, 1.442695
    %v876 = vpow.pop %v875
    %v877 = vmul.f32 %v827, 1.442695
    %v878 = vpow.pop %v877
    %v879 = vmul.f32 %v828, 1.442695
    %v880 = vpow.pop %v879
    %v881 = vmul.f32 %v829, 1.442695
    %v882 = vpow.pop %v881
    %v883 = vmul.f32 %v830, 1.442695
    %v884 = vpow.pop %v883
    %v885 = vmul.f32 %v831, 1.442695
    %v886 = vpow.pop %v885
    %v887 = vmul.f32 %v832, 1.442695
    %v888 = vpow.pop %v887
    %v889 = vmul.f32 %v833, 1.442695
    %v890 = vpow.pop %v889
    %v891 = vmul.f32 %v834, 1.442695
    %v892 = vpow.pop %v891
    %v893 = vmul.f32 %v835, 1.442695
    %v894 = vpow.pop %v893
    %v895 = vmul.f32 %v836, 1.442695
    %v896 = vpow.pop %v895
    %v897 = vmul.f32 %v837, 1.442695
    %v898 = vpow.pop %v897
    %v899 = vmul.f32 %v838, 1.442695
    %v900 = vpow.pop %v899
    %v901 = vmul.f32 %v839, 1.442695
    %v902 = vpow.pop %v901
    %v903 = vmul.f32 %v840, 1.442695
    %v904 = vpow.pop %v903
    %v905 = vsel %vm129, %v842, 0.0
    %906 = vadd.xlane.f32.xlu0 %v905
    %v907 = vpop.xlane.xlu0 %906
    %v908 = vsel %vm129, %v844, 0.0
    %909 = vadd.xlane.f32.xlu0 %v908
    %v910 = vpop.xlane.xlu0 %909
    %v911 = vsel %vm129, %v846, 0.0
    %912 = vadd.xlane.f32.xlu0 %v911
    %v913 = vpop.xlane.xlu0 %912
    %v914 = vsel %vm129, %v848, 0.0
    %915 = vadd.xlane.f32.xlu0 %v914
    %v916 = vpop.xlane.xlu0 %915
    %v917 = vsel %vm129, %v850, 0.0
    %918 = vadd.xlane.f32.xlu0 %v917
    %v919 = vpop.xlane.xlu0 %918
    %v920 = vsel %vm129, %v852, 0.0
    %921 = vadd.xlane.f32.xlu0 %v920
    %v922 = vpop.xlane.xlu0 %921
    %v923 = vsel %vm129, %v854, 0.0
    %924 = vadd.xlane.f32.xlu0 %v923
    %v925 = vpop.xlane.xlu0 %924
    %v926 = vsel %vm129, %v856, 0.0
    %927 = vadd.xlane.f32.xlu0 %v926
    %v928 = vpop.xlane.xlu0 %927
    %v929 = vsel %vm129, %v858, 0.0
    %930 = vadd.xlane.f32.xlu0 %v929
    %v931 = vpop.xlane.xlu0 %930
    %v932 = vsel %vm129, %v860, 0.0
    %933 = vadd.xlane.f32.xlu0 %v932
    %v934 = vpop.xlane.xlu0 %933
    %v935 = vsel %vm129, %v862, 0.0
    %936 = vadd.xlane.f32.xlu0 %v935
    %v937 = vpop.xlane.xlu0 %936
    %v938 = vsel %vm129, %v864, 0.0
    %939 = vadd.xlane.f32.xlu0 %v938
    %v940 = vpop.xlane.xlu0 %939
    %v941 = vsel %vm129, %v866, 0.0
    %942 = vadd.xlane.f32.xlu0 %v941
    %v943 = vpop.xlane.xlu0 %942
    %v944 = vsel %vm129, %v868, 0.0
    %945 = vadd.xlane.f32.xlu0 %v944
    %v946 = vpop.xlane.xlu0 %945
    %v947 = vsel %vm129, %v870, 0.0
    %948 = vadd.xlane.f32.xlu0 %v947
    %v949 = vpop.xlane.xlu0 %948
    %v950 = vsel %vm129, %v872, 0.0
    %951 = vadd.xlane.f32.xlu0 %v950
    %v952 = vpop.xlane.xlu0 %951
    %v953 = vsel %vm129, %v874, 0.0
    %954 = vadd.xlane.f32.xlu0 %v953
    %v955 = vpop.xlane.xlu0 %954
    %v956 = vsel %vm129, %v876, 0.0
    %957 = vadd.xlane.f32.xlu0 %v956
    %v958 = vpop.xlane.xlu0 %957
    %v959 = vsel %vm129, %v878, 0.0
    %960 = vadd.xlane.f32.xlu0 %v959
    %v961 = vpop.xlane.xlu0 %960
    %v962 = vsel %vm129, %v880, 0.0
    %963 = vadd.xlane.f32.xlu0 %v962
    %v964 = vpop.xlane.xlu0 %963
    %v965 = vsel %vm129, %v882, 0.0
    %966 = vadd.xlane.f32.xlu0 %v965
    %v967 = vpop.xlane.xlu0 %966
    %v968 = vsel %vm129, %v884, 0.0
    %969 = vadd.xlane.f32.xlu0 %v968
    %v970 = vpop.xlane.xlu0 %969
    %v971 = vsel %vm129, %v886, 0.0
    %972 = vadd.xlane.f32.xlu0 %v971
    %v973 = vpop.xlane.xlu0 %972
    %v974 = vsel %vm129, %v888, 0.0
    %975 = vadd.xlane.f32.xlu0 %v974
    %v976 = vpop.xlane.xlu0 %975
    %v977 = vsel %vm129, %v890, 0.0
    %978 = vadd.xlane.f32.xlu0 %v977
    %v979 = vpop.xlane.xlu0 %978
    %v980 = vsel %vm129, %v892, 0.0
    %981 = vadd.xlane.f32.xlu0 %v980
    %v982 = vpop.xlane.xlu0 %981
    %v983 = vsel %vm129, %v894, 0.0
    %984 = vadd.xlane.f32.xlu0 %v983
    %v985 = vpop.xlane.xlu0 %984
    %v986 = vsel %vm129, %v896, 0.0
    %987 = vadd.xlane.f32.xlu0 %v986
    %v988 = vpop.xlane.xlu0 %987
    %v989 = vsel %vm129, %v898, 0.0
    %990 = vadd.xlane.f32.xlu0 %v989
    %v991 = vpop.xlane.xlu0 %990
    %v992 = vsel %vm129, %v900, 0.0
    %993 = vadd.xlane.f32.xlu0 %v992
    %v994 = vpop.xlane.xlu0 %993
    %v995 = vsel %vm129, %v902, 0.0
    %996 = vadd.xlane.f32.xlu0 %v995
    %v997 = vpop.xlane.xlu0 %996
    %v998 = vsel %vm129, %v904, 0.0
    %999 = vadd.xlane.f32.xlu0 %v998
    %v1000 = vpop.xlane.xlu0 %999
    %v1001 = vrcp.pop %v907
    %v1002 = vrcp.pop %v910
    %v1003 = vrcp.pop %v913
    %v1004 = vrcp.pop %v916
    %v1005 = vrcp.pop %v919
    %v1006 = vrcp.pop %v922
    %v1007 = vrcp.pop %v925
    %v1008 = vrcp.pop %v928
    %v1009 = vrcp.pop %v931
    %v1010 = vrcp.pop %v934
    %v1011 = vrcp.pop %v937
    %v1012 = vrcp.pop %v940
    %v1013 = vrcp.pop %v943
    %v1014 = vrcp.pop %v946
    %v1015 = vrcp.pop %v949
    %v1016 = vrcp.pop %v952
    %v1017 = vrcp.pop %v955
    %v1018 = vrcp.pop %v958
    %v1019 = vrcp.pop %v961
    %v1020 = vrcp.pop %v964
    %v1021 = vrcp.pop %v967
    %v1022 = vrcp.pop %v970
    %v1023 = vrcp.pop %v973
    %v1024 = vrcp.pop %v976
    %v1025 = vrcp.pop %v979
    %v1026 = vrcp.pop %v982
    %v1027 = vrcp.pop %v985
    %v1028 = vrcp.pop %v988
    %v1029 = vrcp.pop %v991
    %v1030 = vrcp.pop %v994
    %v1031 = vrcp.pop %v997
    %v1032 = vrcp.pop %v1000
    %v1033 = vmul.f32 %v842, %v1001
    %v1034 = vmul.f32 %v844, %v1002
    %v1035 = vmul.f32 %v846, %v1003
    %v1036 = vmul.f32 %v848, %v1004
    %v1037 = vmul.f32 %v850, %v1005
    %v1038 = vmul.f32 %v852, %v1006
    %v1039 = vmul.f32 %v854, %v1007
    %v1040 = vmul.f32 %v856, %v1008
    %v1041 = vmul.f32 %v858, %v1009
    %v1042 = vmul.f32 %v860, %v1010
    %v1043 = vmul.f32 %v862, %v1011
    %v1044 = vmul.f32 %v864, %v1012
    %v1045 = vmul.f32 %v866, %v1013
    %v1046 = vmul.f32 %v868, %v1014
    %v1047 = vmul.f32 %v870, %v1015
    %v1048 = vmul.f32 %v872, %v1016
    %v1049 = vmul.f32 %v874, %v1017
    %v1050 = vmul.f32 %v876, %v1018
    %v1051 = vmul.f32 %v878, %v1019
    %v1052 = vmul.f32 %v880, %v1020
    %v1053 = vmul.f32 %v882, %v1021
    %v1054 = vmul.f32 %v884, %v1022
    %v1055 = vmul.f32 %v886, %v1023
    %v1056 = vmul.f32 %v888, %v1024
    %v1057 = vmul.f32 %v890, %v1025
    %v1058 = vmul.f32 %v892, %v1026
    %v1059 = vmul.f32 %v894, %v1027
    %v1060 = vmul.f32 %v896, %v1028
    %v1061 = vmul.f32 %v898, %v1029
    %v1062 = vmul.f32 %v900, %v1030
    %v1063 = vmul.f32 %v902, %v1031
    %v1064 = vmul.f32 %v904, %v1032
    %v1065 = vpack.c.bf16 %v1034, %v1033
    %v1066 = vpack.c.bf16 %v1036, %v1035
    %v1067 = vpack.c.bf16 %v1038, %v1037
    %v1068 = vpack.c.bf16 %v1040, %v1039
    %v1069 = vpack.c.bf16 %v1042, %v1041
    %v1070 = vpack.c.bf16 %v1044, %v1043
    %v1071 = vpack.c.bf16 %v1046, %v1045
    %v1072 = vpack.c.bf16 %v1048, %v1047
    %v1073 = vpack.c.bf16 %v1050, %v1049
    %v1074 = vpack.c.bf16 %v1052, %v1051
    %v1075 = vpack.c.bf16 %v1054, %v1053
    %v1076 = vpack.c.bf16 %v1056, %v1055
    %v1077 = vpack.c.bf16 %v1058, %v1057
    %v1078 = vpack.c.bf16 %v1060, %v1059
    %v1079 = vpack.c.bf16 %v1062, %v1061
    %v1080 = vpack.c.bf16 %v1064, %v1063
    %v1081 = vpack.c.bf16 %v411, %v408
    %v1082 = vpack.c.bf16 %v419, %v416
    %v1084 = vsel %vm129, %v1065, 0
    %v1087 = vsel %vm129, %v1066, 0
    %v1090 = vsel %vm129, %v1067, 0
    %v1093 = vsel %vm129, %v1068, 0
    %v1096 = vsel %vm129, %v1069, 0
    %v1099 = vsel %vm129, %v1070, 0
    %v1102 = vsel %vm129, %v1071, 0
    %v1105 = vsel %vm129, %v1072, 0
    %v1108 = vsel %vm129, %v1073, 0
    %v1111 = vsel %vm129, %v1074, 0
    %v1114 = vsel %vm129, %v1075, 0
    %v1117 = vsel %vm129, %v1076, 0
    %v1120 = vsel %vm129, %v1077, 0
    %v1123 = vsel %vm129, %v1078, 0
    %v1126 = vsel %vm129, %v1079, 0
    %v1129 = vsel %vm129, %v1080, 0
    %1131 = vmatprep.subr.bf16.mxu0 0
    %1132 = vmatpush1.bf16.msra.mxu0 0
    %1133 = vmatprep.subr.bf16.mxu0 0
    %1134 = vmatpush1.bf16.msra.mxu0 0
    %1135 = vmatprep.subr.bf16.mxu0 0
    %1136 = vmatpush1.bf16.msra.mxu0 0
    %1137 = vmatprep.subr.bf16.mxu0 0
    %1138 = vmatpush1.bf16.msra.mxu0 0
    %1139 = vmatprep.subr.bf16.mxu0 0
    %1140 = vmatpush1.bf16.msra.mxu0 0
    %1141 = vmatprep.subr.bf16.mxu0 0
    %1142 = vmatpush1.bf16.msra.mxu0 0
    %1143 = vmatprep.subr.bf16.mxu0 0
    %1144 = vmatpush1.bf16.msra.mxu0 %v1082
    %1145 = vmatprep.subr.bf16.mxu0 0
    %1146 = vmatpush1.bf16.msra.mxu0 %v1081
    %1147 = vmatprep.subr.bf16.mxu0 0
    %1148 = vmatpush2.bf16.msra.mxu0 0
    %1149 = vmatprep.subr.bf16.mxu0 0
    %1150 = vmatpush2.bf16.msra.mxu0 0
    %1151 = vmatprep.subr.bf16.mxu0 0
    %1152 = vmatpush2.bf16.msra.mxu0 0
    %1153 = vmatprep.subr.bf16.mxu0 0
    %1154 = vmatpush2.bf16.msra.mxu0 0
    %1155 = vmatprep.subr.bf16.mxu0 0
    %1156 = vmatpush2.bf16.msra.mxu0 0
    %1157 = vmatprep.subr.bf16.mxu0 0
    %1158 = vmatpush2.bf16.msra.mxu0 0
    %1159 = vmatprep.subr.bf16.mxu0 0
    %1160 = vmatpush2.bf16.msra.mxu0 0
    %1161 = vmatprep.subr.bf16.mxu0 0
    %1162 = vmatpush2.bf16.msra.mxu0 0
    %1163 = vmatprep.mubr.bf16.mxu0 0
    %1164 = vmatmul.mubr.bf16.gmra.mxu0 %v1084
    %v1165 = vpop.f32.mrf.mxu0
    %v1166 = vadd.f32 0.0, %v1165
    %v1167 = vpop.f32.mrf.mxu0
    %v1168 = vpop.f32.mrf.mxu0
    %v1169 = vadd.f32 0.0, %v1168
    %v1170 = vpop.f32.mrf.mxu0
    %1171 = vmatprep.mubr.bf16.mxu0 0
    %1172 = vmatmul.mubr.bf16.gmra.mxu0 %v1087
    %v1173 = vpop.f32.mrf.mxu0
    %v1174 = vadd.f32 0.0, %v1173
    %v1175 = vpop.f32.mrf.mxu0
    %v1176 = vpop.f32.mrf.mxu0
    %v1177 = vadd.f32 0.0, %v1176
    %v1178 = vpop.f32.mrf.mxu0
    %1179 = vmatprep.mubr.bf16.mxu0 0
    %1180 = vmatmul.mubr.bf16.gmra.mxu0 %v1090
    %v1181 = vpop.f32.mrf.mxu0
    %v1182 = vadd.f32 0.0, %v1181
    %v1183 = vpop.f32.mrf.mxu0
    %v1184 = vpop.f32.mrf.mxu0
    %v1185 = vadd.f32 0.0, %v1184
    %v1186 = vpop.f32.mrf.mxu0
    %1187 = vmatprep.mubr.bf16.mxu0 0
    %1188 = vmatmul.mubr.bf16.gmra.mxu0 %v1093
    %v1189 = vpop.f32.mrf.mxu0
    %v1190 = vadd.f32 0.0, %v1189
    %v1191 = vpop.f32.mrf.mxu0
    %v1192 = vpop.f32.mrf.mxu0
    %v1193 = vadd.f32 0.0, %v1192
    %v1194 = vpop.f32.mrf.mxu0
    %1195 = vmatprep.mubr.bf16.mxu0 0
    %1196 = vmatmul.mubr.bf16.gmra.mxu0 %v1096
    %v1197 = vpop.f32.mrf.mxu0
    %v1198 = vadd.f32 0.0, %v1197
    %v1199 = vpop.f32.mrf.mxu0
    %v1200 = vpop.f32.mrf.mxu0
    %v1201 = vadd.f32 0.0, %v1200
    %v1202 = vpop.f32.mrf.mxu0
    %1203 = vmatprep.mubr.bf16.mxu0 0
    %1204 = vmatmul.mubr.bf16.gmra.mxu0 %v1099
    %v1205 = vpop.f32.mrf.mxu0
    %v1206 = vadd.f32 0.0, %v1205
    %v1207 = vpop.f32.mrf.mxu0
    %v1208 = vpop.f32.mrf.mxu0
    %v1209 = vadd.f32 0.0, %v1208
    %v1210 = vpop.f32.mrf.mxu0
    %1211 = vmatprep.mubr.bf16.mxu0 0
    %1212 = vmatmul.mubr.bf16.gmra.mxu0 %v1102
    %v1213 = vpop.f32.mrf.mxu0
    %v1214 = vadd.f32 0.0, %v1213
    %v1215 = vpop.f32.mrf.mxu0
    %v1216 = vpop.f32.mrf.mxu0
    %v1217 = vadd.f32 0.0, %v1216
    %v1218 = vpop.f32.mrf.mxu0
    %1219 = vmatprep.mubr.bf16.mxu0 0
    %1220 = vmatmul.mubr.bf16.gmra.mxu0 %v1105
    %v1221 = vpop.f32.mrf.mxu0
    %v1222 = vadd.f32 0.0, %v1221
    %v1223 = vpop.f32.mrf.mxu0
    %v1224 = vpop.f32.mrf.mxu0
    %v1225 = vadd.f32 0.0, %v1224
    %v1226 = vpop.f32.mrf.mxu0
    %1227 = vmatprep.mubr.bf16.mxu0 0
    %1228 = vmatmul.mubr.bf16.gmra.mxu0 %v1108
    %v1229 = vpop.f32.mrf.mxu0
    %v1230 = vadd.f32 0.0, %v1229
    %v1231 = vpop.f32.mrf.mxu0
    %v1232 = vpop.f32.mrf.mxu0
    %v1233 = vadd.f32 0.0, %v1232
    %v1234 = vpop.f32.mrf.mxu0
    %1235 = vmatprep.mubr.bf16.mxu0 0
    %1236 = vmatmul.mubr.bf16.gmra.mxu0 %v1111
    %v1237 = vpop.f32.mrf.mxu0
    %v1238 = vadd.f32 0.0, %v1237
    %v1239 = vpop.f32.mrf.mxu0
    %v1240 = vpop.f32.mrf.mxu0
    %v1241 = vadd.f32 0.0, %v1240
    %v1242 = vpop.f32.mrf.mxu0
    %1243 = vmatprep.mubr.bf16.mxu0 0
    %1244 = vmatmul.mubr.bf16.gmra.mxu0 %v1114
    %v1245 = vpop.f32.mrf.mxu0
    %v1246 = vadd.f32 0.0, %v1245
    %v1247 = vpop.f32.mrf.mxu0
    %v1248 = vpop.f32.mrf.mxu0
    %v1249 = vadd.f32 0.0, %v1248
    %v1250 = vpop.f32.mrf.mxu0
    %1251 = vmatprep.mubr.bf16.mxu0 0
    %1252 = vmatmul.mubr.bf16.gmra.mxu0 %v1117
    %v1253 = vpop.f32.mrf.mxu0
    %v1254 = vadd.f32 0.0, %v1253
    %v1255 = vpop.f32.mrf.mxu0
    %v1256 = vpop.f32.mrf.mxu0
    %v1257 = vadd.f32 0.0, %v1256
    %v1258 = vpop.f32.mrf.mxu0
    %1259 = vmatprep.mubr.bf16.mxu0 0
    %1260 = vmatmul.mubr.bf16.gmra.mxu0 %v1120
    %v1261 = vpop.f32.mrf.mxu0
    %v1262 = vadd.f32 0.0, %v1261
    %v1263 = vpop.f32.mrf.mxu0
    %v1264 = vpop.f32.mrf.mxu0
    %v1265 = vadd.f32 0.0, %v1264
    %v1266 = vpop.f32.mrf.mxu0
    %1267 = vmatprep.mubr.bf16.mxu0 0
    %1268 = vmatmul.mubr.bf16.gmra.mxu0 %v1123
    %v1269 = vpop.f32.mrf.mxu0
    %v1270 = vadd.f32 0.0, %v1269
    %v1271 = vpop.f32.mrf.mxu0
    %v1272 = vpop.f32.mrf.mxu0
    %v1273 = vadd.f32 0.0, %v1272
    %v1274 = vpop.f32.mrf.mxu0
    %1275 = vmatprep.mubr.bf16.mxu0 0
    %1276 = vmatmul.mubr.bf16.gmra.mxu0 %v1126
    %v1277 = vpop.f32.mrf.mxu0
    %v1278 = vadd.f32 0.0, %v1277
    %v1279 = vpop.f32.mrf.mxu0
    %v1280 = vpop.f32.mrf.mxu0
    %v1281 = vadd.f32 0.0, %v1280
    %v1282 = vpop.f32.mrf.mxu0
    %1283 = vmatprep.mubr.bf16.mxu0 0
    %1284 = vmatmul.mubr.bf16.gmra.mxu0 %v1129
    %v1285 = vpop.f32.mrf.mxu0
    %v1286 = vadd.f32 0.0, %v1285
    %v1287 = vpop.f32.mrf.mxu0
    %v1288 = vpop.f32.mrf.mxu0
    %v1289 = vadd.f32 0.0, %v1288
    %v1290 = vpop.f32.mrf.mxu0
    %1291 = vdwg.mxu0
    %v1292 = vmul.f32 %v1166, %v97
    %v1293 = vmul.f32 %v1169, %v98
    %v1294 = vmul.f32 %v1174, %v99
    %v1295 = vmul.f32 %v1177, %v100
    %v1296 = vmul.f32 %v1182, %v101
    %v1297 = vmul.f32 %v1185, %v102
    %v1298 = vmul.f32 %v1190, %v103
    %v1299 = vmul.f32 %v1193, %v104
    %v1300 = vmul.f32 %v1198, %v105
    %v1301 = vmul.f32 %v1201, %v106
    %v1302 = vmul.f32 %v1206, %v107
    %v1303 = vmul.f32 %v1209, %v108
    %v1304 = vmul.f32 %v1214, %v109
    %v1305 = vmul.f32 %v1217, %v110
    %v1306 = vmul.f32 %v1222, %v111
    %v1307 = vmul.f32 %v1225, %v112
    %v1308 = vmul.f32 %v1230, %v113
    %v1309 = vmul.f32 %v1233, %v114
    %v1310 = vmul.f32 %v1238, %v115
    %v1311 = vmul.f32 %v1241, %v116
    %v1312 = vmul.f32 %v1246, %v117
    %v1313 = vmul.f32 %v1249, %v118
    %v1314 = vmul.f32 %v1254, %v119
    %v1315 = vmul.f32 %v1257, %v120
    %v1316 = vmul.f32 %v1262, %v121
    %v1317 = vmul.f32 %v1265, %v122
    %v1318 = vmul.f32 %v1270, %v123
    %v1319 = vmul.f32 %v1273, %v124
    %v1320 = vmul.f32 %v1278, %v125
    %v1321 = vmul.f32 %v1281, %v126
    %v1322 = vmul.f32 %v1286, %v127
    %v1323 = vmul.f32 %v1289, %v128
    %v1324 = vadd.f32 %v1292, %v1296
    %v1325 = vadd.f32 %v1293, %v1297
    %v1326 = vadd.f32 %v1294, %v1298
    %v1327 = vadd.f32 %v1295, %v1299
    %v1328 = vadd.f32 %v1324, %v1300
    %v1329 = vadd.f32 %v1325, %v1301
    %v1330 = vadd.f32 %v1326, %v1302
    %v1331 = vadd.f32 %v1327, %v1303
    %v1332 = vadd.f32 %v1328, %v1304
    %v1333 = vadd.f32 %v1329, %v1305
    %v1334 = vadd.f32 %v1330, %v1306
    %v1335 = vadd.f32 %v1331, %v1307
    %v1336 = vadd.f32 %v1332, %v1308
    %v1337 = vadd.f32 %v1333, %v1309
    %v1338 = vadd.f32 %v1334, %v1310
    %v1339 = vadd.f32 %v1335, %v1311
    %v1340 = vadd.f32 %v1336, %v1312
    %v1341 = vadd.f32 %v1337, %v1313
    %v1342 = vadd.f32 %v1338, %v1314
    %v1343 = vadd.f32 %v1339, %v1315
    %v1344 = vadd.f32 %v1340, %v1316
    %v1345 = vadd.f32 %v1341, %v1317
    %v1346 = vadd.f32 %v1342, %v1318
    %v1347 = vadd.f32 %v1343, %v1319
    %v1348 = vadd.f32 %v1344, %v1320
    %v1349 = vadd.f32 %v1345, %v1321
    %v1350 = vadd.f32 %v1346, %v1322
    %v1351 = vadd.f32 %v1347, %v1323
    %v1352 = vpack.c.bf16 %v1349, %v1348
    %v1353 = vpack.c.bf16 %v1351, %v1350
    %v1354 = vlaneseq
    %v1355 = vshrl.u32 %v1354, 7
    %v1356 = vsub.s32 7, %v1355
    %v1357 = vrot.slane %v59, %v1356
    %v1362 = vunpack.c.l.b16 %v211
    %v1363 = vunpack.c.l.b16 %v212
    %v1364 = vunpack.c.l.b16 %v213
    %v1365 = vunpack.c.l.b16 %v214
    %v1366 = vpack.c.b16 %v1363, %v1362
    %v1367 = vpack.c.b16 %v1365, %v1364
    %v1371 = vsel %vm129, %v1352, 0
    %v1374 = vsel %vm129, %v1353, 0
    %1376 = vmatprep.subr.bf16.mxu0 0
    %1377 = vmatpush1.bf16.msra.mxu0 0
    %1378 = vmatprep.subr.bf16.mxu0 0
    %1379 = vmatpush1.bf16.msra.mxu0 0
    %1380 = vmatprep.subr.bf16.mxu0 0
    %1381 = vmatpush1.bf16.msra.mxu0 0
    %1382 = vmatprep.subr.bf16.mxu0 0
    %1383 = vmatpush1.bf16.msra.mxu0 0
    %1384 = vmatprep.subr.bf16.mxu0 0
    %1385 = vmatpush1.bf16.msra.mxu0 0
    %1386 = vmatprep.subr.bf16.mxu0 0
    %1387 = vmatpush1.bf16.msra.mxu0 0
    %1388 = vmatprep.subr.bf16.mxu0 0
    %1389 = vmatpush1.bf16.msra.mxu0 %v1367
    %1390 = vmatprep.subr.bf16.mxu0 0
    %1391 = vmatpush1.bf16.msra.mxu0 %v1366
    %1392 = vmatprep.subr.bf16.mxu0 0
    %1393 = vmatpush2.bf16.msra.mxu0 0
    %1394 = vmatprep.subr.bf16.mxu0 0
    %1395 = vmatpush2.bf16.msra.mxu0 0
    %1396 = vmatprep.subr.bf16.mxu0 0
    %1397 = vmatpush2.bf16.msra.mxu0 0
    %1398 = vmatprep.subr.bf16.mxu0 0
    %1399 = vmatpush2.bf16.msra.mxu0 0
    %1400 = vmatprep.subr.bf16.mxu0 0
    %1401 = vmatpush2.bf16.msra.mxu0 0
    %1402 = vmatprep.subr.bf16.mxu0 0
    %1403 = vmatpush2.bf16.msra.mxu0 0
    %1404 = vmatprep.subr.bf16.mxu0 0
    %1405 = vmatpush2.bf16.msra.mxu0 0
    %1406 = vmatprep.subr.bf16.mxu0 0
    %1407 = vmatpush2.bf16.msra.mxu0 0
    %1408 = vmatprep.mubr.bf16.mxu0 0
    %1409 = vmatmul.mubr.bf16.gmra.mxu0 %v1371
    %v1410 = vpop.f32.mrf.mxu0
    %v1411 = vadd.f32 %v1357, %v1410
    %v1412 = vpop.f32.mrf.mxu0
    %v1413 = vpop.f32.mrf.mxu0
    %v1414 = vadd.f32 %v1357, %v1413
    %v1415 = vpop.f32.mrf.mxu0
    %1416 = vmatprep.mubr.bf16.mxu0 0
    %1417 = vmatmul.mubr.bf16.gmra.mxu0 %v1374
    %v1418 = vpop.f32.mrf.mxu0
    %v1419 = vadd.f32 %v1357, %v1418
    %v1420 = vpop.f32.mrf.mxu0
    %v1421 = vpop.f32.mrf.mxu0
    %v1422 = vadd.f32 %v1357, %v1421
    %v1423 = vpop.f32.mrf.mxu0
    %1424 = vdwg.mxu0
    %v1425 = vadd.f32 %v195, %v1411
    %v1426 = vadd.f32 %v196, %v1414
    %v1427 = vadd.f32 %v197, %v1419
    %v1428 = vadd.f32 %v198, %v1422
    %v1429 = vsel %vm129, %v1425, 0.0
    %1430 = vadd.xlane.f32.xlu0 %v1429
    %v1431 = vpop.xlane.xlu0 %1430
    %v1432 = vsel %vm129, %v1426, 0.0
    %1433 = vadd.xlane.f32.xlu0 %v1432
    %v1434 = vpop.xlane.xlu0 %1433
    %v1435 = vsel %vm129, %v1427, 0.0
    %1436 = vadd.xlane.f32.xlu0 %v1435
    %v1437 = vpop.xlane.xlu0 %1436
    %v1438 = vsel %vm129, %v1428, 0.0
    %1439 = vadd.xlane.f32.xlu0 %v1438
    %v1440 = vpop.xlane.xlu0 %1439
    %v1441 = vmul.f32 %v1431, %v142
    %v1442 = vmul.f32 %v1434, %v142
    %v1443 = vmul.f32 %v1437, %v142
    %v1444 = vmul.f32 %v1440, %v142
    %v1445 = vsub.f32 %v1425, %v1441
    %v1446 = vsub.f32 %v1426, %v1442
    %v1447 = vsub.f32 %v1427, %v1443
    %v1448 = vsub.f32 %v1428, %v1444
    %v1449 = vmul.f32 %v1445, %v1445
    %v1450 = vmul.f32 %v1446, %v1446
    %v1451 = vmul.f32 %v1447, %v1447
    %v1452 = vmul.f32 %v1448, %v1448
    %v1453 = vsel %vm129, %v1449, 0.0
    %1454 = vadd.xlane.f32.xlu0 %v1453
    %v1455 = vpop.xlane.xlu0 %1454
    %v1456 = vsel %vm129, %v1450, 0.0
    %1457 = vadd.xlane.f32.xlu0 %v1456
    %v1458 = vpop.xlane.xlu0 %1457
    %v1459 = vsel %vm129, %v1451, 0.0
    %1460 = vadd.xlane.f32.xlu0 %v1459
    %v1461 = vpop.xlane.xlu0 %1460
    %v1462 = vsel %vm129, %v1452, 0.0
    %1463 = vadd.xlane.f32.xlu0 %v1462
    %v1464 = vpop.xlane.xlu0 %1463
    %v1465 = vmul.f32 %v1455, %v142
    %v1466 = vmul.f32 %v1458, %v142
    %v1467 = vmul.f32 %v1461, %v142
    %v1468 = vmul.f32 %v1464, %v142
    %v1469 = vadd.f32 %v1465, 1e-05
    %v1470 = vadd.f32 %v1466, 1e-05
    %v1471 = vadd.f32 %v1467, 1e-05
    %v1472 = vadd.f32 %v1468, 1e-05
    %v1473 = vrsqrt.pop %v1469
    %v1474 = vrsqrt.pop %v1470
    %v1475 = vrsqrt.pop %v1471
    %v1476 = vrsqrt.pop %v1472
    %v1477 = vmul.f32 %v1445, %v1473
    %v1478 = vmul.f32 %v1446, %v1474
    %v1479 = vmul.f32 %v1447, %v1475
    %v1480 = vmul.f32 %v1448, %v1476
    %v1481 = vlaneseq
    %v1482 = vshrl.u32 %v1481, 7
    %v1483 = vsub.s32 0, %v1482
    %v1484 = vrot.slane %v60, %v1483
    %v1485 = vmul.f32 %v1477, %v1484
    %v1486 = vmul.f32 %v1478, %v1484
    %v1487 = vmul.f32 %v1479, %v1484
    %v1488 = vmul.f32 %v1480, %v1484
    %v1489 = vlaneseq
    %v1490 = vshrl.u32 %v1489, 7
    %v1491 = vsub.s32 1, %v1490
    %v1492 = vrot.slane %v60, %v1491
    %v1493 = vadd.f32 %v1485, %v1492
    %v1494 = vadd.f32 %v1486, %v1492
    %v1495 = vadd.f32 %v1487, %v1492
    %v1496 = vadd.f32 %v1488, %v1492
    %v1497 = vpack.c.bf16 %v1494, %v1493
    %v1498 = vpack.c.bf16 %v1496, %v1495
    %v1499 = vld [vmem:[%s5] sm:$0xf]
    %v1500 = vld [vmem:[%s5 + $0x4] sm:$0xf]
    %v1501 = vld [vmem:[%s5 + $0x8] sm:$0xf]
    %v1502 = vld [vmem:[%s5 + $0xc] sm:$0xf]
    %v1503 = vld [vmem:[%s3] sm:$0x1]
    %v1505 = vlaneseq
    %v1506 = vshrl.u32 %v1505, 7
    %v1507 = vsub.s32 0, %v1506
    %v1508 = vrot.slane %v1503, %v1507
    %v1514 = vunpack.c.l.b16 %v1499
    %v1515 = vunpack.c.l.b16 %v1500
    %v1516 = vunpack.c.l.b16 %v1501
    %v1517 = vunpack.c.l.b16 %v1502
    %v1518 = vpack.c.b16 %v1515, %v1514
    %v1519 = vpack.c.b16 %v1517, %v1516
    %v1523 = vsel %vm129, %v1497, 0
    %v1526 = vsel %vm129, %v1498, 0
    %1528 = vmatprep.subr.bf16.mxu0 0
    %1529 = vmatpush1.bf16.msra.mxu0 0
    %1530 = vmatprep.subr.bf16.mxu0 0
    %1531 = vmatpush1.bf16.msra.mxu0 0
    %1532 = vmatprep.subr.bf16.mxu0 0
    %1533 = vmatpush1.bf16.msra.mxu0 0
    %1534 = vmatprep.subr.bf16.mxu0 0
    %1535 = vmatpush1.bf16.msra.mxu0 0
    %1536 = vmatprep.subr.bf16.mxu0 0
    %1537 = vmatpush1.bf16.msra.mxu0 0
    %1538 = vmatprep.subr.bf16.mxu0 0
    %1539 = vmatpush1.bf16.msra.mxu0 0
    %1540 = vmatprep.subr.bf16.mxu0 0
    %1541 = vmatpush1.bf16.msra.mxu0 %v1519
    %1542 = vmatprep.subr.bf16.mxu0 0
    %1543 = vmatpush1.bf16.msra.mxu0 %v1518
    %1544 = vmatprep.subr.bf16.mxu0 0
    %1545 = vmatpush2.bf16.msra.mxu0 0
    %1546 = vmatprep.subr.bf16.mxu0 0
    %1547 = vmatpush2.bf16.msra.mxu0 0
    %1548 = vmatprep.subr.bf16.mxu0 0
    %1549 = vmatpush2.bf16.msra.mxu0 0
    %1550 = vmatprep.subr.bf16.mxu0 0
    %1551 = vmatpush2.bf16.msra.mxu0 0
    %1552 = vmatprep.subr.bf16.mxu0 0
    %1553 = vmatpush2.bf16.msra.mxu0 0
    %1554 = vmatprep.subr.bf16.mxu0 0
    %1555 = vmatpush2.bf16.msra.mxu0 0
    %1556 = vmatprep.subr.bf16.mxu0 0
    %1557 = vmatpush2.bf16.msra.mxu0 0
    %1558 = vmatprep.subr.bf16.mxu0 0
    %1559 = vmatpush2.bf16.msra.mxu0 0
    %1560 = vmatprep.mubr.bf16.mxu0 0
    %1561 = vmatmul.mubr.bf16.gmra.mxu0 %v1523
    %v1562 = vpop.f32.mrf.mxu0
    %v1563 = vadd.f32 %v1508, %v1562
    %v1564 = vpop.f32.mrf.mxu0
    %v1565 = vpop.f32.mrf.mxu0
    %v1566 = vadd.f32 %v1508, %v1565
    %v1567 = vpop.f32.mrf.mxu0
    %1568 = vmatprep.mubr.bf16.mxu0 0
    %1569 = vmatmul.mubr.bf16.gmra.mxu0 %v1526
    %v1570 = vpop.f32.mrf.mxu0
    %v1571 = vadd.f32 %v1508, %v1570
    %v1572 = vpop.f32.mrf.mxu0
    %v1573 = vpop.f32.mrf.mxu0
    %v1574 = vadd.f32 %v1508, %v1573
    %v1575 = vpop.f32.mrf.mxu0
    %1576 = vdwg.mxu0
    %v1577 = vmax.f32 %v1563, 0.0
    %v1578 = vmax.f32 %v1566, 0.0
    %v1579 = vmax.f32 %v1571, 0.0
    %v1580 = vmax.f32 %v1574, 0.0
    %v1581 = vpack.c.bf16 %v1578, %v1577
    %v1582 = vpack.c.bf16 %v1580, %v1579
    %v1583 = vld [vmem:[%s6] sm:$0xf]
    %v1584 = vld [vmem:[%s6 + $0x4] sm:$0xf]
    %v1585 = vld [vmem:[%s6 + $0x8] sm:$0xf]
    %v1586 = vld [vmem:[%s6 + $0xc] sm:$0xf]
    %v1587 = vld [vmem:[%s6 + $0x10] sm:$0xf]
    %v1588 = vld [vmem:[%s6 + $0x14] sm:$0xf]
    %v1589 = vld [vmem:[%s6 + $0x18] sm:$0xf]
    %v1590 = vld [vmem:[%s6 + $0x1c] sm:$0xf]
    %v1591 = vld [vmem:[%s6 + $0x20] sm:$0xf]
    %v1592 = vld [vmem:[%s6 + $0x24] sm:$0xf]
    %v1593 = vld [vmem:[%s6 + $0x28] sm:$0xf]
    %v1594 = vld [vmem:[%s6 + $0x2c] sm:$0xf]
    %v1595 = vld [vmem:[%s6 + $0x30] sm:$0xf]
    %v1596 = vld [vmem:[%s6 + $0x34] sm:$0xf]
    %v1597 = vld [vmem:[%s6 + $0x38] sm:$0xf]
    %v1598 = vld [vmem:[%s6 + $0x3c] sm:$0xf]
    %v1599 = vlaneseq
    %v1600 = vshrl.u32 %v1599, 7
    %v1601 = vsub.s32 4, %v1600
    %v1602 = vrot.slane %v60, %v1601
    %v1619 = vunpack.c.l.b16 %v1583
    %v1620 = vunpack.c.l.b16 %v1584
    %v1621 = vunpack.c.l.b16 %v1585
    %v1622 = vunpack.c.l.b16 %v1586
    %v1623 = vunpack.c.l.b16 %v1587
    %v1624 = vunpack.c.l.b16 %v1588
    %v1625 = vunpack.c.l.b16 %v1589
    %v1626 = vunpack.c.l.b16 %v1590
    %v1627 = vunpack.c.l.b16 %v1591
    %v1628 = vunpack.c.l.b16 %v1592
    %v1629 = vunpack.c.l.b16 %v1593
    %v1630 = vunpack.c.l.b16 %v1594
    %v1631 = vunpack.c.l.b16 %v1595
    %v1632 = vunpack.c.l.b16 %v1596
    %v1633 = vunpack.c.l.b16 %v1597
    %v1634 = vunpack.c.l.b16 %v1598
    %v1635 = vpack.c.b16 %v1620, %v1619
    %v1636 = vpack.c.b16 %v1622, %v1621
    %v1637 = vpack.c.b16 %v1624, %v1623
    %v1638 = vpack.c.b16 %v1626, %v1625
    %v1639 = vpack.c.b16 %v1628, %v1627
    %v1640 = vpack.c.b16 %v1630, %v1629
    %v1641 = vpack.c.b16 %v1632, %v1631
    %v1642 = vpack.c.b16 %v1634, %v1633
    %1651 = vmatprep.subr.bf16.mxu0 0
    %1652 = vmatpush1.bf16.msra.mxu0 %v1642
    %1653 = vmatprep.subr.bf16.mxu0 0
    %1654 = vmatpush1.bf16.msra.mxu0 %v1641
    %1655 = vmatprep.subr.bf16.mxu0 0
    %1656 = vmatpush1.bf16.msra.mxu0 %v1640
    %1657 = vmatprep.subr.bf16.mxu0 0
    %1658 = vmatpush1.bf16.msra.mxu0 %v1639
    %1659 = vmatprep.subr.bf16.mxu0 0
    %1660 = vmatpush1.bf16.msra.mxu0 %v1638
    %1661 = vmatprep.subr.bf16.mxu0 0
    %1662 = vmatpush1.bf16.msra.mxu0 %v1637
    %1663 = vmatprep.subr.bf16.mxu0 0
    %1664 = vmatpush1.bf16.msra.mxu0 %v1636
    %1665 = vmatprep.subr.bf16.mxu0 0
    %1666 = vmatpush1.bf16.msra.mxu0 %v1635
    %1667 = vmatprep.subr.bf16.mxu0 0
    %1668 = vmatpush2.bf16.msra.mxu0 0
    %1669 = vmatprep.subr.bf16.mxu0 0
    %1670 = vmatpush2.bf16.msra.mxu0 0
    %1671 = vmatprep.subr.bf16.mxu0 0
    %1672 = vmatpush2.bf16.msra.mxu0 0
    %1673 = vmatprep.subr.bf16.mxu0 0
    %1674 = vmatpush2.bf16.msra.mxu0 0
    %1675 = vmatprep.subr.bf16.mxu0 0
    %1676 = vmatpush2.bf16.msra.mxu0 0
    %1677 = vmatprep.subr.bf16.mxu0 0
    %1678 = vmatpush2.bf16.msra.mxu0 0
    %1679 = vmatprep.subr.bf16.mxu0 0
    %1680 = vmatpush2.bf16.msra.mxu0 0
    %1681 = vmatprep.subr.bf16.mxu0 0
    %1682 = vmatpush2.bf16.msra.mxu0 0
    %1683 = vmatprep.mubr.bf16.mxu0 0
    %1684 = vmatmul.mubr.bf16.gmra.mxu0 %v1581
    %v1685 = vpop.f32.mrf.mxu0
    %v1686 = vadd.f32 %v1602, %v1685
    %v1687 = vpop.f32.mrf.mxu0
    %v1688 = vpop.f32.mrf.mxu0
    %v1689 = vadd.f32 %v1602, %v1688
    %v1690 = vpop.f32.mrf.mxu0
    %1691 = vmatprep.mubr.bf16.mxu0 0
    %1692 = vmatmul.mubr.bf16.gmra.mxu0 %v1582
    %v1693 = vpop.f32.mrf.mxu0
    %v1694 = vadd.f32 %v1602, %v1693
    %v1695 = vpop.f32.mrf.mxu0
    %v1696 = vpop.f32.mrf.mxu0
    %v1697 = vadd.f32 %v1602, %v1696
    %v1698 = vpop.f32.mrf.mxu0
    %1699 = vdwg.mxu0
    %v1700 = vadd.f32 %v1493, %v1686
    %v1701 = vadd.f32 %v1494, %v1689
    %v1702 = vadd.f32 %v1495, %v1694
    %v1703 = vadd.f32 %v1496, %v1697
    %v1704 = vsel %vm129, %v1700, 0.0
    %1705 = vadd.xlane.f32.xlu0 %v1704
    %v1706 = vpop.xlane.xlu0 %1705
    %v1707 = vsel %vm129, %v1701, 0.0
    %1708 = vadd.xlane.f32.xlu0 %v1707
    %v1709 = vpop.xlane.xlu0 %1708
    %v1710 = vsel %vm129, %v1702, 0.0
    %1711 = vadd.xlane.f32.xlu0 %v1710
    %v1712 = vpop.xlane.xlu0 %1711
    %v1713 = vsel %vm129, %v1703, 0.0
    %1714 = vadd.xlane.f32.xlu0 %v1713
    %v1715 = vpop.xlane.xlu0 %1714
    %v1716 = vmul.f32 %v1706, %v142
    %v1717 = vmul.f32 %v1709, %v142
    %v1718 = vmul.f32 %v1712, %v142
    %v1719 = vmul.f32 %v1715, %v142
    %v1720 = vsub.f32 %v1700, %v1716
    %v1721 = vsub.f32 %v1701, %v1717
    %v1722 = vsub.f32 %v1702, %v1718
    %v1723 = vsub.f32 %v1703, %v1719
    %v1724 = vmul.f32 %v1720, %v1720
    %v1725 = vmul.f32 %v1721, %v1721
    %v1726 = vmul.f32 %v1722, %v1722
    %v1727 = vmul.f32 %v1723, %v1723
    %v1728 = vsel %vm129, %v1724, 0.0
    %1729 = vadd.xlane.f32.xlu0 %v1728
    %v1730 = vpop.xlane.xlu0 %1729
    %v1731 = vsel %vm129, %v1725, 0.0
    %1732 = vadd.xlane.f32.xlu0 %v1731
    %v1733 = vpop.xlane.xlu0 %1732
    %v1734 = vsel %vm129, %v1726, 0.0
    %1735 = vadd.xlane.f32.xlu0 %v1734
    %v1736 = vpop.xlane.xlu0 %1735
    %v1737 = vsel %vm129, %v1727, 0.0
    %1738 = vadd.xlane.f32.xlu0 %v1737
    %v1739 = vpop.xlane.xlu0 %1738
    %v1740 = vmul.f32 %v1730, %v142
    %v1741 = vmul.f32 %v1733, %v142
    %v1742 = vmul.f32 %v1736, %v142
    %v1743 = vmul.f32 %v1739, %v142
    %v1744 = vadd.f32 %v1740, 1e-05
    %v1745 = vadd.f32 %v1741, 1e-05
    %v1746 = vadd.f32 %v1742, 1e-05
    %v1747 = vadd.f32 %v1743, 1e-05
    %v1748 = vrsqrt.pop %v1744
    %v1749 = vrsqrt.pop %v1745
    %v1750 = vrsqrt.pop %v1746
    %v1751 = vrsqrt.pop %v1747
    %v1752 = vmul.f32 %v1720, %v1748
    %v1753 = vmul.f32 %v1721, %v1749
    %v1754 = vmul.f32 %v1722, %v1750
    %v1755 = vmul.f32 %v1723, %v1751
    %v1756 = vlaneseq
    %v1757 = vshrl.u32 %v1756, 7
    %v1758 = vsub.s32 2, %v1757
    %v1759 = vrot.slane %v60, %v1758
    %v1760 = vmul.f32 %v1752, %v1759
    %v1761 = vmul.f32 %v1753, %v1759
    %v1762 = vmul.f32 %v1754, %v1759
    %v1763 = vmul.f32 %v1755, %v1759
    %v1764 = vlaneseq
    %v1765 = vshrl.u32 %v1764, 7
    %v1766 = vsub.s32 3, %v1765
    %v1767 = vrot.slane %v60, %v1766
    %v1768 = vadd.f32 %v1760, %v1767
    %v1769 = vadd.f32 %v1761, %v1767
    %v1770 = vadd.f32 %v1762, %v1767
    %v1771 = vadd.f32 %v1763, %v1767
    %s1772 = scalar_lea.vmem %s4, 64
    %v1773 = vld [vmem:[%s1772] sm:$0xf]
    %v1774 = vld [vmem:[%s1772 + $0x4] sm:$0xf]
    %v1775 = vld [vmem:[%s1772 + $0x8] sm:$0xf]
    %v1776 = vld [vmem:[%s1772 + $0xc] sm:$0xf]
    %v1777 = vld [vmem:[%s1772 + $0x10] sm:$0xf]
    %v1778 = vld [vmem:[%s1772 + $0x14] sm:$0xf]
    %v1779 = vld [vmem:[%s1772 + $0x18] sm:$0xf]
    %v1780 = vld [vmem:[%s1772 + $0x1c] sm:$0xf]
    %v1781 = vld [vmem:[%s1772 + $0x20] sm:$0xf]
    %v1782 = vld [vmem:[%s1772 + $0x24] sm:$0xf]
    %v1783 = vld [vmem:[%s1772 + $0x28] sm:$0xf]
    %v1784 = vld [vmem:[%s1772 + $0x2c] sm:$0xf]
    %v1785 = vld [vmem:[%s1772 + $0x30] sm:$0xf]
    %v1786 = vld [vmem:[%s1772 + $0x34] sm:$0xf]
    %v1787 = vld [vmem:[%s1772 + $0x38] sm:$0xf]
    %v1788 = vld [vmem:[%s1772 + $0x3c] sm:$0xf]
    %v1789 = vpack.c.bf16 %v1769, %v1768
    %v1790 = vpack.c.bf16 %v1771, %v1770
    %v1791 = vlaneseq
    %v1792 = vshrl.u32 %v1791, 7
    %v1793 = vsub.s32 5, %v1792
    %v1794 = vrot.slane %v60, %v1793
    %v1799 = vunpack.c.l.b16 %v1773
    %v1800 = vunpack.c.l.b16 %v1774
    %v1801 = vunpack.c.l.b16 %v1775
    %v1802 = vunpack.c.l.b16 %v1776
    %v1803 = vpack.c.b16 %v1800, %v1799
    %v1804 = vpack.c.b16 %v1802, %v1801
    %v1808 = vsel %vm129, %v1789, 0
    %v1811 = vsel %vm129, %v1790, 0
    %1813 = vmatprep.subr.bf16.mxu0 0
    %1814 = vmatpush1.bf16.msra.mxu0 0
    %1815 = vmatprep.subr.bf16.mxu0 0
    %1816 = vmatpush1.bf16.msra.mxu0 0
    %1817 = vmatprep.subr.bf16.mxu0 0
    %1818 = vmatpush1.bf16.msra.mxu0 0
    %1819 = vmatprep.subr.bf16.mxu0 0
    %1820 = vmatpush1.bf16.msra.mxu0 0
    %1821 = vmatprep.subr.bf16.mxu0 0
    %1822 = vmatpush1.bf16.msra.mxu0 0
    %1823 = vmatprep.subr.bf16.mxu0 0
    %1824 = vmatpush1.bf16.msra.mxu0 0
    %1825 = vmatprep.subr.bf16.mxu0 0
    %1826 = vmatpush1.bf16.msra.mxu0 %v1804
    %1827 = vmatprep.subr.bf16.mxu0 0
    %1828 = vmatpush1.bf16.msra.mxu0 %v1803
    %1829 = vmatprep.subr.bf16.mxu0 0
    %1830 = vmatpush2.bf16.msra.mxu0 0
    %1831 = vmatprep.subr.bf16.mxu0 0
    %1832 = vmatpush2.bf16.msra.mxu0 0
    %1833 = vmatprep.subr.bf16.mxu0 0
    %1834 = vmatpush2.bf16.msra.mxu0 0
    %1835 = vmatprep.subr.bf16.mxu0 0
    %1836 = vmatpush2.bf16.msra.mxu0 0
    %1837 = vmatprep.subr.bf16.mxu0 0
    %1838 = vmatpush2.bf16.msra.mxu0 0
    %1839 = vmatprep.subr.bf16.mxu0 0
    %1840 = vmatpush2.bf16.msra.mxu0 0
    %1841 = vmatprep.subr.bf16.mxu0 0
    %1842 = vmatpush2.bf16.msra.mxu0 0
    %1843 = vmatprep.subr.bf16.mxu0 0
    %1844 = vmatpush2.bf16.msra.mxu0 0
    %1845 = vmatprep.mubr.bf16.mxu0 0
    %1846 = vmatmul.mubr.bf16.gmra.mxu0 %v1808
    %v1847 = vpop.f32.mrf.mxu0
    %v1848 = vadd.f32 %v1794, %v1847
    %v1849 = vpop.f32.mrf.mxu0
    %v1850 = vpop.f32.mrf.mxu0
    %v1851 = vadd.f32 %v1794, %v1850
    %v1852 = vpop.f32.mrf.mxu0
    %1853 = vmatprep.mubr.bf16.mxu0 0
    %1854 = vmatmul.mubr.bf16.gmra.mxu0 %v1811
    %v1855 = vpop.f32.mrf.mxu0
    %v1856 = vadd.f32 %v1794, %v1855
    %v1857 = vpop.f32.mrf.mxu0
    %v1858 = vpop.f32.mrf.mxu0
    %v1859 = vadd.f32 %v1794, %v1858
    %v1860 = vpop.f32.mrf.mxu0
    %1861 = vdwg.mxu0
    %v1862 = vmul.f32 %v1848, 0.5
    %v1863 = vmul.f32 %v1851, 0.5
    %v1864 = vmul.f32 %v1856, 0.5
    %v1865 = vmul.f32 %v1859, 0.5
    %v1866 = vlaneseq
    %v1867 = vshrl.u32 %v1866, 7
    %v1868 = vsub.s32 6, %v1867
    %v1869 = vrot.slane %v60, %v1868
    %v1874 = vunpack.c.l.b16 %v1777
    %v1875 = vunpack.c.l.b16 %v1778
    %v1876 = vunpack.c.l.b16 %v1779
    %v1877 = vunpack.c.l.b16 %v1780
    %v1878 = vpack.c.b16 %v1875, %v1874
    %v1879 = vpack.c.b16 %v1877, %v1876
    %1882 = vmatprep.subr.bf16.mxu0 0
    %1883 = vmatpush1.bf16.msra.mxu0 0
    %1884 = vmatprep.subr.bf16.mxu0 0
    %1885 = vmatpush1.bf16.msra.mxu0 0
    %1886 = vmatprep.subr.bf16.mxu0 0
    %1887 = vmatpush1.bf16.msra.mxu0 0
    %1888 = vmatprep.subr.bf16.mxu0 0
    %1889 = vmatpush1.bf16.msra.mxu0 0
    %1890 = vmatprep.subr.bf16.mxu0 0
    %1891 = vmatpush1.bf16.msra.mxu0 0
    %1892 = vmatprep.subr.bf16.mxu0 0
    %1893 = vmatpush1.bf16.msra.mxu0 0
    %1894 = vmatprep.subr.bf16.mxu0 0
    %1895 = vmatpush1.bf16.msra.mxu0 %v1879
    %1896 = vmatprep.subr.bf16.mxu0 0
    %1897 = vmatpush1.bf16.msra.mxu0 %v1878
    %1898 = vmatprep.subr.bf16.mxu0 0
    %1899 = vmatpush2.bf16.msra.mxu0 0
    %1900 = vmatprep.subr.bf16.mxu0 0
    %1901 = vmatpush2.bf16.msra.mxu0 0
    %1902 = vmatprep.subr.bf16.mxu0 0
    %1903 = vmatpush2.bf16.msra.mxu0 0
    %1904 = vmatprep.subr.bf16.mxu0 0
    %1905 = vmatpush2.bf16.msra.mxu0 0
    %1906 = vmatprep.subr.bf16.mxu0 0
    %1907 = vmatpush2.bf16.msra.mxu0 0
    %1908 = vmatprep.subr.bf16.mxu0 0
    %1909 = vmatpush2.bf16.msra.mxu0 0
    %1910 = vmatprep.subr.bf16.mxu0 0
    %1911 = vmatpush2.bf16.msra.mxu0 0
    %1912 = vmatprep.subr.bf16.mxu0 0
    %1913 = vmatpush2.bf16.msra.mxu0 0
    %1914 = vmatprep.mubr.bf16.mxu0 0
    %1915 = vmatmul.mubr.bf16.gmra.mxu0 %v1808
    %v1916 = vpop.f32.mrf.mxu0
    %v1917 = vadd.f32 %v1869, %v1916
    %v1918 = vpop.f32.mrf.mxu0
    %v1919 = vpop.f32.mrf.mxu0
    %v1920 = vadd.f32 %v1869, %v1919
    %v1921 = vpop.f32.mrf.mxu0
    %1922 = vmatprep.mubr.bf16.mxu0 0
    %1923 = vmatmul.mubr.bf16.gmra.mxu0 %v1811
    %v1924 = vpop.f32.mrf.mxu0
    %v1925 = vadd.f32 %v1869, %v1924
    %v1926 = vpop.f32.mrf.mxu0
    %v1927 = vpop.f32.mrf.mxu0
    %v1928 = vadd.f32 %v1869, %v1927
    %v1929 = vpop.f32.mrf.mxu0
    %1930 = vdwg.mxu0
    %v1931 = vlaneseq
    %v1932 = vshrl.u32 %v1931, 7
    %v1933 = vsub.s32 7, %v1932
    %v1934 = vrot.slane %v60, %v1933
    %v1939 = vunpack.c.l.b16 %v1781
    %v1940 = vunpack.c.l.b16 %v1782
    %v1941 = vunpack.c.l.b16 %v1783
    %v1942 = vunpack.c.l.b16 %v1784
    %v1943 = vpack.c.b16 %v1940, %v1939
    %v1944 = vpack.c.b16 %v1942, %v1941
    %1947 = vmatprep.subr.bf16.mxu0 0
    %1948 = vmatpush1.bf16.msra.mxu0 0
    %1949 = vmatprep.subr.bf16.mxu0 0
    %1950 = vmatpush1.bf16.msra.mxu0 0
    %1951 = vmatprep.subr.bf16.mxu0 0
    %1952 = vmatpush1.bf16.msra.mxu0 0
    %1953 = vmatprep.subr.bf16.mxu0 0
    %1954 = vmatpush1.bf16.msra.mxu0 0
    %1955 = vmatprep.subr.bf16.mxu0 0
    %1956 = vmatpush1.bf16.msra.mxu0 0
    %1957 = vmatprep.subr.bf16.mxu0 0
    %1958 = vmatpush1.bf16.msra.mxu0 0
    %1959 = vmatprep.subr.bf16.mxu0 0
    %1960 = vmatpush1.bf16.msra.mxu0 %v1944
    %1961 = vmatprep.subr.bf16.mxu0 0
    %1962 = vmatpush1.bf16.msra.mxu0 %v1943
    %1963 = vmatprep.subr.bf16.mxu0 0
    %1964 = vmatpush2.bf16.msra.mxu0 0
    %1965 = vmatprep.subr.bf16.mxu0 0
    %1966 = vmatpush2.bf16.msra.mxu0 0
    %1967 = vmatprep.subr.bf16.mxu0 0
    %1968 = vmatpush2.bf16.msra.mxu0 0
    %1969 = vmatprep.subr.bf16.mxu0 0
    %1970 = vmatpush2.bf16.msra.mxu0 0
    %1971 = vmatprep.subr.bf16.mxu0 0
    %1972 = vmatpush2.bf16.msra.mxu0 0
    %1973 = vmatprep.subr.bf16.mxu0 0
    %1974 = vmatpush2.bf16.msra.mxu0 0
    %1975 = vmatprep.subr.bf16.mxu0 0
    %1976 = vmatpush2.bf16.msra.mxu0 0
    %1977 = vmatprep.subr.bf16.mxu0 0
    %1978 = vmatpush2.bf16.msra.mxu0 0
    %1979 = vmatprep.mubr.bf16.mxu0 0
    %1980 = vmatmul.mubr.bf16.gmra.mxu0 %v1808
    %v1981 = vpop.f32.mrf.mxu0
    %v1982 = vadd.f32 %v1934, %v1981
    %v1983 = vpop.f32.mrf.mxu0
    %v1984 = vpop.f32.mrf.mxu0
    %v1985 = vadd.f32 %v1934, %v1984
    %v1986 = vpop.f32.mrf.mxu0
    %1987 = vmatprep.mubr.bf16.mxu0 0
    %1988 = vmatmul.mubr.bf16.gmra.mxu0 %v1811
    %v1989 = vpop.f32.mrf.mxu0
    %v1990 = vadd.f32 %v1934, %v1989
    %v1991 = vpop.f32.mrf.mxu0
    %v1992 = vpop.f32.mrf.mxu0
    %v1993 = vadd.f32 %v1934, %v1992
    %v1994 = vpop.f32.mrf.mxu0
    %1995 = vdwg.mxu0
    %v1996 = vmul.f32 %v1862, %v97
    %v1997 = vmul.f32 %v1863, %v98
    %v1998 = vmul.f32 %v1864, %v99
    %v1999 = vmul.f32 %v1865, %v100
    %v2000 = vmul.f32 %v1862, %v101
    %v2001 = vmul.f32 %v1863, %v102
    %v2002 = vmul.f32 %v1864, %v103
    %v2003 = vmul.f32 %v1865, %v104
    %v2004 = vmul.f32 %v1862, %v105
    %v2005 = vmul.f32 %v1863, %v106
    %v2006 = vmul.f32 %v1864, %v107
    %v2007 = vmul.f32 %v1865, %v108
    %v2008 = vmul.f32 %v1862, %v109
    %v2009 = vmul.f32 %v1863, %v110
    %v2010 = vmul.f32 %v1864, %v111
    %v2011 = vmul.f32 %v1865, %v112
    %v2012 = vmul.f32 %v1862, %v113
    %v2013 = vmul.f32 %v1863, %v114
    %v2014 = vmul.f32 %v1864, %v115
    %v2015 = vmul.f32 %v1865, %v116
    %v2016 = vmul.f32 %v1862, %v117
    %v2017 = vmul.f32 %v1863, %v118
    %v2018 = vmul.f32 %v1864, %v119
    %v2019 = vmul.f32 %v1865, %v120
    %v2020 = vmul.f32 %v1862, %v121
    %v2021 = vmul.f32 %v1863, %v122
    %v2022 = vmul.f32 %v1864, %v123
    %v2023 = vmul.f32 %v1865, %v124
    %v2024 = vmul.f32 %v1862, %v125
    %v2025 = vmul.f32 %v1863, %v126
    %v2026 = vmul.f32 %v1864, %v127
    %v2027 = vmul.f32 %v1865, %v128
    %v2028 = vpack.c.bf16 %v1997, %v1996
    %v2029 = vpack.c.bf16 %v1999, %v1998
    %v2030 = vpack.c.bf16 %v2001, %v2000
    %v2031 = vpack.c.bf16 %v2003, %v2002
    %v2032 = vpack.c.bf16 %v2005, %v2004
    %v2033 = vpack.c.bf16 %v2007, %v2006
    %v2034 = vpack.c.bf16 %v2009, %v2008
    %v2035 = vpack.c.bf16 %v2011, %v2010
    %v2036 = vpack.c.bf16 %v2013, %v2012
    %v2037 = vpack.c.bf16 %v2015, %v2014
    %v2038 = vpack.c.bf16 %v2017, %v2016
    %v2039 = vpack.c.bf16 %v2019, %v2018
    %v2040 = vpack.c.bf16 %v2021, %v2020
    %v2041 = vpack.c.bf16 %v2023, %v2022
    %v2042 = vpack.c.bf16 %v2025, %v2024
    %v2043 = vpack.c.bf16 %v2027, %v2026
    %2044 = vxpose.xlu0.b32.start [1/16] %v1917, 128
    %2045 = vxpose.xlu0.b32.cont [2/16] %v1920, 128
    %2046 = vxpose.xlu0.b32.cont [3/16] %v1925, 128
    %2047 = vxpose.xlu0.b32.cont [4/16] %v1928, 128
    %2048 = vxpose.xlu0.b32.cont [5/16] 0.0, 128
    %2049 = vxpose.xlu0.b32.cont [6/16] 0.0, 128
    %2050 = vxpose.xlu0.b32.cont [7/16] 0.0, 128
    %2051 = vxpose.xlu0.b32.cont [8/16] 0.0, 128
    %2052 = vxpose.xlu0.b32.cont [9/16] 0.0, 128
    %2053 = vxpose.xlu0.b32.cont [10/16] 0.0, 128
    %2054 = vxpose.xlu0.b32.cont [11/16] 0.0, 128
    %2055 = vxpose.xlu0.b32.cont [12/16] 0.0, 128
    %2056 = vxpose.xlu0.b32.cont [13/16] 0.0, 128
    %2057 = vxpose.xlu0.b32.cont [14/16] 0.0, 128
    %2058 = vxpose.xlu0.b32.cont [15/16] 0.0, 128
    %2059 = vxpose.xlu0.b32.end [16/16] 0.0, 128
    %v2060 = vpop.trf.xlu0
    %v2061 = vpop.trf.xlu0
    %v2062 = vpop.trf.xlu0
    %v2063 = vpop.trf.xlu0
    %v2064 = vpop.trf.xlu0
    %v2065 = vpop.trf.xlu0
    %v2066 = vpop.trf.xlu0
    %v2067 = vpop.trf.xlu0
    %v2068 = vpop.trf.xlu0
    %v2069 = vpop.trf.xlu0
    %v2070 = vpop.trf.xlu0
    %v2071 = vpop.trf.xlu0
    %v2072 = vpop.trf.xlu0
    %v2073 = vpop.trf.xlu0
    %v2074 = vpop.trf.xlu0
    %v2075 = vpop.trf.xlu0
    %v2076 = vpack.c.bf16 %v2061, %v2060
    %v2077 = vpack.c.bf16 %v2063, %v2062
    %v2079 = vsel %vm129, %v2028, 0
    %v2082 = vsel %vm129, %v2029, 0
    %v2085 = vsel %vm129, %v2030, 0
    %v2088 = vsel %vm129, %v2031, 0
    %v2091 = vsel %vm129, %v2032, 0
    %v2094 = vsel %vm129, %v2033, 0
    %v2097 = vsel %vm129, %v2034, 0
    %v2100 = vsel %vm129, %v2035, 0
    %v2103 = vsel %vm129, %v2036, 0
    %v2106 = vsel %vm129, %v2037, 0
    %v2109 = vsel %vm129, %v2038, 0
    %v2112 = vsel %vm129, %v2039, 0
    %v2115 = vsel %vm129, %v2040, 0
    %v2118 = vsel %vm129, %v2041, 0
    %v2121 = vsel %vm129, %v2042, 0
    %v2124 = vsel %vm129, %v2043, 0
    %2126 = vmatprep.subr.bf16.mxu0 0
    %2127 = vmatpush1.bf16.msra.mxu0 0
    %2128 = vmatprep.subr.bf16.mxu0 0
    %2129 = vmatpush1.bf16.msra.mxu0 0
    %2130 = vmatprep.subr.bf16.mxu0 0
    %2131 = vmatpush1.bf16.msra.mxu0 0
    %2132 = vmatprep.subr.bf16.mxu0 0
    %2133 = vmatpush1.bf16.msra.mxu0 0
    %2134 = vmatprep.subr.bf16.mxu0 0
    %2135 = vmatpush1.bf16.msra.mxu0 0
    %2136 = vmatprep.subr.bf16.mxu0 0
    %2137 = vmatpush1.bf16.msra.mxu0 0
    %2138 = vmatprep.subr.bf16.mxu0 0
    %2139 = vmatpush1.bf16.msra.mxu0 %v2077
    %2140 = vmatprep.subr.bf16.mxu0 0
    %2141 = vmatpush1.bf16.msra.mxu0 %v2076
    %2142 = vmatprep.subr.bf16.mxu0 0
    %2143 = vmatpush2.bf16.msra.mxu0 0
    %2144 = vmatprep.subr.bf16.mxu0 0
    %2145 = vmatpush2.bf16.msra.mxu0 0
    %2146 = vmatprep.subr.bf16.mxu0 0
    %2147 = vmatpush2.bf16.msra.mxu0 0
    %2148 = vmatprep.subr.bf16.mxu0 0
    %2149 = vmatpush2.bf16.msra.mxu0 0
    %2150 = vmatprep.subr.bf16.mxu0 0
    %2151 = vmatpush2.bf16.msra.mxu0 0
    %2152 = vmatprep.subr.bf16.mxu0 0
    %2153 = vmatpush2.bf16.msra.mxu0 0
    %2154 = vmatprep.subr.bf16.mxu0 0
    %2155 = vmatpush2.bf16.msra.mxu0 0
    %2156 = vmatprep.subr.bf16.mxu0 0
    %2157 = vmatpush2.bf16.msra.mxu0 0
    %2158 = vmatprep.mubr.bf16.mxu0 0
    %2159 = vmatmul.mubr.bf16.gmra.mxu0 %v2079
    %v2160 = vpop.f32.mrf.mxu0
    %v2161 = vadd.f32 %v64, %v2160
    %v2162 = vpop.f32.mrf.mxu0
    %v2163 = vpop.f32.mrf.mxu0
    %v2164 = vadd.f32 %v65, %v2163
    %v2165 = vpop.f32.mrf.mxu0
    %2166 = vmatprep.mubr.bf16.mxu0 0
    %2167 = vmatmul.mubr.bf16.gmra.mxu0 %v2082
    %v2168 = vpop.f32.mrf.mxu0
    %v2169 = vadd.f32 %v66, %v2168
    %v2170 = vpop.f32.mrf.mxu0
    %v2171 = vpop.f32.mrf.mxu0
    %v2172 = vadd.f32 %v67, %v2171
    %v2173 = vpop.f32.mrf.mxu0
    %2174 = vmatprep.mubr.bf16.mxu0 0
    %2175 = vmatmul.mubr.bf16.gmra.mxu0 %v2085
    %v2176 = vpop.f32.mrf.mxu0
    %v2177 = vadd.f32 %v68, %v2176
    %v2178 = vpop.f32.mrf.mxu0
    %v2179 = vpop.f32.mrf.mxu0
    %v2180 = vadd.f32 %v69, %v2179
    %v2181 = vpop.f32.mrf.mxu0
    %2182 = vmatprep.mubr.bf16.mxu0 0
    %2183 = vmatmul.mubr.bf16.gmra.mxu0 %v2088
    %v2184 = vpop.f32.mrf.mxu0
    %v2185 = vadd.f32 %v70, %v2184
    %v2186 = vpop.f32.mrf.mxu0
    %v2187 = vpop.f32.mrf.mxu0
    %v2188 = vadd.f32 %v71, %v2187
    %v2189 = vpop.f32.mrf.mxu0
    %2190 = vmatprep.mubr.bf16.mxu0 0
    %2191 = vmatmul.mubr.bf16.gmra.mxu0 %v2091
    %v2192 = vpop.f32.mrf.mxu0
    %v2193 = vadd.f32 %v72, %v2192
    %v2194 = vpop.f32.mrf.mxu0
    %v2195 = vpop.f32.mrf.mxu0
    %v2196 = vadd.f32 %v73, %v2195
    %v2197 = vpop.f32.mrf.mxu0
    %2198 = vmatprep.mubr.bf16.mxu0 0
    %2199 = vmatmul.mubr.bf16.gmra.mxu0 %v2094
    %v2200 = vpop.f32.mrf.mxu0
    %v2201 = vadd.f32 %v74, %v2200
    %v2202 = vpop.f32.mrf.mxu0
    %v2203 = vpop.f32.mrf.mxu0
    %v2204 = vadd.f32 %v75, %v2203
    %v2205 = vpop.f32.mrf.mxu0
    %2206 = vmatprep.mubr.bf16.mxu0 0
    %2207 = vmatmul.mubr.bf16.gmra.mxu0 %v2097
    %v2208 = vpop.f32.mrf.mxu0
    %v2209 = vadd.f32 %v76, %v2208
    %v2210 = vpop.f32.mrf.mxu0
    %v2211 = vpop.f32.mrf.mxu0
    %v2212 = vadd.f32 %v77, %v2211
    %v2213 = vpop.f32.mrf.mxu0
    %2214 = vmatprep.mubr.bf16.mxu0 0
    %2215 = vmatmul.mubr.bf16.gmra.mxu0 %v2100
    %v2216 = vpop.f32.mrf.mxu0
    %v2217 = vadd.f32 %v78, %v2216
    %v2218 = vpop.f32.mrf.mxu0
    %v2219 = vpop.f32.mrf.mxu0
    %v2220 = vadd.f32 %v79, %v2219
    %v2221 = vpop.f32.mrf.mxu0
    %2222 = vmatprep.mubr.bf16.mxu0 0
    %2223 = vmatmul.mubr.bf16.gmra.mxu0 %v2103
    %v2224 = vpop.f32.mrf.mxu0
    %v2225 = vadd.f32 %v80, %v2224
    %v2226 = vpop.f32.mrf.mxu0
    %v2227 = vpop.f32.mrf.mxu0
    %v2228 = vadd.f32 %v81, %v2227
    %v2229 = vpop.f32.mrf.mxu0
    %2230 = vmatprep.mubr.bf16.mxu0 0
    %2231 = vmatmul.mubr.bf16.gmra.mxu0 %v2106
    %v2232 = vpop.f32.mrf.mxu0
    %v2233 = vadd.f32 %v82, %v2232
    %v2234 = vpop.f32.mrf.mxu0
    %v2235 = vpop.f32.mrf.mxu0
    %v2236 = vadd.f32 %v83, %v2235
    %v2237 = vpop.f32.mrf.mxu0
    %2238 = vmatprep.mubr.bf16.mxu0 0
    %2239 = vmatmul.mubr.bf16.gmra.mxu0 %v2109
    %v2240 = vpop.f32.mrf.mxu0
    %v2241 = vadd.f32 %v84, %v2240
    %v2242 = vpop.f32.mrf.mxu0
    %v2243 = vpop.f32.mrf.mxu0
    %v2244 = vadd.f32 %v85, %v2243
    %v2245 = vpop.f32.mrf.mxu0
    %2246 = vmatprep.mubr.bf16.mxu0 0
    %2247 = vmatmul.mubr.bf16.gmra.mxu0 %v2112
    %v2248 = vpop.f32.mrf.mxu0
    %v2249 = vadd.f32 %v86, %v2248
    %v2250 = vpop.f32.mrf.mxu0
    %v2251 = vpop.f32.mrf.mxu0
    %v2252 = vadd.f32 %v87, %v2251
    %v2253 = vpop.f32.mrf.mxu0
    %2254 = vmatprep.mubr.bf16.mxu0 0
    %2255 = vmatmul.mubr.bf16.gmra.mxu0 %v2115
    %v2256 = vpop.f32.mrf.mxu0
    %v2257 = vadd.f32 %v88, %v2256
    %v2258 = vpop.f32.mrf.mxu0
    %v2259 = vpop.f32.mrf.mxu0
    %v2260 = vadd.f32 %v89, %v2259
    %v2261 = vpop.f32.mrf.mxu0
    %2262 = vmatprep.mubr.bf16.mxu0 0
    %2263 = vmatmul.mubr.bf16.gmra.mxu0 %v2118
    %v2264 = vpop.f32.mrf.mxu0
    %v2265 = vadd.f32 %v90, %v2264
    %v2266 = vpop.f32.mrf.mxu0
    %v2267 = vpop.f32.mrf.mxu0
    %v2268 = vadd.f32 %v91, %v2267
    %v2269 = vpop.f32.mrf.mxu0
    %2270 = vmatprep.mubr.bf16.mxu0 0
    %2271 = vmatmul.mubr.bf16.gmra.mxu0 %v2121
    %v2272 = vpop.f32.mrf.mxu0
    %v2273 = vadd.f32 %v92, %v2272
    %v2274 = vpop.f32.mrf.mxu0
    %v2275 = vpop.f32.mrf.mxu0
    %v2276 = vadd.f32 %v93, %v2275
    %v2277 = vpop.f32.mrf.mxu0
    %2278 = vmatprep.mubr.bf16.mxu0 0
    %2279 = vmatmul.mubr.bf16.gmra.mxu0 %v2124
    %v2280 = vpop.f32.mrf.mxu0
    %v2281 = vadd.f32 %v94, %v2280
    %v2282 = vpop.f32.mrf.mxu0
    %v2283 = vpop.f32.mrf.mxu0
    %v2284 = vadd.f32 %v95, %v2283
    %v2285 = vpop.f32.mrf.mxu0
    %2286 = vdwg.mxu0
    %v2287 = vsel %vm129, %v2161, -inf
    %2288 = vmax.xlane.f32.xlu0 %v2287
    %v2289 = vpop.xlane.xlu0 %2288
    %v2290 = vsel %vm129, %v2164, -inf
    %2291 = vmax.xlane.f32.xlu0 %v2290
    %v2292 = vpop.xlane.xlu0 %2291
    %v2293 = vsel %vm129, %v2169, -inf
    %2294 = vmax.xlane.f32.xlu0 %v2293
    %v2295 = vpop.xlane.xlu0 %2294
    %v2296 = vsel %vm129, %v2172, -inf
    %2297 = vmax.xlane.f32.xlu0 %v2296
    %v2298 = vpop.xlane.xlu0 %2297
    %v2299 = vsel %vm129, %v2177, -inf
    %2300 = vmax.xlane.f32.xlu0 %v2299
    %v2301 = vpop.xlane.xlu0 %2300
    %v2302 = vsel %vm129, %v2180, -inf
    %2303 = vmax.xlane.f32.xlu0 %v2302
    %v2304 = vpop.xlane.xlu0 %2303
    %v2305 = vsel %vm129, %v2185, -inf
    %2306 = vmax.xlane.f32.xlu0 %v2305
    %v2307 = vpop.xlane.xlu0 %2306
    %v2308 = vsel %vm129, %v2188, -inf
    %2309 = vmax.xlane.f32.xlu0 %v2308
    %v2310 = vpop.xlane.xlu0 %2309
    %v2311 = vsel %vm129, %v2193, -inf
    %2312 = vmax.xlane.f32.xlu0 %v2311
    %v2313 = vpop.xlane.xlu0 %2312
    %v2314 = vsel %vm129, %v2196, -inf
    %2315 = vmax.xlane.f32.xlu0 %v2314
    %v2316 = vpop.xlane.xlu0 %2315
    %v2317 = vsel %vm129, %v2201, -inf
    %2318 = vmax.xlane.f32.xlu0 %v2317
    %v2319 = vpop.xlane.xlu0 %2318
    %v2320 = vsel %vm129, %v2204, -inf
    %2321 = vmax.xlane.f32.xlu0 %v2320
    %v2322 = vpop.xlane.xlu0 %2321
    %v2323 = vsel %vm129, %v2209, -inf
    %2324 = vmax.xlane.f32.xlu0 %v2323
    %v2325 = vpop.xlane.xlu0 %2324
    %v2326 = vsel %vm129, %v2212, -inf
    %2327 = vmax.xlane.f32.xlu0 %v2326
    %v2328 = vpop.xlane.xlu0 %2327
    %v2329 = vsel %vm129, %v2217, -inf
    %2330 = vmax.xlane.f32.xlu0 %v2329
    %v2331 = vpop.xlane.xlu0 %2330
    %v2332 = vsel %vm129, %v2220, -inf
    %2333 = vmax.xlane.f32.xlu0 %v2332
    %v2334 = vpop.xlane.xlu0 %2333
    %v2335 = vsel %vm129, %v2225, -inf
    %2336 = vmax.xlane.f32.xlu0 %v2335
    %v2337 = vpop.xlane.xlu0 %2336
    %v2338 = vsel %vm129, %v2228, -inf
    %2339 = vmax.xlane.f32.xlu0 %v2338
    %v2340 = vpop.xlane.xlu0 %2339
    %v2341 = vsel %vm129, %v2233, -inf
    %2342 = vmax.xlane.f32.xlu0 %v2341
    %v2343 = vpop.xlane.xlu0 %2342
    %v2344 = vsel %vm129, %v2236, -inf
    %2345 = vmax.xlane.f32.xlu0 %v2344
    %v2346 = vpop.xlane.xlu0 %2345
    %v2347 = vsel %vm129, %v2241, -inf
    %2348 = vmax.xlane.f32.xlu0 %v2347
    %v2349 = vpop.xlane.xlu0 %2348
    %v2350 = vsel %vm129, %v2244, -inf
    %2351 = vmax.xlane.f32.xlu0 %v2350
    %v2352 = vpop.xlane.xlu0 %2351
    %v2353 = vsel %vm129, %v2249, -inf
    %2354 = vmax.xlane.f32.xlu0 %v2353
    %v2355 = vpop.xlane.xlu0 %2354
    %v2356 = vsel %vm129, %v2252, -inf
    %2357 = vmax.xlane.f32.xlu0 %v2356
    %v2358 = vpop.xlane.xlu0 %2357
    %v2359 = vsel %vm129, %v2257, -inf
    %2360 = vmax.xlane.f32.xlu0 %v2359
    %v2361 = vpop.xlane.xlu0 %2360
    %v2362 = vsel %vm129, %v2260, -inf
    %2363 = vmax.xlane.f32.xlu0 %v2362
    %v2364 = vpop.xlane.xlu0 %2363
    %v2365 = vsel %vm129, %v2265, -inf
    %2366 = vmax.xlane.f32.xlu0 %v2365
    %v2367 = vpop.xlane.xlu0 %2366
    %v2368 = vsel %vm129, %v2268, -inf
    %2369 = vmax.xlane.f32.xlu0 %v2368
    %v2370 = vpop.xlane.xlu0 %2369
    %v2371 = vsel %vm129, %v2273, -inf
    %2372 = vmax.xlane.f32.xlu0 %v2371
    %v2373 = vpop.xlane.xlu0 %2372
    %v2374 = vsel %vm129, %v2276, -inf
    %2375 = vmax.xlane.f32.xlu0 %v2374
    %v2376 = vpop.xlane.xlu0 %2375
    %v2377 = vsel %vm129, %v2281, -inf
    %2378 = vmax.xlane.f32.xlu0 %v2377
    %v2379 = vpop.xlane.xlu0 %2378
    %v2380 = vsel %vm129, %v2284, -inf
    %2381 = vmax.xlane.f32.xlu0 %v2380
    %v2382 = vpop.xlane.xlu0 %2381
    %v2383 = vsub.f32 %v2161, %v2289
    %v2384 = vsub.f32 %v2164, %v2292
    %v2385 = vsub.f32 %v2169, %v2295
    %v2386 = vsub.f32 %v2172, %v2298
    %v2387 = vsub.f32 %v2177, %v2301
    %v2388 = vsub.f32 %v2180, %v2304
    %v2389 = vsub.f32 %v2185, %v2307
    %v2390 = vsub.f32 %v2188, %v2310
    %v2391 = vsub.f32 %v2193, %v2313
    %v2392 = vsub.f32 %v2196, %v2316
    %v2393 = vsub.f32 %v2201, %v2319
    %v2394 = vsub.f32 %v2204, %v2322
    %v2395 = vsub.f32 %v2209, %v2325
    %v2396 = vsub.f32 %v2212, %v2328
    %v2397 = vsub.f32 %v2217, %v2331
    %v2398 = vsub.f32 %v2220, %v2334
    %v2399 = vsub.f32 %v2225, %v2337
    %v2400 = vsub.f32 %v2228, %v2340
    %v2401 = vsub.f32 %v2233, %v2343
    %v2402 = vsub.f32 %v2236, %v2346
    %v2403 = vsub.f32 %v2241, %v2349
    %v2404 = vsub.f32 %v2244, %v2352
    %v2405 = vsub.f32 %v2249, %v2355
    %v2406 = vsub.f32 %v2252, %v2358
    %v2407 = vsub.f32 %v2257, %v2361
    %v2408 = vsub.f32 %v2260, %v2364
    %v2409 = vsub.f32 %v2265, %v2367
    %v2410 = vsub.f32 %v2268, %v2370
    %v2411 = vsub.f32 %v2273, %v2373
    %v2412 = vsub.f32 %v2276, %v2376
    %v2413 = vsub.f32 %v2281, %v2379
    %v2414 = vsub.f32 %v2284, %v2382
    %v2415 = vmul.f32 %v2383, 1.442695
    %v2416 = vpow.pop %v2415
    %v2417 = vmul.f32 %v2384, 1.442695
    %v2418 = vpow.pop %v2417
    %v2419 = vmul.f32 %v2385, 1.442695
    %v2420 = vpow.pop %v2419
    %v2421 = vmul.f32 %v2386, 1.442695
    %v2422 = vpow.pop %v2421
    %v2423 = vmul.f32 %v2387, 1.442695
    %v2424 = vpow.pop %v2423
    %v2425 = vmul.f32 %v2388, 1.442695
    %v2426 = vpow.pop %v2425
    %v2427 = vmul.f32 %v2389, 1.442695
    %v2428 = vpow.pop %v2427
    %v2429 = vmul.f32 %v2390, 1.442695
    %v2430 = vpow.pop %v2429
    %v2431 = vmul.f32 %v2391, 1.442695
    %v2432 = vpow.pop %v2431
    %v2433 = vmul.f32 %v2392, 1.442695
    %v2434 = vpow.pop %v2433
    %v2435 = vmul.f32 %v2393, 1.442695
    %v2436 = vpow.pop %v2435
    %v2437 = vmul.f32 %v2394, 1.442695
    %v2438 = vpow.pop %v2437
    %v2439 = vmul.f32 %v2395, 1.442695
    %v2440 = vpow.pop %v2439
    %v2441 = vmul.f32 %v2396, 1.442695
    %v2442 = vpow.pop %v2441
    %v2443 = vmul.f32 %v2397, 1.442695
    %v2444 = vpow.pop %v2443
    %v2445 = vmul.f32 %v2398, 1.442695
    %v2446 = vpow.pop %v2445
    %v2447 = vmul.f32 %v2399, 1.442695
    %v2448 = vpow.pop %v2447
    %v2449 = vmul.f32 %v2400, 1.442695
    %v2450 = vpow.pop %v2449
    %v2451 = vmul.f32 %v2401, 1.442695
    %v2452 = vpow.pop %v2451
    %v2453 = vmul.f32 %v2402, 1.442695
    %v2454 = vpow.pop %v2453
    %v2455 = vmul.f32 %v2403, 1.442695
    %v2456 = vpow.pop %v2455
    %v2457 = vmul.f32 %v2404, 1.442695
    %v2458 = vpow.pop %v2457
    %v2459 = vmul.f32 %v2405, 1.442695
    %v2460 = vpow.pop %v2459
    %v2461 = vmul.f32 %v2406, 1.442695
    %v2462 = vpow.pop %v2461
    %v2463 = vmul.f32 %v2407, 1.442695
    %v2464 = vpow.pop %v2463
    %v2465 = vmul.f32 %v2408, 1.442695
    %v2466 = vpow.pop %v2465
    %v2467 = vmul.f32 %v2409, 1.442695
    %v2468 = vpow.pop %v2467
    %v2469 = vmul.f32 %v2410, 1.442695
    %v2470 = vpow.pop %v2469
    %v2471 = vmul.f32 %v2411, 1.442695
    %v2472 = vpow.pop %v2471
    %v2473 = vmul.f32 %v2412, 1.442695
    %v2474 = vpow.pop %v2473
    %v2475 = vmul.f32 %v2413, 1.442695
    %v2476 = vpow.pop %v2475
    %v2477 = vmul.f32 %v2414, 1.442695
    %v2478 = vpow.pop %v2477
    %v2479 = vsel %vm129, %v2416, 0.0
    %2480 = vadd.xlane.f32.xlu0 %v2479
    %v2481 = vpop.xlane.xlu0 %2480
    %v2482 = vsel %vm129, %v2418, 0.0
    %2483 = vadd.xlane.f32.xlu0 %v2482
    %v2484 = vpop.xlane.xlu0 %2483
    %v2485 = vsel %vm129, %v2420, 0.0
    %2486 = vadd.xlane.f32.xlu0 %v2485
    %v2487 = vpop.xlane.xlu0 %2486
    %v2488 = vsel %vm129, %v2422, 0.0
    %2489 = vadd.xlane.f32.xlu0 %v2488
    %v2490 = vpop.xlane.xlu0 %2489
    %v2491 = vsel %vm129, %v2424, 0.0
    %2492 = vadd.xlane.f32.xlu0 %v2491
    %v2493 = vpop.xlane.xlu0 %2492
    %v2494 = vsel %vm129, %v2426, 0.0
    %2495 = vadd.xlane.f32.xlu0 %v2494
    %v2496 = vpop.xlane.xlu0 %2495
    %v2497 = vsel %vm129, %v2428, 0.0
    %2498 = vadd.xlane.f32.xlu0 %v2497
    %v2499 = vpop.xlane.xlu0 %2498
    %v2500 = vsel %vm129, %v2430, 0.0
    %2501 = vadd.xlane.f32.xlu0 %v2500
    %v2502 = vpop.xlane.xlu0 %2501
    %v2503 = vsel %vm129, %v2432, 0.0
    %2504 = vadd.xlane.f32.xlu0 %v2503
    %v2505 = vpop.xlane.xlu0 %2504
    %v2506 = vsel %vm129, %v2434, 0.0
    %2507 = vadd.xlane.f32.xlu0 %v2506
    %v2508 = vpop.xlane.xlu0 %2507
    %v2509 = vsel %vm129, %v2436, 0.0
    %2510 = vadd.xlane.f32.xlu0 %v2509
    %v2511 = vpop.xlane.xlu0 %2510
    %v2512 = vsel %vm129, %v2438, 0.0
    %2513 = vadd.xlane.f32.xlu0 %v2512
    %v2514 = vpop.xlane.xlu0 %2513
    %v2515 = vsel %vm129, %v2440, 0.0
    %2516 = vadd.xlane.f32.xlu0 %v2515
    %v2517 = vpop.xlane.xlu0 %2516
    %v2518 = vsel %vm129, %v2442, 0.0
    %2519 = vadd.xlane.f32.xlu0 %v2518
    %v2520 = vpop.xlane.xlu0 %2519
    %v2521 = vsel %vm129, %v2444, 0.0
    %2522 = vadd.xlane.f32.xlu0 %v2521
    %v2523 = vpop.xlane.xlu0 %2522
    %v2524 = vsel %vm129, %v2446, 0.0
    %2525 = vadd.xlane.f32.xlu0 %v2524
    %v2526 = vpop.xlane.xlu0 %2525
    %v2527 = vsel %vm129, %v2448, 0.0
    %2528 = vadd.xlane.f32.xlu0 %v2527
    %v2529 = vpop.xlane.xlu0 %2528
    %v2530 = vsel %vm129, %v2450, 0.0
    %2531 = vadd.xlane.f32.xlu0 %v2530
    %v2532 = vpop.xlane.xlu0 %2531
    %v2533 = vsel %vm129, %v2452, 0.0
    %2534 = vadd.xlane.f32.xlu0 %v2533
    %v2535 = vpop.xlane.xlu0 %2534
    %v2536 = vsel %vm129, %v2454, 0.0
    %2537 = vadd.xlane.f32.xlu0 %v2536
    %v2538 = vpop.xlane.xlu0 %2537
    %v2539 = vsel %vm129, %v2456, 0.0
    %2540 = vadd.xlane.f32.xlu0 %v2539
    %v2541 = vpop.xlane.xlu0 %2540
    %v2542 = vsel %vm129, %v2458, 0.0
    %2543 = vadd.xlane.f32.xlu0 %v2542
    %v2544 = vpop.xlane.xlu0 %2543
    %v2545 = vsel %vm129, %v2460, 0.0
    %2546 = vadd.xlane.f32.xlu0 %v2545
    %v2547 = vpop.xlane.xlu0 %2546
    %v2548 = vsel %vm129, %v2462, 0.0
    %2549 = vadd.xlane.f32.xlu0 %v2548
    %v2550 = vpop.xlane.xlu0 %2549
    %v2551 = vsel %vm129, %v2464, 0.0
    %2552 = vadd.xlane.f32.xlu0 %v2551
    %v2553 = vpop.xlane.xlu0 %2552
    %v2554 = vsel %vm129, %v2466, 0.0
    %2555 = vadd.xlane.f32.xlu0 %v2554
    %v2556 = vpop.xlane.xlu0 %2555
    %v2557 = vsel %vm129, %v2468, 0.0
    %2558 = vadd.xlane.f32.xlu0 %v2557
    %v2559 = vpop.xlane.xlu0 %2558
    %v2560 = vsel %vm129, %v2470, 0.0
    %2561 = vadd.xlane.f32.xlu0 %v2560
    %v2562 = vpop.xlane.xlu0 %2561
    %v2563 = vsel %vm129, %v2472, 0.0
    %2564 = vadd.xlane.f32.xlu0 %v2563
    %v2565 = vpop.xlane.xlu0 %2564
    %v2566 = vsel %vm129, %v2474, 0.0
    %2567 = vadd.xlane.f32.xlu0 %v2566
    %v2568 = vpop.xlane.xlu0 %2567
    %v2569 = vsel %vm129, %v2476, 0.0
    %2570 = vadd.xlane.f32.xlu0 %v2569
    %v2571 = vpop.xlane.xlu0 %2570
    %v2572 = vsel %vm129, %v2478, 0.0
    %2573 = vadd.xlane.f32.xlu0 %v2572
    %v2574 = vpop.xlane.xlu0 %2573
    %v2575 = vrcp.pop %v2481
    %v2576 = vrcp.pop %v2484
    %v2577 = vrcp.pop %v2487
    %v2578 = vrcp.pop %v2490
    %v2579 = vrcp.pop %v2493
    %v2580 = vrcp.pop %v2496
    %v2581 = vrcp.pop %v2499
    %v2582 = vrcp.pop %v2502
    %v2583 = vrcp.pop %v2505
    %v2584 = vrcp.pop %v2508
    %v2585 = vrcp.pop %v2511
    %v2586 = vrcp.pop %v2514
    %v2587 = vrcp.pop %v2517
    %v2588 = vrcp.pop %v2520
    %v2589 = vrcp.pop %v2523
    %v2590 = vrcp.pop %v2526
    %v2591 = vrcp.pop %v2529
    %v2592 = vrcp.pop %v2532
    %v2593 = vrcp.pop %v2535
    %v2594 = vrcp.pop %v2538
    %v2595 = vrcp.pop %v2541
    %v2596 = vrcp.pop %v2544
    %v2597 = vrcp.pop %v2547
    %v2598 = vrcp.pop %v2550
    %v2599 = vrcp.pop %v2553
    %v2600 = vrcp.pop %v2556
    %v2601 = vrcp.pop %v2559
    %v2602 = vrcp.pop %v2562
    %v2603 = vrcp.pop %v2565
    %v2604 = vrcp.pop %v2568
    %v2605 = vrcp.pop %v2571
    %v2606 = vrcp.pop %v2574
    %v2607 = vmul.f32 %v2416, %v2575
    %v2608 = vmul.f32 %v2418, %v2576
    %v2609 = vmul.f32 %v2420, %v2577
    %v2610 = vmul.f32 %v2422, %v2578
    %v2611 = vmul.f32 %v2424, %v2579
    %v2612 = vmul.f32 %v2426, %v2580
    %v2613 = vmul.f32 %v2428, %v2581
    %v2614 = vmul.f32 %v2430, %v2582
    %v2615 = vmul.f32 %v2432, %v2583
    %v2616 = vmul.f32 %v2434, %v2584
    %v2617 = vmul.f32 %v2436, %v2585
    %v2618 = vmul.f32 %v2438, %v2586
    %v2619 = vmul.f32 %v2440, %v2587
    %v2620 = vmul.f32 %v2442, %v2588
    %v2621 = vmul.f32 %v2444, %v2589
    %v2622 = vmul.f32 %v2446, %v2590
    %v2623 = vmul.f32 %v2448, %v2591
    %v2624 = vmul.f32 %v2450, %v2592
    %v2625 = vmul.f32 %v2452, %v2593
    %v2626 = vmul.f32 %v2454, %v2594
    %v2627 = vmul.f32 %v2456, %v2595
    %v2628 = vmul.f32 %v2458, %v2596
    %v2629 = vmul.f32 %v2460, %v2597
    %v2630 = vmul.f32 %v2462, %v2598
    %v2631 = vmul.f32 %v2464, %v2599
    %v2632 = vmul.f32 %v2466, %v2600
    %v2633 = vmul.f32 %v2468, %v2601
    %v2634 = vmul.f32 %v2470, %v2602
    %v2635 = vmul.f32 %v2472, %v2603
    %v2636 = vmul.f32 %v2474, %v2604
    %v2637 = vmul.f32 %v2476, %v2605
    %v2638 = vmul.f32 %v2478, %v2606
    %v2639 = vpack.c.bf16 %v2608, %v2607
    %v2640 = vpack.c.bf16 %v2610, %v2609
    %v2641 = vpack.c.bf16 %v2612, %v2611
    %v2642 = vpack.c.bf16 %v2614, %v2613
    %v2643 = vpack.c.bf16 %v2616, %v2615
    %v2644 = vpack.c.bf16 %v2618, %v2617
    %v2645 = vpack.c.bf16 %v2620, %v2619
    %v2646 = vpack.c.bf16 %v2622, %v2621
    %v2647 = vpack.c.bf16 %v2624, %v2623
    %v2648 = vpack.c.bf16 %v2626, %v2625
    %v2649 = vpack.c.bf16 %v2628, %v2627
    %v2650 = vpack.c.bf16 %v2630, %v2629
    %v2651 = vpack.c.bf16 %v2632, %v2631
    %v2652 = vpack.c.bf16 %v2634, %v2633
    %v2653 = vpack.c.bf16 %v2636, %v2635
    %v2654 = vpack.c.bf16 %v2638, %v2637
    %v2655 = vpack.c.bf16 %v1985, %v1982
    %v2656 = vpack.c.bf16 %v1993, %v1990
    %v2658 = vsel %vm129, %v2639, 0
    %v2661 = vsel %vm129, %v2640, 0
    %v2664 = vsel %vm129, %v2641, 0
    %v2667 = vsel %vm129, %v2642, 0
    %v2670 = vsel %vm129, %v2643, 0
    %v2673 = vsel %vm129, %v2644, 0
    %v2676 = vsel %vm129, %v2645, 0
    %v2679 = vsel %vm129, %v2646, 0
    %v2682 = vsel %vm129, %v2647, 0
    %v2685 = vsel %vm129, %v2648, 0
    %v2688 = vsel %vm129, %v2649, 0
    %v2691 = vsel %vm129, %v2650, 0
    %v2694 = vsel %vm129, %v2651, 0
    %v2697 = vsel %vm129, %v2652, 0
    %v2700 = vsel %vm129, %v2653, 0
    %v2703 = vsel %vm129, %v2654, 0
    %2705 = vmatprep.subr.bf16.mxu0 0
    %2706 = vmatpush1.bf16.msra.mxu0 0
    %2707 = vmatprep.subr.bf16.mxu0 0
    %2708 = vmatpush1.bf16.msra.mxu0 0
    %2709 = vmatprep.subr.bf16.mxu0 0
    %2710 = vmatpush1.bf16.msra.mxu0 0
    %2711 = vmatprep.subr.bf16.mxu0 0
    %2712 = vmatpush1.bf16.msra.mxu0 0
    %2713 = vmatprep.subr.bf16.mxu0 0
    %2714 = vmatpush1.bf16.msra.mxu0 0
    %2715 = vmatprep.subr.bf16.mxu0 0
    %2716 = vmatpush1.bf16.msra.mxu0 0
    %2717 = vmatprep.subr.bf16.mxu0 0
    %2718 = vmatpush1.bf16.msra.mxu0 %v2656
    %2719 = vmatprep.subr.bf16.mxu0 0
    %2720 = vmatpush1.bf16.msra.mxu0 %v2655
    %2721 = vmatprep.subr.bf16.mxu0 0
    %2722 = vmatpush2.bf16.msra.mxu0 0
    %2723 = vmatprep.subr.bf16.mxu0 0
    %2724 = vmatpush2.bf16.msra.mxu0 0
    %2725 = vmatprep.subr.bf16.mxu0 0
    %2726 = vmatpush2.bf16.msra.mxu0 0
    %2727 = vmatprep.subr.bf16.mxu0 0
    %2728 = vmatpush2.bf16.msra.mxu0 0
    %2729 = vmatprep.subr.bf16.mxu0 0
    %2730 = vmatpush2.bf16.msra.mxu0 0
    %2731 = vmatprep.subr.bf16.mxu0 0
    %2732 = vmatpush2.bf16.msra.mxu0 0
    %2733 = vmatprep.subr.bf16.mxu0 0
    %2734 = vmatpush2.bf16.msra.mxu0 0
    %2735 = vmatprep.subr.bf16.mxu0 0
    %2736 = vmatpush2.bf16.msra.mxu0 0
    %2737 = vmatprep.mubr.bf16.mxu0 0
    %2738 = vmatmul.mubr.bf16.gmra.mxu0 %v2658
    %v2739 = vpop.f32.mrf.mxu0
    %v2740 = vadd.f32 0.0, %v2739
    %v2741 = vpop.f32.mrf.mxu0
    %v2742 = vpop.f32.mrf.mxu0
    %v2743 = vadd.f32 0.0, %v2742
    %v2744 = vpop.f32.mrf.mxu0
    %2745 = vmatprep.mubr.bf16.mxu0 0
    %2746 = vmatmul.mubr.bf16.gmra.mxu0 %v2661
    %v2747 = vpop.f32.mrf.mxu0
    %v2748 = vadd.f32 0.0, %v2747
    %v2749 = vpop.f32.mrf.mxu0
    %v2750 = vpop.f32.mrf.mxu0
    %v2751 = vadd.f32 0.0, %v2750
    %v2752 = vpop.f32.mrf.mxu0
    %2753 = vmatprep.mubr.bf16.mxu0 0
    %2754 = vmatmul.mubr.bf16.gmra.mxu0 %v2664
    %v2755 = vpop.f32.mrf.mxu0
    %v2756 = vadd.f32 0.0, %v2755
    %v2757 = vpop.f32.mrf.mxu0
    %v2758 = vpop.f32.mrf.mxu0
    %v2759 = vadd.f32 0.0, %v2758
    %v2760 = vpop.f32.mrf.mxu0
    %2761 = vmatprep.mubr.bf16.mxu0 0
    %2762 = vmatmul.mubr.bf16.gmra.mxu0 %v2667
    %v2763 = vpop.f32.mrf.mxu0
    %v2764 = vadd.f32 0.0, %v2763
    %v2765 = vpop.f32.mrf.mxu0
    %v2766 = vpop.f32.mrf.mxu0
    %v2767 = vadd.f32 0.0, %v2766
    %v2768 = vpop.f32.mrf.mxu0
    %2769 = vmatprep.mubr.bf16.mxu0 0
    %2770 = vmatmul.mubr.bf16.gmra.mxu0 %v2670
    %v2771 = vpop.f32.mrf.mxu0
    %v2772 = vadd.f32 0.0, %v2771
    %v2773 = vpop.f32.mrf.mxu0
    %v2774 = vpop.f32.mrf.mxu0
    %v2775 = vadd.f32 0.0, %v2774
    %v2776 = vpop.f32.mrf.mxu0
    %2777 = vmatprep.mubr.bf16.mxu0 0
    %2778 = vmatmul.mubr.bf16.gmra.mxu0 %v2673
    %v2779 = vpop.f32.mrf.mxu0
    %v2780 = vadd.f32 0.0, %v2779
    %v2781 = vpop.f32.mrf.mxu0
    %v2782 = vpop.f32.mrf.mxu0
    %v2783 = vadd.f32 0.0, %v2782
    %v2784 = vpop.f32.mrf.mxu0
    %2785 = vmatprep.mubr.bf16.mxu0 0
    %2786 = vmatmul.mubr.bf16.gmra.mxu0 %v2676
    %v2787 = vpop.f32.mrf.mxu0
    %v2788 = vadd.f32 0.0, %v2787
    %v2789 = vpop.f32.mrf.mxu0
    %v2790 = vpop.f32.mrf.mxu0
    %v2791 = vadd.f32 0.0, %v2790
    %v2792 = vpop.f32.mrf.mxu0
    %2793 = vmatprep.mubr.bf16.mxu0 0
    %2794 = vmatmul.mubr.bf16.gmra.mxu0 %v2679
    %v2795 = vpop.f32.mrf.mxu0
    %v2796 = vadd.f32 0.0, %v2795
    %v2797 = vpop.f32.mrf.mxu0
    %v2798 = vpop.f32.mrf.mxu0
    %v2799 = vadd.f32 0.0, %v2798
    %v2800 = vpop.f32.mrf.mxu0
    %2801 = vmatprep.mubr.bf16.mxu0 0
    %2802 = vmatmul.mubr.bf16.gmra.mxu0 %v2682
    %v2803 = vpop.f32.mrf.mxu0
    %v2804 = vadd.f32 0.0, %v2803
    %v2805 = vpop.f32.mrf.mxu0
    %v2806 = vpop.f32.mrf.mxu0
    %v2807 = vadd.f32 0.0, %v2806
    %v2808 = vpop.f32.mrf.mxu0
    %2809 = vmatprep.mubr.bf16.mxu0 0
    %2810 = vmatmul.mubr.bf16.gmra.mxu0 %v2685
    %v2811 = vpop.f32.mrf.mxu0
    %v2812 = vadd.f32 0.0, %v2811
    %v2813 = vpop.f32.mrf.mxu0
    %v2814 = vpop.f32.mrf.mxu0
    %v2815 = vadd.f32 0.0, %v2814
    %v2816 = vpop.f32.mrf.mxu0
    %2817 = vmatprep.mubr.bf16.mxu0 0
    %2818 = vmatmul.mubr.bf16.gmra.mxu0 %v2688
    %v2819 = vpop.f32.mrf.mxu0
    %v2820 = vadd.f32 0.0, %v2819
    %v2821 = vpop.f32.mrf.mxu0
    %v2822 = vpop.f32.mrf.mxu0
    %v2823 = vadd.f32 0.0, %v2822
    %v2824 = vpop.f32.mrf.mxu0
    %2825 = vmatprep.mubr.bf16.mxu0 0
    %2826 = vmatmul.mubr.bf16.gmra.mxu0 %v2691
    %v2827 = vpop.f32.mrf.mxu0
    %v2828 = vadd.f32 0.0, %v2827
    %v2829 = vpop.f32.mrf.mxu0
    %v2830 = vpop.f32.mrf.mxu0
    %v2831 = vadd.f32 0.0, %v2830
    %v2832 = vpop.f32.mrf.mxu0
    %2833 = vmatprep.mubr.bf16.mxu0 0
    %2834 = vmatmul.mubr.bf16.gmra.mxu0 %v2694
    %v2835 = vpop.f32.mrf.mxu0
    %v2836 = vadd.f32 0.0, %v2835
    %v2837 = vpop.f32.mrf.mxu0
    %v2838 = vpop.f32.mrf.mxu0
    %v2839 = vadd.f32 0.0, %v2838
    %v2840 = vpop.f32.mrf.mxu0
    %2841 = vmatprep.mubr.bf16.mxu0 0
    %2842 = vmatmul.mubr.bf16.gmra.mxu0 %v2697
    %v2843 = vpop.f32.mrf.mxu0
    %v2844 = vadd.f32 0.0, %v2843
    %v2845 = vpop.f32.mrf.mxu0
    %v2846 = vpop.f32.mrf.mxu0
    %v2847 = vadd.f32 0.0, %v2846
    %v2848 = vpop.f32.mrf.mxu0
    %2849 = vmatprep.mubr.bf16.mxu0 0
    %2850 = vmatmul.mubr.bf16.gmra.mxu0 %v2700
    %v2851 = vpop.f32.mrf.mxu0
    %v2852 = vadd.f32 0.0, %v2851
    %v2853 = vpop.f32.mrf.mxu0
    %v2854 = vpop.f32.mrf.mxu0
    %v2855 = vadd.f32 0.0, %v2854
    %v2856 = vpop.f32.mrf.mxu0
    %2857 = vmatprep.mubr.bf16.mxu0 0
    %2858 = vmatmul.mubr.bf16.gmra.mxu0 %v2703
    %v2859 = vpop.f32.mrf.mxu0
    %v2860 = vadd.f32 0.0, %v2859
    %v2861 = vpop.f32.mrf.mxu0
    %v2862 = vpop.f32.mrf.mxu0
    %v2863 = vadd.f32 0.0, %v2862
    %v2864 = vpop.f32.mrf.mxu0
    %2865 = vdwg.mxu0
    %v2866 = vmul.f32 %v2740, %v97
    %v2867 = vmul.f32 %v2743, %v98
    %v2868 = vmul.f32 %v2748, %v99
    %v2869 = vmul.f32 %v2751, %v100
    %v2870 = vmul.f32 %v2756, %v101
    %v2871 = vmul.f32 %v2759, %v102
    %v2872 = vmul.f32 %v2764, %v103
    %v2873 = vmul.f32 %v2767, %v104
    %v2874 = vmul.f32 %v2772, %v105
    %v2875 = vmul.f32 %v2775, %v106
    %v2876 = vmul.f32 %v2780, %v107
    %v2877 = vmul.f32 %v2783, %v108
    %v2878 = vmul.f32 %v2788, %v109
    %v2879 = vmul.f32 %v2791, %v110
    %v2880 = vmul.f32 %v2796, %v111
    %v2881 = vmul.f32 %v2799, %v112
    %v2882 = vmul.f32 %v2804, %v113
    %v2883 = vmul.f32 %v2807, %v114
    %v2884 = vmul.f32 %v2812, %v115
    %v2885 = vmul.f32 %v2815, %v116
    %v2886 = vmul.f32 %v2820, %v117
    %v2887 = vmul.f32 %v2823, %v118
    %v2888 = vmul.f32 %v2828, %v119
    %v2889 = vmul.f32 %v2831, %v120
    %v2890 = vmul.f32 %v2836, %v121
    %v2891 = vmul.f32 %v2839, %v122
    %v2892 = vmul.f32 %v2844, %v123
    %v2893 = vmul.f32 %v2847, %v124
    %v2894 = vmul.f32 %v2852, %v125
    %v2895 = vmul.f32 %v2855, %v126
    %v2896 = vmul.f32 %v2860, %v127
    %v2897 = vmul.f32 %v2863, %v128
    %v2898 = vadd.f32 %v2866, %v2870
    %v2899 = vadd.f32 %v2867, %v2871
    %v2900 = vadd.f32 %v2868, %v2872
    %v2901 = vadd.f32 %v2869, %v2873
    %v2902 = vadd.f32 %v2898, %v2874
    %v2903 = vadd.f32 %v2899, %v2875
    %v2904 = vadd.f32 %v2900, %v2876
    %v2905 = vadd.f32 %v2901, %v2877
    %v2906 = vadd.f32 %v2902, %v2878
    %v2907 = vadd.f32 %v2903, %v2879
    %v2908 = vadd.f32 %v2904, %v2880
    %v2909 = vadd.f32 %v2905, %v2881
    %v2910 = vadd.f32 %v2906, %v2882
    %v2911 = vadd.f32 %v2907, %v2883
    %v2912 = vadd.f32 %v2908, %v2884
    %v2913 = vadd.f32 %v2909, %v2885
    %v2914 = vadd.f32 %v2910, %v2886
    %v2915 = vadd.f32 %v2911, %v2887
    %v2916 = vadd.f32 %v2912, %v2888
    %v2917 = vadd.f32 %v2913, %v2889
    %v2918 = vadd.f32 %v2914, %v2890
    %v2919 = vadd.f32 %v2915, %v2891
    %v2920 = vadd.f32 %v2916, %v2892
    %v2921 = vadd.f32 %v2917, %v2893
    %v2922 = vadd.f32 %v2918, %v2894
    %v2923 = vadd.f32 %v2919, %v2895
    %v2924 = vadd.f32 %v2920, %v2896
    %v2925 = vadd.f32 %v2921, %v2897
    %v2926 = vpack.c.bf16 %v2923, %v2922
    %v2927 = vpack.c.bf16 %v2925, %v2924
    %v2928 = vlaneseq
    %v2929 = vshrl.u32 %v2928, 7
    %v2930 = vsub.s32 0, %v2929
    %v2931 = vrot.slane %v61, %v2930
    %v2936 = vunpack.c.l.b16 %v1785
    %v2937 = vunpack.c.l.b16 %v1786
    %v2938 = vunpack.c.l.b16 %v1787
    %v2939 = vunpack.c.l.b16 %v1788
    %v2940 = vpack.c.b16 %v2937, %v2936
    %v2941 = vpack.c.b16 %v2939, %v2938
    %v2945 = vsel %vm129, %v2926, 0
    %v2948 = vsel %vm129, %v2927, 0
    %2950 = vmatprep.subr.bf16.mxu0 0
    %2951 = vmatpush1.bf16.msra.mxu0 0
    %2952 = vmatprep.subr.bf16.mxu0 0
    %2953 = vmatpush1.bf16.msra.mxu0 0
    %2954 = vmatprep.subr.bf16.mxu0 0
    %2955 = vmatpush1.bf16.msra.mxu0 0
    %2956 = vmatprep.subr.bf16.mxu0 0
    %2957 = vmatpush1.bf16.msra.mxu0 0
    %2958 = vmatprep.subr.bf16.mxu0 0
    %2959 = vmatpush1.bf16.msra.mxu0 0
    %2960 = vmatprep.subr.bf16.mxu0 0
    %2961 = vmatpush1.bf16.msra.mxu0 0
    %2962 = vmatprep.subr.bf16.mxu0 0
    %2963 = vmatpush1.bf16.msra.mxu0 %v2941
    %2964 = vmatprep.subr.bf16.mxu0 0
    %2965 = vmatpush1.bf16.msra.mxu0 %v2940
    %2966 = vmatprep.subr.bf16.mxu0 0
    %2967 = vmatpush2.bf16.msra.mxu0 0
    %2968 = vmatprep.subr.bf16.mxu0 0
    %2969 = vmatpush2.bf16.msra.mxu0 0
    %2970 = vmatprep.subr.bf16.mxu0 0
    %2971 = vmatpush2.bf16.msra.mxu0 0
    %2972 = vmatprep.subr.bf16.mxu0 0
    %2973 = vmatpush2.bf16.msra.mxu0 0
    %2974 = vmatprep.subr.bf16.mxu0 0
    %2975 = vmatpush2.bf16.msra.mxu0 0
    %2976 = vmatprep.subr.bf16.mxu0 0
    %2977 = vmatpush2.bf16.msra.mxu0 0
    %2978 = vmatprep.subr.bf16.mxu0 0
    %2979 = vmatpush2.bf16.msra.mxu0 0
    %2980 = vmatprep.subr.bf16.mxu0 0
    %2981 = vmatpush2.bf16.msra.mxu0 0
    %2982 = vmatprep.mubr.bf16.mxu0 0
    %2983 = vmatmul.mubr.bf16.gmra.mxu0 %v2945
    %v2984 = vpop.f32.mrf.mxu0
    %v2985 = vadd.f32 %v2931, %v2984
    %v2986 = vpop.f32.mrf.mxu0
    %v2987 = vpop.f32.mrf.mxu0
    %v2988 = vadd.f32 %v2931, %v2987
    %v2989 = vpop.f32.mrf.mxu0
    %2990 = vmatprep.mubr.bf16.mxu0 0
    %2991 = vmatmul.mubr.bf16.gmra.mxu0 %v2948
    %v2992 = vpop.f32.mrf.mxu0
    %v2993 = vadd.f32 %v2931, %v2992
    %v2994 = vpop.f32.mrf.mxu0
    %v2995 = vpop.f32.mrf.mxu0
    %v2996 = vadd.f32 %v2931, %v2995
    %v2997 = vpop.f32.mrf.mxu0
    %2998 = vdwg.mxu0
    %v2999 = vadd.f32 %v1768, %v2985
    %v3000 = vadd.f32 %v1769, %v2988
    %v3001 = vadd.f32 %v1770, %v2993
    %v3002 = vadd.f32 %v1771, %v2996
    %v3003 = vsel %vm129, %v2999, 0.0
    %3004 = vadd.xlane.f32.xlu0 %v3003
    %v3005 = vpop.xlane.xlu0 %3004
    %v3006 = vsel %vm129, %v3000, 0.0
    %3007 = vadd.xlane.f32.xlu0 %v3006
    %v3008 = vpop.xlane.xlu0 %3007
    %v3009 = vsel %vm129, %v3001, 0.0
    %3010 = vadd.xlane.f32.xlu0 %v3009
    %v3011 = vpop.xlane.xlu0 %3010
    %v3012 = vsel %vm129, %v3002, 0.0
    %3013 = vadd.xlane.f32.xlu0 %v3012
    %v3014 = vpop.xlane.xlu0 %3013
    %v3015 = vmul.f32 %v3005, %v142
    %v3016 = vmul.f32 %v3008, %v142
    %v3017 = vmul.f32 %v3011, %v142
    %v3018 = vmul.f32 %v3014, %v142
    %v3019 = vsub.f32 %v2999, %v3015
    %v3020 = vsub.f32 %v3000, %v3016
    %v3021 = vsub.f32 %v3001, %v3017
    %v3022 = vsub.f32 %v3002, %v3018
    %v3023 = vmul.f32 %v3019, %v3019
    %v3024 = vmul.f32 %v3020, %v3020
    %v3025 = vmul.f32 %v3021, %v3021
    %v3026 = vmul.f32 %v3022, %v3022
    %v3027 = vsel %vm129, %v3023, 0.0
    %3028 = vadd.xlane.f32.xlu0 %v3027
    %v3029 = vpop.xlane.xlu0 %3028
    %v3030 = vsel %vm129, %v3024, 0.0
    %3031 = vadd.xlane.f32.xlu0 %v3030
    %v3032 = vpop.xlane.xlu0 %3031
    %v3033 = vsel %vm129, %v3025, 0.0
    %3034 = vadd.xlane.f32.xlu0 %v3033
    %v3035 = vpop.xlane.xlu0 %3034
    %v3036 = vsel %vm129, %v3026, 0.0
    %3037 = vadd.xlane.f32.xlu0 %v3036
    %v3038 = vpop.xlane.xlu0 %3037
    %v3039 = vmul.f32 %v3029, %v142
    %v3040 = vmul.f32 %v3032, %v142
    %v3041 = vmul.f32 %v3035, %v142
    %v3042 = vmul.f32 %v3038, %v142
    %v3043 = vadd.f32 %v3039, 1e-05
    %v3044 = vadd.f32 %v3040, 1e-05
    %v3045 = vadd.f32 %v3041, 1e-05
    %v3046 = vadd.f32 %v3042, 1e-05
    %v3047 = vrsqrt.pop %v3043
    %v3048 = vrsqrt.pop %v3044
    %v3049 = vrsqrt.pop %v3045
    %v3050 = vrsqrt.pop %v3046
    %v3051 = vmul.f32 %v3019, %v3047
    %v3052 = vmul.f32 %v3020, %v3048
    %v3053 = vmul.f32 %v3021, %v3049
    %v3054 = vmul.f32 %v3022, %v3050
    %v3055 = vlaneseq
    %v3056 = vshrl.u32 %v3055, 7
    %v3057 = vsub.s32 1, %v3056
    %v3058 = vrot.slane %v61, %v3057
    %v3059 = vmul.f32 %v3051, %v3058
    %v3060 = vmul.f32 %v3052, %v3058
    %v3061 = vmul.f32 %v3053, %v3058
    %v3062 = vmul.f32 %v3054, %v3058
    %v3063 = vlaneseq
    %v3064 = vshrl.u32 %v3063, 7
    %v3065 = vsub.s32 2, %v3064
    %v3066 = vrot.slane %v61, %v3065
    %v3067 = vadd.f32 %v3059, %v3066
    %v3068 = vadd.f32 %v3060, %v3066
    %v3069 = vadd.f32 %v3061, %v3066
    %v3070 = vadd.f32 %v3062, %v3066
    %v3071 = vpack.c.bf16 %v3068, %v3067
    %v3072 = vpack.c.bf16 %v3070, %v3069
    %s3073 = scalar_lea.vmem %s5, 16
    %v3074 = vld [vmem:[%s3073] sm:$0xf]
    %v3075 = vld [vmem:[%s3073 + $0x4] sm:$0xf]
    %v3076 = vld [vmem:[%s3073 + $0x8] sm:$0xf]
    %v3077 = vld [vmem:[%s3073 + $0xc] sm:$0xf]
    %s3078 = scalar_lea.vmem %s3, 1
    %v3079 = vld [vmem:[%s3078] sm:$0x1]
    %v3081 = vlaneseq
    %v3082 = vshrl.u32 %v3081, 7
    %v3083 = vsub.s32 0, %v3082
    %v3084 = vrot.slane %v3079, %v3083
    %v3090 = vunpack.c.l.b16 %v3074
    %v3091 = vunpack.c.l.b16 %v3075
    %v3092 = vunpack.c.l.b16 %v3076
    %v3093 = vunpack.c.l.b16 %v3077
    %v3094 = vpack.c.b16 %v3091, %v3090
    %v3095 = vpack.c.b16 %v3093, %v3092
    %v3099 = vsel %vm129, %v3071, 0
    %v3102 = vsel %vm129, %v3072, 0
    %3104 = vmatprep.subr.bf16.mxu0 0
    %3105 = vmatpush1.bf16.msra.mxu0 0
    %3106 = vmatprep.subr.bf16.mxu0 0
    %3107 = vmatpush1.bf16.msra.mxu0 0
    %3108 = vmatprep.subr.bf16.mxu0 0
    %3109 = vmatpush1.bf16.msra.mxu0 0
    %3110 = vmatprep.subr.bf16.mxu0 0
    %3111 = vmatpush1.bf16.msra.mxu0 0
    %3112 = vmatprep.subr.bf16.mxu0 0
    %3113 = vmatpush1.bf16.msra.mxu0 0
    %3114 = vmatprep.subr.bf16.mxu0 0
    %3115 = vmatpush1.bf16.msra.mxu0 0
    %3116 = vmatprep.subr.bf16.mxu0 0
    %3117 = vmatpush1.bf16.msra.mxu0 %v3095
    %3118 = vmatprep.subr.bf16.mxu0 0
    %3119 = vmatpush1.bf16.msra.mxu0 %v3094
    %3120 = vmatprep.subr.bf16.mxu0 0
    %3121 = vmatpush2.bf16.msra.mxu0 0
    %3122 = vmatprep.subr.bf16.mxu0 0
    %3123 = vmatpush2.bf16.msra.mxu0 0
    %3124 = vmatprep.subr.bf16.mxu0 0
    %3125 = vmatpush2.bf16.msra.mxu0 0
    %3126 = vmatprep.subr.bf16.mxu0 0
    %3127 = vmatpush2.bf16.msra.mxu0 0
    %3128 = vmatprep.subr.bf16.mxu0 0
    %3129 = vmatpush2.bf16.msra.mxu0 0
    %3130 = vmatprep.subr.bf16.mxu0 0
    %3131 = vmatpush2.bf16.msra.mxu0 0
    %3132 = vmatprep.subr.bf16.mxu0 0
    %3133 = vmatpush2.bf16.msra.mxu0 0
    %3134 = vmatprep.subr.bf16.mxu0 0
    %3135 = vmatpush2.bf16.msra.mxu0 0
    %3136 = vmatprep.mubr.bf16.mxu0 0
    %3137 = vmatmul.mubr.bf16.gmra.mxu0 %v3099
    %v3138 = vpop.f32.mrf.mxu0
    %v3139 = vadd.f32 %v3084, %v3138
    %v3140 = vpop.f32.mrf.mxu0
    %v3141 = vpop.f32.mrf.mxu0
    %v3142 = vadd.f32 %v3084, %v3141
    %v3143 = vpop.f32.mrf.mxu0
    %3144 = vmatprep.mubr.bf16.mxu0 0
    %3145 = vmatmul.mubr.bf16.gmra.mxu0 %v3102
    %v3146 = vpop.f32.mrf.mxu0
    %v3147 = vadd.f32 %v3084, %v3146
    %v3148 = vpop.f32.mrf.mxu0
    %v3149 = vpop.f32.mrf.mxu0
    %v3150 = vadd.f32 %v3084, %v3149
    %v3151 = vpop.f32.mrf.mxu0
    %3152 = vdwg.mxu0
    %v3153 = vmax.f32 %v3139, 0.0
    %v3154 = vmax.f32 %v3142, 0.0
    %v3155 = vmax.f32 %v3147, 0.0
    %v3156 = vmax.f32 %v3150, 0.0
    %v3157 = vpack.c.bf16 %v3154, %v3153
    %v3158 = vpack.c.bf16 %v3156, %v3155
    %s3159 = scalar_lea.vmem %s6, 64
    %v3160 = vld [vmem:[%s3159] sm:$0xf]
    %v3161 = vld [vmem:[%s3159 + $0x4] sm:$0xf]
    %v3162 = vld [vmem:[%s3159 + $0x8] sm:$0xf]
    %v3163 = vld [vmem:[%s3159 + $0xc] sm:$0xf]
    %v3164 = vld [vmem:[%s3159 + $0x10] sm:$0xf]
    %v3165 = vld [vmem:[%s3159 + $0x14] sm:$0xf]
    %v3166 = vld [vmem:[%s3159 + $0x18] sm:$0xf]
    %v3167 = vld [vmem:[%s3159 + $0x1c] sm:$0xf]
    %v3168 = vld [vmem:[%s3159 + $0x20] sm:$0xf]
    %v3169 = vld [vmem:[%s3159 + $0x24] sm:$0xf]
    %v3170 = vld [vmem:[%s3159 + $0x28] sm:$0xf]
    %v3171 = vld [vmem:[%s3159 + $0x2c] sm:$0xf]
    %v3172 = vld [vmem:[%s3159 + $0x30] sm:$0xf]
    %v3173 = vld [vmem:[%s3159 + $0x34] sm:$0xf]
    %v3174 = vld [vmem:[%s3159 + $0x38] sm:$0xf]
    %v3175 = vld [vmem:[%s3159 + $0x3c] sm:$0xf]
    %v3176 = vlaneseq
    %v3177 = vshrl.u32 %v3176, 7
    %v3178 = vsub.s32 5, %v3177
    %v3179 = vrot.slane %v61, %v3178
    %v3196 = vunpack.c.l.b16 %v3160
    %v3197 = vunpack.c.l.b16 %v3161
    %v3198 = vunpack.c.l.b16 %v3162
    %v3199 = vunpack.c.l.b16 %v3163
    %v3200 = vunpack.c.l.b16 %v3164
    %v3201 = vunpack.c.l.b16 %v3165
    %v3202 = vunpack.c.l.b16 %v3166
    %v3203 = vunpack.c.l.b16 %v3167
    %v3204 = vunpack.c.l.b16 %v3168
    %v3205 = vunpack.c.l.b16 %v3169
    %v3206 = vunpack.c.l.b16 %v3170
    %v3207 = vunpack.c.l.b16 %v3171
    %v3208 = vunpack.c.l.b16 %v3172
    %v3209 = vunpack.c.l.b16 %v3173
    %v3210 = vunpack.c.l.b16 %v3174
    %v3211 = vunpack.c.l.b16 %v3175
    %v3212 = vpack.c.b16 %v3197, %v3196
    %v3213 = vpack.c.b16 %v3199, %v3198
    %v3214 = vpack.c.b16 %v3201, %v3200
    %v3215 = vpack.c.b16 %v3203, %v3202
    %v3216 = vpack.c.b16 %v3205, %v3204
    %v3217 = vpack.c.b16 %v3207, %v3206
    %v3218 = vpack.c.b16 %v3209, %v3208
    %v3219 = vpack.c.b16 %v3211, %v3210
    %3228 = vmatprep.subr.bf16.mxu0 0
    %3229 = vmatpush1.bf16.msra.mxu0 %v3219
    %3230 = vmatprep.subr.bf16.mxu0 0
    %3231 = vmatpush1.bf16.msra.mxu0 %v3218
    %3232 = vmatprep.subr.bf16.mxu0 0
    %3233 = vmatpush1.bf16.msra.mxu0 %v3217
    %3234 = vmatprep.subr.bf16.mxu0 0
    %3235 = vmatpush1.bf16.msra.mxu0 %v3216
    %3236 = vmatprep.subr.bf16.mxu0 0
    %3237 = vmatpush1.bf16.msra.mxu0 %v3215
    %3238 = vmatprep.subr.bf16.mxu0 0
    %3239 = vmatpush1.bf16.msra.mxu0 %v3214
    %3240 = vmatprep.subr.bf16.mxu0 0
    %3241 = vmatpush1.bf16.msra.mxu0 %v3213
    %3242 = vmatprep.subr.bf16.mxu0 0
    %3243 = vmatpush1.bf16.msra.mxu0 %v3212
    %3244 = vmatprep.subr.bf16.mxu0 0
    %3245 = vmatpush2.bf16.msra.mxu0 0
    %3246 = vmatprep.subr.bf16.mxu0 0
    %3247 = vmatpush2.bf16.msra.mxu0 0
    %3248 = vmatprep.subr.bf16.mxu0 0
    %3249 = vmatpush2.bf16.msra.mxu0 0
    %3250 = vmatprep.subr.bf16.mxu0 0
    %3251 = vmatpush2.bf16.msra.mxu0 0
    %3252 = vmatprep.subr.bf16.mxu0 0
    %3253 = vmatpush2.bf16.msra.mxu0 0
    %3254 = vmatprep.subr.bf16.mxu0 0
    %3255 = vmatpush2.bf16.msra.mxu0 0
    %3256 = vmatprep.subr.bf16.mxu0 0
    %3257 = vmatpush2.bf16.msra.mxu0 0
    %3258 = vmatprep.subr.bf16.mxu0 0
    %3259 = vmatpush2.bf16.msra.mxu0 0
    %3260 = vmatprep.mubr.bf16.mxu0 0
    %3261 = vmatmul.mubr.bf16.gmra.mxu0 %v3157
    %v3262 = vpop.f32.mrf.mxu0
    %v3263 = vadd.f32 %v3179, %v3262
    %v3264 = vpop.f32.mrf.mxu0
    %v3265 = vpop.f32.mrf.mxu0
    %v3266 = vadd.f32 %v3179, %v3265
    %v3267 = vpop.f32.mrf.mxu0
    %3268 = vmatprep.mubr.bf16.mxu0 0
    %3269 = vmatmul.mubr.bf16.gmra.mxu0 %v3158
    %v3270 = vpop.f32.mrf.mxu0
    %v3271 = vadd.f32 %v3179, %v3270
    %v3272 = vpop.f32.mrf.mxu0
    %v3273 = vpop.f32.mrf.mxu0
    %v3274 = vadd.f32 %v3179, %v3273
    %v3275 = vpop.f32.mrf.mxu0
    %3276 = vdwg.mxu0
    %v3277 = vadd.f32 %v3067, %v3263
    %v3278 = vadd.f32 %v3068, %v3266
    %v3279 = vadd.f32 %v3069, %v3271
    %v3280 = vadd.f32 %v3070, %v3274
    %v3281 = vsel %vm129, %v3277, 0.0
    %3282 = vadd.xlane.f32.xlu0 %v3281
    %v3283 = vpop.xlane.xlu0 %3282
    %v3284 = vsel %vm129, %v3278, 0.0
    %3285 = vadd.xlane.f32.xlu0 %v3284
    %v3286 = vpop.xlane.xlu0 %3285
    %v3287 = vsel %vm129, %v3279, 0.0
    %3288 = vadd.xlane.f32.xlu0 %v3287
    %v3289 = vpop.xlane.xlu0 %3288
    %v3290 = vsel %vm129, %v3280, 0.0
    %3291 = vadd.xlane.f32.xlu0 %v3290
    %v3292 = vpop.xlane.xlu0 %3291
    %v3293 = vmul.f32 %v3283, %v142
    %v3294 = vmul.f32 %v3286, %v142
    %v3295 = vmul.f32 %v3289, %v142
    %v3296 = vmul.f32 %v3292, %v142
    %v3297 = vsub.f32 %v3277, %v3293
    %v3298 = vsub.f32 %v3278, %v3294
    %v3299 = vsub.f32 %v3279, %v3295
    %v3300 = vsub.f32 %v3280, %v3296
    %v3301 = vmul.f32 %v3297, %v3297
    %v3302 = vmul.f32 %v3298, %v3298
    %v3303 = vmul.f32 %v3299, %v3299
    %v3304 = vmul.f32 %v3300, %v3300
    %v3305 = vsel %vm129, %v3301, 0.0
    %3306 = vadd.xlane.f32.xlu0 %v3305
    %v3307 = vpop.xlane.xlu0 %3306
    %v3308 = vsel %vm129, %v3302, 0.0
    %3309 = vadd.xlane.f32.xlu0 %v3308
    %v3310 = vpop.xlane.xlu0 %3309
    %v3311 = vsel %vm129, %v3303, 0.0
    %3312 = vadd.xlane.f32.xlu0 %v3311
    %v3313 = vpop.xlane.xlu0 %3312
    %v3314 = vsel %vm129, %v3304, 0.0
    %3315 = vadd.xlane.f32.xlu0 %v3314
    %v3316 = vpop.xlane.xlu0 %3315
    %v3317 = vmul.f32 %v3307, %v142
    %v3318 = vmul.f32 %v3310, %v142
    %v3319 = vmul.f32 %v3313, %v142
    %v3320 = vmul.f32 %v3316, %v142
    %v3321 = vadd.f32 %v3317, 1e-05
    %v3322 = vadd.f32 %v3318, 1e-05
    %v3323 = vadd.f32 %v3319, 1e-05
    %v3324 = vadd.f32 %v3320, 1e-05
    %v3325 = vrsqrt.pop %v3321
    %v3326 = vrsqrt.pop %v3322
    %v3327 = vrsqrt.pop %v3323
    %v3328 = vrsqrt.pop %v3324
    %v3329 = vmul.f32 %v3297, %v3325
    %v3330 = vmul.f32 %v3298, %v3326
    %v3331 = vmul.f32 %v3299, %v3327
    %v3332 = vmul.f32 %v3300, %v3328
    %v3333 = vlaneseq
    %v3334 = vshrl.u32 %v3333, 7
    %v3335 = vsub.s32 3, %v3334
    %v3336 = vrot.slane %v61, %v3335
    %v3337 = vmul.f32 %v3329, %v3336
    %v3338 = vmul.f32 %v3330, %v3336
    %v3339 = vmul.f32 %v3331, %v3336
    %v3340 = vmul.f32 %v3332, %v3336
    %v3341 = vlaneseq
    %v3342 = vshrl.u32 %v3341, 7
    %v3343 = vsub.s32 4, %v3342
    %v3344 = vrot.slane %v61, %v3343
    %v3345 = vadd.f32 %v3337, %v3344
    %v3346 = vadd.f32 %v3338, %v3344
    %v3347 = vadd.f32 %v3339, %v3344
    %v3348 = vadd.f32 %v3340, %v3344
    %s3349 = scalar_lea.vmem %s4, 128
    %v3350 = vld [vmem:[%s3349] sm:$0xf]
    %v3351 = vld [vmem:[%s3349 + $0x4] sm:$0xf]
    %v3352 = vld [vmem:[%s3349 + $0x8] sm:$0xf]
    %v3353 = vld [vmem:[%s3349 + $0xc] sm:$0xf]
    %v3354 = vld [vmem:[%s3349 + $0x10] sm:$0xf]
    %v3355 = vld [vmem:[%s3349 + $0x14] sm:$0xf]
    %v3356 = vld [vmem:[%s3349 + $0x18] sm:$0xf]
    %v3357 = vld [vmem:[%s3349 + $0x1c] sm:$0xf]
    %v3358 = vld [vmem:[%s3349 + $0x20] sm:$0xf]
    %v3359 = vld [vmem:[%s3349 + $0x24] sm:$0xf]
    %v3360 = vld [vmem:[%s3349 + $0x28] sm:$0xf]
    %v3361 = vld [vmem:[%s3349 + $0x2c] sm:$0xf]
    %v3362 = vld [vmem:[%s3349 + $0x30] sm:$0xf]
    %v3363 = vld [vmem:[%s3349 + $0x34] sm:$0xf]
    %v3364 = vld [vmem:[%s3349 + $0x38] sm:$0xf]
    %v3365 = vld [vmem:[%s3349 + $0x3c] sm:$0xf]
    %v3366 = vpack.c.bf16 %v3346, %v3345
    %v3367 = vpack.c.bf16 %v3348, %v3347
    %v3368 = vlaneseq
    %v3369 = vshrl.u32 %v3368, 7
    %v3370 = vsub.s32 6, %v3369
    %v3371 = vrot.slane %v61, %v3370
    %v3376 = vunpack.c.l.b16 %v3350
    %v3377 = vunpack.c.l.b16 %v3351
    %v3378 = vunpack.c.l.b16 %v3352
    %v3379 = vunpack.c.l.b16 %v3353
    %v3380 = vpack.c.b16 %v3377, %v3376
    %v3381 = vpack.c.b16 %v3379, %v3378
    %v3385 = vsel %vm129, %v3366, 0
    %v3388 = vsel %vm129, %v3367, 0
    %3390 = vmatprep.subr.bf16.mxu0 0
    %3391 = vmatpush1.bf16.msra.mxu0 0
    %3392 = vmatprep.subr.bf16.mxu0 0
    %3393 = vmatpush1.bf16.msra.mxu0 0
    %3394 = vmatprep.subr.bf16.mxu0 0
    %3395 = vmatpush1.bf16.msra.mxu0 0
    %3396 = vmatprep.subr.bf16.mxu0 0
    %3397 = vmatpush1.bf16.msra.mxu0 0
    %3398 = vmatprep.subr.bf16.mxu0 0
    %3399 = vmatpush1.bf16.msra.mxu0 0
    %3400 = vmatprep.subr.bf16.mxu0 0
    %3401 = vmatpush1.bf16.msra.mxu0 0
    %3402 = vmatprep.subr.bf16.mxu0 0
    %3403 = vmatpush1.bf16.msra.mxu0 %v3381
    %3404 = vmatprep.subr.bf16.mxu0 0
    %3405 = vmatpush1.bf16.msra.mxu0 %v3380
    %3406 = vmatprep.subr.bf16.mxu0 0
    %3407 = vmatpush2.bf16.msra.mxu0 0
    %3408 = vmatprep.subr.bf16.mxu0 0
    %3409 = vmatpush2.bf16.msra.mxu0 0
    %3410 = vmatprep.subr.bf16.mxu0 0
    %3411 = vmatpush2.bf16.msra.mxu0 0
    %3412 = vmatprep.subr.bf16.mxu0 0
    %3413 = vmatpush2.bf16.msra.mxu0 0
    %3414 = vmatprep.subr.bf16.mxu0 0
    %3415 = vmatpush2.bf16.msra.mxu0 0
    %3416 = vmatprep.subr.bf16.mxu0 0
    %3417 = vmatpush2.bf16.msra.mxu0 0
    %3418 = vmatprep.subr.bf16.mxu0 0
    %3419 = vmatpush2.bf16.msra.mxu0 0
    %3420 = vmatprep.subr.bf16.mxu0 0
    %3421 = vmatpush2.bf16.msra.mxu0 0
    %3422 = vmatprep.mubr.bf16.mxu0 0
    %3423 = vmatmul.mubr.bf16.gmra.mxu0 %v3385
    %v3424 = vpop.f32.mrf.mxu0
    %v3425 = vadd.f32 %v3371, %v3424
    %v3426 = vpop.f32.mrf.mxu0
    %v3427 = vpop.f32.mrf.mxu0
    %v3428 = vadd.f32 %v3371, %v3427
    %v3429 = vpop.f32.mrf.mxu0
    %3430 = vmatprep.mubr.bf16.mxu0 0
    %3431 = vmatmul.mubr.bf16.gmra.mxu0 %v3388
    %v3432 = vpop.f32.mrf.mxu0
    %v3433 = vadd.f32 %v3371, %v3432
    %v3434 = vpop.f32.mrf.mxu0
    %v3435 = vpop.f32.mrf.mxu0
    %v3436 = vadd.f32 %v3371, %v3435
    %v3437 = vpop.f32.mrf.mxu0
    %3438 = vdwg.mxu0
    %v3439 = vmul.f32 %v3425, 0.5
    %v3440 = vmul.f32 %v3428, 0.5
    %v3441 = vmul.f32 %v3433, 0.5
    %v3442 = vmul.f32 %v3436, 0.5
    %v3443 = vlaneseq
    %v3444 = vshrl.u32 %v3443, 7
    %v3445 = vsub.s32 7, %v3444
    %v3446 = vrot.slane %v61, %v3445
    %v3451 = vunpack.c.l.b16 %v3354
    %v3452 = vunpack.c.l.b16 %v3355
    %v3453 = vunpack.c.l.b16 %v3356
    %v3454 = vunpack.c.l.b16 %v3357
    %v3455 = vpack.c.b16 %v3452, %v3451
    %v3456 = vpack.c.b16 %v3454, %v3453
    %3459 = vmatprep.subr.bf16.mxu0 0
    %3460 = vmatpush1.bf16.msra.mxu0 0
    %3461 = vmatprep.subr.bf16.mxu0 0
    %3462 = vmatpush1.bf16.msra.mxu0 0
    %3463 = vmatprep.subr.bf16.mxu0 0
    %3464 = vmatpush1.bf16.msra.mxu0 0
    %3465 = vmatprep.subr.bf16.mxu0 0
    %3466 = vmatpush1.bf16.msra.mxu0 0
    %3467 = vmatprep.subr.bf16.mxu0 0
    %3468 = vmatpush1.bf16.msra.mxu0 0
    %3469 = vmatprep.subr.bf16.mxu0 0
    %3470 = vmatpush1.bf16.msra.mxu0 0
    %3471 = vmatprep.subr.bf16.mxu0 0
    %3472 = vmatpush1.bf16.msra.mxu0 %v3456
    %3473 = vmatprep.subr.bf16.mxu0 0
    %3474 = vmatpush1.bf16.msra.mxu0 %v3455
    %3475 = vmatprep.subr.bf16.mxu0 0
    %3476 = vmatpush2.bf16.msra.mxu0 0
    %3477 = vmatprep.subr.bf16.mxu0 0
    %3478 = vmatpush2.bf16.msra.mxu0 0
    %3479 = vmatprep.subr.bf16.mxu0 0
    %3480 = vmatpush2.bf16.msra.mxu0 0
    %3481 = vmatprep.subr.bf16.mxu0 0
    %3482 = vmatpush2.bf16.msra.mxu0 0
    %3483 = vmatprep.subr.bf16.mxu0 0
    %3484 = vmatpush2.bf16.msra.mxu0 0
    %3485 = vmatprep.subr.bf16.mxu0 0
    %3486 = vmatpush2.bf16.msra.mxu0 0
    %3487 = vmatprep.subr.bf16.mxu0 0
    %3488 = vmatpush2.bf16.msra.mxu0 0
    %3489 = vmatprep.subr.bf16.mxu0 0
    %3490 = vmatpush2.bf16.msra.mxu0 0
    %3491 = vmatprep.mubr.bf16.mxu0 0
    %3492 = vmatmul.mubr.bf16.gmra.mxu0 %v3385
    %v3493 = vpop.f32.mrf.mxu0
    %v3494 = vadd.f32 %v3446, %v3493
    %v3495 = vpop.f32.mrf.mxu0
    %v3496 = vpop.f32.mrf.mxu0
    %v3497 = vadd.f32 %v3446, %v3496
    %v3498 = vpop.f32.mrf.mxu0
    %3499 = vmatprep.mubr.bf16.mxu0 0
    %3500 = vmatmul.mubr.bf16.gmra.mxu0 %v3388
    %v3501 = vpop.f32.mrf.mxu0
    %v3502 = vadd.f32 %v3446, %v3501
    %v3503 = vpop.f32.mrf.mxu0
    %v3504 = vpop.f32.mrf.mxu0
    %v3505 = vadd.f32 %v3446, %v3504
    %v3506 = vpop.f32.mrf.mxu0
    %3507 = vdwg.mxu0
    %v3508 = vlaneseq
    %v3509 = vshrl.u32 %v3508, 7
    %v3510 = vsub.s32 0, %v3509
    %v3511 = vrot.slane %v62, %v3510
    %v3516 = vunpack.c.l.b16 %v3358
    %v3517 = vunpack.c.l.b16 %v3359
    %v3518 = vunpack.c.l.b16 %v3360
    %v3519 = vunpack.c.l.b16 %v3361
    %v3520 = vpack.c.b16 %v3517, %v3516
    %v3521 = vpack.c.b16 %v3519, %v3518
    %3524 = vmatprep.subr.bf16.mxu0 0
    %3525 = vmatpush1.bf16.msra.mxu0 0
    %3526 = vmatprep.subr.bf16.mxu0 0
    %3527 = vmatpush1.bf16.msra.mxu0 0
    %3528 = vmatprep.subr.bf16.mxu0 0
    %3529 = vmatpush1.bf16.msra.mxu0 0
    %3530 = vmatprep.subr.bf16.mxu0 0
    %3531 = vmatpush1.bf16.msra.mxu0 0
    %3532 = vmatprep.subr.bf16.mxu0 0
    %3533 = vmatpush1.bf16.msra.mxu0 0
    %3534 = vmatprep.subr.bf16.mxu0 0
    %3535 = vmatpush1.bf16.msra.mxu0 0
    %3536 = vmatprep.subr.bf16.mxu0 0
    %3537 = vmatpush1.bf16.msra.mxu0 %v3521
    %3538 = vmatprep.subr.bf16.mxu0 0
    %3539 = vmatpush1.bf16.msra.mxu0 %v3520
    %3540 = vmatprep.subr.bf16.mxu0 0
    %3541 = vmatpush2.bf16.msra.mxu0 0
    %3542 = vmatprep.subr.bf16.mxu0 0
    %3543 = vmatpush2.bf16.msra.mxu0 0
    %3544 = vmatprep.subr.bf16.mxu0 0
    %3545 = vmatpush2.bf16.msra.mxu0 0
    %3546 = vmatprep.subr.bf16.mxu0 0
    %3547 = vmatpush2.bf16.msra.mxu0 0
    %3548 = vmatprep.subr.bf16.mxu0 0
    %3549 = vmatpush2.bf16.msra.mxu0 0
    %3550 = vmatprep.subr.bf16.mxu0 0
    %3551 = vmatpush2.bf16.msra.mxu0 0
    %3552 = vmatprep.subr.bf16.mxu0 0
    %3553 = vmatpush2.bf16.msra.mxu0 0
    %3554 = vmatprep.subr.bf16.mxu0 0
    %3555 = vmatpush2.bf16.msra.mxu0 0
    %3556 = vmatprep.mubr.bf16.mxu0 0
    %3557 = vmatmul.mubr.bf16.gmra.mxu0 %v3385
    %v3558 = vpop.f32.mrf.mxu0
    %v3559 = vadd.f32 %v3511, %v3558
    %v3560 = vpop.f32.mrf.mxu0
    %v3561 = vpop.f32.mrf.mxu0
    %v3562 = vadd.f32 %v3511, %v3561
    %v3563 = vpop.f32.mrf.mxu0
    %3564 = vmatprep.mubr.bf16.mxu0 0
    %3565 = vmatmul.mubr.bf16.gmra.mxu0 %v3388
    %v3566 = vpop.f32.mrf.mxu0
    %v3567 = vadd.f32 %v3511, %v3566
    %v3568 = vpop.f32.mrf.mxu0
    %v3569 = vpop.f32.mrf.mxu0
    %v3570 = vadd.f32 %v3511, %v3569
    %v3571 = vpop.f32.mrf.mxu0
    %3572 = vdwg.mxu0
    %v3573 = vmul.f32 %v3439, %v97
    %v3574 = vmul.f32 %v3440, %v98
    %v3575 = vmul.f32 %v3441, %v99
    %v3576 = vmul.f32 %v3442, %v100
    %v3577 = vmul.f32 %v3439, %v101
    %v3578 = vmul.f32 %v3440, %v102
    %v3579 = vmul.f32 %v3441, %v103
    %v3580 = vmul.f32 %v3442, %v104
    %v3581 = vmul.f32 %v3439, %v105
    %v3582 = vmul.f32 %v3440, %v106
    %v3583 = vmul.f32 %v3441, %v107
    %v3584 = vmul.f32 %v3442, %v108
    %v3585 = vmul.f32 %v3439, %v109
    %v3586 = vmul.f32 %v3440, %v110
    %v3587 = vmul.f32 %v3441, %v111
    %v3588 = vmul.f32 %v3442, %v112
    %v3589 = vmul.f32 %v3439, %v113
    %v3590 = vmul.f32 %v3440, %v114
    %v3591 = vmul.f32 %v3441, %v115
    %v3592 = vmul.f32 %v3442, %v116
    %v3593 = vmul.f32 %v3439, %v117
    %v3594 = vmul.f32 %v3440, %v118
    %v3595 = vmul.f32 %v3441, %v119
    %v3596 = vmul.f32 %v3442, %v120
    %v3597 = vmul.f32 %v3439, %v121
    %v3598 = vmul.f32 %v3440, %v122
    %v3599 = vmul.f32 %v3441, %v123
    %v3600 = vmul.f32 %v3442, %v124
    %v3601 = vmul.f32 %v3439, %v125
    %v3602 = vmul.f32 %v3440, %v126
    %v3603 = vmul.f32 %v3441, %v127
    %v3604 = vmul.f32 %v3442, %v128
    %v3605 = vpack.c.bf16 %v3574, %v3573
    %v3606 = vpack.c.bf16 %v3576, %v3575
    %v3607 = vpack.c.bf16 %v3578, %v3577
    %v3608 = vpack.c.bf16 %v3580, %v3579
    %v3609 = vpack.c.bf16 %v3582, %v3581
    %v3610 = vpack.c.bf16 %v3584, %v3583
    %v3611 = vpack.c.bf16 %v3586, %v3585
    %v3612 = vpack.c.bf16 %v3588, %v3587
    %v3613 = vpack.c.bf16 %v3590, %v3589
    %v3614 = vpack.c.bf16 %v3592, %v3591
    %v3615 = vpack.c.bf16 %v3594, %v3593
    %v3616 = vpack.c.bf16 %v3596, %v3595
    %v3617 = vpack.c.bf16 %v3598, %v3597
    %v3618 = vpack.c.bf16 %v3600, %v3599
    %v3619 = vpack.c.bf16 %v3602, %v3601
    %v3620 = vpack.c.bf16 %v3604, %v3603
    %3621 = vxpose.xlu0.b32.start [1/16] %v3494, 128
    %3622 = vxpose.xlu0.b32.cont [2/16] %v3497, 128
    %3623 = vxpose.xlu0.b32.cont [3/16] %v3502, 128
    %3624 = vxpose.xlu0.b32.cont [4/16] %v3505, 128
    %3625 = vxpose.xlu0.b32.cont [5/16] 0.0, 128
    %3626 = vxpose.xlu0.b32.cont [6/16] 0.0, 128
    %3627 = vxpose.xlu0.b32.cont [7/16] 0.0, 128
    %3628 = vxpose.xlu0.b32.cont [8/16] 0.0, 128
    %3629 = vxpose.xlu0.b32.cont [9/16] 0.0, 128
    %3630 = vxpose.xlu0.b32.cont [10/16] 0.0, 128
    %3631 = vxpose.xlu0.b32.cont [11/16] 0.0, 128
    %3632 = vxpose.xlu0.b32.cont [12/16] 0.0, 128
    %3633 = vxpose.xlu0.b32.cont [13/16] 0.0, 128
    %3634 = vxpose.xlu0.b32.cont [14/16] 0.0, 128
    %3635 = vxpose.xlu0.b32.cont [15/16] 0.0, 128
    %3636 = vxpose.xlu0.b32.end [16/16] 0.0, 128
    %v3637 = vpop.trf.xlu0
    %v3638 = vpop.trf.xlu0
    %v3639 = vpop.trf.xlu0
    %v3640 = vpop.trf.xlu0
    %v3641 = vpop.trf.xlu0
    %v3642 = vpop.trf.xlu0
    %v3643 = vpop.trf.xlu0
    %v3644 = vpop.trf.xlu0
    %v3645 = vpop.trf.xlu0
    %v3646 = vpop.trf.xlu0
    %v3647 = vpop.trf.xlu0
    %v3648 = vpop.trf.xlu0
    %v3649 = vpop.trf.xlu0
    %v3650 = vpop.trf.xlu0
    %v3651 = vpop.trf.xlu0
    %v3652 = vpop.trf.xlu0
    %v3653 = vpack.c.bf16 %v3638, %v3637
    %v3654 = vpack.c.bf16 %v3640, %v3639
    %v3656 = vsel %vm129, %v3605, 0
    %v3659 = vsel %vm129, %v3606, 0
    %v3662 = vsel %vm129, %v3607, 0
    %v3665 = vsel %vm129, %v3608, 0
    %v3668 = vsel %vm129, %v3609, 0
    %v3671 = vsel %vm129, %v3610, 0
    %v3674 = vsel %vm129, %v3611, 0
    %v3677 = vsel %vm129, %v3612, 0
    %v3680 = vsel %vm129, %v3613, 0
    %v3683 = vsel %vm129, %v3614, 0
    %v3686 = vsel %vm129, %v3615, 0
    %v3689 = vsel %vm129, %v3616, 0
    %v3692 = vsel %vm129, %v3617, 0
    %v3695 = vsel %vm129, %v3618, 0
    %v3698 = vsel %vm129, %v3619, 0
    %v3701 = vsel %vm129, %v3620, 0
    %3703 = vmatprep.subr.bf16.mxu0 0
    %3704 = vmatpush1.bf16.msra.mxu0 0
    %3705 = vmatprep.subr.bf16.mxu0 0
    %3706 = vmatpush1.bf16.msra.mxu0 0
    %3707 = vmatprep.subr.bf16.mxu0 0
    %3708 = vmatpush1.bf16.msra.mxu0 0
    %3709 = vmatprep.subr.bf16.mxu0 0
    %3710 = vmatpush1.bf16.msra.mxu0 0
    %3711 = vmatprep.subr.bf16.mxu0 0
    %3712 = vmatpush1.bf16.msra.mxu0 0
    %3713 = vmatprep.subr.bf16.mxu0 0
    %3714 = vmatpush1.bf16.msra.mxu0 0
    %3715 = vmatprep.subr.bf16.mxu0 0
    %3716 = vmatpush1.bf16.msra.mxu0 %v3654
    %3717 = vmatprep.subr.bf16.mxu0 0
    %3718 = vmatpush1.bf16.msra.mxu0 %v3653
    %3719 = vmatprep.subr.bf16.mxu0 0
    %3720 = vmatpush2.bf16.msra.mxu0 0
    %3721 = vmatprep.subr.bf16.mxu0 0
    %3722 = vmatpush2.bf16.msra.mxu0 0
    %3723 = vmatprep.subr.bf16.mxu0 0
    %3724 = vmatpush2.bf16.msra.mxu0 0
    %3725 = vmatprep.subr.bf16.mxu0 0
    %3726 = vmatpush2.bf16.msra.mxu0 0
    %3727 = vmatprep.subr.bf16.mxu0 0
    %3728 = vmatpush2.bf16.msra.mxu0 0
    %3729 = vmatprep.subr.bf16.mxu0 0
    %3730 = vmatpush2.bf16.msra.mxu0 0
    %3731 = vmatprep.subr.bf16.mxu0 0
    %3732 = vmatpush2.bf16.msra.mxu0 0
    %3733 = vmatprep.subr.bf16.mxu0 0
    %3734 = vmatpush2.bf16.msra.mxu0 0
    %3735 = vmatprep.mubr.bf16.mxu0 0
    %3736 = vmatmul.mubr.bf16.gmra.mxu0 %v3656
    %v3737 = vpop.f32.mrf.mxu0
    %v3738 = vadd.f32 %v64, %v3737
    %v3739 = vpop.f32.mrf.mxu0
    %v3740 = vpop.f32.mrf.mxu0
    %v3741 = vadd.f32 %v65, %v3740
    %v3742 = vpop.f32.mrf.mxu0
    %3743 = vmatprep.mubr.bf16.mxu0 0
    %3744 = vmatmul.mubr.bf16.gmra.mxu0 %v3659
    %v3745 = vpop.f32.mrf.mxu0
    %v3746 = vadd.f32 %v66, %v3745
    %v3747 = vpop.f32.mrf.mxu0
    %v3748 = vpop.f32.mrf.mxu0
    %v3749 = vadd.f32 %v67, %v3748
    %v3750 = vpop.f32.mrf.mxu0
    %3751 = vmatprep.mubr.bf16.mxu0 0
    %3752 = vmatmul.mubr.bf16.gmra.mxu0 %v3662
    %v3753 = vpop.f32.mrf.mxu0
    %v3754 = vadd.f32 %v68, %v3753
    %v3755 = vpop.f32.mrf.mxu0
    %v3756 = vpop.f32.mrf.mxu0
    %v3757 = vadd.f32 %v69, %v3756
    %v3758 = vpop.f32.mrf.mxu0
    %3759 = vmatprep.mubr.bf16.mxu0 0
    %3760 = vmatmul.mubr.bf16.gmra.mxu0 %v3665
    %v3761 = vpop.f32.mrf.mxu0
    %v3762 = vadd.f32 %v70, %v3761
    %v3763 = vpop.f32.mrf.mxu0
    %v3764 = vpop.f32.mrf.mxu0
    %v3765 = vadd.f32 %v71, %v3764
    %v3766 = vpop.f32.mrf.mxu0
    %3767 = vmatprep.mubr.bf16.mxu0 0
    %3768 = vmatmul.mubr.bf16.gmra.mxu0 %v3668
    %v3769 = vpop.f32.mrf.mxu0
    %v3770 = vadd.f32 %v72, %v3769
    %v3771 = vpop.f32.mrf.mxu0
    %v3772 = vpop.f32.mrf.mxu0
    %v3773 = vadd.f32 %v73, %v3772
    %v3774 = vpop.f32.mrf.mxu0
    %3775 = vmatprep.mubr.bf16.mxu0 0
    %3776 = vmatmul.mubr.bf16.gmra.mxu0 %v3671
    %v3777 = vpop.f32.mrf.mxu0
    %v3778 = vadd.f32 %v74, %v3777
    %v3779 = vpop.f32.mrf.mxu0
    %v3780 = vpop.f32.mrf.mxu0
    %v3781 = vadd.f32 %v75, %v3780
    %v3782 = vpop.f32.mrf.mxu0
    %3783 = vmatprep.mubr.bf16.mxu0 0
    %3784 = vmatmul.mubr.bf16.gmra.mxu0 %v3674
    %v3785 = vpop.f32.mrf.mxu0
    %v3786 = vadd.f32 %v76, %v3785
    %v3787 = vpop.f32.mrf.mxu0
    %v3788 = vpop.f32.mrf.mxu0
    %v3789 = vadd.f32 %v77, %v3788
    %v3790 = vpop.f32.mrf.mxu0
    %3791 = vmatprep.mubr.bf16.mxu0 0
    %3792 = vmatmul.mubr.bf16.gmra.mxu0 %v3677
    %v3793 = vpop.f32.mrf.mxu0
    %v3794 = vadd.f32 %v78, %v3793
    %v3795 = vpop.f32.mrf.mxu0
    %v3796 = vpop.f32.mrf.mxu0
    %v3797 = vadd.f32 %v79, %v3796
    %v3798 = vpop.f32.mrf.mxu0
    %3799 = vmatprep.mubr.bf16.mxu0 0
    %3800 = vmatmul.mubr.bf16.gmra.mxu0 %v3680
    %v3801 = vpop.f32.mrf.mxu0
    %v3802 = vadd.f32 %v80, %v3801
    %v3803 = vpop.f32.mrf.mxu0
    %v3804 = vpop.f32.mrf.mxu0
    %v3805 = vadd.f32 %v81, %v3804
    %v3806 = vpop.f32.mrf.mxu0
    %3807 = vmatprep.mubr.bf16.mxu0 0
    %3808 = vmatmul.mubr.bf16.gmra.mxu0 %v3683
    %v3809 = vpop.f32.mrf.mxu0
    %v3810 = vadd.f32 %v82, %v3809
    %v3811 = vpop.f32.mrf.mxu0
    %v3812 = vpop.f32.mrf.mxu0
    %v3813 = vadd.f32 %v83, %v3812
    %v3814 = vpop.f32.mrf.mxu0
    %3815 = vmatprep.mubr.bf16.mxu0 0
    %3816 = vmatmul.mubr.bf16.gmra.mxu0 %v3686
    %v3817 = vpop.f32.mrf.mxu0
    %v3818 = vadd.f32 %v84, %v3817
    %v3819 = vpop.f32.mrf.mxu0
    %v3820 = vpop.f32.mrf.mxu0
    %v3821 = vadd.f32 %v85, %v3820
    %v3822 = vpop.f32.mrf.mxu0
    %3823 = vmatprep.mubr.bf16.mxu0 0
    %3824 = vmatmul.mubr.bf16.gmra.mxu0 %v3689
    %v3825 = vpop.f32.mrf.mxu0
    %v3826 = vadd.f32 %v86, %v3825
    %v3827 = vpop.f32.mrf.mxu0
    %v3828 = vpop.f32.mrf.mxu0
    %v3829 = vadd.f32 %v87, %v3828
    %v3830 = vpop.f32.mrf.mxu0
    %3831 = vmatprep.mubr.bf16.mxu0 0
    %3832 = vmatmul.mubr.bf16.gmra.mxu0 %v3692
    %v3833 = vpop.f32.mrf.mxu0
    %v3834 = vadd.f32 %v88, %v3833
    %v3835 = vpop.f32.mrf.mxu0
    %v3836 = vpop.f32.mrf.mxu0
    %v3837 = vadd.f32 %v89, %v3836
    %v3838 = vpop.f32.mrf.mxu0
    %3839 = vmatprep.mubr.bf16.mxu0 0
    %3840 = vmatmul.mubr.bf16.gmra.mxu0 %v3695
    %v3841 = vpop.f32.mrf.mxu0
    %v3842 = vadd.f32 %v90, %v3841
    %v3843 = vpop.f32.mrf.mxu0
    %v3844 = vpop.f32.mrf.mxu0
    %v3845 = vadd.f32 %v91, %v3844
    %v3846 = vpop.f32.mrf.mxu0
    %3847 = vmatprep.mubr.bf16.mxu0 0
    %3848 = vmatmul.mubr.bf16.gmra.mxu0 %v3698
    %v3849 = vpop.f32.mrf.mxu0
    %v3850 = vadd.f32 %v92, %v3849
    %v3851 = vpop.f32.mrf.mxu0
    %v3852 = vpop.f32.mrf.mxu0
    %v3853 = vadd.f32 %v93, %v3852
    %v3854 = vpop.f32.mrf.mxu0
    %3855 = vmatprep.mubr.bf16.mxu0 0
    %3856 = vmatmul.mubr.bf16.gmra.mxu0 %v3701
    %v3857 = vpop.f32.mrf.mxu0
    %v3858 = vadd.f32 %v94, %v3857
    %v3859 = vpop.f32.mrf.mxu0
    %v3860 = vpop.f32.mrf.mxu0
    %v3861 = vadd.f32 %v95, %v3860
    %v3862 = vpop.f32.mrf.mxu0
    %3863 = vdwg.mxu0
    %v3864 = vsel %vm129, %v3738, -inf
    %3865 = vmax.xlane.f32.xlu0 %v3864
    %v3866 = vpop.xlane.xlu0 %3865
    %v3867 = vsel %vm129, %v3741, -inf
    %3868 = vmax.xlane.f32.xlu0 %v3867
    %v3869 = vpop.xlane.xlu0 %3868
    %v3870 = vsel %vm129, %v3746, -inf
    %3871 = vmax.xlane.f32.xlu0 %v3870
    %v3872 = vpop.xlane.xlu0 %3871
    %v3873 = vsel %vm129, %v3749, -inf
    %3874 = vmax.xlane.f32.xlu0 %v3873
    %v3875 = vpop.xlane.xlu0 %3874
    %v3876 = vsel %vm129, %v3754, -inf
    %3877 = vmax.xlane.f32.xlu0 %v3876
    %v3878 = vpop.xlane.xlu0 %3877
    %v3879 = vsel %vm129, %v3757, -inf
    %3880 = vmax.xlane.f32.xlu0 %v3879
    %v3881 = vpop.xlane.xlu0 %3880
    %v3882 = vsel %vm129, %v3762, -inf
    %3883 = vmax.xlane.f32.xlu0 %v3882
    %v3884 = vpop.xlane.xlu0 %3883
    %v3885 = vsel %vm129, %v3765, -inf
    %3886 = vmax.xlane.f32.xlu0 %v3885
    %v3887 = vpop.xlane.xlu0 %3886
    %v3888 = vsel %vm129, %v3770, -inf
    %3889 = vmax.xlane.f32.xlu0 %v3888
    %v3890 = vpop.xlane.xlu0 %3889
    %v3891 = vsel %vm129, %v3773, -inf
    %3892 = vmax.xlane.f32.xlu0 %v3891
    %v3893 = vpop.xlane.xlu0 %3892
    %v3894 = vsel %vm129, %v3778, -inf
    %3895 = vmax.xlane.f32.xlu0 %v3894
    %v3896 = vpop.xlane.xlu0 %3895
    %v3897 = vsel %vm129, %v3781, -inf
    %3898 = vmax.xlane.f32.xlu0 %v3897
    %v3899 = vpop.xlane.xlu0 %3898
    %v3900 = vsel %vm129, %v3786, -inf
    %3901 = vmax.xlane.f32.xlu0 %v3900
    %v3902 = vpop.xlane.xlu0 %3901
    %v3903 = vsel %vm129, %v3789, -inf
    %3904 = vmax.xlane.f32.xlu0 %v3903
    %v3905 = vpop.xlane.xlu0 %3904
    %v3906 = vsel %vm129, %v3794, -inf
    %3907 = vmax.xlane.f32.xlu0 %v3906
    %v3908 = vpop.xlane.xlu0 %3907
    %v3909 = vsel %vm129, %v3797, -inf
    %3910 = vmax.xlane.f32.xlu0 %v3909
    %v3911 = vpop.xlane.xlu0 %3910
    %v3912 = vsel %vm129, %v3802, -inf
    %3913 = vmax.xlane.f32.xlu0 %v3912
    %v3914 = vpop.xlane.xlu0 %3913
    %v3915 = vsel %vm129, %v3805, -inf
    %3916 = vmax.xlane.f32.xlu0 %v3915
    %v3917 = vpop.xlane.xlu0 %3916
    %v3918 = vsel %vm129, %v3810, -inf
    %3919 = vmax.xlane.f32.xlu0 %v3918
    %v3920 = vpop.xlane.xlu0 %3919
    %v3921 = vsel %vm129, %v3813, -inf
    %3922 = vmax.xlane.f32.xlu0 %v3921
    %v3923 = vpop.xlane.xlu0 %3922
    %v3924 = vsel %vm129, %v3818, -inf
    %3925 = vmax.xlane.f32.xlu0 %v3924
    %v3926 = vpop.xlane.xlu0 %3925
    %v3927 = vsel %vm129, %v3821, -inf
    %3928 = vmax.xlane.f32.xlu0 %v3927
    %v3929 = vpop.xlane.xlu0 %3928
    %v3930 = vsel %vm129, %v3826, -inf
    %3931 = vmax.xlane.f32.xlu0 %v3930
    %v3932 = vpop.xlane.xlu0 %3931
    %v3933 = vsel %vm129, %v3829, -inf
    %3934 = vmax.xlane.f32.xlu0 %v3933
    %v3935 = vpop.xlane.xlu0 %3934
    %v3936 = vsel %vm129, %v3834, -inf
    %3937 = vmax.xlane.f32.xlu0 %v3936
    %v3938 = vpop.xlane.xlu0 %3937
    %v3939 = vsel %vm129, %v3837, -inf
    %3940 = vmax.xlane.f32.xlu0 %v3939
    %v3941 = vpop.xlane.xlu0 %3940
    %v3942 = vsel %vm129, %v3842, -inf
    %3943 = vmax.xlane.f32.xlu0 %v3942
    %v3944 = vpop.xlane.xlu0 %3943
    %v3945 = vsel %vm129, %v3845, -inf
    %3946 = vmax.xlane.f32.xlu0 %v3945
    %v3947 = vpop.xlane.xlu0 %3946
    %v3948 = vsel %vm129, %v3850, -inf
    %3949 = vmax.xlane.f32.xlu0 %v3948
    %v3950 = vpop.xlane.xlu0 %3949
    %v3951 = vsel %vm129, %v3853, -inf
    %3952 = vmax.xlane.f32.xlu0 %v3951
    %v3953 = vpop.xlane.xlu0 %3952
    %v3954 = vsel %vm129, %v3858, -inf
    %3955 = vmax.xlane.f32.xlu0 %v3954
    %v3956 = vpop.xlane.xlu0 %3955
    %v3957 = vsel %vm129, %v3861, -inf
    %3958 = vmax.xlane.f32.xlu0 %v3957
    %v3959 = vpop.xlane.xlu0 %3958
    %v3960 = vsub.f32 %v3738, %v3866
    %v3961 = vsub.f32 %v3741, %v3869
    %v3962 = vsub.f32 %v3746, %v3872
    %v3963 = vsub.f32 %v3749, %v3875
    %v3964 = vsub.f32 %v3754, %v3878
    %v3965 = vsub.f32 %v3757, %v3881
    %v3966 = vsub.f32 %v3762, %v3884
    %v3967 = vsub.f32 %v3765, %v3887
    %v3968 = vsub.f32 %v3770, %v3890
    %v3969 = vsub.f32 %v3773, %v3893
    %v3970 = vsub.f32 %v3778, %v3896
    %v3971 = vsub.f32 %v3781, %v3899
    %v3972 = vsub.f32 %v3786, %v3902
    %v3973 = vsub.f32 %v3789, %v3905
    %v3974 = vsub.f32 %v3794, %v3908
    %v3975 = vsub.f32 %v3797, %v3911
    %v3976 = vsub.f32 %v3802, %v3914
    %v3977 = vsub.f32 %v3805, %v3917
    %v3978 = vsub.f32 %v3810, %v3920
    %v3979 = vsub.f32 %v3813, %v3923
    %v3980 = vsub.f32 %v3818, %v3926
    %v3981 = vsub.f32 %v3821, %v3929
    %v3982 = vsub.f32 %v3826, %v3932
    %v3983 = vsub.f32 %v3829, %v3935
    %v3984 = vsub.f32 %v3834, %v3938
    %v3985 = vsub.f32 %v3837, %v3941
    %v3986 = vsub.f32 %v3842, %v3944
    %v3987 = vsub.f32 %v3845, %v3947
    %v3988 = vsub.f32 %v3850, %v3950
    %v3989 = vsub.f32 %v3853, %v3953
    %v3990 = vsub.f32 %v3858, %v3956
    %v3991 = vsub.f32 %v3861, %v3959
    %v3992 = vmul.f32 %v3960, 1.442695
    %v3993 = vpow.pop %v3992
    %v3994 = vmul.f32 %v3961, 1.442695
    %v3995 = vpow.pop %v3994
    %v3996 = vmul.f32 %v3962, 1.442695
    %v3997 = vpow.pop %v3996
    %v3998 = vmul.f32 %v3963, 1.442695
    %v3999 = vpow.pop %v3998
    %v4000 = vmul.f32 %v3964, 1.442695
    %v4001 = vpow.pop %v4000
    %v4002 = vmul.f32 %v3965, 1.442695
    %v4003 = vpow.pop %v4002
    %v4004 = vmul.f32 %v3966, 1.442695
    %v4005 = vpow.pop %v4004
    %v4006 = vmul.f32 %v3967, 1.442695
    %v4007 = vpow.pop %v4006
    %v4008 = vmul.f32 %v3968, 1.442695
    %v4009 = vpow.pop %v4008
    %v4010 = vmul.f32 %v3969, 1.442695
    %v4011 = vpow.pop %v4010
    %v4012 = vmul.f32 %v3970, 1.442695
    %v4013 = vpow.pop %v4012
    %v4014 = vmul.f32 %v3971, 1.442695
    %v4015 = vpow.pop %v4014
    %v4016 = vmul.f32 %v3972, 1.442695
    %v4017 = vpow.pop %v4016
    %v4018 = vmul.f32 %v3973, 1.442695
    %v4019 = vpow.pop %v4018
    %v4020 = vmul.f32 %v3974, 1.442695
    %v4021 = vpow.pop %v4020
    %v4022 = vmul.f32 %v3975, 1.442695
    %v4023 = vpow.pop %v4022
    %v4024 = vmul.f32 %v3976, 1.442695
    %v4025 = vpow.pop %v4024
    %v4026 = vmul.f32 %v3977, 1.442695
    %v4027 = vpow.pop %v4026
    %v4028 = vmul.f32 %v3978, 1.442695
    %v4029 = vpow.pop %v4028
    %v4030 = vmul.f32 %v3979, 1.442695
    %v4031 = vpow.pop %v4030
    %v4032 = vmul.f32 %v3980, 1.442695
    %v4033 = vpow.pop %v4032
    %v4034 = vmul.f32 %v3981, 1.442695
    %v4035 = vpow.pop %v4034
    %v4036 = vmul.f32 %v3982, 1.442695
    %v4037 = vpow.pop %v4036
    %v4038 = vmul.f32 %v3983, 1.442695
    %v4039 = vpow.pop %v4038
    %v4040 = vmul.f32 %v3984, 1.442695
    %v4041 = vpow.pop %v4040
    %v4042 = vmul.f32 %v3985, 1.442695
    %v4043 = vpow.pop %v4042
    %v4044 = vmul.f32 %v3986, 1.442695
    %v4045 = vpow.pop %v4044
    %v4046 = vmul.f32 %v3987, 1.442695
    %v4047 = vpow.pop %v4046
    %v4048 = vmul.f32 %v3988, 1.442695
    %v4049 = vpow.pop %v4048
    %v4050 = vmul.f32 %v3989, 1.442695
    %v4051 = vpow.pop %v4050
    %v4052 = vmul.f32 %v3990, 1.442695
    %v4053 = vpow.pop %v4052
    %v4054 = vmul.f32 %v3991, 1.442695
    %v4055 = vpow.pop %v4054
    %v4056 = vsel %vm129, %v3993, 0.0
    %4057 = vadd.xlane.f32.xlu0 %v4056
    %v4058 = vpop.xlane.xlu0 %4057
    %v4059 = vsel %vm129, %v3995, 0.0
    %4060 = vadd.xlane.f32.xlu0 %v4059
    %v4061 = vpop.xlane.xlu0 %4060
    %v4062 = vsel %vm129, %v3997, 0.0
    %4063 = vadd.xlane.f32.xlu0 %v4062
    %v4064 = vpop.xlane.xlu0 %4063
    %v4065 = vsel %vm129, %v3999, 0.0
    %4066 = vadd.xlane.f32.xlu0 %v4065
    %v4067 = vpop.xlane.xlu0 %4066
    %v4068 = vsel %vm129, %v4001, 0.0
    %4069 = vadd.xlane.f32.xlu0 %v4068
    %v4070 = vpop.xlane.xlu0 %4069
    %v4071 = vsel %vm129, %v4003, 0.0
    %4072 = vadd.xlane.f32.xlu0 %v4071
    %v4073 = vpop.xlane.xlu0 %4072
    %v4074 = vsel %vm129, %v4005, 0.0
    %4075 = vadd.xlane.f32.xlu0 %v4074
    %v4076 = vpop.xlane.xlu0 %4075
    %v4077 = vsel %vm129, %v4007, 0.0
    %4078 = vadd.xlane.f32.xlu0 %v4077
    %v4079 = vpop.xlane.xlu0 %4078
    %v4080 = vsel %vm129, %v4009, 0.0
    %4081 = vadd.xlane.f32.xlu0 %v4080
    %v4082 = vpop.xlane.xlu0 %4081
    %v4083 = vsel %vm129, %v4011, 0.0
    %4084 = vadd.xlane.f32.xlu0 %v4083
    %v4085 = vpop.xlane.xlu0 %4084
    %v4086 = vsel %vm129, %v4013, 0.0
    %4087 = vadd.xlane.f32.xlu0 %v4086
    %v4088 = vpop.xlane.xlu0 %4087
    %v4089 = vsel %vm129, %v4015, 0.0
    %4090 = vadd.xlane.f32.xlu0 %v4089
    %v4091 = vpop.xlane.xlu0 %4090
    %v4092 = vsel %vm129, %v4017, 0.0
    %4093 = vadd.xlane.f32.xlu0 %v4092
    %v4094 = vpop.xlane.xlu0 %4093
    %v4095 = vsel %vm129, %v4019, 0.0
    %4096 = vadd.xlane.f32.xlu0 %v4095
    %v4097 = vpop.xlane.xlu0 %4096
    %v4098 = vsel %vm129, %v4021, 0.0
    %4099 = vadd.xlane.f32.xlu0 %v4098
    %v4100 = vpop.xlane.xlu0 %4099
    %v4101 = vsel %vm129, %v4023, 0.0
    %4102 = vadd.xlane.f32.xlu0 %v4101
    %v4103 = vpop.xlane.xlu0 %4102
    %v4104 = vsel %vm129, %v4025, 0.0
    %4105 = vadd.xlane.f32.xlu0 %v4104
    %v4106 = vpop.xlane.xlu0 %4105
    %v4107 = vsel %vm129, %v4027, 0.0
    %4108 = vadd.xlane.f32.xlu0 %v4107
    %v4109 = vpop.xlane.xlu0 %4108
    %v4110 = vsel %vm129, %v4029, 0.0
    %4111 = vadd.xlane.f32.xlu0 %v4110
    %v4112 = vpop.xlane.xlu0 %4111
    %v4113 = vsel %vm129, %v4031, 0.0
    %4114 = vadd.xlane.f32.xlu0 %v4113
    %v4115 = vpop.xlane.xlu0 %4114
    %v4116 = vsel %vm129, %v4033, 0.0
    %4117 = vadd.xlane.f32.xlu0 %v4116
    %v4118 = vpop.xlane.xlu0 %4117
    %v4119 = vsel %vm129, %v4035, 0.0
    %4120 = vadd.xlane.f32.xlu0 %v4119
    %v4121 = vpop.xlane.xlu0 %4120
    %v4122 = vsel %vm129, %v4037, 0.0
    %4123 = vadd.xlane.f32.xlu0 %v4122
    %v4124 = vpop.xlane.xlu0 %4123
    %v4125 = vsel %vm129, %v4039, 0.0
    %4126 = vadd.xlane.f32.xlu0 %v4125
    %v4127 = vpop.xlane.xlu0 %4126
    %v4128 = vsel %vm129, %v4041, 0.0
    %4129 = vadd.xlane.f32.xlu0 %v4128
    %v4130 = vpop.xlane.xlu0 %4129
    %v4131 = vsel %vm129, %v4043, 0.0
    %4132 = vadd.xlane.f32.xlu0 %v4131
    %v4133 = vpop.xlane.xlu0 %4132
    %v4134 = vsel %vm129, %v4045, 0.0
    %4135 = vadd.xlane.f32.xlu0 %v4134
    %v4136 = vpop.xlane.xlu0 %4135
    %v4137 = vsel %vm129, %v4047, 0.0
    %4138 = vadd.xlane.f32.xlu0 %v4137
    %v4139 = vpop.xlane.xlu0 %4138
    %v4140 = vsel %vm129, %v4049, 0.0
    %4141 = vadd.xlane.f32.xlu0 %v4140
    %v4142 = vpop.xlane.xlu0 %4141
    %v4143 = vsel %vm129, %v4051, 0.0
    %4144 = vadd.xlane.f32.xlu0 %v4143
    %v4145 = vpop.xlane.xlu0 %4144
    %v4146 = vsel %vm129, %v4053, 0.0
    %4147 = vadd.xlane.f32.xlu0 %v4146
    %v4148 = vpop.xlane.xlu0 %4147
    %v4149 = vsel %vm129, %v4055, 0.0
    %4150 = vadd.xlane.f32.xlu0 %v4149
    %v4151 = vpop.xlane.xlu0 %4150
    %v4152 = vrcp.pop %v4058
    %v4153 = vrcp.pop %v4061
    %v4154 = vrcp.pop %v4064
    %v4155 = vrcp.pop %v4067
    %v4156 = vrcp.pop %v4070
    %v4157 = vrcp.pop %v4073
    %v4158 = vrcp.pop %v4076
    %v4159 = vrcp.pop %v4079
    %v4160 = vrcp.pop %v4082
    %v4161 = vrcp.pop %v4085
    %v4162 = vrcp.pop %v4088
    %v4163 = vrcp.pop %v4091
    %v4164 = vrcp.pop %v4094
    %v4165 = vrcp.pop %v4097
    %v4166 = vrcp.pop %v4100
    %v4167 = vrcp.pop %v4103
    %v4168 = vrcp.pop %v4106
    %v4169 = vrcp.pop %v4109
    %v4170 = vrcp.pop %v4112
    %v4171 = vrcp.pop %v4115
    %v4172 = vrcp.pop %v4118
    %v4173 = vrcp.pop %v4121
    %v4174 = vrcp.pop %v4124
    %v4175 = vrcp.pop %v4127
    %v4176 = vrcp.pop %v4130
    %v4177 = vrcp.pop %v4133
    %v4178 = vrcp.pop %v4136
    %v4179 = vrcp.pop %v4139
    %v4180 = vrcp.pop %v4142
    %v4181 = vrcp.pop %v4145
    %v4182 = vrcp.pop %v4148
    %v4183 = vrcp.pop %v4151
    %v4184 = vmul.f32 %v3993, %v4152
    %v4185 = vmul.f32 %v3995, %v4153
    %v4186 = vmul.f32 %v3997, %v4154
    %v4187 = vmul.f32 %v3999, %v4155
    %v4188 = vmul.f32 %v4001, %v4156
    %v4189 = vmul.f32 %v4003, %v4157
    %v4190 = vmul.f32 %v4005, %v4158
    %v4191 = vmul.f32 %v4007, %v4159
    %v4192 = vmul.f32 %v4009, %v4160
    %v4193 = vmul.f32 %v4011, %v4161
    %v4194 = vmul.f32 %v4013, %v4162
    %v4195 = vmul.f32 %v4015, %v4163
    %v4196 = vmul.f32 %v4017, %v4164
    %v4197 = vmul.f32 %v4019, %v4165
    %v4198 = vmul.f32 %v4021, %v4166
    %v4199 = vmul.f32 %v4023, %v4167
    %v4200 = vmul.f32 %v4025, %v4168
    %v4201 = vmul.f32 %v4027, %v4169
    %v4202 = vmul.f32 %v4029, %v4170
    %v4203 = vmul.f32 %v4031, %v4171
    %v4204 = vmul.f32 %v4033, %v4172
    %v4205 = vmul.f32 %v4035, %v4173
    %v4206 = vmul.f32 %v4037, %v4174
    %v4207 = vmul.f32 %v4039, %v4175
    %v4208 = vmul.f32 %v4041, %v4176
    %v4209 = vmul.f32 %v4043, %v4177
    %v4210 = vmul.f32 %v4045, %v4178
    %v4211 = vmul.f32 %v4047, %v4179
    %v4212 = vmul.f32 %v4049, %v4180
    %v4213 = vmul.f32 %v4051, %v4181
    %v4214 = vmul.f32 %v4053, %v4182
    %v4215 = vmul.f32 %v4055, %v4183
    %v4216 = vpack.c.bf16 %v4185, %v4184
    %v4217 = vpack.c.bf16 %v4187, %v4186
    %v4218 = vpack.c.bf16 %v4189, %v4188
    %v4219 = vpack.c.bf16 %v4191, %v4190
    %v4220 = vpack.c.bf16 %v4193, %v4192
    %v4221 = vpack.c.bf16 %v4195, %v4194
    %v4222 = vpack.c.bf16 %v4197, %v4196
    %v4223 = vpack.c.bf16 %v4199, %v4198
    %v4224 = vpack.c.bf16 %v4201, %v4200
    %v4225 = vpack.c.bf16 %v4203, %v4202
    %v4226 = vpack.c.bf16 %v4205, %v4204
    %v4227 = vpack.c.bf16 %v4207, %v4206
    %v4228 = vpack.c.bf16 %v4209, %v4208
    %v4229 = vpack.c.bf16 %v4211, %v4210
    %v4230 = vpack.c.bf16 %v4213, %v4212
    %v4231 = vpack.c.bf16 %v4215, %v4214
    %v4232 = vpack.c.bf16 %v3562, %v3559
    %v4233 = vpack.c.bf16 %v3570, %v3567
    %v4235 = vsel %vm129, %v4216, 0
    %v4238 = vsel %vm129, %v4217, 0
    %v4241 = vsel %vm129, %v4218, 0
    %v4244 = vsel %vm129, %v4219, 0
    %v4247 = vsel %vm129, %v4220, 0
    %v4250 = vsel %vm129, %v4221, 0
    %v4253 = vsel %vm129, %v4222, 0
    %v4256 = vsel %vm129, %v4223, 0
    %v4259 = vsel %vm129, %v4224, 0
    %v4262 = vsel %vm129, %v4225, 0
    %v4265 = vsel %vm129, %v4226, 0
    %v4268 = vsel %vm129, %v4227, 0
    %v4271 = vsel %vm129, %v4228, 0
    %v4274 = vsel %vm129, %v4229, 0
    %v4277 = vsel %vm129, %v4230, 0
    %v4280 = vsel %vm129, %v4231, 0
    %4282 = vmatprep.subr.bf16.mxu0 0
    %4283 = vmatpush1.bf16.msra.mxu0 0
    %4284 = vmatprep.subr.bf16.mxu0 0
    %4285 = vmatpush1.bf16.msra.mxu0 0
    %4286 = vmatprep.subr.bf16.mxu0 0
    %4287 = vmatpush1.bf16.msra.mxu0 0
    %4288 = vmatprep.subr.bf16.mxu0 0
    %4289 = vmatpush1.bf16.msra.mxu0 0
    %4290 = vmatprep.subr.bf16.mxu0 0
    %4291 = vmatpush1.bf16.msra.mxu0 0
    %4292 = vmatprep.subr.bf16.mxu0 0
    %4293 = vmatpush1.bf16.msra.mxu0 0
    %4294 = vmatprep.subr.bf16.mxu0 0
    %4295 = vmatpush1.bf16.msra.mxu0 %v4233
    %4296 = vmatprep.subr.bf16.mxu0 0
    %4297 = vmatpush1.bf16.msra.mxu0 %v4232
    %4298 = vmatprep.subr.bf16.mxu0 0
    %4299 = vmatpush2.bf16.msra.mxu0 0
    %4300 = vmatprep.subr.bf16.mxu0 0
    %4301 = vmatpush2.bf16.msra.mxu0 0
    %4302 = vmatprep.subr.bf16.mxu0 0
    %4303 = vmatpush2.bf16.msra.mxu0 0
    %4304 = vmatprep.subr.bf16.mxu0 0
    %4305 = vmatpush2.bf16.msra.mxu0 0
    %4306 = vmatprep.subr.bf16.mxu0 0
    %4307 = vmatpush2.bf16.msra.mxu0 0
    %4308 = vmatprep.subr.bf16.mxu0 0
    %4309 = vmatpush2.bf16.msra.mxu0 0
    %4310 = vmatprep.subr.bf16.mxu0 0
    %4311 = vmatpush2.bf16.msra.mxu0 0
    %4312 = vmatprep.subr.bf16.mxu0 0
    %4313 = vmatpush2.bf16.msra.mxu0 0
    %4314 = vmatprep.mubr.bf16.mxu0 0
    %4315 = vmatmul.mubr.bf16.gmra.mxu0 %v4235
    %v4316 = vpop.f32.mrf.mxu0
    %v4317 = vadd.f32 0.0, %v4316
    %v4318 = vpop.f32.mrf.mxu0
    %v4319 = vpop.f32.mrf.mxu0
    %v4320 = vadd.f32 0.0, %v4319
    %v4321 = vpop.f32.mrf.mxu0
    %4322 = vmatprep.mubr.bf16.mxu0 0
    %4323 = vmatmul.mubr.bf16.gmra.mxu0 %v4238
    %v4324 = vpop.f32.mrf.mxu0
    %v4325 = vadd.f32 0.0, %v4324
    %v4326 = vpop.f32.mrf.mxu0
    %v4327 = vpop.f32.mrf.mxu0
    %v4328 = vadd.f32 0.0, %v4327
    %v4329 = vpop.f32.mrf.mxu0
    %4330 = vmatprep.mubr.bf16.mxu0 0
    %4331 = vmatmul.mubr.bf16.gmra.mxu0 %v4241
    %v4332 = vpop.f32.mrf.mxu0
    %v4333 = vadd.f32 0.0, %v4332
    %v4334 = vpop.f32.mrf.mxu0
    %v4335 = vpop.f32.mrf.mxu0
    %v4336 = vadd.f32 0.0, %v4335
    %v4337 = vpop.f32.mrf.mxu0
    %4338 = vmatprep.mubr.bf16.mxu0 0
    %4339 = vmatmul.mubr.bf16.gmra.mxu0 %v4244
    %v4340 = vpop.f32.mrf.mxu0
    %v4341 = vadd.f32 0.0, %v4340
    %v4342 = vpop.f32.mrf.mxu0
    %v4343 = vpop.f32.mrf.mxu0
    %v4344 = vadd.f32 0.0, %v4343
    %v4345 = vpop.f32.mrf.mxu0
    %4346 = vmatprep.mubr.bf16.mxu0 0
    %4347 = vmatmul.mubr.bf16.gmra.mxu0 %v4247
    %v4348 = vpop.f32.mrf.mxu0
    %v4349 = vadd.f32 0.0, %v4348
    %v4350 = vpop.f32.mrf.mxu0
    %v4351 = vpop.f32.mrf.mxu0
    %v4352 = vadd.f32 0.0, %v4351
    %v4353 = vpop.f32.mrf.mxu0
    %4354 = vmatprep.mubr.bf16.mxu0 0
    %4355 = vmatmul.mubr.bf16.gmra.mxu0 %v4250
    %v4356 = vpop.f32.mrf.mxu0
    %v4357 = vadd.f32 0.0, %v4356
    %v4358 = vpop.f32.mrf.mxu0
    %v4359 = vpop.f32.mrf.mxu0
    %v4360 = vadd.f32 0.0, %v4359
    %v4361 = vpop.f32.mrf.mxu0
    %4362 = vmatprep.mubr.bf16.mxu0 0
    %4363 = vmatmul.mubr.bf16.gmra.mxu0 %v4253
    %v4364 = vpop.f32.mrf.mxu0
    %v4365 = vadd.f32 0.0, %v4364
    %v4366 = vpop.f32.mrf.mxu0
    %v4367 = vpop.f32.mrf.mxu0
    %v4368 = vadd.f32 0.0, %v4367
    %v4369 = vpop.f32.mrf.mxu0
    %4370 = vmatprep.mubr.bf16.mxu0 0
    %4371 = vmatmul.mubr.bf16.gmra.mxu0 %v4256
    %v4372 = vpop.f32.mrf.mxu0
    %v4373 = vadd.f32 0.0, %v4372
    %v4374 = vpop.f32.mrf.mxu0
    %v4375 = vpop.f32.mrf.mxu0
    %v4376 = vadd.f32 0.0, %v4375
    %v4377 = vpop.f32.mrf.mxu0
    %4378 = vmatprep.mubr.bf16.mxu0 0
    %4379 = vmatmul.mubr.bf16.gmra.mxu0 %v4259
    %v4380 = vpop.f32.mrf.mxu0
    %v4381 = vadd.f32 0.0, %v4380
    %v4382 = vpop.f32.mrf.mxu0
    %v4383 = vpop.f32.mrf.mxu0
    %v4384 = vadd.f32 0.0, %v4383
    %v4385 = vpop.f32.mrf.mxu0
    %4386 = vmatprep.mubr.bf16.mxu0 0
    %4387 = vmatmul.mubr.bf16.gmra.mxu0 %v4262
    %v4388 = vpop.f32.mrf.mxu0
    %v4389 = vadd.f32 0.0, %v4388
    %v4390 = vpop.f32.mrf.mxu0
    %v4391 = vpop.f32.mrf.mxu0
    %v4392 = vadd.f32 0.0, %v4391
    %v4393 = vpop.f32.mrf.mxu0
    %4394 = vmatprep.mubr.bf16.mxu0 0
    %4395 = vmatmul.mubr.bf16.gmra.mxu0 %v4265
    %v4396 = vpop.f32.mrf.mxu0
    %v4397 = vadd.f32 0.0, %v4396
    %v4398 = vpop.f32.mrf.mxu0
    %v4399 = vpop.f32.mrf.mxu0
    %v4400 = vadd.f32 0.0, %v4399
    %v4401 = vpop.f32.mrf.mxu0
    %4402 = vmatprep.mubr.bf16.mxu0 0
    %4403 = vmatmul.mubr.bf16.gmra.mxu0 %v4268
    %v4404 = vpop.f32.mrf.mxu0
    %v4405 = vadd.f32 0.0, %v4404
    %v4406 = vpop.f32.mrf.mxu0
    %v4407 = vpop.f32.mrf.mxu0
    %v4408 = vadd.f32 0.0, %v4407
    %v4409 = vpop.f32.mrf.mxu0
    %4410 = vmatprep.mubr.bf16.mxu0 0
    %4411 = vmatmul.mubr.bf16.gmra.mxu0 %v4271
    %v4412 = vpop.f32.mrf.mxu0
    %v4413 = vadd.f32 0.0, %v4412
    %v4414 = vpop.f32.mrf.mxu0
    %v4415 = vpop.f32.mrf.mxu0
    %v4416 = vadd.f32 0.0, %v4415
    %v4417 = vpop.f32.mrf.mxu0
    %4418 = vmatprep.mubr.bf16.mxu0 0
    %4419 = vmatmul.mubr.bf16.gmra.mxu0 %v4274
    %v4420 = vpop.f32.mrf.mxu0
    %v4421 = vadd.f32 0.0, %v4420
    %v4422 = vpop.f32.mrf.mxu0
    %v4423 = vpop.f32.mrf.mxu0
    %v4424 = vadd.f32 0.0, %v4423
    %v4425 = vpop.f32.mrf.mxu0
    %4426 = vmatprep.mubr.bf16.mxu0 0
    %4427 = vmatmul.mubr.bf16.gmra.mxu0 %v4277
    %v4428 = vpop.f32.mrf.mxu0
    %v4429 = vadd.f32 0.0, %v4428
    %v4430 = vpop.f32.mrf.mxu0
    %v4431 = vpop.f32.mrf.mxu0
    %v4432 = vadd.f32 0.0, %v4431
    %v4433 = vpop.f32.mrf.mxu0
    %4434 = vmatprep.mubr.bf16.mxu0 0
    %4435 = vmatmul.mubr.bf16.gmra.mxu0 %v4280
    %v4436 = vpop.f32.mrf.mxu0
    %v4437 = vadd.f32 0.0, %v4436
    %v4438 = vpop.f32.mrf.mxu0
    %v4439 = vpop.f32.mrf.mxu0
    %v4440 = vadd.f32 0.0, %v4439
    %v4441 = vpop.f32.mrf.mxu0
    %4442 = vdwg.mxu0
    %v4443 = vmul.f32 %v4317, %v97
    %v4444 = vmul.f32 %v4320, %v98
    %v4445 = vmul.f32 %v4325, %v99
    %v4446 = vmul.f32 %v4328, %v100
    %v4447 = vmul.f32 %v4333, %v101
    %v4448 = vmul.f32 %v4336, %v102
    %v4449 = vmul.f32 %v4341, %v103
    %v4450 = vmul.f32 %v4344, %v104
    %v4451 = vmul.f32 %v4349, %v105
    %v4452 = vmul.f32 %v4352, %v106
    %v4453 = vmul.f32 %v4357, %v107
    %v4454 = vmul.f32 %v4360, %v108
    %v4455 = vmul.f32 %v4365, %v109
    %v4456 = vmul.f32 %v4368, %v110
    %v4457 = vmul.f32 %v4373, %v111
    %v4458 = vmul.f32 %v4376, %v112
    %v4459 = vmul.f32 %v4381, %v113
    %v4460 = vmul.f32 %v4384, %v114
    %v4461 = vmul.f32 %v4389, %v115
    %v4462 = vmul.f32 %v4392, %v116
    %v4463 = vmul.f32 %v4397, %v117
    %v4464 = vmul.f32 %v4400, %v118
    %v4465 = vmul.f32 %v4405, %v119
    %v4466 = vmul.f32 %v4408, %v120
    %v4467 = vmul.f32 %v4413, %v121
    %v4468 = vmul.f32 %v4416, %v122
    %v4469 = vmul.f32 %v4421, %v123
    %v4470 = vmul.f32 %v4424, %v124
    %v4471 = vmul.f32 %v4429, %v125
    %v4472 = vmul.f32 %v4432, %v126
    %v4473 = vmul.f32 %v4437, %v127
    %v4474 = vmul.f32 %v4440, %v128
    %v4475 = vadd.f32 %v4443, %v4447
    %v4476 = vadd.f32 %v4444, %v4448
    %v4477 = vadd.f32 %v4445, %v4449
    %v4478 = vadd.f32 %v4446, %v4450
    %v4479 = vadd.f32 %v4475, %v4451
    %v4480 = vadd.f32 %v4476, %v4452
    %v4481 = vadd.f32 %v4477, %v4453
    %v4482 = vadd.f32 %v4478, %v4454
    %v4483 = vadd.f32 %v4479, %v4455
    %v4484 = vadd.f32 %v4480, %v4456
    %v4485 = vadd.f32 %v4481, %v4457
    %v4486 = vadd.f32 %v4482, %v4458
    %v4487 = vadd.f32 %v4483, %v4459
    %v4488 = vadd.f32 %v4484, %v4460
    %v4489 = vadd.f32 %v4485, %v4461
    %v4490 = vadd.f32 %v4486, %v4462
    %v4491 = vadd.f32 %v4487, %v4463
    %v4492 = vadd.f32 %v4488, %v4464
    %v4493 = vadd.f32 %v4489, %v4465
    %v4494 = vadd.f32 %v4490, %v4466
    %v4495 = vadd.f32 %v4491, %v4467
    %v4496 = vadd.f32 %v4492, %v4468
    %v4497 = vadd.f32 %v4493, %v4469
    %v4498 = vadd.f32 %v4494, %v4470
    %v4499 = vadd.f32 %v4495, %v4471
    %v4500 = vadd.f32 %v4496, %v4472
    %v4501 = vadd.f32 %v4497, %v4473
    %v4502 = vadd.f32 %v4498, %v4474
    %v4503 = vpack.c.bf16 %v4500, %v4499
    %v4504 = vpack.c.bf16 %v4502, %v4501
    %v4505 = vlaneseq
    %v4506 = vshrl.u32 %v4505, 7
    %v4507 = vsub.s32 1, %v4506
    %v4508 = vrot.slane %v62, %v4507
    %v4513 = vunpack.c.l.b16 %v3362
    %v4514 = vunpack.c.l.b16 %v3363
    %v4515 = vunpack.c.l.b16 %v3364
    %v4516 = vunpack.c.l.b16 %v3365
    %v4517 = vpack.c.b16 %v4514, %v4513
    %v4518 = vpack.c.b16 %v4516, %v4515
    %v4522 = vsel %vm129, %v4503, 0
    %v4525 = vsel %vm129, %v4504, 0
    %4527 = vmatprep.subr.bf16.mxu0 0
    %4528 = vmatpush1.bf16.msra.mxu0 0
    %4529 = vmatprep.subr.bf16.mxu0 0
    %4530 = vmatpush1.bf16.msra.mxu0 0
    %4531 = vmatprep.subr.bf16.mxu0 0
    %4532 = vmatpush1.bf16.msra.mxu0 0
    %4533 = vmatprep.subr.bf16.mxu0 0
    %4534 = vmatpush1.bf16.msra.mxu0 0
    %4535 = vmatprep.subr.bf16.mxu0 0
    %4536 = vmatpush1.bf16.msra.mxu0 0
    %4537 = vmatprep.subr.bf16.mxu0 0
    %4538 = vmatpush1.bf16.msra.mxu0 0
    %4539 = vmatprep.subr.bf16.mxu0 0
    %4540 = vmatpush1.bf16.msra.mxu0 %v4518
    %4541 = vmatprep.subr.bf16.mxu0 0
    %4542 = vmatpush1.bf16.msra.mxu0 %v4517
    %4543 = vmatprep.subr.bf16.mxu0 0
    %4544 = vmatpush2.bf16.msra.mxu0 0
    %4545 = vmatprep.subr.bf16.mxu0 0
    %4546 = vmatpush2.bf16.msra.mxu0 0
    %4547 = vmatprep.subr.bf16.mxu0 0
    %4548 = vmatpush2.bf16.msra.mxu0 0
    %4549 = vmatprep.subr.bf16.mxu0 0
    %4550 = vmatpush2.bf16.msra.mxu0 0
    %4551 = vmatprep.subr.bf16.mxu0 0
    %4552 = vmatpush2.bf16.msra.mxu0 0
    %4553 = vmatprep.subr.bf16.mxu0 0
    %4554 = vmatpush2.bf16.msra.mxu0 0
    %4555 = vmatprep.subr.bf16.mxu0 0
    %4556 = vmatpush2.bf16.msra.mxu0 0
    %4557 = vmatprep.subr.bf16.mxu0 0
    %4558 = vmatpush2.bf16.msra.mxu0 0
    %4559 = vmatprep.mubr.bf16.mxu0 0
    %4560 = vmatmul.mubr.bf16.gmra.mxu0 %v4522
    %v4561 = vpop.f32.mrf.mxu0
    %v4562 = vadd.f32 %v4508, %v4561
    %v4563 = vpop.f32.mrf.mxu0
    %v4564 = vpop.f32.mrf.mxu0
    %v4565 = vadd.f32 %v4508, %v4564
    %v4566 = vpop.f32.mrf.mxu0
    %4567 = vmatprep.mubr.bf16.mxu0 0
    %4568 = vmatmul.mubr.bf16.gmra.mxu0 %v4525
    %v4569 = vpop.f32.mrf.mxu0
    %v4570 = vadd.f32 %v4508, %v4569
    %v4571 = vpop.f32.mrf.mxu0
    %v4572 = vpop.f32.mrf.mxu0
    %v4573 = vadd.f32 %v4508, %v4572
    %v4574 = vpop.f32.mrf.mxu0
    %4575 = vdwg.mxu0
    %v4576 = vadd.f32 %v3345, %v4562
    %v4577 = vadd.f32 %v3346, %v4565
    %v4578 = vadd.f32 %v3347, %v4570
    %v4579 = vadd.f32 %v3348, %v4573
    %v4580 = vsel %vm129, %v4576, 0.0
    %4581 = vadd.xlane.f32.xlu0 %v4580
    %v4582 = vpop.xlane.xlu0 %4581
    %v4583 = vsel %vm129, %v4577, 0.0
    %4584 = vadd.xlane.f32.xlu0 %v4583
    %v4585 = vpop.xlane.xlu0 %4584
    %v4586 = vsel %vm129, %v4578, 0.0
    %4587 = vadd.xlane.f32.xlu0 %v4586
    %v4588 = vpop.xlane.xlu0 %4587
    %v4589 = vsel %vm129, %v4579, 0.0
    %4590 = vadd.xlane.f32.xlu0 %v4589
    %v4591 = vpop.xlane.xlu0 %4590
    %v4592 = vmul.f32 %v4582, %v142
    %v4593 = vmul.f32 %v4585, %v142
    %v4594 = vmul.f32 %v4588, %v142
    %v4595 = vmul.f32 %v4591, %v142
    %v4596 = vsub.f32 %v4576, %v4592
    %v4597 = vsub.f32 %v4577, %v4593
    %v4598 = vsub.f32 %v4578, %v4594
    %v4599 = vsub.f32 %v4579, %v4595
    %v4600 = vmul.f32 %v4596, %v4596
    %v4601 = vmul.f32 %v4597, %v4597
    %v4602 = vmul.f32 %v4598, %v4598
    %v4603 = vmul.f32 %v4599, %v4599
    %v4604 = vsel %vm129, %v4600, 0.0
    %4605 = vadd.xlane.f32.xlu0 %v4604
    %v4606 = vpop.xlane.xlu0 %4605
    %v4607 = vsel %vm129, %v4601, 0.0
    %4608 = vadd.xlane.f32.xlu0 %v4607
    %v4609 = vpop.xlane.xlu0 %4608
    %v4610 = vsel %vm129, %v4602, 0.0
    %4611 = vadd.xlane.f32.xlu0 %v4610
    %v4612 = vpop.xlane.xlu0 %4611
    %v4613 = vsel %vm129, %v4603, 0.0
    %4614 = vadd.xlane.f32.xlu0 %v4613
    %v4615 = vpop.xlane.xlu0 %4614
    %v4616 = vmul.f32 %v4606, %v142
    %v4617 = vmul.f32 %v4609, %v142
    %v4618 = vmul.f32 %v4612, %v142
    %v4619 = vmul.f32 %v4615, %v142
    %v4620 = vadd.f32 %v4616, 1e-05
    %v4621 = vadd.f32 %v4617, 1e-05
    %v4622 = vadd.f32 %v4618, 1e-05
    %v4623 = vadd.f32 %v4619, 1e-05
    %v4624 = vrsqrt.pop %v4620
    %v4625 = vrsqrt.pop %v4621
    %v4626 = vrsqrt.pop %v4622
    %v4627 = vrsqrt.pop %v4623
    %v4628 = vmul.f32 %v4596, %v4624
    %v4629 = vmul.f32 %v4597, %v4625
    %v4630 = vmul.f32 %v4598, %v4626
    %v4631 = vmul.f32 %v4599, %v4627
    %v4632 = vlaneseq
    %v4633 = vshrl.u32 %v4632, 7
    %v4634 = vsub.s32 2, %v4633
    %v4635 = vrot.slane %v62, %v4634
    %v4636 = vmul.f32 %v4628, %v4635
    %v4637 = vmul.f32 %v4629, %v4635
    %v4638 = vmul.f32 %v4630, %v4635
    %v4639 = vmul.f32 %v4631, %v4635
    %v4640 = vlaneseq
    %v4641 = vshrl.u32 %v4640, 7
    %v4642 = vsub.s32 3, %v4641
    %v4643 = vrot.slane %v62, %v4642
    %v4644 = vadd.f32 %v4636, %v4643
    %v4645 = vadd.f32 %v4637, %v4643
    %v4646 = vadd.f32 %v4638, %v4643
    %v4647 = vadd.f32 %v4639, %v4643
    %v4648 = vpack.c.bf16 %v4645, %v4644
    %v4649 = vpack.c.bf16 %v4647, %v4646
    %s4650 = scalar_lea.vmem %s5, 32
    %v4651 = vld [vmem:[%s4650] sm:$0xf]
    %v4652 = vld [vmem:[%s4650 + $0x4] sm:$0xf]
    %v4653 = vld [vmem:[%s4650 + $0x8] sm:$0xf]
    %v4654 = vld [vmem:[%s4650 + $0xc] sm:$0xf]
    %s4655 = scalar_lea.vmem %s3, 2
    %v4656 = vld [vmem:[%s4655] sm:$0x1]
    %v4658 = vlaneseq
    %v4659 = vshrl.u32 %v4658, 7
    %v4660 = vsub.s32 0, %v4659
    %v4661 = vrot.slane %v4656, %v4660
    %v4667 = vunpack.c.l.b16 %v4651
    %v4668 = vunpack.c.l.b16 %v4652
    %v4669 = vunpack.c.l.b16 %v4653
    %v4670 = vunpack.c.l.b16 %v4654
    %v4671 = vpack.c.b16 %v4668, %v4667
    %v4672 = vpack.c.b16 %v4670, %v4669
    %v4676 = vsel %vm129, %v4648, 0
    %v4679 = vsel %vm129, %v4649, 0
    %4681 = vmatprep.subr.bf16.mxu0 0
    %4682 = vmatpush1.bf16.msra.mxu0 0
    %4683 = vmatprep.subr.bf16.mxu0 0
    %4684 = vmatpush1.bf16.msra.mxu0 0
    %4685 = vmatprep.subr.bf16.mxu0 0
    %4686 = vmatpush1.bf16.msra.mxu0 0
    %4687 = vmatprep.subr.bf16.mxu0 0
    %4688 = vmatpush1.bf16.msra.mxu0 0
    %4689 = vmatprep.subr.bf16.mxu0 0
    %4690 = vmatpush1.bf16.msra.mxu0 0
    %4691 = vmatprep.subr.bf16.mxu0 0
    %4692 = vmatpush1.bf16.msra.mxu0 0
    %4693 = vmatprep.subr.bf16.mxu0 0
    %4694 = vmatpush1.bf16.msra.mxu0 %v4672
    %4695 = vmatprep.subr.bf16.mxu0 0
    %4696 = vmatpush1.bf16.msra.mxu0 %v4671
    %4697 = vmatprep.subr.bf16.mxu0 0
    %4698 = vmatpush2.bf16.msra.mxu0 0
    %4699 = vmatprep.subr.bf16.mxu0 0
    %4700 = vmatpush2.bf16.msra.mxu0 0
    %4701 = vmatprep.subr.bf16.mxu0 0
    %4702 = vmatpush2.bf16.msra.mxu0 0
    %4703 = vmatprep.subr.bf16.mxu0 0
    %4704 = vmatpush2.bf16.msra.mxu0 0
    %4705 = vmatprep.subr.bf16.mxu0 0
    %4706 = vmatpush2.bf16.msra.mxu0 0
    %4707 = vmatprep.subr.bf16.mxu0 0
    %4708 = vmatpush2.bf16.msra.mxu0 0
    %4709 = vmatprep.subr.bf16.mxu0 0
    %4710 = vmatpush2.bf16.msra.mxu0 0
    %4711 = vmatprep.subr.bf16.mxu0 0
    %4712 = vmatpush2.bf16.msra.mxu0 0
    %4713 = vmatprep.mubr.bf16.mxu0 0
    %4714 = vmatmul.mubr.bf16.gmra.mxu0 %v4676
    %v4715 = vpop.f32.mrf.mxu0
    %v4716 = vadd.f32 %v4661, %v4715
    %v4717 = vpop.f32.mrf.mxu0
    %v4718 = vpop.f32.mrf.mxu0
    %v4719 = vadd.f32 %v4661, %v4718
    %v4720 = vpop.f32.mrf.mxu0
    %4721 = vmatprep.mubr.bf16.mxu0 0
    %4722 = vmatmul.mubr.bf16.gmra.mxu0 %v4679
    %v4723 = vpop.f32.mrf.mxu0
    %v4724 = vadd.f32 %v4661, %v4723
    %v4725 = vpop.f32.mrf.mxu0
    %v4726 = vpop.f32.mrf.mxu0
    %v4727 = vadd.f32 %v4661, %v4726
    %v4728 = vpop.f32.mrf.mxu0
    %4729 = vdwg.mxu0
    %v4730 = vmax.f32 %v4716, 0.0
    %v4731 = vmax.f32 %v4719, 0.0
    %v4732 = vmax.f32 %v4724, 0.0
    %v4733 = vmax.f32 %v4727, 0.0
    %v4734 = vpack.c.bf16 %v4731, %v4730
    %v4735 = vpack.c.bf16 %v4733, %v4732
    %s4736 = scalar_lea.vmem %s6, 128
    %v4737 = vld [vmem:[%s4736] sm:$0xf]
    %v4738 = vld [vmem:[%s4736 + $0x4] sm:$0xf]
    %v4739 = vld [vmem:[%s4736 + $0x8] sm:$0xf]
    %v4740 = vld [vmem:[%s4736 + $0xc] sm:$0xf]
    %v4741 = vld [vmem:[%s4736 + $0x10] sm:$0xf]
    %v4742 = vld [vmem:[%s4736 + $0x14] sm:$0xf]
    %v4743 = vld [vmem:[%s4736 + $0x18] sm:$0xf]
    %v4744 = vld [vmem:[%s4736 + $0x1c] sm:$0xf]
    %v4745 = vld [vmem:[%s4736 + $0x20] sm:$0xf]
    %v4746 = vld [vmem:[%s4736 + $0x24] sm:$0xf]
    %v4747 = vld [vmem:[%s4736 + $0x28] sm:$0xf]
    %v4748 = vld [vmem:[%s4736 + $0x2c] sm:$0xf]
    %v4749 = vld [vmem:[%s4736 + $0x30] sm:$0xf]
    %v4750 = vld [vmem:[%s4736 + $0x34] sm:$0xf]
    %v4751 = vld [vmem:[%s4736 + $0x38] sm:$0xf]
    %v4752 = vld [vmem:[%s4736 + $0x3c] sm:$0xf]
    %v4753 = vlaneseq
    %v4754 = vshrl.u32 %v4753, 7
    %v4755 = vsub.s32 6, %v4754
    %v4756 = vrot.slane %v62, %v4755
    %v4773 = vunpack.c.l.b16 %v4737
    %v4774 = vunpack.c.l.b16 %v4738
    %v4775 = vunpack.c.l.b16 %v4739
    %v4776 = vunpack.c.l.b16 %v4740
    %v4777 = vunpack.c.l.b16 %v4741
    %v4778 = vunpack.c.l.b16 %v4742
    %v4779 = vunpack.c.l.b16 %v4743
    %v4780 = vunpack.c.l.b16 %v4744
    %v4781 = vunpack.c.l.b16 %v4745
    %v4782 = vunpack.c.l.b16 %v4746
    %v4783 = vunpack.c.l.b16 %v4747
    %v4784 = vunpack.c.l.b16 %v4748
    %v4785 = vunpack.c.l.b16 %v4749
    %v4786 = vunpack.c.l.b16 %v4750
    %v4787 = vunpack.c.l.b16 %v4751
    %v4788 = vunpack.c.l.b16 %v4752
    %v4789 = vpack.c.b16 %v4774, %v4773
    %v4790 = vpack.c.b16 %v4776, %v4775
    %v4791 = vpack.c.b16 %v4778, %v4777
    %v4792 = vpack.c.b16 %v4780, %v4779
    %v4793 = vpack.c.b16 %v4782, %v4781
    %v4794 = vpack.c.b16 %v4784, %v4783
    %v4795 = vpack.c.b16 %v4786, %v4785
    %v4796 = vpack.c.b16 %v4788, %v4787
    %4805 = vmatprep.subr.bf16.mxu0 0
    %4806 = vmatpush1.bf16.msra.mxu0 %v4796
    %4807 = vmatprep.subr.bf16.mxu0 0
    %4808 = vmatpush1.bf16.msra.mxu0 %v4795
    %4809 = vmatprep.subr.bf16.mxu0 0
    %4810 = vmatpush1.bf16.msra.mxu0 %v4794
    %4811 = vmatprep.subr.bf16.mxu0 0
    %4812 = vmatpush1.bf16.msra.mxu0 %v4793
    %4813 = vmatprep.subr.bf16.mxu0 0
    %4814 = vmatpush1.bf16.msra.mxu0 %v4792
    %4815 = vmatprep.subr.bf16.mxu0 0
    %4816 = vmatpush1.bf16.msra.mxu0 %v4791
    %4817 = vmatprep.subr.bf16.mxu0 0
    %4818 = vmatpush1.bf16.msra.mxu0 %v4790
    %4819 = vmatprep.subr.bf16.mxu0 0
    %4820 = vmatpush1.bf16.msra.mxu0 %v4789
    %4821 = vmatprep.subr.bf16.mxu0 0
    %4822 = vmatpush2.bf16.msra.mxu0 0
    %4823 = vmatprep.subr.bf16.mxu0 0
    %4824 = vmatpush2.bf16.msra.mxu0 0
    %4825 = vmatprep.subr.bf16.mxu0 0
    %4826 = vmatpush2.bf16.msra.mxu0 0
    %4827 = vmatprep.subr.bf16.mxu0 0
    %4828 = vmatpush2.bf16.msra.mxu0 0
    %4829 = vmatprep.subr.bf16.mxu0 0
    %4830 = vmatpush2.bf16.msra.mxu0 0
    %4831 = vmatprep.subr.bf16.mxu0 0
    %4832 = vmatpush2.bf16.msra.mxu0 0
    %4833 = vmatprep.subr.bf16.mxu0 0
    %4834 = vmatpush2.bf16.msra.mxu0 0
    %4835 = vmatprep.subr.bf16.mxu0 0
    %4836 = vmatpush2.bf16.msra.mxu0 0
    %4837 = vmatprep.mubr.bf16.mxu0 0
    %4838 = vmatmul.mubr.bf16.gmra.mxu0 %v4734
    %v4839 = vpop.f32.mrf.mxu0
    %v4840 = vadd.f32 %v4756, %v4839
    %v4841 = vpop.f32.mrf.mxu0
    %v4842 = vpop.f32.mrf.mxu0
    %v4843 = vadd.f32 %v4756, %v4842
    %v4844 = vpop.f32.mrf.mxu0
    %4845 = vmatprep.mubr.bf16.mxu0 0
    %4846 = vmatmul.mubr.bf16.gmra.mxu0 %v4735
    %v4847 = vpop.f32.mrf.mxu0
    %v4848 = vadd.f32 %v4756, %v4847
    %v4849 = vpop.f32.mrf.mxu0
    %v4850 = vpop.f32.mrf.mxu0
    %v4851 = vadd.f32 %v4756, %v4850
    %v4852 = vpop.f32.mrf.mxu0
    %4853 = vdwg.mxu0
    %v4854 = vadd.f32 %v4644, %v4840
    %v4855 = vadd.f32 %v4645, %v4843
    %v4856 = vadd.f32 %v4646, %v4848
    %v4857 = vadd.f32 %v4647, %v4851
    %v4858 = vsel %vm129, %v4854, 0.0
    %4859 = vadd.xlane.f32.xlu0 %v4858
    %v4860 = vpop.xlane.xlu0 %4859
    %v4861 = vsel %vm129, %v4855, 0.0
    %4862 = vadd.xlane.f32.xlu0 %v4861
    %v4863 = vpop.xlane.xlu0 %4862
    %v4864 = vsel %vm129, %v4856, 0.0
    %4865 = vadd.xlane.f32.xlu0 %v4864
    %v4866 = vpop.xlane.xlu0 %4865
    %v4867 = vsel %vm129, %v4857, 0.0
    %4868 = vadd.xlane.f32.xlu0 %v4867
    %v4869 = vpop.xlane.xlu0 %4868
    %v4870 = vmul.f32 %v4860, %v142
    %v4871 = vmul.f32 %v4863, %v142
    %v4872 = vmul.f32 %v4866, %v142
    %v4873 = vmul.f32 %v4869, %v142
    %v4874 = vsub.f32 %v4854, %v4870
    %v4875 = vsub.f32 %v4855, %v4871
    %v4876 = vsub.f32 %v4856, %v4872
    %v4877 = vsub.f32 %v4857, %v4873
    %v4878 = vmul.f32 %v4874, %v4874
    %v4879 = vmul.f32 %v4875, %v4875
    %v4880 = vmul.f32 %v4876, %v4876
    %v4881 = vmul.f32 %v4877, %v4877
    %v4882 = vsel %vm129, %v4878, 0.0
    %4883 = vadd.xlane.f32.xlu0 %v4882
    %v4884 = vpop.xlane.xlu0 %4883
    %v4885 = vsel %vm129, %v4879, 0.0
    %4886 = vadd.xlane.f32.xlu0 %v4885
    %v4887 = vpop.xlane.xlu0 %4886
    %v4888 = vsel %vm129, %v4880, 0.0
    %4889 = vadd.xlane.f32.xlu0 %v4888
    %v4890 = vpop.xlane.xlu0 %4889
    %v4891 = vsel %vm129, %v4881, 0.0
    %4892 = vadd.xlane.f32.xlu0 %v4891
    %v4893 = vpop.xlane.xlu0 %4892
    %v4894 = vmul.f32 %v4884, %v142
    %v4895 = vmul.f32 %v4887, %v142
    %v4896 = vmul.f32 %v4890, %v142
    %v4897 = vmul.f32 %v4893, %v142
    %v4898 = vadd.f32 %v4894, 1e-05
    %v4899 = vadd.f32 %v4895, 1e-05
    %v4900 = vadd.f32 %v4896, 1e-05
    %v4901 = vadd.f32 %v4897, 1e-05
    %v4902 = vrsqrt.pop %v4898
    %v4903 = vrsqrt.pop %v4899
    %v4904 = vrsqrt.pop %v4900
    %v4905 = vrsqrt.pop %v4901
    %v4906 = vmul.f32 %v4874, %v4902
    %v4907 = vmul.f32 %v4875, %v4903
    %v4908 = vmul.f32 %v4876, %v4904
    %v4909 = vmul.f32 %v4877, %v4905
    %v4910 = vlaneseq
    %v4911 = vshrl.u32 %v4910, 7
    %v4912 = vsub.s32 4, %v4911
    %v4913 = vrot.slane %v62, %v4912
    %v4914 = vmul.f32 %v4906, %v4913
    %v4915 = vmul.f32 %v4907, %v4913
    %v4916 = vmul.f32 %v4908, %v4913
    %v4917 = vmul.f32 %v4909, %v4913
    %v4918 = vlaneseq
    %v4919 = vshrl.u32 %v4918, 7
    %v4920 = vsub.s32 5, %v4919
    %v4921 = vrot.slane %v62, %v4920
    %v4922 = vadd.f32 %v4914, %v4921
    %v4923 = vadd.f32 %v4915, %v4921
    %v4924 = vadd.f32 %v4916, %v4921
    %v4925 = vadd.f32 %v4917, %v4921
    %s4926 = scalar_lea.vmem %s4, 192
    %v4927 = vld [vmem:[%s4926] sm:$0xf]
    %v4928 = vld [vmem:[%s4926 + $0x4] sm:$0xf]
    %v4929 = vld [vmem:[%s4926 + $0x8] sm:$0xf]
    %v4930 = vld [vmem:[%s4926 + $0xc] sm:$0xf]
    %v4931 = vld [vmem:[%s4926 + $0x10] sm:$0xf]
    %v4932 = vld [vmem:[%s4926 + $0x14] sm:$0xf]
    %v4933 = vld [vmem:[%s4926 + $0x18] sm:$0xf]
    %v4934 = vld [vmem:[%s4926 + $0x1c] sm:$0xf]
    %v4935 = vld [vmem:[%s4926 + $0x20] sm:$0xf]
    %v4936 = vld [vmem:[%s4926 + $0x24] sm:$0xf]
    %v4937 = vld [vmem:[%s4926 + $0x28] sm:$0xf]
    %v4938 = vld [vmem:[%s4926 + $0x2c] sm:$0xf]
    %v4939 = vld [vmem:[%s4926 + $0x30] sm:$0xf]
    %v4940 = vld [vmem:[%s4926 + $0x34] sm:$0xf]
    %v4941 = vld [vmem:[%s4926 + $0x38] sm:$0xf]
    %v4942 = vld [vmem:[%s4926 + $0x3c] sm:$0xf]
    %v4943 = vpack.c.bf16 %v4923, %v4922
    %v4944 = vpack.c.bf16 %v4925, %v4924
    %v4945 = vlaneseq
    %v4946 = vshrl.u32 %v4945, 7
    %v4947 = vsub.s32 7, %v4946
    %v4948 = vrot.slane %v62, %v4947
    %v4953 = vunpack.c.l.b16 %v4927
    %v4954 = vunpack.c.l.b16 %v4928
    %v4955 = vunpack.c.l.b16 %v4929
    %v4956 = vunpack.c.l.b16 %v4930
    %v4957 = vpack.c.b16 %v4954, %v4953
    %v4958 = vpack.c.b16 %v4956, %v4955
    %v4962 = vsel %vm129, %v4943, 0
    %v4965 = vsel %vm129, %v4944, 0
    %4967 = vmatprep.subr.bf16.mxu0 0
    %4968 = vmatpush1.bf16.msra.mxu0 0
    %4969 = vmatprep.subr.bf16.mxu0 0
    %4970 = vmatpush1.bf16.msra.mxu0 0
    %4971 = vmatprep.subr.bf16.mxu0 0
    %4972 = vmatpush1.bf16.msra.mxu0 0
    %4973 = vmatprep.subr.bf16.mxu0 0
    %4974 = vmatpush1.bf16.msra.mxu0 0
    %4975 = vmatprep.subr.bf16.mxu0 0
    %4976 = vmatpush1.bf16.msra.mxu0 0
    %4977 = vmatprep.subr.bf16.mxu0 0
    %4978 = vmatpush1.bf16.msra.mxu0 0
    %4979 = vmatprep.subr.bf16.mxu0 0
    %4980 = vmatpush1.bf16.msra.mxu0 %v4958
    %4981 = vmatprep.subr.bf16.mxu0 0
    %4982 = vmatpush1.bf16.msra.mxu0 %v4957
    %4983 = vmatprep.subr.bf16.mxu0 0
    %4984 = vmatpush2.bf16.msra.mxu0 0
    %4985 = vmatprep.subr.bf16.mxu0 0
    %4986 = vmatpush2.bf16.msra.mxu0 0
    %4987 = vmatprep.subr.bf16.mxu0 0
    %4988 = vmatpush2.bf16.msra.mxu0 0
    %4989 = vmatprep.subr.bf16.mxu0 0
    %4990 = vmatpush2.bf16.msra.mxu0 0
    %4991 = vmatprep.subr.bf16.mxu0 0
    %4992 = vmatpush2.bf16.msra.mxu0 0
    %4993 = vmatprep.subr.bf16.mxu0 0
    %4994 = vmatpush2.bf16.msra.mxu0 0
    %4995 = vmatprep.subr.bf16.mxu0 0
    %4996 = vmatpush2.bf16.msra.mxu0 0
    %4997 = vmatprep.subr.bf16.mxu0 0
    %4998 = vmatpush2.bf16.msra.mxu0 0
    %4999 = vmatprep.mubr.bf16.mxu0 0
    %5000 = vmatmul.mubr.bf16.gmra.mxu0 %v4962
    %v5001 = vpop.f32.mrf.mxu0
    %v5002 = vadd.f32 %v4948, %v5001
    %v5003 = vpop.f32.mrf.mxu0
    %v5004 = vpop.f32.mrf.mxu0
    %v5005 = vadd.f32 %v4948, %v5004
    %v5006 = vpop.f32.mrf.mxu0
    %5007 = vmatprep.mubr.bf16.mxu0 0
    %5008 = vmatmul.mubr.bf16.gmra.mxu0 %v4965
    %v5009 = vpop.f32.mrf.mxu0
    %v5010 = vadd.f32 %v4948, %v5009
    %v5011 = vpop.f32.mrf.mxu0
    %v5012 = vpop.f32.mrf.mxu0
    %v5013 = vadd.f32 %v4948, %v5012
    %v5014 = vpop.f32.mrf.mxu0
    %5015 = vdwg.mxu0
    %v5016 = vmul.f32 %v5002, 0.5
    %v5017 = vmul.f32 %v5005, 0.5
    %v5018 = vmul.f32 %v5010, 0.5
    %v5019 = vmul.f32 %v5013, 0.5
    %v5020 = vlaneseq
    %v5021 = vshrl.u32 %v5020, 7
    %v5022 = vsub.s32 0, %v5021
    %v5023 = vrot.slane %v63, %v5022
    %v5028 = vunpack.c.l.b16 %v4931
    %v5029 = vunpack.c.l.b16 %v4932
    %v5030 = vunpack.c.l.b16 %v4933
    %v5031 = vunpack.c.l.b16 %v4934
    %v5032 = vpack.c.b16 %v5029, %v5028
    %v5033 = vpack.c.b16 %v5031, %v5030
    %5036 = vmatprep.subr.bf16.mxu0 0
    %5037 = vmatpush1.bf16.msra.mxu0 0
    %5038 = vmatprep.subr.bf16.mxu0 0
    %5039 = vmatpush1.bf16.msra.mxu0 0
    %5040 = vmatprep.subr.bf16.mxu0 0
    %5041 = vmatpush1.bf16.msra.mxu0 0
    %5042 = vmatprep.subr.bf16.mxu0 0
    %5043 = vmatpush1.bf16.msra.mxu0 0
    %5044 = vmatprep.subr.bf16.mxu0 0
    %5045 = vmatpush1.bf16.msra.mxu0 0
    %5046 = vmatprep.subr.bf16.mxu0 0
    %5047 = vmatpush1.bf16.msra.mxu0 0
    %5048 = vmatprep.subr.bf16.mxu0 0
    %5049 = vmatpush1.bf16.msra.mxu0 %v5033
    %5050 = vmatprep.subr.bf16.mxu0 0
    %5051 = vmatpush1.bf16.msra.mxu0 %v5032
    %5052 = vmatprep.subr.bf16.mxu0 0
    %5053 = vmatpush2.bf16.msra.mxu0 0
    %5054 = vmatprep.subr.bf16.mxu0 0
    %5055 = vmatpush2.bf16.msra.mxu0 0
    %5056 = vmatprep.subr.bf16.mxu0 0
    %5057 = vmatpush2.bf16.msra.mxu0 0
    %5058 = vmatprep.subr.bf16.mxu0 0
    %5059 = vmatpush2.bf16.msra.mxu0 0
    %5060 = vmatprep.subr.bf16.mxu0 0
    %5061 = vmatpush2.bf16.msra.mxu0 0
    %5062 = vmatprep.subr.bf16.mxu0 0
    %5063 = vmatpush2.bf16.msra.mxu0 0
    %5064 = vmatprep.subr.bf16.mxu0 0
    %5065 = vmatpush2.bf16.msra.mxu0 0
    %5066 = vmatprep.subr.bf16.mxu0 0
    %5067 = vmatpush2.bf16.msra.mxu0 0
    %5068 = vmatprep.mubr.bf16.mxu0 0
    %5069 = vmatmul.mubr.bf16.gmra.mxu0 %v4962
    %v5070 = vpop.f32.mrf.mxu0
    %v5071 = vadd.f32 %v5023, %v5070
    %v5072 = vpop.f32.mrf.mxu0
    %v5073 = vpop.f32.mrf.mxu0
    %v5074 = vadd.f32 %v5023, %v5073
    %v5075 = vpop.f32.mrf.mxu0
    %5076 = vmatprep.mubr.bf16.mxu0 0
    %5077 = vmatmul.mubr.bf16.gmra.mxu0 %v4965
    %v5078 = vpop.f32.mrf.mxu0
    %v5079 = vadd.f32 %v5023, %v5078
    %v5080 = vpop.f32.mrf.mxu0
    %v5081 = vpop.f32.mrf.mxu0
    %v5082 = vadd.f32 %v5023, %v5081
    %v5083 = vpop.f32.mrf.mxu0
    %5084 = vdwg.mxu0
    %v5085 = vlaneseq
    %v5086 = vshrl.u32 %v5085, 7
    %v5087 = vsub.s32 1, %v5086
    %v5088 = vrot.slane %v63, %v5087
    %v5093 = vunpack.c.l.b16 %v4935
    %v5094 = vunpack.c.l.b16 %v4936
    %v5095 = vunpack.c.l.b16 %v4937
    %v5096 = vunpack.c.l.b16 %v4938
    %v5097 = vpack.c.b16 %v5094, %v5093
    %v5098 = vpack.c.b16 %v5096, %v5095
    %5101 = vmatprep.subr.bf16.mxu0 0
    %5102 = vmatpush1.bf16.msra.mxu0 0
    %5103 = vmatprep.subr.bf16.mxu0 0
    %5104 = vmatpush1.bf16.msra.mxu0 0
    %5105 = vmatprep.subr.bf16.mxu0 0
    %5106 = vmatpush1.bf16.msra.mxu0 0
    %5107 = vmatprep.subr.bf16.mxu0 0
    %5108 = vmatpush1.bf16.msra.mxu0 0
    %5109 = vmatprep.subr.bf16.mxu0 0
    %5110 = vmatpush1.bf16.msra.mxu0 0
    %5111 = vmatprep.subr.bf16.mxu0 0
    %5112 = vmatpush1.bf16.msra.mxu0 0
    %5113 = vmatprep.subr.bf16.mxu0 0
    %5114 = vmatpush1.bf16.msra.mxu0 %v5098
    %5115 = vmatprep.subr.bf16.mxu0 0
    %5116 = vmatpush1.bf16.msra.mxu0 %v5097
    %5117 = vmatprep.subr.bf16.mxu0 0
    %5118 = vmatpush2.bf16.msra.mxu0 0
    %5119 = vmatprep.subr.bf16.mxu0 0
    %5120 = vmatpush2.bf16.msra.mxu0 0
    %5121 = vmatprep.subr.bf16.mxu0 0
    %5122 = vmatpush2.bf16.msra.mxu0 0
    %5123 = vmatprep.subr.bf16.mxu0 0
    %5124 = vmatpush2.bf16.msra.mxu0 0
    %5125 = vmatprep.subr.bf16.mxu0 0
    %5126 = vmatpush2.bf16.msra.mxu0 0
    %5127 = vmatprep.subr.bf16.mxu0 0
    %5128 = vmatpush2.bf16.msra.mxu0 0
    %5129 = vmatprep.subr.bf16.mxu0 0
    %5130 = vmatpush2.bf16.msra.mxu0 0
    %5131 = vmatprep.subr.bf16.mxu0 0
    %5132 = vmatpush2.bf16.msra.mxu0 0
    %5133 = vmatprep.mubr.bf16.mxu0 0
    %5134 = vmatmul.mubr.bf16.gmra.mxu0 %v4962
    %v5135 = vpop.f32.mrf.mxu0
    %v5136 = vadd.f32 %v5088, %v5135
    %v5137 = vpop.f32.mrf.mxu0
    %v5138 = vpop.f32.mrf.mxu0
    %v5139 = vadd.f32 %v5088, %v5138
    %v5140 = vpop.f32.mrf.mxu0
    %5141 = vmatprep.mubr.bf16.mxu0 0
    %5142 = vmatmul.mubr.bf16.gmra.mxu0 %v4965
    %v5143 = vpop.f32.mrf.mxu0
    %v5144 = vadd.f32 %v5088, %v5143
    %v5145 = vpop.f32.mrf.mxu0
    %v5146 = vpop.f32.mrf.mxu0
    %v5147 = vadd.f32 %v5088, %v5146
    %v5148 = vpop.f32.mrf.mxu0
    %5149 = vdwg.mxu0
    %v5150 = vmul.f32 %v5016, %v97
    %v5151 = vmul.f32 %v5017, %v98
    %v5152 = vmul.f32 %v5018, %v99
    %v5153 = vmul.f32 %v5019, %v100
    %v5154 = vmul.f32 %v5016, %v101
    %v5155 = vmul.f32 %v5017, %v102
    %v5156 = vmul.f32 %v5018, %v103
    %v5157 = vmul.f32 %v5019, %v104
    %v5158 = vmul.f32 %v5016, %v105
    %v5159 = vmul.f32 %v5017, %v106
    %v5160 = vmul.f32 %v5018, %v107
    %v5161 = vmul.f32 %v5019, %v108
    %v5162 = vmul.f32 %v5016, %v109
    %v5163 = vmul.f32 %v5017, %v110
    %v5164 = vmul.f32 %v5018, %v111
    %v5165 = vmul.f32 %v5019, %v112
    %v5166 = vmul.f32 %v5016, %v113
    %v5167 = vmul.f32 %v5017, %v114
    %v5168 = vmul.f32 %v5018, %v115
    %v5169 = vmul.f32 %v5019, %v116
    %v5170 = vmul.f32 %v5016, %v117
    %v5171 = vmul.f32 %v5017, %v118
    %v5172 = vmul.f32 %v5018, %v119
    %v5173 = vmul.f32 %v5019, %v120
    %v5174 = vmul.f32 %v5016, %v121
    %v5175 = vmul.f32 %v5017, %v122
    %v5176 = vmul.f32 %v5018, %v123
    %v5177 = vmul.f32 %v5019, %v124
    %v5178 = vmul.f32 %v5016, %v125
    %v5179 = vmul.f32 %v5017, %v126
    %v5180 = vmul.f32 %v5018, %v127
    %v5181 = vmul.f32 %v5019, %v128
    %v5182 = vpack.c.bf16 %v5151, %v5150
    %v5183 = vpack.c.bf16 %v5153, %v5152
    %v5184 = vpack.c.bf16 %v5155, %v5154
    %v5185 = vpack.c.bf16 %v5157, %v5156
    %v5186 = vpack.c.bf16 %v5159, %v5158
    %v5187 = vpack.c.bf16 %v5161, %v5160
    %v5188 = vpack.c.bf16 %v5163, %v5162
    %v5189 = vpack.c.bf16 %v5165, %v5164
    %v5190 = vpack.c.bf16 %v5167, %v5166
    %v5191 = vpack.c.bf16 %v5169, %v5168
    %v5192 = vpack.c.bf16 %v5171, %v5170
    %v5193 = vpack.c.bf16 %v5173, %v5172
    %v5194 = vpack.c.bf16 %v5175, %v5174
    %v5195 = vpack.c.bf16 %v5177, %v5176
    %v5196 = vpack.c.bf16 %v5179, %v5178
    %v5197 = vpack.c.bf16 %v5181, %v5180
    %5198 = vxpose.xlu0.b32.start [1/16] %v5071, 128
    %5199 = vxpose.xlu0.b32.cont [2/16] %v5074, 128
    %5200 = vxpose.xlu0.b32.cont [3/16] %v5079, 128
    %5201 = vxpose.xlu0.b32.cont [4/16] %v5082, 128
    %5202 = vxpose.xlu0.b32.cont [5/16] 0.0, 128
    %5203 = vxpose.xlu0.b32.cont [6/16] 0.0, 128
    %5204 = vxpose.xlu0.b32.cont [7/16] 0.0, 128
    %5205 = vxpose.xlu0.b32.cont [8/16] 0.0, 128
    %5206 = vxpose.xlu0.b32.cont [9/16] 0.0, 128
    %5207 = vxpose.xlu0.b32.cont [10/16] 0.0, 128
    %5208 = vxpose.xlu0.b32.cont [11/16] 0.0, 128
    %5209 = vxpose.xlu0.b32.cont [12/16] 0.0, 128
    %5210 = vxpose.xlu0.b32.cont [13/16] 0.0, 128
    %5211 = vxpose.xlu0.b32.cont [14/16] 0.0, 128
    %5212 = vxpose.xlu0.b32.cont [15/16] 0.0, 128
    %5213 = vxpose.xlu0.b32.end [16/16] 0.0, 128
    %v5214 = vpop.trf.xlu0
    %v5215 = vpop.trf.xlu0
    %v5216 = vpop.trf.xlu0
    %v5217 = vpop.trf.xlu0
    %v5218 = vpop.trf.xlu0
    %v5219 = vpop.trf.xlu0
    %v5220 = vpop.trf.xlu0
    %v5221 = vpop.trf.xlu0
    %v5222 = vpop.trf.xlu0
    %v5223 = vpop.trf.xlu0
    %v5224 = vpop.trf.xlu0
    %v5225 = vpop.trf.xlu0
    %v5226 = vpop.trf.xlu0
    %v5227 = vpop.trf.xlu0
    %v5228 = vpop.trf.xlu0
    %v5229 = vpop.trf.xlu0
    %v5230 = vpack.c.bf16 %v5215, %v5214
    %v5231 = vpack.c.bf16 %v5217, %v5216
    %v5233 = vsel %vm129, %v5182, 0
    %v5236 = vsel %vm129, %v5183, 0
    %v5239 = vsel %vm129, %v5184, 0
    %v5242 = vsel %vm129, %v5185, 0
    %v5245 = vsel %vm129, %v5186, 0
    %v5248 = vsel %vm129, %v5187, 0
    %v5251 = vsel %vm129, %v5188, 0
    %v5254 = vsel %vm129, %v5189, 0
    %v5257 = vsel %vm129, %v5190, 0
    %v5260 = vsel %vm129, %v5191, 0
    %v5263 = vsel %vm129, %v5192, 0
    %v5266 = vsel %vm129, %v5193, 0
    %v5269 = vsel %vm129, %v5194, 0
    %v5272 = vsel %vm129, %v5195, 0
    %v5275 = vsel %vm129, %v5196, 0
    %v5278 = vsel %vm129, %v5197, 0
    %5280 = vmatprep.subr.bf16.mxu0 0
    %5281 = vmatpush1.bf16.msra.mxu0 0
    %5282 = vmatprep.subr.bf16.mxu0 0
    %5283 = vmatpush1.bf16.msra.mxu0 0
    %5284 = vmatprep.subr.bf16.mxu0 0
    %5285 = vmatpush1.bf16.msra.mxu0 0
    %5286 = vmatprep.subr.bf16.mxu0 0
    %5287 = vmatpush1.bf16.msra.mxu0 0
    %5288 = vmatprep.subr.bf16.mxu0 0
    %5289 = vmatpush1.bf16.msra.mxu0 0
    %5290 = vmatprep.subr.bf16.mxu0 0
    %5291 = vmatpush1.bf16.msra.mxu0 0
    %5292 = vmatprep.subr.bf16.mxu0 0
    %5293 = vmatpush1.bf16.msra.mxu0 %v5231
    %5294 = vmatprep.subr.bf16.mxu0 0
    %5295 = vmatpush1.bf16.msra.mxu0 %v5230
    %5296 = vmatprep.subr.bf16.mxu0 0
    %5297 = vmatpush2.bf16.msra.mxu0 0
    %5298 = vmatprep.subr.bf16.mxu0 0
    %5299 = vmatpush2.bf16.msra.mxu0 0
    %5300 = vmatprep.subr.bf16.mxu0 0
    %5301 = vmatpush2.bf16.msra.mxu0 0
    %5302 = vmatprep.subr.bf16.mxu0 0
    %5303 = vmatpush2.bf16.msra.mxu0 0
    %5304 = vmatprep.subr.bf16.mxu0 0
    %5305 = vmatpush2.bf16.msra.mxu0 0
    %5306 = vmatprep.subr.bf16.mxu0 0
    %5307 = vmatpush2.bf16.msra.mxu0 0
    %5308 = vmatprep.subr.bf16.mxu0 0
    %5309 = vmatpush2.bf16.msra.mxu0 0
    %5310 = vmatprep.subr.bf16.mxu0 0
    %5311 = vmatpush2.bf16.msra.mxu0 0
    %5312 = vmatprep.mubr.bf16.mxu0 0
    %5313 = vmatmul.mubr.bf16.gmra.mxu0 %v5233
    %v5314 = vpop.f32.mrf.mxu0
    %v5315 = vadd.f32 %v64, %v5314
    %v5316 = vpop.f32.mrf.mxu0
    %v5317 = vpop.f32.mrf.mxu0
    %v5318 = vadd.f32 %v65, %v5317
    %v5319 = vpop.f32.mrf.mxu0
    %5320 = vmatprep.mubr.bf16.mxu0 0
    %5321 = vmatmul.mubr.bf16.gmra.mxu0 %v5236
    %v5322 = vpop.f32.mrf.mxu0
    %v5323 = vadd.f32 %v66, %v5322
    %v5324 = vpop.f32.mrf.mxu0
    %v5325 = vpop.f32.mrf.mxu0
    %v5326 = vadd.f32 %v67, %v5325
    %v5327 = vpop.f32.mrf.mxu0
    %5328 = vmatprep.mubr.bf16.mxu0 0
    %5329 = vmatmul.mubr.bf16.gmra.mxu0 %v5239
    %v5330 = vpop.f32.mrf.mxu0
    %v5331 = vadd.f32 %v68, %v5330
    %v5332 = vpop.f32.mrf.mxu0
    %v5333 = vpop.f32.mrf.mxu0
    %v5334 = vadd.f32 %v69, %v5333
    %v5335 = vpop.f32.mrf.mxu0
    %5336 = vmatprep.mubr.bf16.mxu0 0
    %5337 = vmatmul.mubr.bf16.gmra.mxu0 %v5242
    %v5338 = vpop.f32.mrf.mxu0
    %v5339 = vadd.f32 %v70, %v5338
    %v5340 = vpop.f32.mrf.mxu0
    %v5341 = vpop.f32.mrf.mxu0
    %v5342 = vadd.f32 %v71, %v5341
    %v5343 = vpop.f32.mrf.mxu0
    %5344 = vmatprep.mubr.bf16.mxu0 0
    %5345 = vmatmul.mubr.bf16.gmra.mxu0 %v5245
    %v5346 = vpop.f32.mrf.mxu0
    %v5347 = vadd.f32 %v72, %v5346
    %v5348 = vpop.f32.mrf.mxu0
    %v5349 = vpop.f32.mrf.mxu0
    %v5350 = vadd.f32 %v73, %v5349
    %v5351 = vpop.f32.mrf.mxu0
    %5352 = vmatprep.mubr.bf16.mxu0 0
    %5353 = vmatmul.mubr.bf16.gmra.mxu0 %v5248
    %v5354 = vpop.f32.mrf.mxu0
    %v5355 = vadd.f32 %v74, %v5354
    %v5356 = vpop.f32.mrf.mxu0
    %v5357 = vpop.f32.mrf.mxu0
    %v5358 = vadd.f32 %v75, %v5357
    %v5359 = vpop.f32.mrf.mxu0
    %5360 = vmatprep.mubr.bf16.mxu0 0
    %5361 = vmatmul.mubr.bf16.gmra.mxu0 %v5251
    %v5362 = vpop.f32.mrf.mxu0
    %v5363 = vadd.f32 %v76, %v5362
    %v5364 = vpop.f32.mrf.mxu0
    %v5365 = vpop.f32.mrf.mxu0
    %v5366 = vadd.f32 %v77, %v5365
    %v5367 = vpop.f32.mrf.mxu0
    %5368 = vmatprep.mubr.bf16.mxu0 0
    %5369 = vmatmul.mubr.bf16.gmra.mxu0 %v5254
    %v5370 = vpop.f32.mrf.mxu0
    %v5371 = vadd.f32 %v78, %v5370
    %v5372 = vpop.f32.mrf.mxu0
    %v5373 = vpop.f32.mrf.mxu0
    %v5374 = vadd.f32 %v79, %v5373
    %v5375 = vpop.f32.mrf.mxu0
    %5376 = vmatprep.mubr.bf16.mxu0 0
    %5377 = vmatmul.mubr.bf16.gmra.mxu0 %v5257
    %v5378 = vpop.f32.mrf.mxu0
    %v5379 = vadd.f32 %v80, %v5378
    %v5380 = vpop.f32.mrf.mxu0
    %v5381 = vpop.f32.mrf.mxu0
    %v5382 = vadd.f32 %v81, %v5381
    %v5383 = vpop.f32.mrf.mxu0
    %5384 = vmatprep.mubr.bf16.mxu0 0
    %5385 = vmatmul.mubr.bf16.gmra.mxu0 %v5260
    %v5386 = vpop.f32.mrf.mxu0
    %v5387 = vadd.f32 %v82, %v5386
    %v5388 = vpop.f32.mrf.mxu0
    %v5389 = vpop.f32.mrf.mxu0
    %v5390 = vadd.f32 %v83, %v5389
    %v5391 = vpop.f32.mrf.mxu0
    %5392 = vmatprep.mubr.bf16.mxu0 0
    %5393 = vmatmul.mubr.bf16.gmra.mxu0 %v5263
    %v5394 = vpop.f32.mrf.mxu0
    %v5395 = vadd.f32 %v84, %v5394
    %v5396 = vpop.f32.mrf.mxu0
    %v5397 = vpop.f32.mrf.mxu0
    %v5398 = vadd.f32 %v85, %v5397
    %v5399 = vpop.f32.mrf.mxu0
    %5400 = vmatprep.mubr.bf16.mxu0 0
    %5401 = vmatmul.mubr.bf16.gmra.mxu0 %v5266
    %v5402 = vpop.f32.mrf.mxu0
    %v5403 = vadd.f32 %v86, %v5402
    %v5404 = vpop.f32.mrf.mxu0
    %v5405 = vpop.f32.mrf.mxu0
    %v5406 = vadd.f32 %v87, %v5405
    %v5407 = vpop.f32.mrf.mxu0
    %5408 = vmatprep.mubr.bf16.mxu0 0
    %5409 = vmatmul.mubr.bf16.gmra.mxu0 %v5269
    %v5410 = vpop.f32.mrf.mxu0
    %v5411 = vadd.f32 %v88, %v5410
    %v5412 = vpop.f32.mrf.mxu0
    %v5413 = vpop.f32.mrf.mxu0
    %v5414 = vadd.f32 %v89, %v5413
    %v5415 = vpop.f32.mrf.mxu0
    %5416 = vmatprep.mubr.bf16.mxu0 0
    %5417 = vmatmul.mubr.bf16.gmra.mxu0 %v5272
    %v5418 = vpop.f32.mrf.mxu0
    %v5419 = vadd.f32 %v90, %v5418
    %v5420 = vpop.f32.mrf.mxu0
    %v5421 = vpop.f32.mrf.mxu0
    %v5422 = vadd.f32 %v91, %v5421
    %v5423 = vpop.f32.mrf.mxu0
    %5424 = vmatprep.mubr.bf16.mxu0 0
    %5425 = vmatmul.mubr.bf16.gmra.mxu0 %v5275
    %v5426 = vpop.f32.mrf.mxu0
    %v5427 = vadd.f32 %v92, %v5426
    %v5428 = vpop.f32.mrf.mxu0
    %v5429 = vpop.f32.mrf.mxu0
    %v5430 = vadd.f32 %v93, %v5429
    %v5431 = vpop.f32.mrf.mxu0
    %5432 = vmatprep.mubr.bf16.mxu0 0
    %5433 = vmatmul.mubr.bf16.gmra.mxu0 %v5278
    %v5434 = vpop.f32.mrf.mxu0
    %v5435 = vadd.f32 %v94, %v5434
    %v5436 = vpop.f32.mrf.mxu0
    %v5437 = vpop.f32.mrf.mxu0
    %v5438 = vadd.f32 %v95, %v5437
    %v5439 = vpop.f32.mrf.mxu0
    %5440 = vdwg.mxu0
    %v5441 = vsel %vm129, %v5315, -inf
    %5442 = vmax.xlane.f32.xlu0 %v5441
    %v5443 = vpop.xlane.xlu0 %5442
    %v5444 = vsel %vm129, %v5318, -inf
    %5445 = vmax.xlane.f32.xlu0 %v5444
    %v5446 = vpop.xlane.xlu0 %5445
    %v5447 = vsel %vm129, %v5323, -inf
    %5448 = vmax.xlane.f32.xlu0 %v5447
    %v5449 = vpop.xlane.xlu0 %5448
    %v5450 = vsel %vm129, %v5326, -inf
    %5451 = vmax.xlane.f32.xlu0 %v5450
    %v5452 = vpop.xlane.xlu0 %5451
    %v5453 = vsel %vm129, %v5331, -inf
    %5454 = vmax.xlane.f32.xlu0 %v5453
    %v5455 = vpop.xlane.xlu0 %5454
    %v5456 = vsel %vm129, %v5334, -inf
    %5457 = vmax.xlane.f32.xlu0 %v5456
    %v5458 = vpop.xlane.xlu0 %5457
    %v5459 = vsel %vm129, %v5339, -inf
    %5460 = vmax.xlane.f32.xlu0 %v5459
    %v5461 = vpop.xlane.xlu0 %5460
    %v5462 = vsel %vm129, %v5342, -inf
    %5463 = vmax.xlane.f32.xlu0 %v5462
    %v5464 = vpop.xlane.xlu0 %5463
    %v5465 = vsel %vm129, %v5347, -inf
    %5466 = vmax.xlane.f32.xlu0 %v5465
    %v5467 = vpop.xlane.xlu0 %5466
    %v5468 = vsel %vm129, %v5350, -inf
    %5469 = vmax.xlane.f32.xlu0 %v5468
    %v5470 = vpop.xlane.xlu0 %5469
    %v5471 = vsel %vm129, %v5355, -inf
    %5472 = vmax.xlane.f32.xlu0 %v5471
    %v5473 = vpop.xlane.xlu0 %5472
    %v5474 = vsel %vm129, %v5358, -inf
    %5475 = vmax.xlane.f32.xlu0 %v5474
    %v5476 = vpop.xlane.xlu0 %5475
    %v5477 = vsel %vm129, %v5363, -inf
    %5478 = vmax.xlane.f32.xlu0 %v5477
    %v5479 = vpop.xlane.xlu0 %5478
    %v5480 = vsel %vm129, %v5366, -inf
    %5481 = vmax.xlane.f32.xlu0 %v5480
    %v5482 = vpop.xlane.xlu0 %5481
    %v5483 = vsel %vm129, %v5371, -inf
    %5484 = vmax.xlane.f32.xlu0 %v5483
    %v5485 = vpop.xlane.xlu0 %5484
    %v5486 = vsel %vm129, %v5374, -inf
    %5487 = vmax.xlane.f32.xlu0 %v5486
    %v5488 = vpop.xlane.xlu0 %5487
    %v5489 = vsel %vm129, %v5379, -inf
    %5490 = vmax.xlane.f32.xlu0 %v5489
    %v5491 = vpop.xlane.xlu0 %5490
    %v5492 = vsel %vm129, %v5382, -inf
    %5493 = vmax.xlane.f32.xlu0 %v5492
    %v5494 = vpop.xlane.xlu0 %5493
    %v5495 = vsel %vm129, %v5387, -inf
    %5496 = vmax.xlane.f32.xlu0 %v5495
    %v5497 = vpop.xlane.xlu0 %5496
    %v5498 = vsel %vm129, %v5390, -inf
    %5499 = vmax.xlane.f32.xlu0 %v5498
    %v5500 = vpop.xlane.xlu0 %5499
    %v5501 = vsel %vm129, %v5395, -inf
    %5502 = vmax.xlane.f32.xlu0 %v5501
    %v5503 = vpop.xlane.xlu0 %5502
    %v5504 = vsel %vm129, %v5398, -inf
    %5505 = vmax.xlane.f32.xlu0 %v5504
    %v5506 = vpop.xlane.xlu0 %5505
    %v5507 = vsel %vm129, %v5403, -inf
    %5508 = vmax.xlane.f32.xlu0 %v5507
    %v5509 = vpop.xlane.xlu0 %5508
    %v5510 = vsel %vm129, %v5406, -inf
    %5511 = vmax.xlane.f32.xlu0 %v5510
    %v5512 = vpop.xlane.xlu0 %5511
    %v5513 = vsel %vm129, %v5411, -inf
    %5514 = vmax.xlane.f32.xlu0 %v5513
    %v5515 = vpop.xlane.xlu0 %5514
    %v5516 = vsel %vm129, %v5414, -inf
    %5517 = vmax.xlane.f32.xlu0 %v5516
    %v5518 = vpop.xlane.xlu0 %5517
    %v5519 = vsel %vm129, %v5419, -inf
    %5520 = vmax.xlane.f32.xlu0 %v5519
    %v5521 = vpop.xlane.xlu0 %5520
    %v5522 = vsel %vm129, %v5422, -inf
    %5523 = vmax.xlane.f32.xlu0 %v5522
    %v5524 = vpop.xlane.xlu0 %5523
    %v5525 = vsel %vm129, %v5427, -inf
    %5526 = vmax.xlane.f32.xlu0 %v5525
    %v5527 = vpop.xlane.xlu0 %5526
    %v5528 = vsel %vm129, %v5430, -inf
    %5529 = vmax.xlane.f32.xlu0 %v5528
    %v5530 = vpop.xlane.xlu0 %5529
    %v5531 = vsel %vm129, %v5435, -inf
    %5532 = vmax.xlane.f32.xlu0 %v5531
    %v5533 = vpop.xlane.xlu0 %5532
    %v5534 = vsel %vm129, %v5438, -inf
    %5535 = vmax.xlane.f32.xlu0 %v5534
    %v5536 = vpop.xlane.xlu0 %5535
    %v5537 = vsub.f32 %v5315, %v5443
    %v5538 = vsub.f32 %v5318, %v5446
    %v5539 = vsub.f32 %v5323, %v5449
    %v5540 = vsub.f32 %v5326, %v5452
    %v5541 = vsub.f32 %v5331, %v5455
    %v5542 = vsub.f32 %v5334, %v5458
    %v5543 = vsub.f32 %v5339, %v5461
    %v5544 = vsub.f32 %v5342, %v5464
    %v5545 = vsub.f32 %v5347, %v5467
    %v5546 = vsub.f32 %v5350, %v5470
    %v5547 = vsub.f32 %v5355, %v5473
    %v5548 = vsub.f32 %v5358, %v5476
    %v5549 = vsub.f32 %v5363, %v5479
    %v5550 = vsub.f32 %v5366, %v5482
    %v5551 = vsub.f32 %v5371, %v5485
    %v5552 = vsub.f32 %v5374, %v5488
    %v5553 = vsub.f32 %v5379, %v5491
    %v5554 = vsub.f32 %v5382, %v5494
    %v5555 = vsub.f32 %v5387, %v5497
    %v5556 = vsub.f32 %v5390, %v5500
    %v5557 = vsub.f32 %v5395, %v5503
    %v5558 = vsub.f32 %v5398, %v5506
    %v5559 = vsub.f32 %v5403, %v5509
    %v5560 = vsub.f32 %v5406, %v5512
    %v5561 = vsub.f32 %v5411, %v5515
    %v5562 = vsub.f32 %v5414, %v5518
    %v5563 = vsub.f32 %v5419, %v5521
    %v5564 = vsub.f32 %v5422, %v5524
    %v5565 = vsub.f32 %v5427, %v5527
    %v5566 = vsub.f32 %v5430, %v5530
    %v5567 = vsub.f32 %v5435, %v5533
    %v5568 = vsub.f32 %v5438, %v5536
    %v5569 = vmul.f32 %v5537, 1.442695
    %v5570 = vpow.pop %v5569
    %v5571 = vmul.f32 %v5538, 1.442695
    %v5572 = vpow.pop %v5571
    %v5573 = vmul.f32 %v5539, 1.442695
    %v5574 = vpow.pop %v5573
    %v5575 = vmul.f32 %v5540, 1.442695
    %v5576 = vpow.pop %v5575
    %v5577 = vmul.f32 %v5541, 1.442695
    %v5578 = vpow.pop %v5577
    %v5579 = vmul.f32 %v5542, 1.442695
    %v5580 = vpow.pop %v5579
    %v5581 = vmul.f32 %v5543, 1.442695
    %v5582 = vpow.pop %v5581
    %v5583 = vmul.f32 %v5544, 1.442695
    %v5584 = vpow.pop %v5583
    %v5585 = vmul.f32 %v5545, 1.442695
    %v5586 = vpow.pop %v5585
    %v5587 = vmul.f32 %v5546, 1.442695
    %v5588 = vpow.pop %v5587
    %v5589 = vmul.f32 %v5547, 1.442695
    %v5590 = vpow.pop %v5589
    %v5591 = vmul.f32 %v5548, 1.442695
    %v5592 = vpow.pop %v5591
    %v5593 = vmul.f32 %v5549, 1.442695
    %v5594 = vpow.pop %v5593
    %v5595 = vmul.f32 %v5550, 1.442695
    %v5596 = vpow.pop %v5595
    %v5597 = vmul.f32 %v5551, 1.442695
    %v5598 = vpow.pop %v5597
    %v5599 = vmul.f32 %v5552, 1.442695
    %v5600 = vpow.pop %v5599
    %v5601 = vmul.f32 %v5553, 1.442695
    %v5602 = vpow.pop %v5601
    %v5603 = vmul.f32 %v5554, 1.442695
    %v5604 = vpow.pop %v5603
    %v5605 = vmul.f32 %v5555, 1.442695
    %v5606 = vpow.pop %v5605
    %v5607 = vmul.f32 %v5556, 1.442695
    %v5608 = vpow.pop %v5607
    %v5609 = vmul.f32 %v5557, 1.442695
    %v5610 = vpow.pop %v5609
    %v5611 = vmul.f32 %v5558, 1.442695
    %v5612 = vpow.pop %v5611
    %v5613 = vmul.f32 %v5559, 1.442695
    %v5614 = vpow.pop %v5613
    %v5615 = vmul.f32 %v5560, 1.442695
    %v5616 = vpow.pop %v5615
    %v5617 = vmul.f32 %v5561, 1.442695
    %v5618 = vpow.pop %v5617
    %v5619 = vmul.f32 %v5562, 1.442695
    %v5620 = vpow.pop %v5619
    %v5621 = vmul.f32 %v5563, 1.442695
    %v5622 = vpow.pop %v5621
    %v5623 = vmul.f32 %v5564, 1.442695
    %v5624 = vpow.pop %v5623
    %v5625 = vmul.f32 %v5565, 1.442695
    %v5626 = vpow.pop %v5625
    %v5627 = vmul.f32 %v5566, 1.442695
    %v5628 = vpow.pop %v5627
    %v5629 = vmul.f32 %v5567, 1.442695
    %v5630 = vpow.pop %v5629
    %v5631 = vmul.f32 %v5568, 1.442695
    %v5632 = vpow.pop %v5631
    %v5633 = vsel %vm129, %v5570, 0.0
    %5634 = vadd.xlane.f32.xlu0 %v5633
    %v5635 = vpop.xlane.xlu0 %5634
    %v5636 = vsel %vm129, %v5572, 0.0
    %5637 = vadd.xlane.f32.xlu0 %v5636
    %v5638 = vpop.xlane.xlu0 %5637
    %v5639 = vsel %vm129, %v5574, 0.0
    %5640 = vadd.xlane.f32.xlu0 %v5639
    %v5641 = vpop.xlane.xlu0 %5640
    %v5642 = vsel %vm129, %v5576, 0.0
    %5643 = vadd.xlane.f32.xlu0 %v5642
    %v5644 = vpop.xlane.xlu0 %5643
    %v5645 = vsel %vm129, %v5578, 0.0
    %5646 = vadd.xlane.f32.xlu0 %v5645
    %v5647 = vpop.xlane.xlu0 %5646
    %v5648 = vsel %vm129, %v5580, 0.0
    %5649 = vadd.xlane.f32.xlu0 %v5648
    %v5650 = vpop.xlane.xlu0 %5649
    %v5651 = vsel %vm129, %v5582, 0.0
    %5652 = vadd.xlane.f32.xlu0 %v5651
    %v5653 = vpop.xlane.xlu0 %5652
    %v5654 = vsel %vm129, %v5584, 0.0
    %5655 = vadd.xlane.f32.xlu0 %v5654
    %v5656 = vpop.xlane.xlu0 %5655
    %v5657 = vsel %vm129, %v5586, 0.0
    %5658 = vadd.xlane.f32.xlu0 %v5657
    %v5659 = vpop.xlane.xlu0 %5658
    %v5660 = vsel %vm129, %v5588, 0.0
    %5661 = vadd.xlane.f32.xlu0 %v5660
    %v5662 = vpop.xlane.xlu0 %5661
    %v5663 = vsel %vm129, %v5590, 0.0
    %5664 = vadd.xlane.f32.xlu0 %v5663
    %v5665 = vpop.xlane.xlu0 %5664
    %v5666 = vsel %vm129, %v5592, 0.0
    %5667 = vadd.xlane.f32.xlu0 %v5666
    %v5668 = vpop.xlane.xlu0 %5667
    %v5669 = vsel %vm129, %v5594, 0.0
    %5670 = vadd.xlane.f32.xlu0 %v5669
    %v5671 = vpop.xlane.xlu0 %5670
    %v5672 = vsel %vm129, %v5596, 0.0
    %5673 = vadd.xlane.f32.xlu0 %v5672
    %v5674 = vpop.xlane.xlu0 %5673
    %v5675 = vsel %vm129, %v5598, 0.0
    %5676 = vadd.xlane.f32.xlu0 %v5675
    %v5677 = vpop.xlane.xlu0 %5676
    %v5678 = vsel %vm129, %v5600, 0.0
    %5679 = vadd.xlane.f32.xlu0 %v5678
    %v5680 = vpop.xlane.xlu0 %5679
    %v5681 = vsel %vm129, %v5602, 0.0
    %5682 = vadd.xlane.f32.xlu0 %v5681
    %v5683 = vpop.xlane.xlu0 %5682
    %v5684 = vsel %vm129, %v5604, 0.0
    %5685 = vadd.xlane.f32.xlu0 %v5684
    %v5686 = vpop.xlane.xlu0 %5685
    %v5687 = vsel %vm129, %v5606, 0.0
    %5688 = vadd.xlane.f32.xlu0 %v5687
    %v5689 = vpop.xlane.xlu0 %5688
    %v5690 = vsel %vm129, %v5608, 0.0
    %5691 = vadd.xlane.f32.xlu0 %v5690
    %v5692 = vpop.xlane.xlu0 %5691
    %v5693 = vsel %vm129, %v5610, 0.0
    %5694 = vadd.xlane.f32.xlu0 %v5693
    %v5695 = vpop.xlane.xlu0 %5694
    %v5696 = vsel %vm129, %v5612, 0.0
    %5697 = vadd.xlane.f32.xlu0 %v5696
    %v5698 = vpop.xlane.xlu0 %5697
    %v5699 = vsel %vm129, %v5614, 0.0
    %5700 = vadd.xlane.f32.xlu0 %v5699
    %v5701 = vpop.xlane.xlu0 %5700
    %v5702 = vsel %vm129, %v5616, 0.0
    %5703 = vadd.xlane.f32.xlu0 %v5702
    %v5704 = vpop.xlane.xlu0 %5703
    %v5705 = vsel %vm129, %v5618, 0.0
    %5706 = vadd.xlane.f32.xlu0 %v5705
    %v5707 = vpop.xlane.xlu0 %5706
    %v5708 = vsel %vm129, %v5620, 0.0
    %5709 = vadd.xlane.f32.xlu0 %v5708
    %v5710 = vpop.xlane.xlu0 %5709
    %v5711 = vsel %vm129, %v5622, 0.0
    %5712 = vadd.xlane.f32.xlu0 %v5711
    %v5713 = vpop.xlane.xlu0 %5712
    %v5714 = vsel %vm129, %v5624, 0.0
    %5715 = vadd.xlane.f32.xlu0 %v5714
    %v5716 = vpop.xlane.xlu0 %5715
    %v5717 = vsel %vm129, %v5626, 0.0
    %5718 = vadd.xlane.f32.xlu0 %v5717
    %v5719 = vpop.xlane.xlu0 %5718
    %v5720 = vsel %vm129, %v5628, 0.0
    %5721 = vadd.xlane.f32.xlu0 %v5720
    %v5722 = vpop.xlane.xlu0 %5721
    %v5723 = vsel %vm129, %v5630, 0.0
    %5724 = vadd.xlane.f32.xlu0 %v5723
    %v5725 = vpop.xlane.xlu0 %5724
    %v5726 = vsel %vm129, %v5632, 0.0
    %5727 = vadd.xlane.f32.xlu0 %v5726
    %v5728 = vpop.xlane.xlu0 %5727
    %v5729 = vrcp.pop %v5635
    %v5730 = vrcp.pop %v5638
    %v5731 = vrcp.pop %v5641
    %v5732 = vrcp.pop %v5644
    %v5733 = vrcp.pop %v5647
    %v5734 = vrcp.pop %v5650
    %v5735 = vrcp.pop %v5653
    %v5736 = vrcp.pop %v5656
    %v5737 = vrcp.pop %v5659
    %v5738 = vrcp.pop %v5662
    %v5739 = vrcp.pop %v5665
    %v5740 = vrcp.pop %v5668
    %v5741 = vrcp.pop %v5671
    %v5742 = vrcp.pop %v5674
    %v5743 = vrcp.pop %v5677
    %v5744 = vrcp.pop %v5680
    %v5745 = vrcp.pop %v5683
    %v5746 = vrcp.pop %v5686
    %v5747 = vrcp.pop %v5689
    %v5748 = vrcp.pop %v5692
    %v5749 = vrcp.pop %v5695
    %v5750 = vrcp.pop %v5698
    %v5751 = vrcp.pop %v5701
    %v5752 = vrcp.pop %v5704
    %v5753 = vrcp.pop %v5707
    %v5754 = vrcp.pop %v5710
    %v5755 = vrcp.pop %v5713
    %v5756 = vrcp.pop %v5716
    %v5757 = vrcp.pop %v5719
    %v5758 = vrcp.pop %v5722
    %v5759 = vrcp.pop %v5725
    %v5760 = vrcp.pop %v5728
    %v5761 = vmul.f32 %v5570, %v5729
    %v5762 = vmul.f32 %v5572, %v5730
    %v5763 = vmul.f32 %v5574, %v5731
    %v5764 = vmul.f32 %v5576, %v5732
    %v5765 = vmul.f32 %v5578, %v5733
    %v5766 = vmul.f32 %v5580, %v5734
    %v5767 = vmul.f32 %v5582, %v5735
    %v5768 = vmul.f32 %v5584, %v5736
    %v5769 = vmul.f32 %v5586, %v5737
    %v5770 = vmul.f32 %v5588, %v5738
    %v5771 = vmul.f32 %v5590, %v5739
    %v5772 = vmul.f32 %v5592, %v5740
    %v5773 = vmul.f32 %v5594, %v5741
    %v5774 = vmul.f32 %v5596, %v5742
    %v5775 = vmul.f32 %v5598, %v5743
    %v5776 = vmul.f32 %v5600, %v5744
    %v5777 = vmul.f32 %v5602, %v5745
    %v5778 = vmul.f32 %v5604, %v5746
    %v5779 = vmul.f32 %v5606, %v5747
    %v5780 = vmul.f32 %v5608, %v5748
    %v5781 = vmul.f32 %v5610, %v5749
    %v5782 = vmul.f32 %v5612, %v5750
    %v5783 = vmul.f32 %v5614, %v5751
    %v5784 = vmul.f32 %v5616, %v5752
    %v5785 = vmul.f32 %v5618, %v5753
    %v5786 = vmul.f32 %v5620, %v5754
    %v5787 = vmul.f32 %v5622, %v5755
    %v5788 = vmul.f32 %v5624, %v5756
    %v5789 = vmul.f32 %v5626, %v5757
    %v5790 = vmul.f32 %v5628, %v5758
    %v5791 = vmul.f32 %v5630, %v5759
    %v5792 = vmul.f32 %v5632, %v5760
    %v5793 = vpack.c.bf16 %v5762, %v5761
    %v5794 = vpack.c.bf16 %v5764, %v5763
    %v5795 = vpack.c.bf16 %v5766, %v5765
    %v5796 = vpack.c.bf16 %v5768, %v5767
    %v5797 = vpack.c.bf16 %v5770, %v5769
    %v5798 = vpack.c.bf16 %v5772, %v5771
    %v5799 = vpack.c.bf16 %v5774, %v5773
    %v5800 = vpack.c.bf16 %v5776, %v5775
    %v5801 = vpack.c.bf16 %v5778, %v5777
    %v5802 = vpack.c.bf16 %v5780, %v5779
    %v5803 = vpack.c.bf16 %v5782, %v5781
    %v5804 = vpack.c.bf16 %v5784, %v5783
    %v5805 = vpack.c.bf16 %v5786, %v5785
    %v5806 = vpack.c.bf16 %v5788, %v5787
    %v5807 = vpack.c.bf16 %v5790, %v5789
    %v5808 = vpack.c.bf16 %v5792, %v5791
    %v5809 = vpack.c.bf16 %v5139, %v5136
    %v5810 = vpack.c.bf16 %v5147, %v5144
    %v5812 = vsel %vm129, %v5793, 0
    %v5815 = vsel %vm129, %v5794, 0
    %v5818 = vsel %vm129, %v5795, 0
    %v5821 = vsel %vm129, %v5796, 0
    %v5824 = vsel %vm129, %v5797, 0
    %v5827 = vsel %vm129, %v5798, 0
    %v5830 = vsel %vm129, %v5799, 0
    %v5833 = vsel %vm129, %v5800, 0
    %v5836 = vsel %vm129, %v5801, 0
    %v5839 = vsel %vm129, %v5802, 0
    %v5842 = vsel %vm129, %v5803, 0
    %v5845 = vsel %vm129, %v5804, 0
    %v5848 = vsel %vm129, %v5805, 0
    %v5851 = vsel %vm129, %v5806, 0
    %v5854 = vsel %vm129, %v5807, 0
    %v5857 = vsel %vm129, %v5808, 0
    %5859 = vmatprep.subr.bf16.mxu0 0
    %5860 = vmatpush1.bf16.msra.mxu0 0
    %5861 = vmatprep.subr.bf16.mxu0 0
    %5862 = vmatpush1.bf16.msra.mxu0 0
    %5863 = vmatprep.subr.bf16.mxu0 0
    %5864 = vmatpush1.bf16.msra.mxu0 0
    %5865 = vmatprep.subr.bf16.mxu0 0
    %5866 = vmatpush1.bf16.msra.mxu0 0
    %5867 = vmatprep.subr.bf16.mxu0 0
    %5868 = vmatpush1.bf16.msra.mxu0 0
    %5869 = vmatprep.subr.bf16.mxu0 0
    %5870 = vmatpush1.bf16.msra.mxu0 0
    %5871 = vmatprep.subr.bf16.mxu0 0
    %5872 = vmatpush1.bf16.msra.mxu0 %v5810
    %5873 = vmatprep.subr.bf16.mxu0 0
    %5874 = vmatpush1.bf16.msra.mxu0 %v5809
    %5875 = vmatprep.subr.bf16.mxu0 0
    %5876 = vmatpush2.bf16.msra.mxu0 0
    %5877 = vmatprep.subr.bf16.mxu0 0
    %5878 = vmatpush2.bf16.msra.mxu0 0
    %5879 = vmatprep.subr.bf16.mxu0 0
    %5880 = vmatpush2.bf16.msra.mxu0 0
    %5881 = vmatprep.subr.bf16.mxu0 0
    %5882 = vmatpush2.bf16.msra.mxu0 0
    %5883 = vmatprep.subr.bf16.mxu0 0
    %5884 = vmatpush2.bf16.msra.mxu0 0
    %5885 = vmatprep.subr.bf16.mxu0 0
    %5886 = vmatpush2.bf16.msra.mxu0 0
    %5887 = vmatprep.subr.bf16.mxu0 0
    %5888 = vmatpush2.bf16.msra.mxu0 0
    %5889 = vmatprep.subr.bf16.mxu0 0
    %5890 = vmatpush2.bf16.msra.mxu0 0
    %5891 = vmatprep.mubr.bf16.mxu0 0
    %5892 = vmatmul.mubr.bf16.gmra.mxu0 %v5812
    %v5893 = vpop.f32.mrf.mxu0
    %v5894 = vadd.f32 0.0, %v5893
    %v5895 = vpop.f32.mrf.mxu0
    %v5896 = vpop.f32.mrf.mxu0
    %v5897 = vadd.f32 0.0, %v5896
    %v5898 = vpop.f32.mrf.mxu0
    %5899 = vmatprep.mubr.bf16.mxu0 0
    %5900 = vmatmul.mubr.bf16.gmra.mxu0 %v5815
    %v5901 = vpop.f32.mrf.mxu0
    %v5902 = vadd.f32 0.0, %v5901
    %v5903 = vpop.f32.mrf.mxu0
    %v5904 = vpop.f32.mrf.mxu0
    %v5905 = vadd.f32 0.0, %v5904
    %v5906 = vpop.f32.mrf.mxu0
    %5907 = vmatprep.mubr.bf16.mxu0 0
    %5908 = vmatmul.mubr.bf16.gmra.mxu0 %v5818
    %v5909 = vpop.f32.mrf.mxu0
    %v5910 = vadd.f32 0.0, %v5909
    %v5911 = vpop.f32.mrf.mxu0
    %v5912 = vpop.f32.mrf.mxu0
    %v5913 = vadd.f32 0.0, %v5912
    %v5914 = vpop.f32.mrf.mxu0
    %5915 = vmatprep.mubr.bf16.mxu0 0
    %5916 = vmatmul.mubr.bf16.gmra.mxu0 %v5821
    %v5917 = vpop.f32.mrf.mxu0
    %v5918 = vadd.f32 0.0, %v5917
    %v5919 = vpop.f32.mrf.mxu0
    %v5920 = vpop.f32.mrf.mxu0
    %v5921 = vadd.f32 0.0, %v5920
    %v5922 = vpop.f32.mrf.mxu0
    %5923 = vmatprep.mubr.bf16.mxu0 0
    %5924 = vmatmul.mubr.bf16.gmra.mxu0 %v5824
    %v5925 = vpop.f32.mrf.mxu0
    %v5926 = vadd.f32 0.0, %v5925
    %v5927 = vpop.f32.mrf.mxu0
    %v5928 = vpop.f32.mrf.mxu0
    %v5929 = vadd.f32 0.0, %v5928
    %v5930 = vpop.f32.mrf.mxu0
    %5931 = vmatprep.mubr.bf16.mxu0 0
    %5932 = vmatmul.mubr.bf16.gmra.mxu0 %v5827
    %v5933 = vpop.f32.mrf.mxu0
    %v5934 = vadd.f32 0.0, %v5933
    %v5935 = vpop.f32.mrf.mxu0
    %v5936 = vpop.f32.mrf.mxu0
    %v5937 = vadd.f32 0.0, %v5936
    %v5938 = vpop.f32.mrf.mxu0
    %5939 = vmatprep.mubr.bf16.mxu0 0
    %5940 = vmatmul.mubr.bf16.gmra.mxu0 %v5830
    %v5941 = vpop.f32.mrf.mxu0
    %v5942 = vadd.f32 0.0, %v5941
    %v5943 = vpop.f32.mrf.mxu0
    %v5944 = vpop.f32.mrf.mxu0
    %v5945 = vadd.f32 0.0, %v5944
    %v5946 = vpop.f32.mrf.mxu0
    %5947 = vmatprep.mubr.bf16.mxu0 0
    %5948 = vmatmul.mubr.bf16.gmra.mxu0 %v5833
    %v5949 = vpop.f32.mrf.mxu0
    %v5950 = vadd.f32 0.0, %v5949
    %v5951 = vpop.f32.mrf.mxu0
    %v5952 = vpop.f32.mrf.mxu0
    %v5953 = vadd.f32 0.0, %v5952
    %v5954 = vpop.f32.mrf.mxu0
    %5955 = vmatprep.mubr.bf16.mxu0 0
    %5956 = vmatmul.mubr.bf16.gmra.mxu0 %v5836
    %v5957 = vpop.f32.mrf.mxu0
    %v5958 = vadd.f32 0.0, %v5957
    %v5959 = vpop.f32.mrf.mxu0
    %v5960 = vpop.f32.mrf.mxu0
    %v5961 = vadd.f32 0.0, %v5960
    %v5962 = vpop.f32.mrf.mxu0
    %5963 = vmatprep.mubr.bf16.mxu0 0
    %5964 = vmatmul.mubr.bf16.gmra.mxu0 %v5839
    %v5965 = vpop.f32.mrf.mxu0
    %v5966 = vadd.f32 0.0, %v5965
    %v5967 = vpop.f32.mrf.mxu0
    %v5968 = vpop.f32.mrf.mxu0
    %v5969 = vadd.f32 0.0, %v5968
    %v5970 = vpop.f32.mrf.mxu0
    %5971 = vmatprep.mubr.bf16.mxu0 0
    %5972 = vmatmul.mubr.bf16.gmra.mxu0 %v5842
    %v5973 = vpop.f32.mrf.mxu0
    %v5974 = vadd.f32 0.0, %v5973
    %v5975 = vpop.f32.mrf.mxu0
    %v5976 = vpop.f32.mrf.mxu0
    %v5977 = vadd.f32 0.0, %v5976
    %v5978 = vpop.f32.mrf.mxu0
    %5979 = vmatprep.mubr.bf16.mxu0 0
    %5980 = vmatmul.mubr.bf16.gmra.mxu0 %v5845
    %v5981 = vpop.f32.mrf.mxu0
    %v5982 = vadd.f32 0.0, %v5981
    %v5983 = vpop.f32.mrf.mxu0
    %v5984 = vpop.f32.mrf.mxu0
    %v5985 = vadd.f32 0.0, %v5984
    %v5986 = vpop.f32.mrf.mxu0
    %5987 = vmatprep.mubr.bf16.mxu0 0
    %5988 = vmatmul.mubr.bf16.gmra.mxu0 %v5848
    %v5989 = vpop.f32.mrf.mxu0
    %v5990 = vadd.f32 0.0, %v5989
    %v5991 = vpop.f32.mrf.mxu0
    %v5992 = vpop.f32.mrf.mxu0
    %v5993 = vadd.f32 0.0, %v5992
    %v5994 = vpop.f32.mrf.mxu0
    %5995 = vmatprep.mubr.bf16.mxu0 0
    %5996 = vmatmul.mubr.bf16.gmra.mxu0 %v5851
    %v5997 = vpop.f32.mrf.mxu0
    %v5998 = vadd.f32 0.0, %v5997
    %v5999 = vpop.f32.mrf.mxu0
    %v6000 = vpop.f32.mrf.mxu0
    %v6001 = vadd.f32 0.0, %v6000
    %v6002 = vpop.f32.mrf.mxu0
    %6003 = vmatprep.mubr.bf16.mxu0 0
    %6004 = vmatmul.mubr.bf16.gmra.mxu0 %v5854
    %v6005 = vpop.f32.mrf.mxu0
    %v6006 = vadd.f32 0.0, %v6005
    %v6007 = vpop.f32.mrf.mxu0
    %v6008 = vpop.f32.mrf.mxu0
    %v6009 = vadd.f32 0.0, %v6008
    %v6010 = vpop.f32.mrf.mxu0
    %6011 = vmatprep.mubr.bf16.mxu0 0
    %6012 = vmatmul.mubr.bf16.gmra.mxu0 %v5857
    %v6013 = vpop.f32.mrf.mxu0
    %v6014 = vadd.f32 0.0, %v6013
    %v6015 = vpop.f32.mrf.mxu0
    %v6016 = vpop.f32.mrf.mxu0
    %v6017 = vadd.f32 0.0, %v6016
    %v6018 = vpop.f32.mrf.mxu0
    %6019 = vdwg.mxu0
    %v6020 = vmul.f32 %v5894, %v97
    %v6021 = vmul.f32 %v5897, %v98
    %v6022 = vmul.f32 %v5902, %v99
    %v6023 = vmul.f32 %v5905, %v100
    %v6024 = vmul.f32 %v5910, %v101
    %v6025 = vmul.f32 %v5913, %v102
    %v6026 = vmul.f32 %v5918, %v103
    %v6027 = vmul.f32 %v5921, %v104
    %v6028 = vmul.f32 %v5926, %v105
    %v6029 = vmul.f32 %v5929, %v106
    %v6030 = vmul.f32 %v5934, %v107
    %v6031 = vmul.f32 %v5937, %v108
    %v6032 = vmul.f32 %v5942, %v109
    %v6033 = vmul.f32 %v5945, %v110
    %v6034 = vmul.f32 %v5950, %v111
    %v6035 = vmul.f32 %v5953, %v112
    %v6036 = vmul.f32 %v5958, %v113
    %v6037 = vmul.f32 %v5961, %v114
    %v6038 = vmul.f32 %v5966, %v115
    %v6039 = vmul.f32 %v5969, %v116
    %v6040 = vmul.f32 %v5974, %v117
    %v6041 = vmul.f32 %v5977, %v118
    %v6042 = vmul.f32 %v5982, %v119
    %v6043 = vmul.f32 %v5985, %v120
    %v6044 = vmul.f32 %v5990, %v121
    %v6045 = vmul.f32 %v5993, %v122
    %v6046 = vmul.f32 %v5998, %v123
    %v6047 = vmul.f32 %v6001, %v124
    %v6048 = vmul.f32 %v6006, %v125
    %v6049 = vmul.f32 %v6009, %v126
    %v6050 = vmul.f32 %v6014, %v127
    %v6051 = vmul.f32 %v6017, %v128
    %v6052 = vadd.f32 %v6020, %v6024
    %v6053 = vadd.f32 %v6021, %v6025
    %v6054 = vadd.f32 %v6022, %v6026
    %v6055 = vadd.f32 %v6023, %v6027
    %v6056 = vadd.f32 %v6052, %v6028
    %v6057 = vadd.f32 %v6053, %v6029
    %v6058 = vadd.f32 %v6054, %v6030
    %v6059 = vadd.f32 %v6055, %v6031
    %v6060 = vadd.f32 %v6056, %v6032
    %v6061 = vadd.f32 %v6057, %v6033
    %v6062 = vadd.f32 %v6058, %v6034
    %v6063 = vadd.f32 %v6059, %v6035
    %v6064 = vadd.f32 %v6060, %v6036
    %v6065 = vadd.f32 %v6061, %v6037
    %v6066 = vadd.f32 %v6062, %v6038
    %v6067 = vadd.f32 %v6063, %v6039
    %v6068 = vadd.f32 %v6064, %v6040
    %v6069 = vadd.f32 %v6065, %v6041
    %v6070 = vadd.f32 %v6066, %v6042
    %v6071 = vadd.f32 %v6067, %v6043
    %v6072 = vadd.f32 %v6068, %v6044
    %v6073 = vadd.f32 %v6069, %v6045
    %v6074 = vadd.f32 %v6070, %v6046
    %v6075 = vadd.f32 %v6071, %v6047
    %v6076 = vadd.f32 %v6072, %v6048
    %v6077 = vadd.f32 %v6073, %v6049
    %v6078 = vadd.f32 %v6074, %v6050
    %v6079 = vadd.f32 %v6075, %v6051
    %v6080 = vpack.c.bf16 %v6077, %v6076
    %v6081 = vpack.c.bf16 %v6079, %v6078
    %v6082 = vlaneseq
    %v6083 = vshrl.u32 %v6082, 7
    %v6084 = vsub.s32 2, %v6083
    %v6085 = vrot.slane %v63, %v6084
    %v6090 = vunpack.c.l.b16 %v4939
    %v6091 = vunpack.c.l.b16 %v4940
    %v6092 = vunpack.c.l.b16 %v4941
    %v6093 = vunpack.c.l.b16 %v4942
    %v6094 = vpack.c.b16 %v6091, %v6090
    %v6095 = vpack.c.b16 %v6093, %v6092
    %v6099 = vsel %vm129, %v6080, 0
    %v6102 = vsel %vm129, %v6081, 0
    %6104 = vmatprep.subr.bf16.mxu0 0
    %6105 = vmatpush1.bf16.msra.mxu0 0
    %6106 = vmatprep.subr.bf16.mxu0 0
    %6107 = vmatpush1.bf16.msra.mxu0 0
    %6108 = vmatprep.subr.bf16.mxu0 0
    %6109 = vmatpush1.bf16.msra.mxu0 0
    %6110 = vmatprep.subr.bf16.mxu0 0
    %6111 = vmatpush1.bf16.msra.mxu0 0
    %6112 = vmatprep.subr.bf16.mxu0 0
    %6113 = vmatpush1.bf16.msra.mxu0 0
    %6114 = vmatprep.subr.bf16.mxu0 0
    %6115 = vmatpush1.bf16.msra.mxu0 0
    %6116 = vmatprep.subr.bf16.mxu0 0
    %6117 = vmatpush1.bf16.msra.mxu0 %v6095
    %6118 = vmatprep.subr.bf16.mxu0 0
    %6119 = vmatpush1.bf16.msra.mxu0 %v6094
    %6120 = vmatprep.subr.bf16.mxu0 0
    %6121 = vmatpush2.bf16.msra.mxu0 0
    %6122 = vmatprep.subr.bf16.mxu0 0
    %6123 = vmatpush2.bf16.msra.mxu0 0
    %6124 = vmatprep.subr.bf16.mxu0 0
    %6125 = vmatpush2.bf16.msra.mxu0 0
    %6126 = vmatprep.subr.bf16.mxu0 0
    %6127 = vmatpush2.bf16.msra.mxu0 0
    %6128 = vmatprep.subr.bf16.mxu0 0
    %6129 = vmatpush2.bf16.msra.mxu0 0
    %6130 = vmatprep.subr.bf16.mxu0 0
    %6131 = vmatpush2.bf16.msra.mxu0 0
    %6132 = vmatprep.subr.bf16.mxu0 0
    %6133 = vmatpush2.bf16.msra.mxu0 0
    %6134 = vmatprep.subr.bf16.mxu0 0
    %6135 = vmatpush2.bf16.msra.mxu0 0
    %6136 = vmatprep.mubr.bf16.mxu0 0
    %6137 = vmatmul.mubr.bf16.gmra.mxu0 %v6099
    %v6138 = vpop.f32.mrf.mxu0
    %v6139 = vadd.f32 %v6085, %v6138
    %v6140 = vpop.f32.mrf.mxu0
    %v6141 = vpop.f32.mrf.mxu0
    %v6142 = vadd.f32 %v6085, %v6141
    %v6143 = vpop.f32.mrf.mxu0
    %6144 = vmatprep.mubr.bf16.mxu0 0
    %6145 = vmatmul.mubr.bf16.gmra.mxu0 %v6102
    %v6146 = vpop.f32.mrf.mxu0
    %v6147 = vadd.f32 %v6085, %v6146
    %v6148 = vpop.f32.mrf.mxu0
    %v6149 = vpop.f32.mrf.mxu0
    %v6150 = vadd.f32 %v6085, %v6149
    %v6151 = vpop.f32.mrf.mxu0
    %6152 = vdwg.mxu0
    %v6153 = vadd.f32 %v4922, %v6139
    %v6154 = vadd.f32 %v4923, %v6142
    %v6155 = vadd.f32 %v4924, %v6147
    %v6156 = vadd.f32 %v4925, %v6150
    %v6157 = vsel %vm129, %v6153, 0.0
    %6158 = vadd.xlane.f32.xlu0 %v6157
    %v6159 = vpop.xlane.xlu0 %6158
    %v6160 = vsel %vm129, %v6154, 0.0
    %6161 = vadd.xlane.f32.xlu0 %v6160
    %v6162 = vpop.xlane.xlu0 %6161
    %v6163 = vsel %vm129, %v6155, 0.0
    %6164 = vadd.xlane.f32.xlu0 %v6163
    %v6165 = vpop.xlane.xlu0 %6164
    %v6166 = vsel %vm129, %v6156, 0.0
    %6167 = vadd.xlane.f32.xlu0 %v6166
    %v6168 = vpop.xlane.xlu0 %6167
    %v6169 = vmul.f32 %v6159, %v142
    %v6170 = vmul.f32 %v6162, %v142
    %v6171 = vmul.f32 %v6165, %v142
    %v6172 = vmul.f32 %v6168, %v142
    %v6173 = vsub.f32 %v6153, %v6169
    %v6174 = vsub.f32 %v6154, %v6170
    %v6175 = vsub.f32 %v6155, %v6171
    %v6176 = vsub.f32 %v6156, %v6172
    %v6177 = vmul.f32 %v6173, %v6173
    %v6178 = vmul.f32 %v6174, %v6174
    %v6179 = vmul.f32 %v6175, %v6175
    %v6180 = vmul.f32 %v6176, %v6176
    %v6181 = vsel %vm129, %v6177, 0.0
    %6182 = vadd.xlane.f32.xlu0 %v6181
    %v6183 = vpop.xlane.xlu0 %6182
    %v6184 = vsel %vm129, %v6178, 0.0
    %6185 = vadd.xlane.f32.xlu0 %v6184
    %v6186 = vpop.xlane.xlu0 %6185
    %v6187 = vsel %vm129, %v6179, 0.0
    %6188 = vadd.xlane.f32.xlu0 %v6187
    %v6189 = vpop.xlane.xlu0 %6188
    %v6190 = vsel %vm129, %v6180, 0.0
    %6191 = vadd.xlane.f32.xlu0 %v6190
    %v6192 = vpop.xlane.xlu0 %6191
    %v6193 = vmul.f32 %v6183, %v142
    %v6194 = vmul.f32 %v6186, %v142
    %v6195 = vmul.f32 %v6189, %v142
    %v6196 = vmul.f32 %v6192, %v142
    %v6197 = vadd.f32 %v6193, 1e-05
    %v6198 = vadd.f32 %v6194, 1e-05
    %v6199 = vadd.f32 %v6195, 1e-05
    %v6200 = vadd.f32 %v6196, 1e-05
    %v6201 = vrsqrt.pop %v6197
    %v6202 = vrsqrt.pop %v6198
    %v6203 = vrsqrt.pop %v6199
    %v6204 = vrsqrt.pop %v6200
    %v6205 = vmul.f32 %v6173, %v6201
    %v6206 = vmul.f32 %v6174, %v6202
    %v6207 = vmul.f32 %v6175, %v6203
    %v6208 = vmul.f32 %v6176, %v6204
    %v6209 = vlaneseq
    %v6210 = vshrl.u32 %v6209, 7
    %v6211 = vsub.s32 3, %v6210
    %v6212 = vrot.slane %v63, %v6211
    %v6213 = vmul.f32 %v6205, %v6212
    %v6214 = vmul.f32 %v6206, %v6212
    %v6215 = vmul.f32 %v6207, %v6212
    %v6216 = vmul.f32 %v6208, %v6212
    %v6217 = vlaneseq
    %v6218 = vshrl.u32 %v6217, 7
    %v6219 = vsub.s32 4, %v6218
    %v6220 = vrot.slane %v63, %v6219
    %v6221 = vadd.f32 %v6213, %v6220
    %v6222 = vadd.f32 %v6214, %v6220
    %v6223 = vadd.f32 %v6215, %v6220
    %v6224 = vadd.f32 %v6216, %v6220
    %v6225 = vpack.c.bf16 %v6222, %v6221
    %v6226 = vpack.c.bf16 %v6224, %v6223
    %s6227 = scalar_lea.vmem %s5, 48
    %v6228 = vld [vmem:[%s6227] sm:$0xf]
    %v6229 = vld [vmem:[%s6227 + $0x4] sm:$0xf]
    %v6230 = vld [vmem:[%s6227 + $0x8] sm:$0xf]
    %v6231 = vld [vmem:[%s6227 + $0xc] sm:$0xf]
    %s6232 = scalar_lea.vmem %s3, 3
    %v6233 = vld [vmem:[%s6232] sm:$0x1]
    %v6235 = vlaneseq
    %v6236 = vshrl.u32 %v6235, 7
    %v6237 = vsub.s32 0, %v6236
    %v6238 = vrot.slane %v6233, %v6237
    %v6244 = vunpack.c.l.b16 %v6228
    %v6245 = vunpack.c.l.b16 %v6229
    %v6246 = vunpack.c.l.b16 %v6230
    %v6247 = vunpack.c.l.b16 %v6231
    %v6248 = vpack.c.b16 %v6245, %v6244
    %v6249 = vpack.c.b16 %v6247, %v6246
    %v6253 = vsel %vm129, %v6225, 0
    %v6256 = vsel %vm129, %v6226, 0
    %6258 = vmatprep.subr.bf16.mxu0 0
    %6259 = vmatpush1.bf16.msra.mxu0 0
    %6260 = vmatprep.subr.bf16.mxu0 0
    %6261 = vmatpush1.bf16.msra.mxu0 0
    %6262 = vmatprep.subr.bf16.mxu0 0
    %6263 = vmatpush1.bf16.msra.mxu0 0
    %6264 = vmatprep.subr.bf16.mxu0 0
    %6265 = vmatpush1.bf16.msra.mxu0 0
    %6266 = vmatprep.subr.bf16.mxu0 0
    %6267 = vmatpush1.bf16.msra.mxu0 0
    %6268 = vmatprep.subr.bf16.mxu0 0
    %6269 = vmatpush1.bf16.msra.mxu0 0
    %6270 = vmatprep.subr.bf16.mxu0 0
    %6271 = vmatpush1.bf16.msra.mxu0 %v6249
    %6272 = vmatprep.subr.bf16.mxu0 0
    %6273 = vmatpush1.bf16.msra.mxu0 %v6248
    %6274 = vmatprep.subr.bf16.mxu0 0
    %6275 = vmatpush2.bf16.msra.mxu0 0
    %6276 = vmatprep.subr.bf16.mxu0 0
    %6277 = vmatpush2.bf16.msra.mxu0 0
    %6278 = vmatprep.subr.bf16.mxu0 0
    %6279 = vmatpush2.bf16.msra.mxu0 0
    %6280 = vmatprep.subr.bf16.mxu0 0
    %6281 = vmatpush2.bf16.msra.mxu0 0
    %6282 = vmatprep.subr.bf16.mxu0 0
    %6283 = vmatpush2.bf16.msra.mxu0 0
    %6284 = vmatprep.subr.bf16.mxu0 0
    %6285 = vmatpush2.bf16.msra.mxu0 0
    %6286 = vmatprep.subr.bf16.mxu0 0
    %6287 = vmatpush2.bf16.msra.mxu0 0
    %6288 = vmatprep.subr.bf16.mxu0 0
    %6289 = vmatpush2.bf16.msra.mxu0 0
    %6290 = vmatprep.mubr.bf16.mxu0 0
    %6291 = vmatmul.mubr.bf16.gmra.mxu0 %v6253
    %v6292 = vpop.f32.mrf.mxu0
    %v6293 = vadd.f32 %v6238, %v6292
    %v6294 = vpop.f32.mrf.mxu0
    %v6295 = vpop.f32.mrf.mxu0
    %v6296 = vadd.f32 %v6238, %v6295
    %v6297 = vpop.f32.mrf.mxu0
    %6298 = vmatprep.mubr.bf16.mxu0 0
    %6299 = vmatmul.mubr.bf16.gmra.mxu0 %v6256
    %v6300 = vpop.f32.mrf.mxu0
    %v6301 = vadd.f32 %v6238, %v6300
    %v6302 = vpop.f32.mrf.mxu0
    %v6303 = vpop.f32.mrf.mxu0
    %v6304 = vadd.f32 %v6238, %v6303
    %v6305 = vpop.f32.mrf.mxu0
    %6306 = vdwg.mxu0
    %v6307 = vmax.f32 %v6293, 0.0
    %v6308 = vmax.f32 %v6296, 0.0
    %v6309 = vmax.f32 %v6301, 0.0
    %v6310 = vmax.f32 %v6304, 0.0
    %v6311 = vpack.c.bf16 %v6308, %v6307
    %v6312 = vpack.c.bf16 %v6310, %v6309
    %s6313 = scalar_lea.vmem %s6, 192
    %v6314 = vld [vmem:[%s6313] sm:$0xf]
    %v6315 = vld [vmem:[%s6313 + $0x4] sm:$0xf]
    %v6316 = vld [vmem:[%s6313 + $0x8] sm:$0xf]
    %v6317 = vld [vmem:[%s6313 + $0xc] sm:$0xf]
    %v6318 = vld [vmem:[%s6313 + $0x10] sm:$0xf]
    %v6319 = vld [vmem:[%s6313 + $0x14] sm:$0xf]
    %v6320 = vld [vmem:[%s6313 + $0x18] sm:$0xf]
    %v6321 = vld [vmem:[%s6313 + $0x1c] sm:$0xf]
    %v6322 = vld [vmem:[%s6313 + $0x20] sm:$0xf]
    %v6323 = vld [vmem:[%s6313 + $0x24] sm:$0xf]
    %v6324 = vld [vmem:[%s6313 + $0x28] sm:$0xf]
    %v6325 = vld [vmem:[%s6313 + $0x2c] sm:$0xf]
    %v6326 = vld [vmem:[%s6313 + $0x30] sm:$0xf]
    %v6327 = vld [vmem:[%s6313 + $0x34] sm:$0xf]
    %v6328 = vld [vmem:[%s6313 + $0x38] sm:$0xf]
    %v6329 = vld [vmem:[%s6313 + $0x3c] sm:$0xf]
    %v6330 = vlaneseq
    %v6331 = vshrl.u32 %v6330, 7
    %v6332 = vsub.s32 7, %v6331
    %v6333 = vrot.slane %v63, %v6332
    %v6350 = vunpack.c.l.b16 %v6314
    %v6351 = vunpack.c.l.b16 %v6315
    %v6352 = vunpack.c.l.b16 %v6316
    %v6353 = vunpack.c.l.b16 %v6317
    %v6354 = vunpack.c.l.b16 %v6318
    %v6355 = vunpack.c.l.b16 %v6319
    %v6356 = vunpack.c.l.b16 %v6320
    %v6357 = vunpack.c.l.b16 %v6321
    %v6358 = vunpack.c.l.b16 %v6322
    %v6359 = vunpack.c.l.b16 %v6323
    %v6360 = vunpack.c.l.b16 %v6324
    %v6361 = vunpack.c.l.b16 %v6325
    %v6362 = vunpack.c.l.b16 %v6326
    %v6363 = vunpack.c.l.b16 %v6327
    %v6364 = vunpack.c.l.b16 %v6328
    %v6365 = vunpack.c.l.b16 %v6329
    %v6366 = vpack.c.b16 %v6351, %v6350
    %v6367 = vpack.c.b16 %v6353, %v6352
    %v6368 = vpack.c.b16 %v6355, %v6354
    %v6369 = vpack.c.b16 %v6357, %v6356
    %v6370 = vpack.c.b16 %v6359, %v6358
    %v6371 = vpack.c.b16 %v6361, %v6360
    %v6372 = vpack.c.b16 %v6363, %v6362
    %v6373 = vpack.c.b16 %v6365, %v6364
    %6382 = vmatprep.subr.bf16.mxu0 0
    %6383 = vmatpush1.bf16.msra.mxu0 %v6373
    %6384 = vmatprep.subr.bf16.mxu0 0
    %6385 = vmatpush1.bf16.msra.mxu0 %v6372
    %6386 = vmatprep.subr.bf16.mxu0 0
    %6387 = vmatpush1.bf16.msra.mxu0 %v6371
    %6388 = vmatprep.subr.bf16.mxu0 0
    %6389 = vmatpush1.bf16.msra.mxu0 %v6370
    %6390 = vmatprep.subr.bf16.mxu0 0
    %6391 = vmatpush1.bf16.msra.mxu0 %v6369
    %6392 = vmatprep.subr.bf16.mxu0 0
    %6393 = vmatpush1.bf16.msra.mxu0 %v6368
    %6394 = vmatprep.subr.bf16.mxu0 0
    %6395 = vmatpush1.bf16.msra.mxu0 %v6367
    %6396 = vmatprep.subr.bf16.mxu0 0
    %6397 = vmatpush1.bf16.msra.mxu0 %v6366
    %6398 = vmatprep.subr.bf16.mxu0 0
    %6399 = vmatpush2.bf16.msra.mxu0 0
    %6400 = vmatprep.subr.bf16.mxu0 0
    %6401 = vmatpush2.bf16.msra.mxu0 0
    %6402 = vmatprep.subr.bf16.mxu0 0
    %6403 = vmatpush2.bf16.msra.mxu0 0
    %6404 = vmatprep.subr.bf16.mxu0 0
    %6405 = vmatpush2.bf16.msra.mxu0 0
    %6406 = vmatprep.subr.bf16.mxu0 0
    %6407 = vmatpush2.bf16.msra.mxu0 0
    %6408 = vmatprep.subr.bf16.mxu0 0
    %6409 = vmatpush2.bf16.msra.mxu0 0
    %6410 = vmatprep.subr.bf16.mxu0 0
    %6411 = vmatpush2.bf16.msra.mxu0 0
    %6412 = vmatprep.subr.bf16.mxu0 0
    %6413 = vmatpush2.bf16.msra.mxu0 0
    %6414 = vmatprep.mubr.bf16.mxu0 0
    %6415 = vmatmul.mubr.bf16.gmra.mxu0 %v6311
    %v6416 = vpop.f32.mrf.mxu0
    %v6417 = vpop.f32.mrf.mxu0
    %v6418 = vpop.f32.mrf.mxu0
    %v6419 = vpop.f32.mrf.mxu0
    %6420 = vmatprep.mubr.bf16.mxu0 0
    %6421 = vmatmul.mubr.bf16.gmra.mxu0 %v6312
    %v6422 = vpop.f32.mrf.mxu0
    %v6423 = vadd.f32 %v6333, %v6422
    %v6424 = vpop.f32.mrf.mxu0
    %v6425 = vpop.f32.mrf.mxu0
    %v6426 = vpop.f32.mrf.mxu0
    %6427 = vdwg.mxu0
    %v6428 = vadd.f32 %v6223, %v6423
    %v6429 = vsel %vm129, %v6428, 0.0
    %6430 = vadd.xlane.f32.xlu0 %v6429
    %v6431 = vpop.xlane.xlu0 %6430
    %v6432 = vmul.f32 %v6431, %v142
    %v6433 = vsub.f32 %v6428, %v6432
    %v6434 = vmul.f32 %v6433, %v6433
    %v6435 = vsel %vm129, %v6434, 0.0
    %6436 = vadd.xlane.f32.xlu0 %v6435
    %v6437 = vpop.xlane.xlu0 %6436
    %v6438 = vmul.f32 %v6437, %v142
    %v6439 = vadd.f32 %v6438, 1e-05
    %v6440 = vrsqrt.pop %v6439
    %v6441 = vmul.f32 %v6433, %v6440
    %v6442 = vlaneseq
    %v6443 = vshrl.u32 %v6442, 7
    %v6444 = vsub.s32 5, %v6443
    %v6445 = vrot.slane %v63, %v6444
    %v6446 = vmul.f32 %v6441, %v6445
    %v6447 = vlaneseq
    %v6448 = vshrl.u32 %v6447, 7
    %v6449 = vsub.s32 6, %v6448
    %v6450 = vrot.slane %v63, %v6449
    %v6451 = vadd.f32 %v6446, %v6450
    %vm6452 = vcmask 254976
    %v6453 = vsel %vm6452, %v6451, 0.0
    %6454 = vadd.xlane.f32.xlu0 %v6453
    %v6455 = vpop.xlane.xlu0 %6454
    %v6456 = vmul.f32 %v6455, %v142
    %v6457 = vsub.f32 %v6451, %v6456
    %v6458 = vmul.f32 %v6457, %v6457
    %v6459 = vsel %vm6452, %v6458, 0.0
    %6460 = vadd.xlane.f32.xlu0 %v6459
    %v6461 = vpop.xlane.xlu0 %6460
    %v6462 = vmul.f32 %v6461, %v142
    %v6463 = vadd.f32 %v6462, 1e-05
    %v6464 = vrsqrt.pop %v6463
    %v6465 = vmul.f32 %v6457, %v6464
    %v6466 = vlaneseq
    %v6467 = vshrl.u32 %v6466, 7
    %v6468 = vsub.s32 2, %v6467
    %v6469 = vrot.slane %v59, %v6468
    %v6470 = vmul.f32 %v6465, %v6469
    %v6471 = vlaneseq
    %v6472 = vshrl.u32 %v6471, 7
    %v6473 = vsub.s32 3, %v6472
    %v6474 = vrot.slane %v59, %v6473
    %v6475 = vadd.f32 %v6470, %v6474
    %6476 = vst.msk [vmem:[#allocation2] sm:$0x3] %vm6452, %v6475
    // Predicated region
    $region30: #{temporal_encoder_forward.1} parent=1 // pred_check
      _
    $region31: #{temporal_encoder_forward.1} parent=1 // pred_check_branch
      %6478 = sbr.rel (0) target = $region33
    $region32: #{temporal_encoder_forward.1} parent=1 // pred_region
      %s6480 = ssub.s32 32, 32
      %6481 = vsyncadd [#allocation3], %s6480
      %s6483 = sshll.u32 [#allocation2], 4
      %s6484 = int_to_ptr.vmem [resolvable:$true] %s6483
      %6486 = dma.vmem_to_hbm [thread:$0]  %s6484, 32, %s7, [#allocation3]
    $region33: #{temporal_encoder_forward.1} parent=1 // pred_fallthru
      _
    // Predicated region
    $region34: #{temporal_encoder_forward.1} parent=1 // pred_check
      _
    $region35: #{temporal_encoder_forward.1} parent=1 // pred_check_branch
      %6488 = sbr.rel (0) target = $region37
    $region36: #{temporal_encoder_forward.1} parent=1 // pred_region
      %6489 = dma.done [#allocation3], 32
    $region37: #{temporal_encoder_forward.1} parent=1 // pred_fallthru
      _
    %6490 = vsyncpa [#allocation3], 1

</llo_original>
